<compile_context>
chip_gen: v7x
topology: tpu7x:2x2x1
jax: 0.10.0
libtpu: 0.0.40
codegen_flags: <defaults>
</compile_context>

<pallas_src>
import jax
import jax.numpy as jnp
from jax.experimental import pallas as pl
from jax.experimental.pallas import tpu as pltpu

# ---- per-generation VMEM budget (≈48 MiB on v7x, ≈96 MiB on v5e/v6e) --------
try:
    _VMEM_CAP = int(pltpu.get_tpu_info().vmem_capacity_bytes)
except Exception:  # conservative fallback if the query is unavailable
    _VMEM_CAP = 64 * 1024 * 1024
_VMEM_LIMIT_BYTES = min((_VMEM_CAP * 3) // 4, 100 * 1024 * 1024)

_T_CHUNK = 16  # timesteps per recurrence grid step (multiple of 16 for bf16 tiling)


def _round_up(x, m):
    return ((x + m - 1) // m) * m


def _pick_tile(n, cap=512):
    """Largest tile in {512,256,128} that divides n (n is a multiple of 128)."""
    for t in (cap, cap // 2, cap // 4):
        if t <= n and n % t == 0:
            return t
    return n


# ---------------------------------------------------------------------------
# Generic tiled matmul-with-bias kernel:  out = x @ w + b   (stages 1 and 3)
# bf16 operands, f32 accumulation on the MXU.
# ---------------------------------------------------------------------------
def _matmul_bias_kernel(x_ref, w_ref, b_ref, o_ref):
    o_ref[...] = (jnp.dot(x_ref[...], w_ref[...],
                          preferred_element_type=jnp.float32)
                  + b_ref[...]).astype(o_ref.dtype)


def _pallas_matmul_bias(x, w, b2, out_dtype):
    """x: (M, K), w: (K, N), b2: (1, N) f32 -> (M, N) out_dtype.

    The wrapper guarantees M is a multiple of 128 and N a multiple of 128.
    """
    M, K = x.shape
    _, N = w.shape
    tm = _pick_tile(M)
    tn = _pick_tile(N)
    return pl.pallas_call(
        _matmul_bias_kernel,
        out_shape=jax.ShapeDtypeStruct((M, N), out_dtype),
        grid_spec=pltpu.PrefetchScalarGridSpec(
            num_scalar_prefetch=0,
            grid=(M // tm, N // tn),
            in_specs=[pl.BlockSpec((tm, K), lambda i, j: (i, 0)),
                      pl.BlockSpec((K, tn), lambda i, j: (0, j)),
                      pl.BlockSpec((1, tn), lambda i, j: (0, j))],
            out_specs=pl.BlockSpec((tm, tn), lambda i, j: (i, j)),
        ),
        compiler_params=pltpu.CompilerParams(
            dimension_semantics=("parallel", "parallel"),
            vmem_limit_bytes=_VMEM_LIMIT_BYTES),
    )(x, w, b2)


# ---------------------------------------------------------------------------
# LSTM recurrence kernel (stage 2), batch-major:
#   xproj_ref: (Bc, Tc, 4*Hp) bf16  precomputed x @ W_ih + (b_ih+b_hh)
#   whh_ref  : (Hp, 4*Hp)     f32   resident, single-buffered recurrent weights
#   hseq_ref : (Bc, Tc, Hp)   bf16  hidden-state sequence for this chunk
#   h_scr/c_scr: (Bc, Hp)     f32   persist across the T grid axis
# ---------------------------------------------------------------------------
def _lstm_recurrence_kernel(xproj_ref, whh_ref, hseq_ref, h_scr, c_scr):
    Tc = xproj_ref.shape[1]
    Hp = whh_ref.shape[0]

    @pl.when(pl.program_id(1) == 0)  # new batch chunk -> reset state
    def _():
        h_scr[...] = jnp.zeros_like(h_scr)
        c_scr[...] = jnp.zeros_like(c_scr)

    whh = whh_ref[...]  # resident recurrent weights (f32 for accuracy)

    def sigm(z):  # sigmoid as a single EUP tanh push (fewer transcendentals)
        return 0.5 * jnp.tanh(0.5 * z) + 0.5

    # Small fixed chunk -> static Python unroll (static slice indices).
    for t in range(Tc):
        h = h_scr[...]
        c = c_scr[...]
        gates = (xproj_ref[:, t, :].astype(jnp.float32)
                 + jnp.dot(h, whh, preferred_element_type=jnp.float32))
        # PyTorch gate order (i, f, g, o); slices are lane-aligned (Hp % 128 == 0).
        i_g = sigm(gates[:, 0:Hp])
        f_g = sigm(gates[:, Hp:2 * Hp])
        g_g = jnp.tanh(gates[:, 2 * Hp:3 * Hp])
        o_g = sigm(gates[:, 3 * Hp:4 * Hp])
        c_new = f_g * c + i_g * g_g
        h_new = o_g * jnp.tanh(c_new)
        h_scr[...] = h_new
        c_scr[...] = c_new
        hseq_ref[:, t, :] = h_new.astype(hseq_ref.dtype)


# ---------------------------------------------------------------------------
# One-time parameter preparation (hoisted out of the per-call forward)
# ---------------------------------------------------------------------------
def prepare_decoder_params(params):
    emb = params["embedding"].astype(jnp.float32)       # (V, E)
    w_ih = params["w_ih"].astype(jnp.float32)           # (4H, E)
    w_hh = params["w_hh"].astype(jnp.float32)           # (4H, H)
    b = (params["b_ih"] + params["b_hh"]).astype(jnp.float32)  # (4H,)
    w_fc = params["w_fc"].astype(jnp.float32)           # (V, H)
    b_fc = params["b_fc"].astype(jnp.float32)           # (V,)

    V, E = emb.shape
    H = w_hh.shape[1]
    H_pad = _round_up(H, 128)
    V_pad = _round_up(V, 128)

    def pad_gate_cols(w_t):  # (K, 4H) -> (K, 4*H_pad), each gate lane-aligned
        K = w_t.shape[0]
        w4 = w_t.reshape(K, 4, H)
        return (jnp.zeros((K, 4, H_pad), w_t.dtype)
                .at[:, :, :H].set(w4).reshape(K, 4 * H_pad))

    wih_p = pad_gate_cols(w_ih.T).astype(jnp.bfloat16)                 # (E, 4Hp)
    whh_p = (jnp.zeros((H_pad, 4 * H_pad), jnp.float32)
             .at[:H, :].set(pad_gate_cols(w_hh.T)))                    # (Hp, 4Hp) f32
    b_p = (jnp.zeros((4, H_pad), jnp.float32)
           .at[:, :H].set(b.reshape(4, H)).reshape(1, 4 * H_pad))      # (1, 4Hp)
    wfc_p = (jnp.zeros((H_pad, V_pad), jnp.float32)
             .at[:H, :V].set(w_fc.T).astype(jnp.bfloat16))             # (Hp, Vp)
    bfc_p = jnp.zeros((1, V_pad), jnp.float32).at[0, :V].set(b_fc)     # (1, Vp)

    return {"emb": emb, "wih_p": wih_p, "whh_p": whh_p, "b_p": b_p,
            "wfc_p": wfc_p, "bfc_p": bfc_p}


# ---------------------------------------------------------------------------
# Full forward pass
# ---------------------------------------------------------------------------
@jax.jit
def decoder_rnn_forward(features, captions, prep):
    """features: (B, E) f32, captions: (B, Tc) i32 -> (B, Tc, V) f32 logits."""
    emb = prep["emb"]
    V, E = emb.shape
    H_pad = prep["whh_p"].shape[0]
    V_pad = prep["wfc_p"].shape[1]

    # ---- glue: embedding lookup + feature concat, batch-first like PyTorch
    cap_emb = emb[captions[:, :-1]]                                      # (B, T-1, E)
    inputs = jnp.concatenate([features.astype(jnp.float32)[:, None, :], cap_emb],
                             axis=1).astype(jnp.bfloat16)                # (B, T, E)
    B, T, _ = inputs.shape

    # ---- hardware-friendly padding (batch-major throughout)
    B_pad = _round_up(B, 8)
    if B_pad >= 16:  # >=2 batch chunks so both v7x TensorCores get recurrence work
        B_chunk = min(128, _round_up(B_pad // 2, 8))
    else:
        B_chunk = B_pad
    B_pad = _round_up(B_pad, B_chunk)
    T_pad = _round_up(T, _T_CHUNK)

    x = jnp.zeros((B_pad, T_pad, E), jnp.bfloat16).at[:B, :T, :].set(inputs)

    # ---- stage 1: hoisted input projection (one big bf16 GEMM, bias folded in)
    xproj = _pallas_matmul_bias(x.reshape(B_pad * T_pad, E),
                                prep["wih_p"], prep["b_p"], jnp.bfloat16)
    xproj = xproj.reshape(B_pad, T_pad, 4 * H_pad)

    # ---- stage 2: serial LSTM recurrence, batch-parallel / time-serial grid
    n_b = B_pad // B_chunk
    n_t = T_pad // _T_CHUNK
    try:  # single-buffer the resident W_hh block (constant index_map)
        whh_spec = pl.BlockSpec((H_pad, 4 * H_pad), lambda b, t: (0, 0),
                                pipeline_mode=pl.Buffered(1))
    except Exception:
        whh_spec = pl.BlockSpec((H_pad, 4 * H_pad), lambda b, t: (0, 0))

    h_seq = pl.pallas_call(
        _lstm_recurrence_kernel,
        out_shape=jax.ShapeDtypeStruct((B_pad, T_pad, H_pad), jnp.bfloat16),
        grid_spec=pltpu.PrefetchScalarGridSpec(
            num_scalar_prefetch=0,
            grid=(n_b, n_t),
            in_specs=[
                pl.BlockSpec((B_chunk, _T_CHUNK, 4 * H_pad),
                             lambda b, t: (b, t, 0)),
                whh_spec,
            ],
            out_specs=pl.BlockSpec((B_chunk, _T_CHUNK, H_pad),
                                   lambda b, t: (b, t, 0)),
            scratch_shapes=[pltpu.VMEM((B_chunk, H_pad), jnp.float32),   # h
                            pltpu.VMEM((B_chunk, H_pad), jnp.float32)],  # c
        ),
        compiler_params=pltpu.CompilerParams(
            dimension_semantics=("parallel", "arbitrary"),
            vmem_limit_bytes=_VMEM_LIMIT_BYTES),
    )(xproj, prep["whh_p"])

    # ---- stage 3: fc projection, consumed batch-major directly (no transpose)
    logits = _pallas_matmul_bias(h_seq.reshape(B_pad * T_pad, H_pad),
                                 prep["wfc_p"], prep["bfc_p"], jnp.float32)
    logits = logits.reshape(B_pad, T_pad, V_pad)
    return logits[:B, :T, :V]


# ---------------------------------------------------------------------------
# Pure-JAX f32 reference mirroring PyTorch semantics
# ---------------------------------------------------------------------------
def _reference_forward(features, captions, params):
    emb = params["embedding"][captions[:, :-1]]
    inputs = jnp.concatenate([features[:, None, :], emb], axis=1)  # (B, T, E)
    H = params["w_hh"].shape[1]

    def step(carry, xt):
        h, c = carry
        gates = (xt @ params["w_ih"].T + h @ params["w_hh"].T
                 + params["b_ih"] + params["b_hh"])
        i_g, f_g, g_g, o_g = jnp.split(gates, 4, axis=-1)
        c_new = jax.nn.sigmoid(f_g) * c + jax.nn.sigmoid(i_g) * jnp.tanh(g_g)
        h_new = jax.nn.sigmoid(o_g) * jnp.tanh(c_new)
        return (h_new, c_new), h_new

    B = inputs.shape[0]
    h0 = jnp.zeros((B, H), jnp.float32)
    c0 = jnp.zeros((B, H), jnp.float32)
    _, hs = jax.lax.scan(step, (h0, c0), jnp.transpose(inputs, (1, 0, 2)))
    hs = jnp.transpose(hs, (1, 0, 2))                              # (B, T, H)
    return hs @ params["w_fc"].T + params["b_fc"]


def _init_params(key, embed_size, hidden_size, vocab_size):
    ks = jax.random.split(key, 7)
    s = 0.1
    return {
        "embedding": jax.random.normal(ks[0], (vocab_size, embed_size), jnp.float32) * s,
        "w_ih": jax.random.normal(ks[1], (4 * hidden_size, embed_size), jnp.float32) * s,
        "w_hh": jax.random.normal(ks[2], (4 * hidden_size, hidden_size), jnp.float32) * s,
        "b_ih": jax.random.normal(ks[3], (4 * hidden_size,), jnp.float32) * s,
        "b_hh": jax.random.normal(ks[4], (4 * hidden_size,), jnp.float32) * s,
        "w_fc": jax.random.normal(ks[5], (vocab_size, hidden_size), jnp.float32) * s,
        "b_fc": jax.random.normal(ks[6], (vocab_size,), jnp.float32) * s,
    }


if __name__ == "__main__":
    embed_size, hidden_size, vocab_size = 32, 32, 64
    batch, cap_len = 2, 8   # -> sequence length T = 1 + (cap_len - 1) = 8

    key = jax.random.PRNGKey(0)
    k_params, k_feat, k_cap = jax.random.split(key, 3)

    params = _init_params(k_params, embed_size, hidden_size, vocab_size)
    features = jax.random.normal(k_feat, (batch, embed_size), jnp.float32)
    captions = jax.random.randint(k_cap, (batch, cap_len), 0, vocab_size, jnp.int32)

    prep = prepare_decoder_params(params)            # one-time weight prep
    out = decoder_rnn_forward(features, captions, prep)
    out = jax.block_until_ready(out)

    ref = _reference_forward(features, captions, params)
    assert out.shape == (batch, cap_len, vocab_size), out.shape
    # bf16 MXU operands for the big GEMMs / stored activations -> relaxed tol
    # (the recurrent W_hh / h / c path stays f32 so error does not compound).
    assert jnp.allclose(out, ref, atol=2e-2, rtol=2e-2), "mismatch vs reference"

    print("KERNEL_OK")
</pallas_src>

<mosaic_0001>
module attributes {stable_mosaic.version = 11 : i64} {
  func.func @_matmul_bias_kernel(%arg0: i32, %arg1: i32, %arg2: memref<128x32xbf16, #tpu.memory_space<vmem>>, %arg3: memref<32x512xbf16, #tpu.memory_space<vmem>>, %arg4: memref<1x512xf32, #tpu.memory_space<vmem>>, %arg5: memref<128x512xbf16, #tpu.memory_space<vmem>>) attributes {dimension_semantics = [#tpu.dimension_semantics<parallel>, #tpu.dimension_semantics<parallel>], iteration_bounds = array<i64: 1, 1>, scalar_prefetch = 0 : i64, scratch_operands = 0 : i64, tpu.core_type = #tpu.core_type<tc>, window_params = [{transform_indices = @transform_0, window_bounds = array<i64: 128, 32>}, {transform_indices = @transform_1, window_bounds = array<i64: 32, 512>}, {transform_indices = @transform_2, window_bounds = array<i64: 1, 512>}, {transform_indices = @transform_3, window_bounds = array<i64: 128, 512>}]} {
    %c0 = arith.constant 0 : index
    %c0_0 = arith.constant 0 : index
    %0 = vector.load %arg2[%c0, %c0_0] : memref<128x32xbf16, #tpu.memory_space<vmem>>, vector<128x32xbf16>
    %c0_1 = arith.constant 0 : index
    %c0_2 = arith.constant 0 : index
    %1 = vector.load %arg3[%c0_1, %c0_2] : memref<32x512xbf16, #tpu.memory_space<vmem>>, vector<32x512xbf16>
    %cst = arith.constant dense<0.000000e+00> : vector<128x512xf32>
    %2 = tpu.matmul %0, %1, %cst {dimension_numbers = #tpu.dot_dimension_numbers<[1], [0], [0], [1], [0, 0, 1, 1], [], []>} : vector<128x32xbf16>, vector<32x512xbf16>, vector<128x512xf32> -> vector<128x512xf32>
    %c0_3 = arith.constant 0 : index
    %c0_4 = arith.constant 0 : index
    %3 = vector.load %arg4[%c0_3, %c0_4] : memref<1x512xf32, #tpu.memory_space<vmem>>, vector<1x512xf32>
    %4 = vector.broadcast %3 : vector<1x512xf32> to vector<128x512xf32>
    %5 = arith.addf %2, %4 : vector<128x512xf32>
    %6 = arith.truncf %5 : vector<128x512xf32> to vector<128x512xbf16>
    %c0_5 = arith.constant 0 : index
    %c0_6 = arith.constant 0 : index
    %7 = vector.load %arg5[%c0_5, %c0_6] : memref<128x512xbf16, #tpu.memory_space<vmem>>, vector<128x512xbf16>
    tpu.vector_store %arg5[%c0_5, %c0_6], %6 {strides = array<i32>} : memref<128x512xbf16, #tpu.memory_space<vmem>>, vector<128x512xbf16>,
    return
  }
  func.func @transform_0(%arg0: i32, %arg1: i32) -> (i32, i32) {
    %c0_i32 = arith.constant 0 : i32
    %c0_i32_0 = arith.constant 0 : i32
    return %arg0, %c0_i32 : i32, i32
  }
  func.func @transform_1(%arg0: i32, %arg1: i32) -> (i32, i32) {
    %c0_i32 = arith.constant 0 : i32
    %c0_i32_0 = arith.constant 0 : i32
    return %c0_i32, %arg1 : i32, i32
  }
  func.func @transform_2(%arg0: i32, %arg1: i32) -> (i32, i32) {
    %c0_i32 = arith.constant 0 : i32
    %c0_i32_0 = arith.constant 0 : i32
    return %c0_i32, %arg1 : i32, i32
  }
  func.func @transform_3(%arg0: i32, %arg1: i32) -> (i32, i32) {
    %c0_i32 = arith.constant 0 : i32
    return %arg0, %arg1 : i32, i32
  }
}

module attributes {stable_mosaic.version = 11 : i64} {
  func.func @_matmul_bias_kernel(%arg0: i32, %arg1: i32, %arg2: memref<128x128xbf16, #tpu.memory_space<vmem>>, %arg3: memref<128x128xbf16, #tpu.memory_space<vmem>>, %arg4: memref<1x128xf32, #tpu.memory_space<vmem>>, %arg5: memref<128x128xf32, #tpu.memory_space<vmem>>) attributes {dimension_semantics = [#tpu.dimension_semantics<parallel>, #tpu.dimension_semantics<parallel>], iteration_bounds = array<i64: 1, 1>, scalar_prefetch = 0 : i64, scratch_operands = 0 : i64, tpu.core_type = #tpu.core_type<tc>, window_params = [{transform_indices = @transform_0, window_bounds = array<i64: 128, 128>}, {transform_indices = @transform_1, window_bounds = array<i64: 128, 128>}, {transform_indices = @transform_2, window_bounds = array<i64: 1, 128>}, {transform_indices = @transform_3, window_bounds = array<i64: 128, 128>}]} {
    %c0 = arith.constant 0 : index
    %c0_0 = arith.constant 0 : index
    %0 = vector.load %arg2[%c0, %c0_0] : memref<128x128xbf16, #tpu.memory_space<vmem>>, vector<128x128xbf16>
    %c0_1 = arith.constant 0 : index
    %c0_2 = arith.constant 0 : index
    %1 = vector.load %arg3[%c0_1, %c0_2] : memref<128x128xbf16, #tpu.memory_space<vmem>>, vector<128x128xbf16>
    %cst = arith.constant dense<0.000000e+00> : vector<128x128xf32>
    %2 = tpu.matmul %0, %1, %cst {dimension_numbers = #tpu.dot_dimension_numbers<[1], [0], [0], [1], [0, 0, 1, 1], [], []>} : vector<128x128xbf16>, vector<128x128xbf16>, vector<128x128xf32> -> vector<128x128xf32>
    %c0_3 = arith.constant 0 : index
    %c0_4 = arith.constant 0 : index
    %3 = vector.load %arg4[%c0_3, %c0_4] : memref<1x128xf32, #tpu.memory_space<vmem>>, vector<1x128xf32>
    %4 = vector.broadcast %3 : vector<1x128xf32> to vector<128x128xf32>
    %5 = arith.addf %2, %4 : vector<128x128xf32>
    %c0_5 = arith.constant 0 : index
    %c0_6 = arith.constant 0 : index
    %6 = vector.load %arg5[%c0_5, %c0_6] : memref<128x128xf32, #tpu.memory_space<vmem>>, vector<128x128xf32>
    tpu.vector_store %arg5[%c0_5, %c0_6], %5 {strides = array<i32>} : memref<128x128xf32, #tpu.memory_space<vmem>>, vector<128x128xf32>,
    return
  }
  func.func @transform_0(%arg0: i32, %arg1: i32) -> (i32, i32) {
    %c0_i32 = arith.constant 0 : i32
    %c0_i32_0 = arith.constant 0 : i32
    return %arg0, %c0_i32 : i32, i32
  }
  func.func @transform_1(%arg0: i32, %arg1: i32) -> (i32, i32) {
    %c0_i32 = arith.constant 0 : i32
    %c0_i32_0 = arith.constant 0 : i32
    return %c0_i32, %arg1 : i32, i32
  }
  func.func @transform_2(%arg0: i32, %arg1: i32) -> (i32, i32) {
    %c0_i32 = arith.constant 0 : i32
    %c0_i32_0 = arith.constant 0 : i32
    return %c0_i32, %arg1 : i32, i32
  }
  func.func @transform_3(%arg0: i32, %arg1: i32) -> (i32, i32) {
    %c0_i32 = arith.constant 0 : i32
    return %arg0, %arg1 : i32, i32
  }
}

module attributes {stable_mosaic.version = 11 : i64} {
  func.func @_lstm_recurrence_kernel(%arg0: i32, %arg1: i32, %arg2: memref<8x16x512xbf16, #tpu.memory_space<vmem>>, %arg3: memref<128x512xf32, #tpu.memory_space<vmem>>, %arg4: memref<8x16x128xbf16, #tpu.memory_space<vmem>>, %arg5: memref<8x128xf32, #tpu.memory_space<vmem>>, %arg6: memref<8x128xf32, #tpu.memory_space<vmem>>) attributes {dimension_semantics = [#tpu.dimension_semantics<parallel>, #tpu.dimension_semantics<arbitrary>], iteration_bounds = array<i64: 1, 1>, scalar_prefetch = 0 : i64, scratch_operands = 2 : i64, tpu.core_type = #tpu.core_type<tc>, window_params = [{transform_indices = @transform_0, window_bounds = array<i64: 8, 16, 512>}, {pipeline_mode = #tpu.pipeline_mode<synchronous>, transform_indices = @transform_1, window_bounds = array<i64: 128, 512>}, {transform_indices = @transform_2, window_bounds = array<i64: 8, 16, 128>}]} {
    %c0_i32 = arith.constant 0 : i32
    %0 = arith.cmpi eq, %arg1, %c0_i32 : i32
    %1 = arith.extui %0 : i1 to i32
    %c0_i32_0 = arith.constant 0 : i32
    %2 = arith.cmpi ne, %1, %c0_i32_0 : i32
    scf.if %2 {
      %cst_370 = arith.constant 0.000000e+00 : f32
      %708 = vector.broadcast %cst_370 : f32 to vector<8x128xf32>
      %c0_371 = arith.constant 0 : index
      %c0_372 = arith.constant 0 : index
      %709 = vector.load %arg5[%c0_371, %c0_372] : memref<8x128xf32, #tpu.memory_space<vmem>>, vector<8x128xf32>
      tpu.vector_store %arg5[%c0_371, %c0_372], %708 {strides = array<i32>} : memref<8x128xf32, #tpu.memory_space<vmem>>, vector<8x128xf32>,
      %cst_373 = arith.constant 0.000000e+00 : f32
      %710 = vector.broadcast %cst_373 : f32 to vector<8x128xf32>
      %c0_374 = arith.constant 0 : index
      %c0_375 = arith.constant 0 : index
      %711 = vector.load %arg6[%c0_374, %c0_375] : memref<8x128xf32, #tpu.memory_space<vmem>>, vector<8x128xf32>
      tpu.vector_store %arg6[%c0_374, %c0_375], %710 {strides = array<i32>} : memref<8x128xf32, #tpu.memory_space<vmem>>, vector<8x128xf32>,
    } else {
    }
    %c0 = arith.constant 0 : index
    %c0_1 = arith.constant 0 : index
    %3 = vector.load %arg3[%c0, %c0_1] : memref<128x512xf32, #tpu.memory_space<vmem>>, vector<128x512xf32>
    %c0_2 = arith.constant 0 : index
    %c0_3 = arith.constant 0 : index
    %4 = vector.load %arg5[%c0_2, %c0_3] : memref<8x128xf32, #tpu.memory_space<vmem>>, vector<8x128xf32>
    %c0_4 = arith.constant 0 : index
    %c0_5 = arith.constant 0 : index
    %5 = vector.load %arg6[%c0_4, %c0_5] : memref<8x128xf32, #tpu.memory_space<vmem>>, vector<8x128xf32>
    %c0_6 = arith.constant 0 : index
    %c0_7 = arith.constant 0 : index
    %c0_8 = arith.constant 0 : index
    %6 = vector.load %arg2[%c0_6, %c0_7, %c0_8] : memref<8x16x512xbf16, #tpu.memory_space<vmem>>, vector<8x1x512xbf16>
    %7 = vector.shape_cast %6 : vector<8x1x512xbf16> to vector<8x512xbf16>
    %8 = arith.extf %7 : vector<8x512xbf16> to vector<8x512xf32>
    %cst = arith.constant dense<0.000000e+00> : vector<8x512xf32>
    %9 = tpu.matmul %4, %3, %cst {dimension_numbers = #tpu.dot_dimension_numbers<[1], [0], [0], [1], [0, 0, 1, 1], [], []>} : vector<8x128xf32>, vector<128x512xf32>, vector<8x512xf32> -> vector<8x512xf32>
    %10 = arith.addf %8, %9 : vector<8x512xf32>
    %11 = vector.extract_strided_slice %10 {offsets = [0, 0], sizes = [8, 128], strides = [1, 1]} : vector<8x512xf32> to vector<8x128xf32>
    %cst_9 = arith.constant 5.000000e-01 : f32
    %12 = vector.broadcast %cst_9 : f32 to vector<8x128xf32>
    %13 = arith.mulf %12, %11 : vector<8x128xf32>
    %14 = math.tanh %13 : vector<8x128xf32>
    %cst_10 = arith.constant 5.000000e-01 : f32
    %15 = vector.broadcast %cst_10 : f32 to vector<8x128xf32>
    %16 = arith.mulf %15, %14 : vector<8x128xf32>
    %cst_11 = arith.constant 5.000000e-01 : f32
    %17 = vector.broadcast %cst_11 : f32 to vector<8x128xf32>
    %18 = arith.addf %16, %17 : vector<8x128xf32>
    %19 = vector.extract_strided_slice %10 {offsets = [0, 128], sizes = [8, 128], strides = [1, 1]} : vector<8x512xf32> to vector<8x128xf32>
    %cst_12 = arith.constant 5.000000e-01 : f32
    %20 = vector.broadcast %cst_12 : f32 to vector<8x128xf32>
    %21 = arith.mulf %20, %19 : vector<8x128xf32>
    %22 = math.tanh %21 : vector<8x128xf32>
    %cst_13 = arith.constant 5.000000e-01 : f32
    %23 = vector.broadcast %cst_13 : f32 to vector<8x128xf32>
    %24 = arith.mulf %23, %22 : vector<8x128xf32>
    %cst_14 = arith.constant 5.000000e-01 : f32
    %25 = vector.broadcast %cst_14 : f32 to vector<8x128xf32>
    %26 = arith.addf %24, %25 : vector<8x128xf32>
    %27 = vector.extract_strided_slice %10 {offsets = [0, 256], sizes = [8, 128], strides = [1, 1]} : vector<8x512xf32> to vector<8x128xf32>
    %28 = math.tanh %27 : vector<8x128xf32>
    %29 = vector.extract_strided_slice %10 {offsets = [0, 384], sizes = [8, 128], strides = [1, 1]} : vector<8x512xf32> to vector<8x128xf32>
    %cst_15 = arith.constant 5.000000e-01 : f32
    %30 = vector.broadcast %cst_15 : f32 to vector<8x128xf32>
    %31 = arith.mulf %30, %29 : vector<8x128xf32>
    %32 = math.tanh %31 : vector<8x128xf32>
    %cst_16 = arith.constant 5.000000e-01 : f32
    %33 = vector.broadcast %cst_16 : f32 to vector<8x128xf32>
    %34 = arith.mulf %33, %32 : vector<8x128xf32>
    %cst_17 = arith.constant 5.000000e-01 : f32
    %35 = vector.broadcast %cst_17 : f32 to vector<8x128xf32>
    %36 = arith.addf %34, %35 : vector<8x128xf32>
    %37 = arith.mulf %26, %5 : vector<8x128xf32>
    %38 = arith.mulf %18, %28 : vector<8x128xf32>
    %39 = arith.addf %37, %38 : vector<8x128xf32>
    %40 = math.tanh %39 : vector<8x128xf32>
    %41 = arith.mulf %36, %40 : vector<8x128xf32>
    %c0_18 = arith.constant 0 : index
    %c0_19 = arith.constant 0 : index
    %42 = vector.load %arg5[%c0_18, %c0_19] : memref<8x128xf32, #tpu.memory_space<vmem>>, vector<8x128xf32>
    tpu.vector_store %arg5[%c0_18, %c0_19], %41 {strides = array<i32>} : memref<8x128xf32, #tpu.memory_space<vmem>>, vector<8x128xf32>,
    %c0_20 = arith.constant 0 : index
    %c0_21 = arith.constant 0 : index
    %43 = vector.load %arg6[%c0_20, %c0_21] : memref<8x128xf32, #tpu.memory_space<vmem>>, vector<8x128xf32>
    tpu.vector_store %arg6[%c0_20, %c0_21], %39 {strides = array<i32>} : memref<8x128xf32, #tpu.memory_space<vmem>>, vector<8x128xf32>,
    %44 = arith.truncf %41 : vector<8x128xf32> to vector<8x128xbf16>
    %c0_22 = arith.constant 0 : index
    %c0_23 = arith.constant 0 : index
    %c0_24 = arith.constant 0 : index
    %45 = vector.load %arg4[%c0_22, %c0_23, %c0_24] : memref<8x16x128xbf16, #tpu.memory_space<vmem>>, vector<8x1x128xbf16>
    %46 = vector.shape_cast %45 : vector<8x1x128xbf16> to vector<8x128xbf16>
    %47 = vector.shape_cast %44 : vector<8x128xbf16> to vector<8x1x128xbf16>
    tpu.vector_store %arg4[%c0_22, %c0_23, %c0_24], %47 {strides = array<i32>} : memref<8x16x128xbf16, #tpu.memory_space<vmem>>, vector<8x1x128xbf16>,
    %c0_25 = arith.constant 0 : index
    %c0_26 = arith.constant 0 : index
    %48 = vector.load %arg5[%c0_25, %c0_26] : memref<8x128xf32, #tpu.memory_space<vmem>>, vector<8x128xf32>
    %c0_27 = arith.constant 0 : index
    %c0_28 = arith.constant 0 : index
    %49 = vector.load %arg6[%c0_27, %c0_28] : memref<8x128xf32, #tpu.memory_space<vmem>>, vector<8x128xf32>
    %c0_29 = arith.constant 0 : index
    %c1 = arith.constant 1 : index
    %c0_30 = arith.constant 0 : index
    %50 = vector.load %arg2[%c0_29, %c1, %c0_30] : memref<8x16x512xbf16, #tpu.memory_space<vmem>>, vector<8x1x512xbf16>
    %51 = vector.shape_cast %50 : vector<8x1x512xbf16> to vector<8x512xbf16>
    %52 = arith.extf %51 : vector<8x512xbf16> to vector<8x512xf32>
    %cst_31 = arith.constant dense<0.000000e+00> : vector<8x512xf32>
    %53 = tpu.matmul %48, %3, %cst_31 {dimension_numbers = #tpu.dot_dimension_numbers<[1], [0], [0], [1], [0, 0, 1, 1], [], []>} : vector<8x128xf32>, vector<128x512xf32>, vector<8x512xf32> -> vector<8x512xf32>
    %54 = arith.addf %52, %53 : vector<8x512xf32>
    %55 = vector.extract_strided_slice %54 {offsets = [0, 0], sizes = [8, 128], strides = [1, 1]} : vector<8x512xf32> to vector<8x128xf32>
    %cst_32 = arith.constant 5.000000e-01 : f32
    %56 = vector.broadcast %cst_32 : f32 to vector<8x128xf32>
    %57 = arith.mulf %56, %55 : vector<8x128xf32>
    %58 = math.tanh %57 : vector<8x128xf32>
    %cst_33 = arith.constant 5.000000e-01 : f32
    %59 = vector.broadcast %cst_33 : f32 to vector<8x128xf32>
    %60 = arith.mulf %59, %58 : vector<8x128xf32>
    %cst_34 = arith.constant 5.000000e-01 : f32
    %61 = vector.broadcast %cst_34 : f32 to vector<8x128xf32>
    %62 = arith.addf %60, %61 : vector<8x128xf32>
    %63 = vector.extract_strided_slice %54 {offsets = [0, 128], sizes = [8, 128], strides = [1, 1]} : vector<8x512xf32> to vector<8x128xf32>
    %cst_35 = arith.constant 5.000000e-01 : f32
    %64 = vector.broadcast %cst_35 : f32 to vector<8x128xf32>
    %65 = arith.mulf %64, %63 : vector<8x128xf32>
    %66 = math.tanh %65 : vector<8x128xf32>
    %cst_36 = arith.constant 5.000000e-01 : f32
    %67 = vector.broadcast %cst_36 : f32 to vector<8x128xf32>
    %68 = arith.mulf %67, %66 : vector<8x128xf32>
    %cst_37 = arith.constant 5.000000e-01 : f32
    %69 = vector.broadcast %cst_37 : f32 to vector<8x128xf32>
    %70 = arith.addf %68, %69 : vector<8x128xf32>
    %71 = vector.extract_strided_slice %54 {offsets = [0, 256], sizes = [8, 128], strides = [1, 1]} : vector<8x512xf32> to vector<8x128xf32>
    %72 = math.tanh %71 : vector<8x128xf32>
    %73 = vector.extract_strided_slice %54 {offsets = [0, 384], sizes = [8, 128], strides = [1, 1]} : vector<8x512xf32> to vector<8x128xf32>
    %cst_38 = arith.constant 5.000000e-01 : f32
    %74 = vector.broadcast %cst_38 : f32 to vector<8x128xf32>
    %75 = arith.mulf %74, %73 : vector<8x128xf32>
    %76 = math.tanh %75 : vector<8x128xf32>
    %cst_39 = arith.constant 5.000000e-01 : f32
    %77 = vector.broadcast %cst_39 : f32 to vector<8x128xf32>
    %78 = arith.mulf %77, %76 : vector<8x128xf32>
    %cst_40 = arith.constant 5.000000e-01 : f32
    %79 = vector.broadcast %cst_40 : f32 to vector<8x128xf32>
    %80 = arith.addf %78, %79 : vector<8x128xf32>
    %81 = arith.mulf %70, %49 : vector<8x128xf32>
    %82 = arith.mulf %62, %72 : vector<8x128xf32>
    %83 = arith.addf %81, %82 : vector<8x128xf32>
    %84 = math.tanh %83 : vector<8x128xf32>
    %85 = arith.mulf %80, %84 : vector<8x128xf32>
    %c0_41 = arith.constant 0 : index
    %c0_42 = arith.constant 0 : index
    %86 = vector.load %arg5[%c0_41, %c0_42] : memref<8x128xf32, #tpu.memory_space<vmem>>, vector<8x128xf32>
    tpu.vector_store %arg5[%c0_41, %c0_42], %85 {strides = array<i32>} : memref<8x128xf32, #tpu.memory_space<vmem>>, vector<8x128xf32>,
    %c0_43 = arith.constant 0 : index
    %c0_44 = arith.constant 0 : index
    %87 = vector.load %arg6[%c0_43, %c0_44] : memref<8x128xf32, #tpu.memory_space<vmem>>, vector<8x128xf32>
    tpu.vector_store %arg6[%c0_43, %c0_44], %83 {strides = array<i32>} : memref<8x128xf32, #tpu.memory_space<vmem>>, vector<8x128xf32>,
    %88 = arith.truncf %85 : vector<8x128xf32> to vector<8x128xbf16>
    %c0_45 = arith.constant 0 : index
    %c1_46 = arith.constant 1 : index
    %c0_47 = arith.constant 0 : index
    %89 = vector.load %arg4[%c0_45, %c1_46, %c0_47] : memref<8x16x128xbf16, #tpu.memory_space<vmem>>, vector<8x1x128xbf16>
    %90 = vector.shape_cast %89 : vector<8x1x128xbf16> to vector<8x128xbf16>
    %91 = vector.shape_cast %88 : vector<8x128xbf16> to vector<8x1x128xbf16>
    tpu.vector_store %arg4[%c0_45, %c1_46, %c0_47], %91 {strides = array<i32>} : memref<8x16x128xbf16, #tpu.memory_space<vmem>>, vector<8x1x128xbf16>,
    %c0_48 = arith.constant 0 : index
    %c0_49 = arith.constant 0 : index
    %92 = vector.load %arg5[%c0_48, %c0_49] : memref<8x128xf32, #tpu.memory_space<vmem>>, vector<8x128xf32>
    %c0_50 = arith.constant 0 : index
    %c0_51 = arith.constant 0 : index
    %93 = vector.load %arg6[%c0_50, %c0_51] : memref<8x128xf32, #tpu.memory_space<vmem>>, vector<8x128xf32>
    %c0_52 = arith.constant 0 : index
    %c2 = arith.constant 2 : index
    %c0_53 = arith.constant 0 : index
    %94 = vector.load %arg2[%c0_52, %c2, %c0_53] : memref<8x16x512xbf16, #tpu.memory_space<vmem>>, vector<8x1x512xbf16>
    %95 = vector.shape_cast %94 : vector<8x1x512xbf16> to vector<8x512xbf16>
    %96 = arith.extf %95 : vector<8x512xbf16> to vector<8x512xf32>
    %cst_54 = arith.constant dense<0.000000e+00> : vector<8x512xf32>
    %97 = tpu.matmul %92, %3, %cst_54 {dimension_numbers = #tpu.dot_dimension_numbers<[1], [0], [0], [1], [0, 0, 1, 1], [], []>} : vector<8x128xf32>, vector<128x512xf32>, vector<8x512xf32> -> vector<8x512xf32>
    %98 = arith.addf %96, %97 : vector<8x512xf32>
    %99 = vector.extract_strided_slice %98 {offsets = [0, 0], sizes = [8, 128], strides = [1, 1]} : vector<8x512xf32> to vector<8x128xf32>
    %cst_55 = arith.constant 5.000000e-01 : f32
    %100 = vector.broadcast %cst_55 : f32 to vector<8x128xf32>
    %101 = arith.mulf %100, %99 : vector<8x128xf32>
    %102 = math.tanh %101 : vector<8x128xf32>
    %cst_56 = arith.constant 5.000000e-01 : f32
    %103 = vector.broadcast %cst_56 : f32 to vector<8x128xf32>
    %104 = arith.mulf %103, %102 : vector<8x128xf32>
    %cst_57 = arith.constant 5.000000e-01 : f32
    %105 = vector.broadcast %cst_57 : f32 to vector<8x128xf32>
    %106 = arith.addf %104, %105 : vector<8x128xf32>
    %107 = vector.extract_strided_slice %98 {offsets = [0, 128], sizes = [8, 128], strides = [1, 1]} : vector<8x512xf32> to vector<8x128xf32>
    %cst_58 = arith.constant 5.000000e-01 : f32
    %108 = vector.broadcast %cst_58 : f32 to vector<8x128xf32>
    %109 = arith.mulf %108, %107 : vector<8x128xf32>
    %110 = math.tanh %109 : vector<8x128xf32>
    %cst_59 = arith.constant 5.000000e-01 : f32
    %111 = vector.broadcast %cst_59 : f32 to vector<8x128xf32>
    %112 = arith.mulf %111, %110 : vector<8x128xf32>
    %cst_60 = arith.constant 5.000000e-01 : f32
    %113 = vector.broadcast %cst_60 : f32 to vector<8x128xf32>
    %114 = arith.addf %112, %113 : vector<8x128xf32>
    %115 = vector.extract_strided_slice %98 {offsets = [0, 256], sizes = [8, 128], strides = [1, 1]} : vector<8x512xf32> to vector<8x128xf32>
    %116 = math.tanh %115 : vector<8x128xf32>
    %117 = vector.extract_strided_slice %98 {offsets = [0, 384], sizes = [8, 128], strides = [1, 1]} : vector<8x512xf32> to vector<8x128xf32>
    %cst_61 = arith.constant 5.000000e-01 : f32
    %118 = vector.broadcast %cst_61 : f32 to vector<8x128xf32>
    %119 = arith.mulf %118, %117 : vector<8x128xf32>
    %120 = math.tanh %119 : vector<8x128xf32>
    %cst_62 = arith.constant 5.000000e-01 : f32
    %121 = vector.broadcast %cst_62 : f32 to vector<8x128xf32>
    %122 = arith.mulf %121, %120 : vector<8x128xf32>
    %cst_63 = arith.constant 5.000000e-01 : f32
    %123 = vector.broadcast %cst_63 : f32 to vector<8x128xf32>
    %124 = arith.addf %122, %123 : vector<8x128xf32>
    %125 = arith.mulf %114, %93 : vector<8x128xf32>
    %126 = arith.mulf %106, %116 : vector<8x128xf32>
    %127 = arith.addf %125, %126 : vector<8x128xf32>
    %128 = math.tanh %127 : vector<8x128xf32>
    %129 = arith.mulf %124, %128 : vector<8x128xf32>
    %c0_64 = arith.constant 0 : index
    %c0_65 = arith.constant 0 : index
    %130 = vector.load %arg5[%c0_64, %c0_65] : memref<8x128xf32, #tpu.memory_space<vmem>>, vector<8x128xf32>
    tpu.vector_store %arg5[%c0_64, %c0_65], %129 {strides = array<i32>} : memref<8x128xf32, #tpu.memory_space<vmem>>, vector<8x128xf32>,
    %c0_66 = arith.constant 0 : index
    %c0_67 = arith.constant 0 : index
    %131 = vector.load %arg6[%c0_66, %c0_67] : memref<8x128xf32, #tpu.memory_space<vmem>>, vector<8x128xf32>
    tpu.vector_store %arg6[%c0_66, %c0_67], %127 {strides = array<i32>} : memref<8x128xf32, #tpu.memory_space<vmem>>, vector<8x128xf32>,
    %132 = arith.truncf %129 : vector<8x128xf32> to vector<8x128xbf16>
    %c0_68 = arith.constant 0 : index
    %c2_69 = arith.constant 2 : index
    %c0_70 = arith.constant 0 : index
    %133 = vector.load %arg4[%c0_68, %c2_69, %c0_70] : memref<8x16x128xbf16, #tpu.memory_space<vmem>>, vector<8x1x128xbf16>
    %134 = vector.shape_cast %133 : vector<8x1x128xbf16> to vector<8x128xbf16>
    %135 = vector.shape_cast %132 : vector<8x128xbf16> to vector<8x1x128xbf16>
    tpu.vector_store %arg4[%c0_68, %c2_69, %c0_70], %135 {strides = array<i32>} : memref<8x16x128xbf16, #tpu.memory_space<vmem>>, vector<8x1x128xbf16>,
    %c0_71 = arith.constant 0 : index
    %c0_72 = arith.constant 0 : index
    %136 = vector.load %arg5[%c0_71, %c0_72] : memref<8x128xf32, #tpu.memory_space<vmem>>, vector<8x128xf32>
    %c0_73 = arith.constant 0 : index
    %c0_74 = arith.constant 0 : index
    %137 = vector.load %arg6[%c0_73, %c0_74] : memref<8x128xf32, #tpu.memory_space<vmem>>, vector<8x128xf32>
    %c0_75 = arith.constant 0 : index
    %c3 = arith.constant 3 : index
    %c0_76 = arith.constant 0 : index
    %138 = vector.load %arg2[%c0_75, %c3, %c0_76] : memref<8x16x512xbf16, #tpu.memory_space<vmem>>, vector<8x1x512xbf16>
    %139 = vector.shape_cast %138 : vector<8x1x512xbf16> to vector<8x512xbf16>
    %140 = arith.extf %139 : vector<8x512xbf16> to vector<8x512xf32>
    %cst_77 = arith.constant dense<0.000000e+00> : vector<8x512xf32>
    %141 = tpu.matmul %136, %3, %cst_77 {dimension_numbers = #tpu.dot_dimension_numbers<[1], [0], [0], [1], [0, 0, 1, 1], [], []>} : vector<8x128xf32>, vector<128x512xf32>, vector<8x512xf32> -> vector<8x512xf32>
    %142 = arith.addf %140, %141 : vector<8x512xf32>
    %143 = vector.extract_strided_slice %142 {offsets = [0, 0], sizes = [8, 128], strides = [1, 1]} : vector<8x512xf32> to vector<8x128xf32>
    %cst_78 = arith.constant 5.000000e-01 : f32
    %144 = vector.broadcast %cst_78 : f32 to vector<8x128xf32>
    %145 = arith.mulf %144, %143 : vector<8x128xf32>
    %146 = math.tanh %145 : vector<8x128xf32>
    %cst_79 = arith.constant 5.000000e-01 : f32
    %147 = vector.broadcast %cst_79 : f32 to vector<8x128xf32>
    %148 = arith.mulf %147, %146 : vector<8x128xf32>
    %cst_80 = arith.constant 5.000000e-01 : f32
    %149 = vector.broadcast %cst_80 : f32 to vector<8x128xf32>
    %150 = arith.addf %148, %149 : vector<8x128xf32>
    %151 = vector.extract_strided_slice %142 {offsets = [0, 128], sizes = [8, 128], strides = [1, 1]} : vector<8x512xf32> to vector<8x128xf32>
    %cst_81 = arith.constant 5.000000e-01 : f32
    %152 = vector.broadcast %cst_81 : f32 to vector<8x128xf32>
    %153 = arith.mulf %152, %151 : vector<8x128xf32>
    %154 = math.tanh %153 : vector<8x128xf32>
    %cst_82 = arith.constant 5.000000e-01 : f32
    %155 = vector.broadcast %cst_82 : f32 to vector<8x128xf32>
    %156 = arith.mulf %155, %154 : vector<8x128xf32>
    %cst_83 = arith.constant 5.000000e-01 : f32
    %157 = vector.broadcast %cst_83 : f32 to vector<8x128xf32>
    %158 = arith.addf %156, %157 : vector<8x128xf32>
    %159 = vector.extract_strided_slice %142 {offsets = [0, 256], sizes = [8, 128], strides = [1, 1]} : vector<8x512xf32> to vector<8x128xf32>
    %160 = math.tanh %159 : vector<8x128xf32>
    %161 = vector.extract_strided_slice %142 {offsets = [0, 384], sizes = [8, 128], strides = [1, 1]} : vector<8x512xf32> to vector<8x128xf32>
    %cst_84 = arith.constant 5.000000e-01 : f32
    %162 = vector.broadcast %cst_84 : f32 to vector<8x128xf32>
    %163 = arith.mulf %162, %161 : vector<8x128xf32>
    %164 = math.tanh %163 : vector<8x128xf32>
    %cst_85 = arith.constant 5.000000e-01 : f32
    %165 = vector.broadcast %cst_85 : f32 to vector<8x128xf32>
    %166 = arith.mulf %165, %164 : vector<8x128xf32>
    %cst_86 = arith.constant 5.000000e-01 : f32
    %167 = vector.broadcast %cst_86 : f32 to vector<8x128xf32>
    %168 = arith.addf %166, %167 : vector<8x128xf32>
    %169 = arith.mulf %158, %137 : vector<8x128xf32>
    %170 = arith.mulf %150, %160 : vector<8x128xf32>
    %171 = arith.addf %169, %170 : vector<8x128xf32>
    %172 = math.tanh %171 : vector<8x128xf32>
    %173 = arith.mulf %168, %172 : vector<8x128xf32>
    %c0_87 = arith.constant 0 : index
    %c0_88 = arith.constant 0 : index
    %174 = vector.load %arg5[%c0_87, %c0_88] : memref<8x128xf32, #tpu.memory_space<vmem>>, vector<8x128xf32>
    tpu.vector_store %arg5[%c0_87, %c0_88], %173 {strides = array<i32>} : memref<8x128xf32, #tpu.memory_space<vmem>>, vector<8x128xf32>,
    %c0_89 = arith.constant 0 : index
    %c0_90 = arith.constant 0 : index
    %175 = vector.load %arg6[%c0_89, %c0_90] : memref<8x128xf32, #tpu.memory_space<vmem>>, vector<8x128xf32>
    tpu.vector_store %arg6[%c0_89, %c0_90], %171 {strides = array<i32>} : memref<8x128xf32, #tpu.memory_space<vmem>>, vector<8x128xf32>,
    %176 = arith.truncf %173 : vector<8x128xf32> to vector<8x128xbf16>
    %c0_91 = arith.constant 0 : index
    %c3_92 = arith.constant 3 : index
    %c0_93 = arith.constant 0 : index
    %177 = vector.load %arg4[%c0_91, %c3_92, %c0_93] : memref<8x16x128xbf16, #tpu.memory_space<vmem>>, vector<8x1x128xbf16>
    %178 = vector.shape_cast %177 : vector<8x1x128xbf16> to vector<8x128xbf16>
    %179 = vector.shape_cast %176 : vector<8x128xbf16> to vector<8x1x128xbf16>
    tpu.vector_store %arg4[%c0_91, %c3_92, %c0_93], %179 {strides = array<i32>} : memref<8x16x128xbf16, #tpu.memory_space<vmem>>, vector<8x1x128xbf16>,
    %c0_94 = arith.constant 0 : index
    %c0_95 = arith.constant 0 : index
    %180 = vector.load %arg5[%c0_94, %c0_95] : memref<8x128xf32, #tpu.memory_space<vmem>>, vector<8x128xf32>
    %c0_96 = arith.constant 0 : index
    %c0_97 = arith.constant 0 : index
    %181 = vector.load %arg6[%c0_96, %c0_97] : memref<8x128xf32, #tpu.memory_space<vmem>>, vector<8x128xf32>
    %c0_98 = arith.constant 0 : index
    %c4 = arith.constant 4 : index
    %c0_99 = arith.constant 0 : index
    %182 = vector.load %arg2[%c0_98, %c4, %c0_99] : memref<8x16x512xbf16, #tpu.memory_space<vmem>>, vector<8x1x512xbf16>
    %183 = vector.shape_cast %182 : vector<8x1x512xbf16> to vector<8x512xbf16>
    %184 = arith.extf %183 : vector<8x512xbf16> to vector<8x512xf32>
    %cst_100 = arith.constant dense<0.000000e+00> : vector<8x512xf32>
    %185 = tpu.matmul %180, %3, %cst_100 {dimension_numbers = #tpu.dot_dimension_numbers<[1], [0], [0], [1], [0, 0, 1, 1], [], []>} : vector<8x128xf32>, vector<128x512xf32>, vector<8x512xf32> -> vector<8x512xf32>
    %186 = arith.addf %184, %185 : vector<8x512xf32>
    %187 = vector.extract_strided_slice %186 {offsets = [0, 0], sizes = [8, 128], strides = [1, 1]} : vector<8x512xf32> to vector<8x128xf32>
    %cst_101 = arith.constant 5.000000e-01 : f32
    %188 = vector.broadcast %cst_101 : f32 to vector<8x128xf32>
    %189 = arith.mulf %188, %187 : vector<8x128xf32>
    %190 = math.tanh %189 : vector<8x128xf32>
    %cst_102 = arith.constant 5.000000e-01 : f32
    %191 = vector.broadcast %cst_102 : f32 to vector<8x128xf32>
    %192 = arith.mulf %191, %190 : vector<8x128xf32>
    %cst_103 = arith.constant 5.000000e-01 : f32
    %193 = vector.broadcast %cst_103 : f32 to vector<8x128xf32>
    %194 = arith.addf %192, %193 : vector<8x128xf32>
    %195 = vector.extract_strided_slice %186 {offsets = [0, 128], sizes = [8, 128], strides = [1, 1]} : vector<8x512xf32> to vector<8x128xf32>
    %cst_104 = arith.constant 5.000000e-01 : f32
    %196 = vector.broadcast %cst_104 : f32 to vector<8x128xf32>
    %197 = arith.mulf %196, %195 : vector<8x128xf32>
    %198 = math.tanh %197 : vector<8x128xf32>
    %cst_105 = arith.constant 5.000000e-01 : f32
    %199 = vector.broadcast %cst_105 : f32 to vector<8x128xf32>
    %200 = arith.mulf %199, %198 : vector<8x128xf32>
    %cst_106 = arith.constant 5.000000e-01 : f32
    %201 = vector.broadcast %cst_106 : f32 to vector<8x128xf32>
    %202 = arith.addf %200, %201 : vector<8x128xf32>
    %203 = vector.extract_strided_slice %186 {offsets = [0, 256], sizes = [8, 128], strides = [1, 1]} : vector<8x512xf32> to vector<8x128xf32>
    %204 = math.tanh %203 : vector<8x128xf32>
    %205 = vector.extract_strided_slice %186 {offsets = [0, 384], sizes = [8, 128], strides = [1, 1]} : vector<8x512xf32> to vector<8x128xf32>
    %cst_107 = arith.constant 5.000000e-01 : f32
    %206 = vector.broadcast %cst_107 : f32 to vector<8x128xf32>
    %207 = arith.mulf %206, %205 : vector<8x128xf32>
    %208 = math.tanh %207 : vector<8x128xf32>
    %cst_108 = arith.constant 5.000000e-01 : f32
    %209 = vector.broadcast %cst_108 : f32 to vector<8x128xf32>
    %210 = arith.mulf %209, %208 : vector<8x128xf32>
    %cst_109 = arith.constant 5.000000e-01 : f32
    %211 = vector.broadcast %cst_109 : f32 to vector<8x128xf32>
    %212 = arith.addf %210, %211 : vector<8x128xf32>
    %213 = arith.mulf %202, %181 : vector<8x128xf32>
    %214 = arith.mulf %194, %204 : vector<8x128xf32>
    %215 = arith.addf %213, %214 : vector<8x128xf32>
    %216 = math.tanh %215 : vector<8x128xf32>
    %217 = arith.mulf %212, %216 : vector<8x128xf32>
    %c0_110 = arith.constant 0 : index
    %c0_111 = arith.constant 0 : index
    %218 = vector.load %arg5[%c0_110, %c0_111] : memref<8x128xf32, #tpu.memory_space<vmem>>, vector<8x128xf32>
    tpu.vector_store %arg5[%c0_110, %c0_111], %217 {strides = array<i32>} : memref<8x128xf32, #tpu.memory_space<vmem>>, vector<8x128xf32>,
    %c0_112 = arith.constant 0 : index
    %c0_113 = arith.constant 0 : index
    %219 = vector.load %arg6[%c0_112, %c0_113] : memref<8x128xf32, #tpu.memory_space<vmem>>, vector<8x128xf32>
    tpu.vector_store %arg6[%c0_112, %c0_113], %215 {strides = array<i32>} : memref<8x128xf32, #tpu.memory_space<vmem>>, vector<8x128xf32>,
    %220 = arith.truncf %217 : vector<8x128xf32> to vector<8x128xbf16>
    %c0_114 = arith.constant 0 : index
    %c4_115 = arith.constant 4 : index
    %c0_116 = arith.constant 0 : index
    %221 = vector.load %arg4[%c0_114, %c4_115, %c0_116] : memref<8x16x128xbf16, #tpu.memory_space<vmem>>, vector<8x1x128xbf16>
    %222 = vector.shape_cast %221 : vector<8x1x128xbf16> to vector<8x128xbf16>
    %223 = vector.shape_cast %220 : vector<8x128xbf16> to vector<8x1x128xbf16>
    tpu.vector_store %arg4[%c0_114, %c4_115, %c0_116], %223 {strides = array<i32>} : memref<8x16x128xbf16, #tpu.memory_space<vmem>>, vector<8x1x128xbf16>,
    %c0_117 = arith.constant 0 : index
    %c0_118 = arith.constant 0 : index
    %224 = vector.load %arg5[%c0_117, %c0_118] : memref<8x128xf32, #tpu.memory_space<vmem>>, vector<8x128xf32>
    %c0_119 = arith.constant 0 : index
    %c0_120 = arith.constant 0 : index
    %225 = vector.load %arg6[%c0_119, %c0_120] : memref<8x128xf32, #tpu.memory_space<vmem>>, vector<8x128xf32>
    %c0_121 = arith.constant 0 : index
    %c5 = arith.constant 5 : index
    %c0_122 = arith.constant 0 : index
    %226 = vector.load %arg2[%c0_121, %c5, %c0_122] : memref<8x16x512xbf16, #tpu.memory_space<vmem>>, vector<8x1x512xbf16>
    %227 = vector.shape_cast %226 : vector<8x1x512xbf16> to vector<8x512xbf16>
    %228 = arith.extf %227 : vector<8x512xbf16> to vector<8x512xf32>
    %cst_123 = arith.constant dense<0.000000e+00> : vector<8x512xf32>
    %229 = tpu.matmul %224, %3, %cst_123 {dimension_numbers = #tpu.dot_dimension_numbers<[1], [0], [0], [1], [0, 0, 1, 1], [], []>} : vector<8x128xf32>, vector<128x512xf32>, vector<8x512xf32> -> vector<8x512xf32>
    %230 = arith.addf %228, %229 : vector<8x512xf32>
    %231 = vector.extract_strided_slice %230 {offsets = [0, 0], sizes = [8, 128], strides = [1, 1]} : vector<8x512xf32> to vector<8x128xf32>
    %cst_124 = arith.constant 5.000000e-01 : f32
    %232 = vector.broadcast %cst_124 : f32 to vector<8x128xf32>
    %233 = arith.mulf %232, %231 : vector<8x128xf32>
    %234 = math.tanh %233 : vector<8x128xf32>
    %cst_125 = arith.constant 5.000000e-01 : f32
    %235 = vector.broadcast %cst_125 : f32 to vector<8x128xf32>
    %236 = arith.mulf %235, %234 : vector<8x128xf32>
    %cst_126 = arith.constant 5.000000e-01 : f32
    %237 = vector.broadcast %cst_126 : f32 to vector<8x128xf32>
    %238 = arith.addf %236, %237 : vector<8x128xf32>
    %239 = vector.extract_strided_slice %230 {offsets = [0, 128], sizes = [8, 128], strides = [1, 1]} : vector<8x512xf32> to vector<8x128xf32>
    %cst_127 = arith.constant 5.000000e-01 : f32
    %240 = vector.broadcast %cst_127 : f32 to vector<8x128xf32>
    %241 = arith.mulf %240, %239 : vector<8x128xf32>
    %242 = math.tanh %241 : vector<8x128xf32>
    %cst_128 = arith.constant 5.000000e-01 : f32
    %243 = vector.broadcast %cst_128 : f32 to vector<8x128xf32>
    %244 = arith.mulf %243, %242 : vector<8x128xf32>
    %cst_129 = arith.constant 5.000000e-01 : f32
    %245 = vector.broadcast %cst_129 : f32 to vector<8x128xf32>
    %246 = arith.addf %244, %245 : vector<8x128xf32>
    %247 = vector.extract_strided_slice %230 {offsets = [0, 256], sizes = [8, 128], strides = [1, 1]} : vector<8x512xf32> to vector<8x128xf32>
    %248 = math.tanh %247 : vector<8x128xf32>
    %249 = vector.extract_strided_slice %230 {offsets = [0, 384], sizes = [8, 128], strides = [1, 1]} : vector<8x512xf32> to vector<8x128xf32>
    %cst_130 = arith.constant 5.000000e-01 : f32
    %250 = vector.broadcast %cst_130 : f32 to vector<8x128xf32>
    %251 = arith.mulf %250, %249 : vector<8x128xf32>
    %252 = math.tanh %251 : vector<8x128xf32>
    %cst_131 = arith.constant 5.000000e-01 : f32
    %253 = vector.broadcast %cst_131 : f32 to vector<8x128xf32>
    %254 = arith.mulf %253, %252 : vector<8x128xf32>
    %cst_132 = arith.constant 5.000000e-01 : f32
    %255 = vector.broadcast %cst_132 : f32 to vector<8x128xf32>
    %256 = arith.addf %254, %255 : vector<8x128xf32>
    %257 = arith.mulf %246, %225 : vector<8x128xf32>
    %258 = arith.mulf %238, %248 : vector<8x128xf32>
    %259 = arith.addf %257, %258 : vector<8x128xf32>
    %260 = math.tanh %259 : vector<8x128xf32>
    %261 = arith.mulf %256, %260 : vector<8x128xf32>
    %c0_133 = arith.constant 0 : index
    %c0_134 = arith.constant 0 : index
    %262 = vector.load %arg5[%c0_133, %c0_134] : memref<8x128xf32, #tpu.memory_space<vmem>>, vector<8x128xf32>
    tpu.vector_store %arg5[%c0_133, %c0_134], %261 {strides = array<i32>} : memref<8x128xf32, #tpu.memory_space<vmem>>, vector<8x128xf32>,
    %c0_135 = arith.constant 0 : index
    %c0_136 = arith.constant 0 : index
    %263 = vector.load %arg6[%c0_135, %c0_136] : memref<8x128xf32, #tpu.memory_space<vmem>>, vector<8x128xf32>
    tpu.vector_store %arg6[%c0_135, %c0_136], %259 {strides = array<i32>} : memref<8x128xf32, #tpu.memory_space<vmem>>, vector<8x128xf32>,
    %264 = arith.truncf %261 : vector<8x128xf32> to vector<8x128xbf16>
    %c0_137 = arith.constant 0 : index
    %c5_138 = arith.constant 5 : index
    %c0_139 = arith.constant 0 : index
    %265 = vector.load %arg4[%c0_137, %c5_138, %c0_139] : memref<8x16x128xbf16, #tpu.memory_space<vmem>>, vector<8x1x128xbf16>
    %266 = vector.shape_cast %265 : vector<8x1x128xbf16> to vector<8x128xbf16>
    %267 = vector.shape_cast %264 : vector<8x128xbf16> to vector<8x1x128xbf16>
    tpu.vector_store %arg4[%c0_137, %c5_138, %c0_139], %267 {strides = array<i32>} : memref<8x16x128xbf16, #tpu.memory_space<vmem>>, vector<8x1x128xbf16>,
    %c0_140 = arith.constant 0 : index
    %c0_141 = arith.constant 0 : index
    %268 = vector.load %arg5[%c0_140, %c0_141] : memref<8x128xf32, #tpu.memory_space<vmem>>, vector<8x128xf32>
    %c0_142 = arith.constant 0 : index
    %c0_143 = arith.constant 0 : index
    %269 = vector.load %arg6[%c0_142, %c0_143] : memref<8x128xf32, #tpu.memory_space<vmem>>, vector<8x128xf32>
    %c0_144 = arith.constant 0 : index
    %c6 = arith.constant 6 : index
    %c0_145 = arith.constant 0 : index
    %270 = vector.load %arg2[%c0_144, %c6, %c0_145] : memref<8x16x512xbf16, #tpu.memory_space<vmem>>, vector<8x1x512xbf16>
    %271 = vector.shape_cast %270 : vector<8x1x512xbf16> to vector<8x512xbf16>
    %272 = arith.extf %271 : vector<8x512xbf16> to vector<8x512xf32>
    %cst_146 = arith.constant dense<0.000000e+00> : vector<8x512xf32>
    %273 = tpu.matmul %268, %3, %cst_146 {dimension_numbers = #tpu.dot_dimension_numbers<[1], [0], [0], [1], [0, 0, 1, 1], [], []>} : vector<8x128xf32>, vector<128x512xf32>, vector<8x512xf32> -> vector<8x512xf32>
    %274 = arith.addf %272, %273 : vector<8x512xf32>
    %275 = vector.extract_strided_slice %274 {offsets = [0, 0], sizes = [8, 128], strides = [1, 1]} : vector<8x512xf32> to vector<8x128xf32>
    %cst_147 = arith.constant 5.000000e-01 : f32
    %276 = vector.broadcast %cst_147 : f32 to vector<8x128xf32>
    %277 = arith.mulf %276, %275 : vector<8x128xf32>
    %278 = math.tanh %277 : vector<8x128xf32>
    %cst_148 = arith.constant 5.000000e-01 : f32
    %279 = vector.broadcast %cst_148 : f32 to vector<8x128xf32>
    %280 = arith.mulf %279, %278 : vector<8x128xf32>
    %cst_149 = arith.constant 5.000000e-01 : f32
    %281 = vector.broadcast %cst_149 : f32 to vector<8x128xf32>
    %282 = arith.addf %280, %281 : vector<8x128xf32>
    %283 = vector.extract_strided_slice %274 {offsets = [0, 128], sizes = [8, 128], strides = [1, 1]} : vector<8x512xf32> to vector<8x128xf32>
    %cst_150 = arith.constant 5.000000e-01 : f32
    %284 = vector.broadcast %cst_150 : f32 to vector<8x128xf32>
    %285 = arith.mulf %284, %283 : vector<8x128xf32>
    %286 = math.tanh %285 : vector<8x128xf32>
    %cst_151 = arith.constant 5.000000e-01 : f32
    %287 = vector.broadcast %cst_151 : f32 to vector<8x128xf32>
    %288 = arith.mulf %287, %286 : vector<8x128xf32>
    %cst_152 = arith.constant 5.000000e-01 : f32
    %289 = vector.broadcast %cst_152 : f32 to vector<8x128xf32>
    %290 = arith.addf %288, %289 : vector<8x128xf32>
    %291 = vector.extract_strided_slice %274 {offsets = [0, 256], sizes = [8, 128], strides = [1, 1]} : vector<8x512xf32> to vector<8x128xf32>
    %292 = math.tanh %291 : vector<8x128xf32>
    %293 = vector.extract_strided_slice %274 {offsets = [0, 384], sizes = [8, 128], strides = [1, 1]} : vector<8x512xf32> to vector<8x128xf32>
    %cst_153 = arith.constant 5.000000e-01 : f32
    %294 = vector.broadcast %cst_153 : f32 to vector<8x128xf32>
    %295 = arith.mulf %294, %293 : vector<8x128xf32>
    %296 = math.tanh %295 : vector<8x128xf32>
    %cst_154 = arith.constant 5.000000e-01 : f32
    %297 = vector.broadcast %cst_154 : f32 to vector<8x128xf32>
    %298 = arith.mulf %297, %296 : vector<8x128xf32>
    %cst_155 = arith.constant 5.000000e-01 : f32
    %299 = vector.broadcast %cst_155 : f32 to vector<8x128xf32>
    %300 = arith.addf %298, %299 : vector<8x128xf32>
    %301 = arith.mulf %290, %269 : vector<8x128xf32>
    %302 = arith.mulf %282, %292 : vector<8x128xf32>
    %303 = arith.addf %301, %302 : vector<8x128xf32>
    %304 = math.tanh %303 : vector<8x128xf32>
    %305 = arith.mulf %300, %304 : vector<8x128xf32>
    %c0_156 = arith.constant 0 : index
    %c0_157 = arith.constant 0 : index
    %306 = vector.load %arg5[%c0_156, %c0_157] : memref<8x128xf32, #tpu.memory_space<vmem>>, vector<8x128xf32>
    tpu.vector_store %arg5[%c0_156, %c0_157], %305 {strides = array<i32>} : memref<8x128xf32, #tpu.memory_space<vmem>>, vector<8x128xf32>,
    %c0_158 = arith.constant 0 : index
    %c0_159 = arith.constant 0 : index
    %307 = vector.load %arg6[%c0_158, %c0_159] : memref<8x128xf32, #tpu.memory_space<vmem>>, vector<8x128xf32>
    tpu.vector_store %arg6[%c0_158, %c0_159], %303 {strides = array<i32>} : memref<8x128xf32, #tpu.memory_space<vmem>>, vector<8x128xf32>,
    %308 = arith.truncf %305 : vector<8x128xf32> to vector<8x128xbf16>
    %c0_160 = arith.constant 0 : index
    %c6_161 = arith.constant 6 : index
    %c0_162 = arith.constant 0 : index
    %309 = vector.load %arg4[%c0_160, %c6_161, %c0_162] : memref<8x16x128xbf16, #tpu.memory_space<vmem>>, vector<8x1x128xbf16>
    %310 = vector.shape_cast %309 : vector<8x1x128xbf16> to vector<8x128xbf16>
    %311 = vector.shape_cast %308 : vector<8x128xbf16> to vector<8x1x128xbf16>
    tpu.vector_store %arg4[%c0_160, %c6_161, %c0_162], %311 {strides = array<i32>} : memref<8x16x128xbf16, #tpu.memory_space<vmem>>, vector<8x1x128xbf16>,
    %c0_163 = arith.constant 0 : index
    %c0_164 = arith.constant 0 : index
    %312 = vector.load %arg5[%c0_163, %c0_164] : memref<8x128xf32, #tpu.memory_space<vmem>>, vector<8x128xf32>
    %c0_165 = arith.constant 0 : index
    %c0_166 = arith.constant 0 : index
    %313 = vector.load %arg6[%c0_165, %c0_166] : memref<8x128xf32, #tpu.memory_space<vmem>>, vector<8x128xf32>
    %c0_167 = arith.constant 0 : index
    %c7 = arith.constant 7 : index
    %c0_168 = arith.constant 0 : index
    %314 = vector.load %arg2[%c0_167, %c7, %c0_168] : memref<8x16x512xbf16, #tpu.memory_space<vmem>>, vector<8x1x512xbf16>
    %315 = vector.shape_cast %314 : vector<8x1x512xbf16> to vector<8x512xbf16>
    %316 = arith.extf %315 : vector<8x512xbf16> to vector<8x512xf32>
    %cst_169 = arith.constant dense<0.000000e+00> : vector<8x512xf32>
    %317 = tpu.matmul %312, %3, %cst_169 {dimension_numbers = #tpu.dot_dimension_numbers<[1], [0], [0], [1], [0, 0, 1, 1], [], []>} : vector<8x128xf32>, vector<128x512xf32>, vector<8x512xf32> -> vector<8x512xf32>
    %318 = arith.addf %316, %317 : vector<8x512xf32>
    %319 = vector.extract_strided_slice %318 {offsets = [0, 0], sizes = [8, 128], strides = [1, 1]} : vector<8x512xf32> to vector<8x128xf32>
    %cst_170 = arith.constant 5.000000e-01 : f32
    %320 = vector.broadcast %cst_170 : f32 to vector<8x128xf32>
    %321 = arith.mulf %320, %319 : vector<8x128xf32>
    %322 = math.tanh %321 : vector<8x128xf32>
    %cst_171 = arith.constant 5.000000e-01 : f32
    %323 = vector.broadcast %cst_171 : f32 to vector<8x128xf32>
    %324 = arith.mulf %323, %322 : vector<8x128xf32>
    %cst_172 = arith.constant 5.000000e-01 : f32
    %325 = vector.broadcast %cst_172 : f32 to vector<8x128xf32>
    %326 = arith.addf %324, %325 : vector<8x128xf32>
    %327 = vector.extract_strided_slice %318 {offsets = [0, 128], sizes = [8, 128], strides = [1, 1]} : vector<8x512xf32> to vector<8x128xf32>
    %cst_173 = arith.constant 5.000000e-01 : f32
    %328 = vector.broadcast %cst_173 : f32 to vector<8x128xf32>
    %329 = arith.mulf %328, %327 : vector<8x128xf32>
    %330 = math.tanh %329 : vector<8x128xf32>
    %cst_174 = arith.constant 5.000000e-01 : f32
    %331 = vector.broadcast %cst_174 : f32 to vector<8x128xf32>
    %332 = arith.mulf %331, %330 : vector<8x128xf32>
    %cst_175 = arith.constant 5.000000e-01 : f32
    %333 = vector.broadcast %cst_175 : f32 to vector<8x128xf32>
    %334 = arith.addf %332, %333 : vector<8x128xf32>
    %335 = vector.extract_strided_slice %318 {offsets = [0, 256], sizes = [8, 128], strides = [1, 1]} : vector<8x512xf32> to vector<8x128xf32>
    %336 = math.tanh %335 : vector<8x128xf32>
    %337 = vector.extract_strided_slice %318 {offsets = [0, 384], sizes = [8, 128], strides = [1, 1]} : vector<8x512xf32> to vector<8x128xf32>
    %cst_176 = arith.constant 5.000000e-01 : f32
    %338 = vector.broadcast %cst_176 : f32 to vector<8x128xf32>
    %339 = arith.mulf %338, %337 : vector<8x128xf32>
    %340 = math.tanh %339 : vector<8x128xf32>
    %cst_177 = arith.constant 5.000000e-01 : f32
    %341 = vector.broadcast %cst_177 : f32 to vector<8x128xf32>
    %342 = arith.mulf %341, %340 : vector<8x128xf32>
    %cst_178 = arith.constant 5.000000e-01 : f32
    %343 = vector.broadcast %cst_178 : f32 to vector<8x128xf32>
    %344 = arith.addf %342, %343 : vector<8x128xf32>
    %345 = arith.mulf %334, %313 : vector<8x128xf32>
    %346 = arith.mulf %326, %336 : vector<8x128xf32>
    %347 = arith.addf %345, %346 : vector<8x128xf32>
    %348 = math.tanh %347 : vector<8x128xf32>
    %349 = arith.mulf %344, %348 : vector<8x128xf32>
    %c0_179 = arith.constant 0 : index
    %c0_180 = arith.constant 0 : index
    %350 = vector.load %arg5[%c0_179, %c0_180] : memref<8x128xf32, #tpu.memory_space<vmem>>, vector<8x128xf32>
    tpu.vector_store %arg5[%c0_179, %c0_180], %349 {strides = array<i32>} : memref<8x128xf32, #tpu.memory_space<vmem>>, vector<8x128xf32>,
    %c0_181 = arith.constant 0 : index
    %c0_182 = arith.constant 0 : index
    %351 = vector.load %arg6[%c0_181, %c0_182] : memref<8x128xf32, #tpu.memory_space<vmem>>, vector<8x128xf32>
    tpu.vector_store %arg6[%c0_181, %c0_182], %347 {strides = array<i32>} : memref<8x128xf32, #tpu.memory_space<vmem>>, vector<8x128xf32>,
    %352 = arith.truncf %349 : vector<8x128xf32> to vector<8x128xbf16>
    %c0_183 = arith.constant 0 : index
    %c7_184 = arith.constant 7 : index
    %c0_185 = arith.constant 0 : index
    %353 = vector.load %arg4[%c0_183, %c7_184, %c0_185] : memref<8x16x128xbf16, #tpu.memory_space<vmem>>, vector<8x1x128xbf16>
    %354 = vector.shape_cast %353 : vector<8x1x128xbf16> to vector<8x128xbf16>
    %355 = vector.shape_cast %352 : vector<8x128xbf16> to vector<8x1x128xbf16>
    tpu.vector_store %arg4[%c0_183, %c7_184, %c0_185], %355 {strides = array<i32>} : memref<8x16x128xbf16, #tpu.memory_space<vmem>>, vector<8x1x128xbf16>,
    %c0_186 = arith.constant 0 : index
    %c0_187 = arith.constant 0 : index
    %356 = vector.load %arg5[%c0_186, %c0_187] : memref<8x128xf32, #tpu.memory_space<vmem>>, vector<8x128xf32>
    %c0_188 = arith.constant 0 : index
    %c0_189 = arith.constant 0 : index
    %357 = vector.load %arg6[%c0_188, %c0_189] : memref<8x128xf32, #tpu.memory_space<vmem>>, vector<8x128xf32>
    %c0_190 = arith.constant 0 : index
    %c8 = arith.constant 8 : index
    %c0_191 = arith.constant 0 : index
    %358 = vector.load %arg2[%c0_190, %c8, %c0_191] : memref<8x16x512xbf16, #tpu.memory_space<vmem>>, vector<8x1x512xbf16>
    %359 = vector.shape_cast %358 : vector<8x1x512xbf16> to vector<8x512xbf16>
    %360 = arith.extf %359 : vector<8x512xbf16> to vector<8x512xf32>
    %cst_192 = arith.constant dense<0.000000e+00> : vector<8x512xf32>
    %361 = tpu.matmul %356, %3, %cst_192 {dimension_numbers = #tpu.dot_dimension_numbers<[1], [0], [0], [1], [0, 0, 1, 1], [], []>} : vector<8x128xf32>, vector<128x512xf32>, vector<8x512xf32> -> vector<8x512xf32>
    %362 = arith.addf %360, %361 : vector<8x512xf32>
    %363 = vector.extract_strided_slice %362 {offsets = [0, 0], sizes = [8, 128], strides = [1, 1]} : vector<8x512xf32> to vector<8x128xf32>
    %cst_193 = arith.constant 5.000000e-01 : f32
    %364 = vector.broadcast %cst_193 : f32 to vector<8x128xf32>
    %365 = arith.mulf %364, %363 : vector<8x128xf32>
    %366 = math.tanh %365 : vector<8x128xf32>
    %cst_194 = arith.constant 5.000000e-01 : f32
    %367 = vector.broadcast %cst_194 : f32 to vector<8x128xf32>
    %368 = arith.mulf %367, %366 : vector<8x128xf32>
    %cst_195 = arith.constant 5.000000e-01 : f32
    %369 = vector.broadcast %cst_195 : f32 to vector<8x128xf32>
    %370 = arith.addf %368, %369 : vector<8x128xf32>
    %371 = vector.extract_strided_slice %362 {offsets = [0, 128], sizes = [8, 128], strides = [1, 1]} : vector<8x512xf32> to vector<8x128xf32>
    %cst_196 = arith.constant 5.000000e-01 : f32
    %372 = vector.broadcast %cst_196 : f32 to vector<8x128xf32>
    %373 = arith.mulf %372, %371 : vector<8x128xf32>
    %374 = math.tanh %373 : vector<8x128xf32>
    %cst_197 = arith.constant 5.000000e-01 : f32
    %375 = vector.broadcast %cst_197 : f32 to vector<8x128xf32>
    %376 = arith.mulf %375, %374 : vector<8x128xf32>
    %cst_198 = arith.constant 5.000000e-01 : f32
    %377 = vector.broadcast %cst_198 : f32 to vector<8x128xf32>
    %378 = arith.addf %376, %377 : vector<8x128xf32>
    %379 = vector.extract_strided_slice %362 {offsets = [0, 256], sizes = [8, 128], strides = [1, 1]} : vector<8x512xf32> to vector<8x128xf32>
    %380 = math.tanh %379 : vector<8x128xf32>
    %381 = vector.extract_strided_slice %362 {offsets = [0, 384], sizes = [8, 128], strides = [1, 1]} : vector<8x512xf32> to vector<8x128xf32>
    %cst_199 = arith.constant 5.000000e-01 : f32
    %382 = vector.broadcast %cst_199 : f32 to vector<8x128xf32>
    %383 = arith.mulf %382, %381 : vector<8x128xf32>
    %384 = math.tanh %383 : vector<8x128xf32>
    %cst_200 = arith.constant 5.000000e-01 : f32
    %385 = vector.broadcast %cst_200 : f32 to vector<8x128xf32>
    %386 = arith.mulf %385, %384 : vector<8x128xf32>
    %cst_201 = arith.constant 5.000000e-01 : f32
    %387 = vector.broadcast %cst_201 : f32 to vector<8x128xf32>
    %388 = arith.addf %386, %387 : vector<8x128xf32>
    %389 = arith.mulf %378, %357 : vector<8x128xf32>
    %390 = arith.mulf %370, %380 : vector<8x128xf32>
    %391 = arith.addf %389, %390 : vector<8x128xf32>
    %392 = math.tanh %391 : vector<8x128xf32>
    %393 = arith.mulf %388, %392 : vector<8x128xf32>
    %c0_202 = arith.constant 0 : index
    %c0_203 = arith.constant 0 : index
    %394 = vector.load %arg5[%c0_202, %c0_203] : memref<8x128xf32, #tpu.memory_space<vmem>>, vector<8x128xf32>
    tpu.vector_store %arg5[%c0_202, %c0_203], %393 {strides = array<i32>} : memref<8x128xf32, #tpu.memory_space<vmem>>, vector<8x128xf32>,
    %c0_204 = arith.constant 0 : index
    %c0_205 = arith.constant 0 : index
    %395 = vector.load %arg6[%c0_204, %c0_205] : memref<8x128xf32, #tpu.memory_space<vmem>>, vector<8x128xf32>
    tpu.vector_store %arg6[%c0_204, %c0_205], %391 {strides = array<i32>} : memref<8x128xf32, #tpu.memory_space<vmem>>, vector<8x128xf32>,
    %396 = arith.truncf %393 : vector<8x128xf32> to vector<8x128xbf16>
    %c0_206 = arith.constant 0 : index
    %c8_207 = arith.constant 8 : index
    %c0_208 = arith.constant 0 : index
    %397 = vector.load %arg4[%c0_206, %c8_207, %c0_208] : memref<8x16x128xbf16, #tpu.memory_space<vmem>>, vector<8x1x128xbf16>
    %398 = vector.shape_cast %397 : vector<8x1x128xbf16> to vector<8x128xbf16>
    %399 = vector.shape_cast %396 : vector<8x128xbf16> to vector<8x1x128xbf16>
    tpu.vector_store %arg4[%c0_206, %c8_207, %c0_208], %399 {strides = array<i32>} : memref<8x16x128xbf16, #tpu.memory_space<vmem>>, vector<8x1x128xbf16>,
    %c0_209 = arith.constant 0 : index
    %c0_210 = arith.constant 0 : index
    %400 = vector.load %arg5[%c0_209, %c0_210] : memref<8x128xf32, #tpu.memory_space<vmem>>, vector<8x128xf32>
    %c0_211 = arith.constant 0 : index
    %c0_212 = arith.constant 0 : index
    %401 = vector.load %arg6[%c0_211, %c0_212] : memref<8x128xf32, #tpu.memory_space<vmem>>, vector<8x128xf32>
    %c0_213 = arith.constant 0 : index
    %c9 = arith.constant 9 : index
    %c0_214 = arith.constant 0 : index
    %402 = vector.load %arg2[%c0_213, %c9, %c0_214] : memref<8x16x512xbf16, #tpu.memory_space<vmem>>, vector<8x1x512xbf16>
    %403 = vector.shape_cast %402 : vector<8x1x512xbf16> to vector<8x512xbf16>
    %404 = arith.extf %403 : vector<8x512xbf16> to vector<8x512xf32>
    %cst_215 = arith.constant dense<0.000000e+00> : vector<8x512xf32>
    %405 = tpu.matmul %400, %3, %cst_215 {dimension_numbers = #tpu.dot_dimension_numbers<[1], [0], [0], [1], [0, 0, 1, 1], [], []>} : vector<8x128xf32>, vector<128x512xf32>, vector<8x512xf32> -> vector<8x512xf32>
    %406 = arith.addf %404, %405 : vector<8x512xf32>
    %407 = vector.extract_strided_slice %406 {offsets = [0, 0], sizes = [8, 128], strides = [1, 1]} : vector<8x512xf32> to vector<8x128xf32>
    %cst_216 = arith.constant 5.000000e-01 : f32
    %408 = vector.broadcast %cst_216 : f32 to vector<8x128xf32>
    %409 = arith.mulf %408, %407 : vector<8x128xf32>
    %410 = math.tanh %409 : vector<8x128xf32>
    %cst_217 = arith.constant 5.000000e-01 : f32
    %411 = vector.broadcast %cst_217 : f32 to vector<8x128xf32>
    %412 = arith.mulf %411, %410 : vector<8x128xf32>
    %cst_218 = arith.constant 5.000000e-01 : f32
    %413 = vector.broadcast %cst_218 : f32 to vector<8x128xf32>
    %414 = arith.addf %412, %413 : vector<8x128xf32>
    %415 = vector.extract_strided_slice %406 {offsets = [0, 128], sizes = [8, 128], strides = [1, 1]} : vector<8x512xf32> to vector<8x128xf32>
    %cst_219 = arith.constant 5.000000e-01 : f32
    %416 = vector.broadcast %cst_219 : f32 to vector<8x128xf32>
    %417 = arith.mulf %416, %415 : vector<8x128xf32>
    %418 = math.tanh %417 : vector<8x128xf32>
    %cst_220 = arith.constant 5.000000e-01 : f32
    %419 = vector.broadcast %cst_220 : f32 to vector<8x128xf32>
    %420 = arith.mulf %419, %418 : vector<8x128xf32>
    %cst_221 = arith.constant 5.000000e-01 : f32
    %421 = vector.broadcast %cst_221 : f32 to vector<8x128xf32>
    %422 = arith.addf %420, %421 : vector<8x128xf32>
    %423 = vector.extract_strided_slice %406 {offsets = [0, 256], sizes = [8, 128], strides = [1, 1]} : vector<8x512xf32> to vector<8x128xf32>
    %424 = math.tanh %423 : vector<8x128xf32>
    %425 = vector.extract_strided_slice %406 {offsets = [0, 384], sizes = [8, 128], strides = [1, 1]} : vector<8x512xf32> to vector<8x128xf32>
    %cst_222 = arith.constant 5.000000e-01 : f32
    %426 = vector.broadcast %cst_222 : f32 to vector<8x128xf32>
    %427 = arith.mulf %426, %425 : vector<8x128xf32>
    %428 = math.tanh %427 : vector<8x128xf32>
    %cst_223 = arith.constant 5.000000e-01 : f32
    %429 = vector.broadcast %cst_223 : f32 to vector<8x128xf32>
    %430 = arith.mulf %429, %428 : vector<8x128xf32>
    %cst_224 = arith.constant 5.000000e-01 : f32
    %431 = vector.broadcast %cst_224 : f32 to vector<8x128xf32>
    %432 = arith.addf %430, %431 : vector<8x128xf32>
    %433 = arith.mulf %422, %401 : vector<8x128xf32>
    %434 = arith.mulf %414, %424 : vector<8x128xf32>
    %435 = arith.addf %433, %434 : vector<8x128xf32>
    %436 = math.tanh %435 : vector<8x128xf32>
    %437 = arith.mulf %432, %436 : vector<8x128xf32>
    %c0_225 = arith.constant 0 : index
    %c0_226 = arith.constant 0 : index
    %438 = vector.load %arg5[%c0_225, %c0_226] : memref<8x128xf32, #tpu.memory_space<vmem>>, vector<8x128xf32>
    tpu.vector_store %arg5[%c0_225, %c0_226], %437 {strides = array<i32>} : memref<8x128xf32, #tpu.memory_space<vmem>>, vector<8x128xf32>,
    %c0_227 = arith.constant 0 : index
    %c0_228 = arith.constant 0 : index
    %439 = vector.load %arg6[%c0_227, %c0_228] : memref<8x128xf32, #tpu.memory_space<vmem>>, vector<8x128xf32>
    tpu.vector_store %arg6[%c0_227, %c0_228], %435 {strides = array<i32>} : memref<8x128xf32, #tpu.memory_space<vmem>>, vector<8x128xf32>,
    %440 = arith.truncf %437 : vector<8x128xf32> to vector<8x128xbf16>
    %c0_229 = arith.constant 0 : index
    %c9_230 = arith.constant 9 : index
    %c0_231 = arith.constant 0 : index
    %441 = vector.load %arg4[%c0_229, %c9_230, %c0_231] : memref<8x16x128xbf16, #tpu.memory_space<vmem>>, vector<8x1x128xbf16>
    %442 = vector.shape_cast %441 : vector<8x1x128xbf16> to vector<8x128xbf16>
    %443 = vector.shape_cast %440 : vector<8x128xbf16> to vector<8x1x128xbf16>
    tpu.vector_store %arg4[%c0_229, %c9_230, %c0_231], %443 {strides = array<i32>} : memref<8x16x128xbf16, #tpu.memory_space<vmem>>, vector<8x1x128xbf16>,
    %c0_232 = arith.constant 0 : index
    %c0_233 = arith.constant 0 : index
    %444 = vector.load %arg5[%c0_232, %c0_233] : memref<8x128xf32, #tpu.memory_space<vmem>>, vector<8x128xf32>
    %c0_234 = arith.constant 0 : index
    %c0_235 = arith.constant 0 : index
    %445 = vector.load %arg6[%c0_234, %c0_235] : memref<8x128xf32, #tpu.memory_space<vmem>>, vector<8x128xf32>
    %c0_236 = arith.constant 0 : index
    %c10 = arith.constant 10 : index
    %c0_237 = arith.constant 0 : index
    %446 = vector.load %arg2[%c0_236, %c10, %c0_237] : memref<8x16x512xbf16, #tpu.memory_space<vmem>>, vector<8x1x512xbf16>
    %447 = vector.shape_cast %446 : vector<8x1x512xbf16> to vector<8x512xbf16>
    %448 = arith.extf %447 : vector<8x512xbf16> to vector<8x512xf32>
    %cst_238 = arith.constant dense<0.000000e+00> : vector<8x512xf32>
    %449 = tpu.matmul %444, %3, %cst_238 {dimension_numbers = #tpu.dot_dimension_numbers<[1], [0], [0], [1], [0, 0, 1, 1], [], []>} : vector<8x128xf32>, vector<128x512xf32>, vector<8x512xf32> -> vector<8x512xf32>
    %450 = arith.addf %448, %449 : vector<8x512xf32>
    %451 = vector.extract_strided_slice %450 {offsets = [0, 0], sizes = [8, 128], strides = [1, 1]} : vector<8x512xf32> to vector<8x128xf32>
    %cst_239 = arith.constant 5.000000e-01 : f32
    %452 = vector.broadcast %cst_239 : f32 to vector<8x128xf32>
    %453 = arith.mulf %452, %451 : vector<8x128xf32>
    %454 = math.tanh %453 : vector<8x128xf32>
    %cst_240 = arith.constant 5.000000e-01 : f32
    %455 = vector.broadcast %cst_240 : f32 to vector<8x128xf32>
    %456 = arith.mulf %455, %454 : vector<8x128xf32>
    %cst_241 = arith.constant 5.000000e-01 : f32
    %457 = vector.broadcast %cst_241 : f32 to vector<8x128xf32>
    %458 = arith.addf %456, %457 : vector<8x128xf32>
    %459 = vector.extract_strided_slice %450 {offsets = [0, 128], sizes = [8, 128], strides = [1, 1]} : vector<8x512xf32> to vector<8x128xf32>
    %cst_242 = arith.constant 5.000000e-01 : f32
    %460 = vector.broadcast %cst_242 : f32 to vector<8x128xf32>
    %461 = arith.mulf %460, %459 : vector<8x128xf32>
    %462 = math.tanh %461 : vector<8x128xf32>
    %cst_243 = arith.constant 5.000000e-01 : f32
    %463 = vector.broadcast %cst_243 : f32 to vector<8x128xf32>
    %464 = arith.mulf %463, %462 : vector<8x128xf32>
    %cst_244 = arith.constant 5.000000e-01 : f32
    %465 = vector.broadcast %cst_244 : f32 to vector<8x128xf32>
    %466 = arith.addf %464, %465 : vector<8x128xf32>
    %467 = vector.extract_strided_slice %450 {offsets = [0, 256], sizes = [8, 128], strides = [1, 1]} : vector<8x512xf32> to vector<8x128xf32>
    %468 = math.tanh %467 : vector<8x128xf32>
    %469 = vector.extract_strided_slice %450 {offsets = [0, 384], sizes = [8, 128], strides = [1, 1]} : vector<8x512xf32> to vector<8x128xf32>
    %cst_245 = arith.constant 5.000000e-01 : f32
    %470 = vector.broadcast %cst_245 : f32 to vector<8x128xf32>
    %471 = arith.mulf %470, %469 : vector<8x128xf32>
    %472 = math.tanh %471 : vector<8x128xf32>
    %cst_246 = arith.constant 5.000000e-01 : f32
    %473 = vector.broadcast %cst_246 : f32 to vector<8x128xf32>
    %474 = arith.mulf %473, %472 : vector<8x128xf32>
    %cst_247 = arith.constant 5.000000e-01 : f32
    %475 = vector.broadcast %cst_247 : f32 to vector<8x128xf32>
    %476 = arith.addf %474, %475 : vector<8x128xf32>
    %477 = arith.mulf %466, %445 : vector<8x128xf32>
    %478 = arith.mulf %458, %468 : vector<8x128xf32>
    %479 = arith.addf %477, %478 : vector<8x128xf32>
    %480 = math.tanh %479 : vector<8x128xf32>
    %481 = arith.mulf %476, %480 : vector<8x128xf32>
    %c0_248 = arith.constant 0 : index
    %c0_249 = arith.constant 0 : index
    %482 = vector.load %arg5[%c0_248, %c0_249] : memref<8x128xf32, #tpu.memory_space<vmem>>, vector<8x128xf32>
    tpu.vector_store %arg5[%c0_248, %c0_249], %481 {strides = array<i32>} : memref<8x128xf32, #tpu.memory_space<vmem>>, vector<8x128xf32>,
    %c0_250 = arith.constant 0 : index
    %c0_251 = arith.constant 0 : index
    %483 = vector.load %arg6[%c0_250, %c0_251] : memref<8x128xf32, #tpu.memory_space<vmem>>, vector<8x128xf32>
    tpu.vector_store %arg6[%c0_250, %c0_251], %479 {strides = array<i32>} : memref<8x128xf32, #tpu.memory_space<vmem>>, vector<8x128xf32>,
    %484 = arith.truncf %481 : vector<8x128xf32> to vector<8x128xbf16>
    %c0_252 = arith.constant 0 : index
    %c10_253 = arith.constant 10 : index
    %c0_254 = arith.constant 0 : index
    %485 = vector.load %arg4[%c0_252, %c10_253, %c0_254] : memref<8x16x128xbf16, #tpu.memory_space<vmem>>, vector<8x1x128xbf16>
    %486 = vector.shape_cast %485 : vector<8x1x128xbf16> to vector<8x128xbf16>
    %487 = vector.shape_cast %484 : vector<8x128xbf16> to vector<8x1x128xbf16>
    tpu.vector_store %arg4[%c0_252, %c10_253, %c0_254], %487 {strides = array<i32>} : memref<8x16x128xbf16, #tpu.memory_space<vmem>>, vector<8x1x128xbf16>,
    %c0_255 = arith.constant 0 : index
    %c0_256 = arith.constant 0 : index
    %488 = vector.load %arg5[%c0_255, %c0_256] : memref<8x128xf32, #tpu.memory_space<vmem>>, vector<8x128xf32>
    %c0_257 = arith.constant 0 : index
    %c0_258 = arith.constant 0 : index
    %489 = vector.load %arg6[%c0_257, %c0_258] : memref<8x128xf32, #tpu.memory_space<vmem>>, vector<8x128xf32>
    %c0_259 = arith.constant 0 : index
    %c11 = arith.constant 11 : index
    %c0_260 = arith.constant 0 : index
    %490 = vector.load %arg2[%c0_259, %c11, %c0_260] : memref<8x16x512xbf16, #tpu.memory_space<vmem>>, vector<8x1x512xbf16>
    %491 = vector.shape_cast %490 : vector<8x1x512xbf16> to vector<8x512xbf16>
    %492 = arith.extf %491 : vector<8x512xbf16> to vector<8x512xf32>
    %cst_261 = arith.constant dense<0.000000e+00> : vector<8x512xf32>
    %493 = tpu.matmul %488, %3, %cst_261 {dimension_numbers = #tpu.dot_dimension_numbers<[1], [0], [0], [1], [0, 0, 1, 1], [], []>} : vector<8x128xf32>, vector<128x512xf32>, vector<8x512xf32> -> vector<8x512xf32>
    %494 = arith.addf %492, %493 : vector<8x512xf32>
    %495 = vector.extract_strided_slice %494 {offsets = [0, 0], sizes = [8, 128], strides = [1, 1]} : vector<8x512xf32> to vector<8x128xf32>
    %cst_262 = arith.constant 5.000000e-01 : f32
    %496 = vector.broadcast %cst_262 : f32 to vector<8x128xf32>
    %497 = arith.mulf %496, %495 : vector<8x128xf32>
    %498 = math.tanh %497 : vector<8x128xf32>
    %cst_263 = arith.constant 5.000000e-01 : f32
    %499 = vector.broadcast %cst_263 : f32 to vector<8x128xf32>
    %500 = arith.mulf %499, %498 : vector<8x128xf32>
    %cst_264 = arith.constant 5.000000e-01 : f32
    %501 = vector.broadcast %cst_264 : f32 to vector<8x128xf32>
    %502 = arith.addf %500, %501 : vector<8x128xf32>
    %503 = vector.extract_strided_slice %494 {offsets = [0, 128], sizes = [8, 128], strides = [1, 1]} : vector<8x512xf32> to vector<8x128xf32>
    %cst_265 = arith.constant 5.000000e-01 : f32
    %504 = vector.broadcast %cst_265 : f32 to vector<8x128xf32>
    %505 = arith.mulf %504, %503 : vector<8x128xf32>
    %506 = math.tanh %505 : vector<8x128xf32>
    %cst_266 = arith.constant 5.000000e-01 : f32
    %507 = vector.broadcast %cst_266 : f32 to vector<8x128xf32>
    %508 = arith.mulf %507, %506 : vector<8x128xf32>
    %cst_267 = arith.constant 5.000000e-01 : f32
    %509 = vector.broadcast %cst_267 : f32 to vector<8x128xf32>
    %510 = arith.addf %508, %509 : vector<8x128xf32>
    %511 = vector.extract_strided_slice %494 {offsets = [0, 256], sizes = [8, 128], strides = [1, 1]} : vector<8x512xf32> to vector<8x128xf32>
    %512 = math.tanh %511 : vector<8x128xf32>
    %513 = vector.extract_strided_slice %494 {offsets = [0, 384], sizes = [8, 128], strides = [1, 1]} : vector<8x512xf32> to vector<8x128xf32>
    %cst_268 = arith.constant 5.000000e-01 : f32
    %514 = vector.broadcast %cst_268 : f32 to vector<8x128xf32>
    %515 = arith.mulf %514, %513 : vector<8x128xf32>
    %516 = math.tanh %515 : vector<8x128xf32>
    %cst_269 = arith.constant 5.000000e-01 : f32
    %517 = vector.broadcast %cst_269 : f32 to vector<8x128xf32>
    %518 = arith.mulf %517, %516 : vector<8x128xf32>
    %cst_270 = arith.constant 5.000000e-01 : f32
    %519 = vector.broadcast %cst_270 : f32 to vector<8x128xf32>
    %520 = arith.addf %518, %519 : vector<8x128xf32>
    %521 = arith.mulf %510, %489 : vector<8x128xf32>
    %522 = arith.mulf %502, %512 : vector<8x128xf32>
    %523 = arith.addf %521, %522 : vector<8x128xf32>
    %524 = math.tanh %523 : vector<8x128xf32>
    %525 = arith.mulf %520, %524 : vector<8x128xf32>
    %c0_271 = arith.constant 0 : index
    %c0_272 = arith.constant 0 : index
    %526 = vector.load %arg5[%c0_271, %c0_272] : memref<8x128xf32, #tpu.memory_space<vmem>>, vector<8x128xf32>
    tpu.vector_store %arg5[%c0_271, %c0_272], %525 {strides = array<i32>} : memref<8x128xf32, #tpu.memory_space<vmem>>, vector<8x128xf32>,
    %c0_273 = arith.constant 0 : index
    %c0_274 = arith.constant 0 : index
    %527 = vector.load %arg6[%c0_273, %c0_274] : memref<8x128xf32, #tpu.memory_space<vmem>>, vector<8x128xf32>
    tpu.vector_store %arg6[%c0_273, %c0_274], %523 {strides = array<i32>} : memref<8x128xf32, #tpu.memory_space<vmem>>, vector<8x128xf32>,
    %528 = arith.truncf %525 : vector<8x128xf32> to vector<8x128xbf16>
    %c0_275 = arith.constant 0 : index
    %c11_276 = arith.constant 11 : index
    %c0_277 = arith.constant 0 : index
    %529 = vector.load %arg4[%c0_275, %c11_276, %c0_277] : memref<8x16x128xbf16, #tpu.memory_space<vmem>>, vector<8x1x128xbf16>
    %530 = vector.shape_cast %529 : vector<8x1x128xbf16> to vector<8x128xbf16>
    %531 = vector.shape_cast %528 : vector<8x128xbf16> to vector<8x1x128xbf16>
    tpu.vector_store %arg4[%c0_275, %c11_276, %c0_277], %531 {strides = array<i32>} : memref<8x16x128xbf16, #tpu.memory_space<vmem>>, vector<8x1x128xbf16>,
    %c0_278 = arith.constant 0 : index
    %c0_279 = arith.constant 0 : index
    %532 = vector.load %arg5[%c0_278, %c0_279] : memref<8x128xf32, #tpu.memory_space<vmem>>, vector<8x128xf32>
    %c0_280 = arith.constant 0 : index
    %c0_281 = arith.constant 0 : index
    %533 = vector.load %arg6[%c0_280, %c0_281] : memref<8x128xf32, #tpu.memory_space<vmem>>, vector<8x128xf32>
    %c0_282 = arith.constant 0 : index
    %c12 = arith.constant 12 : index
    %c0_283 = arith.constant 0 : index
    %534 = vector.load %arg2[%c0_282, %c12, %c0_283] : memref<8x16x512xbf16, #tpu.memory_space<vmem>>, vector<8x1x512xbf16>
    %535 = vector.shape_cast %534 : vector<8x1x512xbf16> to vector<8x512xbf16>
    %536 = arith.extf %535 : vector<8x512xbf16> to vector<8x512xf32>
    %cst_284 = arith.constant dense<0.000000e+00> : vector<8x512xf32>
    %537 = tpu.matmul %532, %3, %cst_284 {dimension_numbers = #tpu.dot_dimension_numbers<[1], [0], [0], [1], [0, 0, 1, 1], [], []>} : vector<8x128xf32>, vector<128x512xf32>, vector<8x512xf32> -> vector<8x512xf32>
    %538 = arith.addf %536, %537 : vector<8x512xf32>
    %539 = vector.extract_strided_slice %538 {offsets = [0, 0], sizes = [8, 128], strides = [1, 1]} : vector<8x512xf32> to vector<8x128xf32>
    %cst_285 = arith.constant 5.000000e-01 : f32
    %540 = vector.broadcast %cst_285 : f32 to vector<8x128xf32>
    %541 = arith.mulf %540, %539 : vector<8x128xf32>
    %542 = math.tanh %541 : vector<8x128xf32>
    %cst_286 = arith.constant 5.000000e-01 : f32
    %543 = vector.broadcast %cst_286 : f32 to vector<8x128xf32>
    %544 = arith.mulf %543, %542 : vector<8x128xf32>
    %cst_287 = arith.constant 5.000000e-01 : f32
    %545 = vector.broadcast %cst_287 : f32 to vector<8x128xf32>
    %546 = arith.addf %544, %545 : vector<8x128xf32>
    %547 = vector.extract_strided_slice %538 {offsets = [0, 128], sizes = [8, 128], strides = [1, 1]} : vector<8x512xf32> to vector<8x128xf32>
    %cst_288 = arith.constant 5.000000e-01 : f32
    %548 = vector.broadcast %cst_288 : f32 to vector<8x128xf32>
    %549 = arith.mulf %548, %547 : vector<8x128xf32>
    %550 = math.tanh %549 : vector<8x128xf32>
    %cst_289 = arith.constant 5.000000e-01 : f32
    %551 = vector.broadcast %cst_289 : f32 to vector<8x128xf32>
    %552 = arith.mulf %551, %550 : vector<8x128xf32>
    %cst_290 = arith.constant 5.000000e-01 : f32
    %553 = vector.broadcast %cst_290 : f32 to vector<8x128xf32>
    %554 = arith.addf %552, %553 : vector<8x128xf32>
    %555 = vector.extract_strided_slice %538 {offsets = [0, 256], sizes = [8, 128], strides = [1, 1]} : vector<8x512xf32> to vector<8x128xf32>
    %556 = math.tanh %555 : vector<8x128xf32>
    %557 = vector.extract_strided_slice %538 {offsets = [0, 384], sizes = [8, 128], strides = [1, 1]} : vector<8x512xf32> to vector<8x128xf32>
    %cst_291 = arith.constant 5.000000e-01 : f32
    %558 = vector.broadcast %cst_291 : f32 to vector<8x128xf32>
    %559 = arith.mulf %558, %557 : vector<8x128xf32>
    %560 = math.tanh %559 : vector<8x128xf32>
    %cst_292 = arith.constant 5.000000e-01 : f32
    %561 = vector.broadcast %cst_292 : f32 to vector<8x128xf32>
    %562 = arith.mulf %561, %560 : vector<8x128xf32>
    %cst_293 = arith.constant 5.000000e-01 : f32
    %563 = vector.broadcast %cst_293 : f32 to vector<8x128xf32>
    %564 = arith.addf %562, %563 : vector<8x128xf32>
    %565 = arith.mulf %554, %533 : vector<8x128xf32>
    %566 = arith.mulf %546, %556 : vector<8x128xf32>
    %567 = arith.addf %565, %566 : vector<8x128xf32>
    %568 = math.tanh %567 : vector<8x128xf32>
    %569 = arith.mulf %564, %568 : vector<8x128xf32>
    %c0_294 = arith.constant 0 : index
    %c0_295 = arith.constant 0 : index
    %570 = vector.load %arg5[%c0_294, %c0_295] : memref<8x128xf32, #tpu.memory_space<vmem>>, vector<8x128xf32>
    tpu.vector_store %arg5[%c0_294, %c0_295], %569 {strides = array<i32>} : memref<8x128xf32, #tpu.memory_space<vmem>>, vector<8x128xf32>,
    %c0_296 = arith.constant 0 : index
    %c0_297 = arith.constant 0 : index
    %571 = vector.load %arg6[%c0_296, %c0_297] : memref<8x128xf32, #tpu.memory_space<vmem>>, vector<8x128xf32>
    tpu.vector_store %arg6[%c0_296, %c0_297], %567 {strides = array<i32>} : memref<8x128xf32, #tpu.memory_space<vmem>>, vector<8x128xf32>,
    %572 = arith.truncf %569 : vector<8x128xf32> to vector<8x128xbf16>
    %c0_298 = arith.constant 0 : index
    %c12_299 = arith.constant 12 : index
    %c0_300 = arith.constant 0 : index
    %573 = vector.load %arg4[%c0_298, %c12_299, %c0_300] : memref<8x16x128xbf16, #tpu.memory_space<vmem>>, vector<8x1x128xbf16>
    %574 = vector.shape_cast %573 : vector<8x1x128xbf16> to vector<8x128xbf16>
    %575 = vector.shape_cast %572 : vector<8x128xbf16> to vector<8x1x128xbf16>
    tpu.vector_store %arg4[%c0_298, %c12_299, %c0_300], %575 {strides = array<i32>} : memref<8x16x128xbf16, #tpu.memory_space<vmem>>, vector<8x1x128xbf16>,
    %c0_301 = arith.constant 0 : index
    %c0_302 = arith.constant 0 : index
    %576 = vector.load %arg5[%c0_301, %c0_302] : memref<8x128xf32, #tpu.memory_space<vmem>>, vector<8x128xf32>
    %c0_303 = arith.constant 0 : index
    %c0_304 = arith.constant 0 : index
    %577 = vector.load %arg6[%c0_303, %c0_304] : memref<8x128xf32, #tpu.memory_space<vmem>>, vector<8x128xf32>
    %c0_305 = arith.constant 0 : index
    %c13 = arith.constant 13 : index
    %c0_306 = arith.constant 0 : index
    %578 = vector.load %arg2[%c0_305, %c13, %c0_306] : memref<8x16x512xbf16, #tpu.memory_space<vmem>>, vector<8x1x512xbf16>
    %579 = vector.shape_cast %578 : vector<8x1x512xbf16> to vector<8x512xbf16>
    %580 = arith.extf %579 : vector<8x512xbf16> to vector<8x512xf32>
    %cst_307 = arith.constant dense<0.000000e+00> : vector<8x512xf32>
    %581 = tpu.matmul %576, %3, %cst_307 {dimension_numbers = #tpu.dot_dimension_numbers<[1], [0], [0], [1], [0, 0, 1, 1], [], []>} : vector<8x128xf32>, vector<128x512xf32>, vector<8x512xf32> -> vector<8x512xf32>
    %582 = arith.addf %580, %581 : vector<8x512xf32>
    %583 = vector.extract_strided_slice %582 {offsets = [0, 0], sizes = [8, 128], strides = [1, 1]} : vector<8x512xf32> to vector<8x128xf32>
    %cst_308 = arith.constant 5.000000e-01 : f32
    %584 = vector.broadcast %cst_308 : f32 to vector<8x128xf32>
    %585 = arith.mulf %584, %583 : vector<8x128xf32>
    %586 = math.tanh %585 : vector<8x128xf32>
    %cst_309 = arith.constant 5.000000e-01 : f32
    %587 = vector.broadcast %cst_309 : f32 to vector<8x128xf32>
    %588 = arith.mulf %587, %586 : vector<8x128xf32>
    %cst_310 = arith.constant 5.000000e-01 : f32
    %589 = vector.broadcast %cst_310 : f32 to vector<8x128xf32>
    %590 = arith.addf %588, %589 : vector<8x128xf32>
    %591 = vector.extract_strided_slice %582 {offsets = [0, 128], sizes = [8, 128], strides = [1, 1]} : vector<8x512xf32> to vector<8x128xf32>
    %cst_311 = arith.constant 5.000000e-01 : f32
    %592 = vector.broadcast %cst_311 : f32 to vector<8x128xf32>
    %593 = arith.mulf %592, %591 : vector<8x128xf32>
    %594 = math.tanh %593 : vector<8x128xf32>
    %cst_312 = arith.constant 5.000000e-01 : f32
    %595 = vector.broadcast %cst_312 : f32 to vector<8x128xf32>
    %596 = arith.mulf %595, %594 : vector<8x128xf32>
    %cst_313 = arith.constant 5.000000e-01 : f32
    %597 = vector.broadcast %cst_313 : f32 to vector<8x128xf32>
    %598 = arith.addf %596, %597 : vector<8x128xf32>
    %599 = vector.extract_strided_slice %582 {offsets = [0, 256], sizes = [8, 128], strides = [1, 1]} : vector<8x512xf32> to vector<8x128xf32>
    %600 = math.tanh %599 : vector<8x128xf32>
    %601 = vector.extract_strided_slice %582 {offsets = [0, 384], sizes = [8, 128], strides = [1, 1]} : vector<8x512xf32> to vector<8x128xf32>
    %cst_314 = arith.constant 5.000000e-01 : f32
    %602 = vector.broadcast %cst_314 : f32 to vector<8x128xf32>
    %603 = arith.mulf %602, %601 : vector<8x128xf32>
    %604 = math.tanh %603 : vector<8x128xf32>
    %cst_315 = arith.constant 5.000000e-01 : f32
    %605 = vector.broadcast %cst_315 : f32 to vector<8x128xf32>
    %606 = arith.mulf %605, %604 : vector<8x128xf32>
    %cst_316 = arith.constant 5.000000e-01 : f32
    %607 = vector.broadcast %cst_316 : f32 to vector<8x128xf32>
    %608 = arith.addf %606, %607 : vector<8x128xf32>
    %609 = arith.mulf %598, %577 : vector<8x128xf32>
    %610 = arith.mulf %590, %600 : vector<8x128xf32>
    %611 = arith.addf %609, %610 : vector<8x128xf32>
    %612 = math.tanh %611 : vector<8x128xf32>
    %613 = arith.mulf %608, %612 : vector<8x128xf32>
    %c0_317 = arith.constant 0 : index
    %c0_318 = arith.constant 0 : index
    %614 = vector.load %arg5[%c0_317, %c0_318] : memref<8x128xf32, #tpu.memory_space<vmem>>, vector<8x128xf32>
    tpu.vector_store %arg5[%c0_317, %c0_318], %613 {strides = array<i32>} : memref<8x128xf32, #tpu.memory_space<vmem>>, vector<8x128xf32>,
    %c0_319 = arith.constant 0 : index
    %c0_320 = arith.constant 0 : index
    %615 = vector.load %arg6[%c0_319, %c0_320] : memref<8x128xf32, #tpu.memory_space<vmem>>, vector<8x128xf32>
    tpu.vector_store %arg6[%c0_319, %c0_320], %611 {strides = array<i32>} : memref<8x128xf32, #tpu.memory_space<vmem>>, vector<8x128xf32>,
    %616 = arith.truncf %613 : vector<8x128xf32> to vector<8x128xbf16>
    %c0_321 = arith.constant 0 : index
    %c13_322 = arith.constant 13 : index
    %c0_323 = arith.constant 0 : index
    %617 = vector.load %arg4[%c0_321, %c13_322, %c0_323] : memref<8x16x128xbf16, #tpu.memory_space<vmem>>, vector<8x1x128xbf16>
    %618 = vector.shape_cast %617 : vector<8x1x128xbf16> to vector<8x128xbf16>
    %619 = vector.shape_cast %616 : vector<8x128xbf16> to vector<8x1x128xbf16>
    tpu.vector_store %arg4[%c0_321, %c13_322, %c0_323], %619 {strides = array<i32>} : memref<8x16x128xbf16, #tpu.memory_space<vmem>>, vector<8x1x128xbf16>,
    %c0_324 = arith.constant 0 : index
    %c0_325 = arith.constant 0 : index
    %620 = vector.load %arg5[%c0_324, %c0_325] : memref<8x128xf32, #tpu.memory_space<vmem>>, vector<8x128xf32>
    %c0_326 = arith.constant 0 : index
    %c0_327 = arith.constant 0 : index
    %621 = vector.load %arg6[%c0_326, %c0_327] : memref<8x128xf32, #tpu.memory_space<vmem>>, vector<8x128xf32>
    %c0_328 = arith.constant 0 : index
    %c14 = arith.constant 14 : index
    %c0_329 = arith.constant 0 : index
    %622 = vector.load %arg2[%c0_328, %c14, %c0_329] : memref<8x16x512xbf16, #tpu.memory_space<vmem>>, vector<8x1x512xbf16>
    %623 = vector.shape_cast %622 : vector<8x1x512xbf16> to vector<8x512xbf16>
    %624 = arith.extf %623 : vector<8x512xbf16> to vector<8x512xf32>
    %cst_330 = arith.constant dense<0.000000e+00> : vector<8x512xf32>
    %625 = tpu.matmul %620, %3, %cst_330 {dimension_numbers = #tpu.dot_dimension_numbers<[1], [0], [0], [1], [0, 0, 1, 1], [], []>} : vector<8x128xf32>, vector<128x512xf32>, vector<8x512xf32> -> vector<8x512xf32>
    %626 = arith.addf %624, %625 : vector<8x512xf32>
    %627 = vector.extract_strided_slice %626 {offsets = [0, 0], sizes = [8, 128], strides = [1, 1]} : vector<8x512xf32> to vector<8x128xf32>
    %cst_331 = arith.constant 5.000000e-01 : f32
    %628 = vector.broadcast %cst_331 : f32 to vector<8x128xf32>
    %629 = arith.mulf %628, %627 : vector<8x128xf32>
    %630 = math.tanh %629 : vector<8x128xf32>
    %cst_332 = arith.constant 5.000000e-01 : f32
    %631 = vector.broadcast %cst_332 : f32 to vector<8x128xf32>
    %632 = arith.mulf %631, %630 : vector<8x128xf32>
    %cst_333 = arith.constant 5.000000e-01 : f32
    %633 = vector.broadcast %cst_333 : f32 to vector<8x128xf32>
    %634 = arith.addf %632, %633 : vector<8x128xf32>
    %635 = vector.extract_strided_slice %626 {offsets = [0, 128], sizes = [8, 128], strides = [1, 1]} : vector<8x512xf32> to vector<8x128xf32>
    %cst_334 = arith.constant 5.000000e-01 : f32
    %636 = vector.broadcast %cst_334 : f32 to vector<8x128xf32>
    %637 = arith.mulf %636, %635 : vector<8x128xf32>
    %638 = math.tanh %637 : vector<8x128xf32>
    %cst_335 = arith.constant 5.000000e-01 : f32
    %639 = vector.broadcast %cst_335 : f32 to vector<8x128xf32>
    %640 = arith.mulf %639, %638 : vector<8x128xf32>
    %cst_336 = arith.constant 5.000000e-01 : f32
    %641 = vector.broadcast %cst_336 : f32 to vector<8x128xf32>
    %642 = arith.addf %640, %641 : vector<8x128xf32>
    %643 = vector.extract_strided_slice %626 {offsets = [0, 256], sizes = [8, 128], strides = [1, 1]} : vector<8x512xf32> to vector<8x128xf32>
    %644 = math.tanh %643 : vector<8x128xf32>
    %645 = vector.extract_strided_slice %626 {offsets = [0, 384], sizes = [8, 128], strides = [1, 1]} : vector<8x512xf32> to vector<8x128xf32>
    %cst_337 = arith.constant 5.000000e-01 : f32
    %646 = vector.broadcast %cst_337 : f32 to vector<8x128xf32>
    %647 = arith.mulf %646, %645 : vector<8x128xf32>
    %648 = math.tanh %647 : vector<8x128xf32>
    %cst_338 = arith.constant 5.000000e-01 : f32
    %649 = vector.broadcast %cst_338 : f32 to vector<8x128xf32>
    %650 = arith.mulf %649, %648 : vector<8x128xf32>
    %cst_339 = arith.constant 5.000000e-01 : f32
    %651 = vector.broadcast %cst_339 : f32 to vector<8x128xf32>
    %652 = arith.addf %650, %651 : vector<8x128xf32>
    %653 = arith.mulf %642, %621 : vector<8x128xf32>
    %654 = arith.mulf %634, %644 : vector<8x128xf32>
    %655 = arith.addf %653, %654 : vector<8x128xf32>
    %656 = math.tanh %655 : vector<8x128xf32>
    %657 = arith.mulf %652, %656 : vector<8x128xf32>
    %c0_340 = arith.constant 0 : index
    %c0_341 = arith.constant 0 : index
    %658 = vector.load %arg5[%c0_340, %c0_341] : memref<8x128xf32, #tpu.memory_space<vmem>>, vector<8x128xf32>
    tpu.vector_store %arg5[%c0_340, %c0_341], %657 {strides = array<i32>} : memref<8x128xf32, #tpu.memory_space<vmem>>, vector<8x128xf32>,
    %c0_342 = arith.constant 0 : index
    %c0_343 = arith.constant 0 : index
    %659 = vector.load %arg6[%c0_342, %c0_343] : memref<8x128xf32, #tpu.memory_space<vmem>>, vector<8x128xf32>
    tpu.vector_store %arg6[%c0_342, %c0_343], %655 {strides = array<i32>} : memref<8x128xf32, #tpu.memory_space<vmem>>, vector<8x128xf32>,
    %660 = arith.truncf %657 : vector<8x128xf32> to vector<8x128xbf16>
    %c0_344 = arith.constant 0 : index
    %c14_345 = arith.constant 14 : index
    %c0_346 = arith.constant 0 : index
    %661 = vector.load %arg4[%c0_344, %c14_345, %c0_346] : memref<8x16x128xbf16, #tpu.memory_space<vmem>>, vector<8x1x128xbf16>
    %662 = vector.shape_cast %661 : vector<8x1x128xbf16> to vector<8x128xbf16>
    %663 = vector.shape_cast %660 : vector<8x128xbf16> to vector<8x1x128xbf16>
    tpu.vector_store %arg4[%c0_344, %c14_345, %c0_346], %663 {strides = array<i32>} : memref<8x16x128xbf16, #tpu.memory_space<vmem>>, vector<8x1x128xbf16>,
    %c0_347 = arith.constant 0 : index
    %c0_348 = arith.constant 0 : index
    %664 = vector.load %arg5[%c0_347, %c0_348] : memref<8x128xf32, #tpu.memory_space<vmem>>, vector<8x128xf32>
    %c0_349 = arith.constant 0 : index
    %c0_350 = arith.constant 0 : index
    %665 = vector.load %arg6[%c0_349, %c0_350] : memref<8x128xf32, #tpu.memory_space<vmem>>, vector<8x128xf32>
    %c0_351 = arith.constant 0 : index
    %c15 = arith.constant 15 : index
    %c0_352 = arith.constant 0 : index
    %666 = vector.load %arg2[%c0_351, %c15, %c0_352] : memref<8x16x512xbf16, #tpu.memory_space<vmem>>, vector<8x1x512xbf16>
    %667 = vector.shape_cast %666 : vector<8x1x512xbf16> to vector<8x512xbf16>
    %668 = arith.extf %667 : vector<8x512xbf16> to vector<8x512xf32>
    %cst_353 = arith.constant dense<0.000000e+00> : vector<8x512xf32>
    %669 = tpu.matmul %664, %3, %cst_353 {dimension_numbers = #tpu.dot_dimension_numbers<[1], [0], [0], [1], [0, 0, 1, 1], [], []>} : vector<8x128xf32>, vector<128x512xf32>, vector<8x512xf32> -> vector<8x512xf32>
    %670 = arith.addf %668, %669 : vector<8x512xf32>
    %671 = vector.extract_strided_slice %670 {offsets = [0, 0], sizes = [8, 128], strides = [1, 1]} : vector<8x512xf32> to vector<8x128xf32>
    %cst_354 = arith.constant 5.000000e-01 : f32
    %672 = vector.broadcast %cst_354 : f32 to vector<8x128xf32>
    %673 = arith.mulf %672, %671 : vector<8x128xf32>
    %674 = math.tanh %673 : vector<8x128xf32>
    %cst_355 = arith.constant 5.000000e-01 : f32
    %675 = vector.broadcast %cst_355 : f32 to vector<8x128xf32>
    %676 = arith.mulf %675, %674 : vector<8x128xf32>
    %cst_356 = arith.constant 5.000000e-01 : f32
    %677 = vector.broadcast %cst_356 : f32 to vector<8x128xf32>
    %678 = arith.addf %676, %677 : vector<8x128xf32>
    %679 = vector.extract_strided_slice %670 {offsets = [0, 128], sizes = [8, 128], strides = [1, 1]} : vector<8x512xf32> to vector<8x128xf32>
    %cst_357 = arith.constant 5.000000e-01 : f32
    %680 = vector.broadcast %cst_357 : f32 to vector<8x128xf32>
    %681 = arith.mulf %680, %679 : vector<8x128xf32>
    %682 = math.tanh %681 : vector<8x128xf32>
    %cst_358 = arith.constant 5.000000e-01 : f32
    %683 = vector.broadcast %cst_358 : f32 to vector<8x128xf32>
    %684 = arith.mulf %683, %682 : vector<8x128xf32>
    %cst_359 = arith.constant 5.000000e-01 : f32
    %685 = vector.broadcast %cst_359 : f32 to vector<8x128xf32>
    %686 = arith.addf %684, %685 : vector<8x128xf32>
    %687 = vector.extract_strided_slice %670 {offsets = [0, 256], sizes = [8, 128], strides = [1, 1]} : vector<8x512xf32> to vector<8x128xf32>
    %688 = math.tanh %687 : vector<8x128xf32>
    %689 = vector.extract_strided_slice %670 {offsets = [0, 384], sizes = [8, 128], strides = [1, 1]} : vector<8x512xf32> to vector<8x128xf32>
    %cst_360 = arith.constant 5.000000e-01 : f32
    %690 = vector.broadcast %cst_360 : f32 to vector<8x128xf32>
    %691 = arith.mulf %690, %689 : vector<8x128xf32>
    %692 = math.tanh %691 : vector<8x128xf32>
    %cst_361 = arith.constant 5.000000e-01 : f32
    %693 = vector.broadcast %cst_361 : f32 to vector<8x128xf32>
    %694 = arith.mulf %693, %692 : vector<8x128xf32>
    %cst_362 = arith.constant 5.000000e-01 : f32
    %695 = vector.broadcast %cst_362 : f32 to vector<8x128xf32>
    %696 = arith.addf %694, %695 : vector<8x128xf32>
    %697 = arith.mulf %686, %665 : vector<8x128xf32>
    %698 = arith.mulf %678, %688 : vector<8x128xf32>
    %699 = arith.addf %697, %698 : vector<8x128xf32>
    %700 = math.tanh %699 : vector<8x128xf32>
    %701 = arith.mulf %696, %700 : vector<8x128xf32>
    %c0_363 = arith.constant 0 : index
    %c0_364 = arith.constant 0 : index
    %702 = vector.load %arg5[%c0_363, %c0_364] : memref<8x128xf32, #tpu.memory_space<vmem>>, vector<8x128xf32>
    tpu.vector_store %arg5[%c0_363, %c0_364], %701 {strides = array<i32>} : memref<8x128xf32, #tpu.memory_space<vmem>>, vector<8x128xf32>,
    %c0_365 = arith.constant 0 : index
    %c0_366 = arith.constant 0 : index
    %703 = vector.load %arg6[%c0_365, %c0_366] : memref<8x128xf32, #tpu.memory_space<vmem>>, vector<8x128xf32>
    tpu.vector_store %arg6[%c0_365, %c0_366], %699 {strides = array<i32>} : memref<8x128xf32, #tpu.memory_space<vmem>>, vector<8x128xf32>,
    %704 = arith.truncf %701 : vector<8x128xf32> to vector<8x128xbf16>
    %c0_367 = arith.constant 0 : index
    %c15_368 = arith.constant 15 : index
    %c0_369 = arith.constant 0 : index
    %705 = vector.load %arg4[%c0_367, %c15_368, %c0_369] : memref<8x16x128xbf16, #tpu.memory_space<vmem>>, vector<8x1x128xbf16>
    %706 = vector.shape_cast %705 : vector<8x1x128xbf16> to vector<8x128xbf16>
    %707 = vector.shape_cast %704 : vector<8x128xbf16> to vector<8x1x128xbf16>
    tpu.vector_store %arg4[%c0_367, %c15_368, %c0_369], %707 {strides = array<i32>} : memref<8x16x128xbf16, #tpu.memory_space<vmem>>, vector<8x1x128xbf16>,
    return
  }
  func.func @transform_0(%arg0: i32, %arg1: i32) -> (i32, i32, i32) {
    %c0_i32 = arith.constant 0 : i32
    %c0_i32_0 = arith.constant 0 : i32
    return %arg0, %arg1, %c0_i32 : i32, i32, i32
  }
  func.func @transform_1(%arg0: i32, %arg1: i32) -> (i32, i32) {
    %c0_i32 = arith.constant 0 : i32
    %c0_i32_0 = arith.constant 0 : i32
    %c0_i32_1 = arith.constant 0 : i32
    return %c0_i32, %c0_i32_0 : i32, i32
  }
  func.func @transform_2(%arg0: i32, %arg1: i32) -> (i32, i32, i32) {
    %c0_i32 = arith.constant 0 : i32
    %c0_i32_0 = arith.constant 0 : i32
    return %arg0, %arg1, %c0_i32 : i32, i32, i32
  }
}

</mosaic_0001>

<llo_original>
// kernel: decoder_rnn_forward.5
$region0: #{decoder_rnn_forward.5}
  #allocation0 [shape = 'u32[]', space=smem, size = 0x4, offset = 0x4, fixed_abs, tag = 'smem constant byte address 0x4 - core index']
  #allocation1 [shape = 'u32[144,128]{1,0:T(1,128)}', space=vmem, size = 0x12000, scoped, tag = 'internal scratch']
  %s0 = inlined_call_operand.vmem [shape: bf16[128,128], index: 0, kind: input, shape index: {}]
  %s1 = inlined_call_operand.vmem [shape: bf16[128,128], index: 1, kind: input, shape index: {}]
  %s2 = inlined_call_operand.vmem [shape: f32[1,128], index: 2, kind: input, shape index: {}]
  %s3 = inlined_call_operand.vmem [shape: f32[128,128], index: 3, kind: output, shape index: {}]
  %s4 = sld [smem:[#allocation0]]
  $region22: #{decoder_rnn_forward.5} parent=0
    _
  %s6 = ssub.s32 1, %s4
  %s7 = scalar_select 0, %s6, %s4
  // Predicated region
  $region2: #{decoder_rnn_forward.5} parent=0 // pred_check
    _
  $region3: #{decoder_rnn_forward.5} parent=0 // pred_check_branch
    %9 = sbr.rel (0) target = $region5
  $region4: #{decoder_rnn_forward.5} parent=0 // pred_region
    _
  $region5: #{decoder_rnn_forward.5} parent=0 // pred_fallthru
    _
  // Predicated region
  $region6: #{decoder_rnn_forward.5} parent=0 // pred_check
    _
  $region7: #{decoder_rnn_forward.5} parent=0 // pred_check_branch
    %11 = sbr.rel (0) target = $region9
  $region8: #{decoder_rnn_forward.5} parent=0 // pred_region
    _
  $region9: #{decoder_rnn_forward.5} parent=0 // pred_fallthru
    _
  // Predicated region
  $region10: #{decoder_rnn_forward.5} parent=0 // pred_check
    _
  $region11: #{decoder_rnn_forward.5} parent=0 // pred_check_branch
    %13 = sbr.rel (0) target = $region13
  $region12: #{decoder_rnn_forward.5} parent=0 // pred_region
    _
  $region13: #{decoder_rnn_forward.5} parent=0 // pred_fallthru
    _
  %v15 = vld [vmem:[%s0] sm:$0xf]
  %v16 = vld [vmem:[%s0 + $0x4] sm:$0xf]
  %v17 = vld [vmem:[%s0 + $0x8] sm:$0xf]
  %v18 = vld [vmem:[%s0 + $0xc] sm:$0xf]
  %v19 = vld [vmem:[%s0 + $0x10] sm:$0xf]
  %v20 = vld [vmem:[%s0 + $0x14] sm:$0xf]
  %v21 = vld [vmem:[%s0 + $0x18] sm:$0xf]
  %v22 = vld [vmem:[%s0 + $0x1c] sm:$0xf]
  %v23 = vld [vmem:[%s0 + $0x20] sm:$0xf]
  %v24 = vld [vmem:[%s0 + $0x24] sm:$0xf]
  %v25 = vld [vmem:[%s0 + $0x28] sm:$0xf]
  %v26 = vld [vmem:[%s0 + $0x2c] sm:$0xf]
  %v27 = vld [vmem:[%s0 + $0x30] sm:$0xf]
  %v28 = vld [vmem:[%s0 + $0x34] sm:$0xf]
  %v29 = vld [vmem:[%s0 + $0x38] sm:$0xf]
  %v30 = vld [vmem:[%s0 + $0x3c] sm:$0xf]
  %v31 = vld [vmem:[%s1] sm:$0xf]
  %v32 = vld [vmem:[%s1 + $0x4] sm:$0xf]
  %v33 = vld [vmem:[%s1 + $0x8] sm:$0xf]
  %v34 = vld [vmem:[%s1 + $0xc] sm:$0xf]
  %v35 = vld [vmem:[%s1 + $0x10] sm:$0xf]
  %v36 = vld [vmem:[%s1 + $0x14] sm:$0xf]
  %v37 = vld [vmem:[%s1 + $0x18] sm:$0xf]
  %v38 = vld [vmem:[%s1 + $0x1c] sm:$0xf]
  %v39 = vld [vmem:[%s1 + $0x20] sm:$0xf]
  %v40 = vld [vmem:[%s1 + $0x24] sm:$0xf]
  %v41 = vld [vmem:[%s1 + $0x28] sm:$0xf]
  %v42 = vld [vmem:[%s1 + $0x2c] sm:$0xf]
  %v43 = vld [vmem:[%s1 + $0x30] sm:$0xf]
  %v44 = vld [vmem:[%s1 + $0x34] sm:$0xf]
  %v45 = vld [vmem:[%s1 + $0x38] sm:$0xf]
  %v46 = vld [vmem:[%s1 + $0x3c] sm:$0xf]
  %v47 = vld [vmem:[%s2] sm:$0x1]
  %v49 = vlaneseq
  %v50 = vshrl.u32 %v49, 7
  %v51 = vsub.s32 0, %v50
  %v52 = vrot.slane %v47, %v51
  %v70 = vunpack.c.l.b16 %v15
  %v71 = vunpack.c.l.b16 %v16
  %v72 = vunpack.c.l.b16 %v17
  %v73 = vunpack.c.l.b16 %v18
  %v74 = vunpack.c.l.b16 %v19
  %v75 = vunpack.c.l.b16 %v20
  %v76 = vunpack.c.l.b16 %v21
  %v77 = vunpack.c.l.b16 %v22
  %v78 = vunpack.c.l.b16 %v23
  %v79 = vunpack.c.l.b16 %v24
  %v80 = vunpack.c.l.b16 %v25
  %v81 = vunpack.c.l.b16 %v26
  %v82 = vunpack.c.l.b16 %v27
  %v83 = vunpack.c.l.b16 %v28
  %v84 = vunpack.c.l.b16 %v29
  %v85 = vunpack.c.l.b16 %v30
  %v86 = vpack.c.b16 %v71, %v70
  %v87 = vpack.c.b16 %v73, %v72
  %v88 = vpack.c.b16 %v75, %v74
  %v89 = vpack.c.b16 %v77, %v76
  %v90 = vpack.c.b16 %v79, %v78
  %v91 = vpack.c.b16 %v81, %v80
  %v92 = vpack.c.b16 %v83, %v82
  %v93 = vpack.c.b16 %v85, %v84
  %v118 = vunpack.c.l.b16 %v31
  %v119 = vunpack.c.l.b16 %v32
  %v120 = vunpack.c.l.b16 %v33
  %v121 = vunpack.c.l.b16 %v34
  %v122 = vunpack.c.l.b16 %v35
  %v123 = vunpack.c.l.b16 %v36
  %v124 = vunpack.c.l.b16 %v37
  %v125 = vunpack.c.l.b16 %v38
  %v126 = vunpack.c.l.b16 %v39
  %v127 = vunpack.c.l.b16 %v40
  %v128 = vunpack.c.l.b16 %v41
  %v129 = vunpack.c.l.b16 %v42
  %v130 = vunpack.c.l.b16 %v43
  %v131 = vunpack.c.l.b16 %v44
  %v132 = vunpack.c.l.b16 %v45
  %v133 = vunpack.c.l.b16 %v46
  %v134 = vpack.c.b16 %v119, %v118
  %v135 = vpack.c.b16 %v121, %v120
  %v136 = vpack.c.b16 %v123, %v122
  %v137 = vpack.c.b16 %v125, %v124
  %v138 = vpack.c.b16 %v127, %v126
  %v139 = vpack.c.b16 %v129, %v128
  %v140 = vpack.c.b16 %v131, %v130
  %v141 = vpack.c.b16 %v133, %v132
  %150 = vmatprep.subr.bf16.mxu0 0
  %151 = vmatpush1.bf16.msra.mxu0 %v134
  %152 = vmatprep.subr.bf16.mxu0 0
  %153 = vmatpush1.bf16.msra.mxu0 %v135
  %154 = vmatprep.subr.bf16.mxu0 0
  %155 = vmatpush1.bf16.msra.mxu0 %v136
  %156 = vmatprep.subr.bf16.mxu0 0
  %157 = vmatpush1.bf16.msra.mxu0 %v137
  %158 = vmatprep.subr.bf16.mxu0 0
  %159 = vmatpush1.bf16.msra.mxu0 %v138
  %160 = vmatprep.subr.bf16.mxu0 0
  %161 = vmatpush1.bf16.msra.mxu0 %v139
  %162 = vmatprep.subr.bf16.mxu0 0
  %163 = vmatpush1.bf16.msra.mxu0 %v140
  %164 = vmatprep.subr.bf16.mxu0 0
  %165 = vmatpush1.bf16.msra.mxu0 %v141
  %166 = vmatprep.subr.bf16.mxu0 0
  %167 = vmatpush1.bf16.msra.mxu0 0
  %168 = vmatprep.subr.bf16.mxu0 0
  %169 = vmatpush1.bf16.msra.mxu0 0
  %170 = vmatprep.subr.bf16.mxu0 0
  %171 = vmatpush1.bf16.msra.mxu0 0
  %172 = vmatprep.subr.bf16.mxu0 0
  %173 = vmatpush1.bf16.msra.mxu0 0
  %174 = vmatprep.subr.bf16.mxu0 0
  %175 = vmatpush1.bf16.msra.mxu0 0
  %176 = vmatprep.subr.bf16.mxu0 0
  %177 = vmatpush1.bf16.msra.mxu0 0
  %178 = vmatprep.subr.bf16.mxu0 0
  %179 = vmatpush1.bf16.msra.mxu0 0
  %180 = vmatprep.subr.bf16.mxu0 0
  %181 = vmatpush1.bf16.msra.mxu0 0
  %182 = vmatprep.mubr.bf16.mxu0 0
  %183 = vmatmul.mubr.bf16.gmra.mrb[0].mxu0 %v86
  %v184 = vpop.f32.mrb[0].mxu0
  %v185 = vadd.f32 %v52, %v184
  %v186 = vpop.f32.mrb[0].mxu0
  %v187 = vpop.f32.mrb[0].mxu0
  %v188 = vadd.f32 %v52, %v187
  %v189 = vpop.f32.mrb[0].mxu0
  %190 = vmatprep.mubr.bf16.mxu0 0
  %191 = vmatmul.mubr.bf16.gmra.mrb[0].mxu0 %v87
  %v192 = vpop.f32.mrb[0].mxu0
  %v193 = vadd.f32 %v52, %v192
  %v194 = vpop.f32.mrb[0].mxu0
  %v195 = vpop.f32.mrb[0].mxu0
  %v196 = vadd.f32 %v52, %v195
  %v197 = vpop.f32.mrb[0].mxu0
  %198 = vmatprep.mubr.bf16.mxu0 0
  %199 = vmatmul.mubr.bf16.gmra.mrb[0].mxu0 %v88
  %v200 = vpop.f32.mrb[0].mxu0
  %v201 = vadd.f32 %v52, %v200
  %v202 = vpop.f32.mrb[0].mxu0
  %v203 = vpop.f32.mrb[0].mxu0
  %v204 = vadd.f32 %v52, %v203
  %v205 = vpop.f32.mrb[0].mxu0
  %206 = vmatprep.mubr.bf16.mxu0 0
  %207 = vmatmul.mubr.bf16.gmra.mrb[0].mxu0 %v89
  %v208 = vpop.f32.mrb[0].mxu0
  %v209 = vadd.f32 %v52, %v208
  %v210 = vpop.f32.mrb[0].mxu0
  %v211 = vpop.f32.mrb[0].mxu0
  %v212 = vadd.f32 %v52, %v211
  %v213 = vpop.f32.mrb[0].mxu0
  %214 = vmatprep.mubr.bf16.mxu0 0
  %215 = vmatmul.mubr.bf16.gmra.mrb[0].mxu0 %v90
  %v216 = vpop.f32.mrb[0].mxu0
  %v217 = vadd.f32 %v52, %v216
  %v218 = vpop.f32.mrb[0].mxu0
  %v219 = vpop.f32.mrb[0].mxu0
  %v220 = vadd.f32 %v52, %v219
  %v221 = vpop.f32.mrb[0].mxu0
  %222 = vmatprep.mubr.bf16.mxu0 0
  %223 = vmatmul.mubr.bf16.gmra.mrb[0].mxu0 %v91
  %v224 = vpop.f32.mrb[0].mxu0
  %v225 = vadd.f32 %v52, %v224
  %v226 = vpop.f32.mrb[0].mxu0
  %v227 = vpop.f32.mrb[0].mxu0
  %v228 = vadd.f32 %v52, %v227
  %v229 = vpop.f32.mrb[0].mxu0
  %230 = vmatprep.mubr.bf16.mxu0 0
  %231 = vmatmul.mubr.bf16.gmra.mrb[0].mxu0 %v92
  %v232 = vpop.f32.mrb[0].mxu0
  %v233 = vadd.f32 %v52, %v232
  %v234 = vpop.f32.mrb[0].mxu0
  %v235 = vpop.f32.mrb[0].mxu0
  %v236 = vadd.f32 %v52, %v235
  %v237 = vpop.f32.mrb[0].mxu0
  %238 = vmatprep.mubr.bf16.mxu0 0
  %239 = vmatmul.mubr.bf16.gmra.mrb[0].mxu0 %v93
  %v240 = vpop.f32.mrb[0].mxu0
  %v241 = vadd.f32 %v52, %v240
  %v242 = vpop.f32.mrb[0].mxu0
  %v243 = vpop.f32.mrb[0].mxu0
  %v244 = vadd.f32 %v52, %v243
  %v245 = vpop.f32.mrb[0].mxu0
  %246 = vdwg.mxu0
  %247 = vst [vmem:[%s3] sm:$0xff] %v185
  %248 = vst [vmem:[%s3 + $0x8] sm:$0xff] %v188
  %249 = vst [vmem:[%s3 + $0x10] sm:$0xff] %v193
  %250 = vst [vmem:[%s3 + $0x18] sm:$0xff] %v196
  %251 = vst [vmem:[%s3 + $0x20] sm:$0xff] %v201
  %252 = vst [vmem:[%s3 + $0x28] sm:$0xff] %v204
  %253 = vst [vmem:[%s3 + $0x30] sm:$0xff] %v209
  %254 = vst [vmem:[%s3 + $0x38] sm:$0xff] %v212
  %255 = vst [vmem:[%s3 + $0x40] sm:$0xff] %v217
  %256 = vst [vmem:[%s3 + $0x48] sm:$0xff] %v220
  %257 = vst [vmem:[%s3 + $0x50] sm:$0xff] %v225
  %258 = vst [vmem:[%s3 + $0x58] sm:$0xff] %v228
  %259 = vst [vmem:[%s3 + $0x60] sm:$0xff] %v233
  %260 = vst [vmem:[%s3 + $0x68] sm:$0xff] %v236
  %261 = vst [vmem:[%s3 + $0x70] sm:$0xff] %v241
  %262 = vst [vmem:[%s3 + $0x78] sm:$0xff] %v244
  // Predicated region
  $region14: #{decoder_rnn_forward.5} parent=0 // pred_check
    _
  $region15: #{decoder_rnn_forward.5} parent=0 // pred_check_branch
    %264 = sbr.rel (0) target = $region17
  $region16: #{decoder_rnn_forward.5} parent=0 // pred_region
    _
  $region17: #{decoder_rnn_forward.5} parent=0 // pred_fallthru
    _
  // Predicated region
  $region18: #{decoder_rnn_forward.5} parent=0 // pred_check
    _
  $region19: #{decoder_rnn_forward.5} parent=0 // pred_check_branch
    %266 = sbr.rel (0) target = $region21
  $region20: #{decoder_rnn_forward.5} parent=0 // pred_region
    _
  $region21: #{decoder_rnn_forward.5} parent=0 // pred_fallthru
    _

// kernel: decoder_rnn_forward.3
$region0: #{decoder_rnn_forward.3}
  #allocation0 [shape = 'u32[]', space=smem, size = 0x4, offset = 0x4, fixed_abs, tag = 'smem constant byte address 0x4 - core index']
  #allocation1 [shape = 'u32[144,128]{1,0:T(1,128)}', space=vmem, size = 0x12000, scoped, tag = 'internal scratch']
  %s0 = inlined_call_operand.vmem [shape: bf16[128,32], index: 0, kind: input, shape index: {}]
  %s1 = inlined_call_operand.vmem [shape: bf16[32,512], index: 1, kind: input, shape index: {}]
  %s2 = inlined_call_operand.hbm [shape: f32[1,512], index: 2, kind: input, shape index: {}]
  %s3 = inlined_call_operand.vmem [shape: bf16[128,512], index: 3, kind: output, shape index: {}]
  %s4 = sld [smem:[#allocation0]]
  $region26: #{decoder_rnn_forward.3} parent=0
    _
  %s6 = ssub.s32 1, %s4
  %s7 = scalar_select 0, %s6, %s4
  $region1: #{decoder_rnn_forward.3} parent=0
    #allocation2 [shape = 'u8[2048]{0}', space=vmem, size = 0x800, scoped, tag = 'input window, operand 2, single buffered']
    #allocation3 [shape = 's32[1]{0}', space=sflag, size = 0x4, scoped, tag = 'scoped memory for decoder_rnn_forward.3']
    %8 = vsyncpa [#allocation3], 0
    // Predicated region
    $region2: #{decoder_rnn_forward.3} parent=1 // pred_check
      _
    $region3: #{decoder_rnn_forward.3} parent=1 // pred_check_branch
      %10 = sbr.rel (0) target = $region5
    $region4: #{decoder_rnn_forward.3} parent=1 // pred_region
      _
    $region5: #{decoder_rnn_forward.3} parent=1 // pred_fallthru
      _
    // Predicated region
    $region6: #{decoder_rnn_forward.3} parent=1 // pred_check
      _
    $region7: #{decoder_rnn_forward.3} parent=1 // pred_check_branch
      %12 = sbr.rel (0) target = $region9
    $region8: #{decoder_rnn_forward.3} parent=1 // pred_region
      _
    $region9: #{decoder_rnn_forward.3} parent=1 // pred_fallthru
      _
    // Predicated region
    $region10: #{decoder_rnn_forward.3} parent=1 // pred_check
      _
    $region11: #{decoder_rnn_forward.3} parent=1 // pred_check_branch
      %14 = sbr.rel (0) target = $region13
    $region12: #{decoder_rnn_forward.3} parent=1 // pred_region
      %s16 = ssub.s32 64, 64
      %17 = vsyncadd [#allocation3], %s16
      %s19 = sshll.u32 [#allocation2], 4
      %s20 = int_to_ptr.vmem [resolvable:$true] %s19
      %22 = dma.hbm_to_vmem [thread:$0]  %s2, 64, %s20, [#allocation3]
    $region13: #{decoder_rnn_forward.3} parent=1 // pred_fallthru
      _
    // Predicated region
    $region14: #{decoder_rnn_forward.3} parent=1 // pred_check
      _
    $region15: #{decoder_rnn_forward.3} parent=1 // pred_check_branch
      %24 = sbr.rel (0) target = $region17
    $region16: #{decoder_rnn_forward.3} parent=1 // pred_region
      %25 = dma.done [#allocation3], 64
    $region17: #{decoder_rnn_forward.3} parent=1 // pred_fallthru
      _
    %v27 = vld [vmem:[%s0] sm:$0xf]
    %v28 = vld [vmem:[%s0 + $0x4] sm:$0xf]
    %v29 = vld [vmem:[%s0 + $0x8] sm:$0xf]
    %v30 = vld [vmem:[%s0 + $0xc] sm:$0xf]
    %v31 = vld [vmem:[%s0 + $0x10] sm:$0xf]
    %v32 = vld [vmem:[%s0 + $0x14] sm:$0xf]
    %v33 = vld [vmem:[%s0 + $0x18] sm:$0xf]
    %v34 = vld [vmem:[%s0 + $0x1c] sm:$0xf]
    %v35 = vld [vmem:[%s0 + $0x20] sm:$0xf]
    %v36 = vld [vmem:[%s0 + $0x24] sm:$0xf]
    %v37 = vld [vmem:[%s0 + $0x28] sm:$0xf]
    %v38 = vld [vmem:[%s0 + $0x2c] sm:$0xf]
    %v39 = vld [vmem:[%s0 + $0x30] sm:$0xf]
    %v40 = vld [vmem:[%s0 + $0x34] sm:$0xf]
    %v41 = vld [vmem:[%s0 + $0x38] sm:$0xf]
    %v42 = vld [vmem:[%s0 + $0x3c] sm:$0xf]
    %v43 = vld [vmem:[%s1] sm:$0xff]
    %v44 = vld [vmem:[%s1 + $0x8] sm:$0xff]
    %v45 = vld [vmem:[%s1 + $0x10] sm:$0xff]
    %v46 = vld [vmem:[%s1 + $0x18] sm:$0xff]
    %v47 = vld [vmem:[%s1 + $0x20] sm:$0xff]
    %v48 = vld [vmem:[%s1 + $0x28] sm:$0xff]
    %v49 = vld [vmem:[%s1 + $0x30] sm:$0xff]
    %v50 = vld [vmem:[%s1 + $0x38] sm:$0xff]
    %v51 = vld [vmem:[#allocation2] sm:$0xf]
    %v53 = vlaneseq
    %v54 = vshrl.u32 %v53, 7
    %v55 = vsub.s32 0, %v54
    %v56 = vrot.slane %v51, %v55
    %v57 = vlaneseq
    %v58 = vshrl.u32 %v57, 7
    %v59 = vsub.s32 1, %v58
    %v60 = vrot.slane %v51, %v59
    %v61 = vlaneseq
    %v62 = vshrl.u32 %v61, 7
    %v63 = vsub.s32 2, %v62
    %v64 = vrot.slane %v51, %v63
    %v65 = vlaneseq
    %v66 = vshrl.u32 %v65, 7
    %v67 = vsub.s32 3, %v66
    %v68 = vrot.slane %v51, %v67
    %v89 = vunpack.c.l.b16 %v27
    %v90 = vunpack.c.l.b16 %v28
    %v91 = vunpack.c.l.b16 %v29
    %v92 = vunpack.c.l.b16 %v30
    %v93 = vunpack.c.l.b16 %v31
    %v94 = vunpack.c.l.b16 %v32
    %v95 = vunpack.c.l.b16 %v33
    %v96 = vunpack.c.l.b16 %v34
    %v97 = vunpack.c.l.b16 %v35
    %v98 = vunpack.c.l.b16 %v36
    %v99 = vunpack.c.l.b16 %v37
    %v100 = vunpack.c.l.b16 %v38
    %v101 = vunpack.c.l.b16 %v39
    %v102 = vunpack.c.l.b16 %v40
    %v103 = vunpack.c.l.b16 %v41
    %v104 = vunpack.c.l.b16 %v42
    %v105 = vpack.c.b16 %v90, %v89
    %v106 = vpack.c.b16 %v92, %v91
    %v107 = vpack.c.b16 %v94, %v93
    %v108 = vpack.c.b16 %v96, %v95
    %v109 = vpack.c.b16 %v98, %v97
    %v110 = vpack.c.b16 %v100, %v99
    %v111 = vpack.c.b16 %v102, %v101
    %v112 = vpack.c.b16 %v104, %v103
    %v121 = vunpack.c.l.b16 %v43
    %v122 = vunpack.c.h.b16 %v43
    %v123 = vunpack.c.l.b16 %v44
    %v124 = vunpack.c.h.b16 %v44
    %v125 = vunpack.c.l.b16 %v45
    %v126 = vunpack.c.h.b16 %v45
    %v127 = vunpack.c.l.b16 %v46
    %v128 = vunpack.c.h.b16 %v46
    %v129 = vunpack.c.l.b16 %v47
    %v130 = vunpack.c.h.b16 %v47
    %v131 = vunpack.c.l.b16 %v48
    %v132 = vunpack.c.h.b16 %v48
    %v133 = vunpack.c.l.b16 %v49
    %v134 = vunpack.c.h.b16 %v49
    %v135 = vunpack.c.l.b16 %v50
    %v136 = vunpack.c.h.b16 %v50
    %v137 = vpack.c.b16 %v125, %v121
    %v138 = vpack.c.b16 %v126, %v122
    %v139 = vpack.c.b16 %v127, %v123
    %v140 = vpack.c.b16 %v128, %v124
    %v141 = vpack.c.b16 %v133, %v129
    %v142 = vpack.c.b16 %v134, %v130
    %v143 = vpack.c.b16 %v135, %v131
    %v144 = vpack.c.b16 %v136, %v132
    %vm153 = vcmask 261120
    %v155 = vsel %vm153, %v105, 0
    %v158 = vsel %vm153, %v106, 0
    %v161 = vsel %vm153, %v107, 0
    %v164 = vsel %vm153, %v108, 0
    %v167 = vsel %vm153, %v109, 0
    %v170 = vsel %vm153, %v110, 0
    %v173 = vsel %vm153, %v111, 0
    %v176 = vsel %vm153, %v112, 0
    %178 = vmatprep.subr.bf16.mxu0 %v138
    %179 = vmatpush1.bf16.msra.mxu0 %v137
    %180 = vmatprep.subr.bf16.mxu0 %v142
    %181 = vmatpush1.bf16.msra.mxu0 %v141
    %182 = vmatprep.subr.bf16.mxu0 0
    %183 = vmatpush1.bf16.msra.mxu0 0
    %184 = vmatprep.subr.bf16.mxu0 0
    %185 = vmatpush1.bf16.msra.mxu0 0
    %186 = vmatprep.subr.bf16.mxu0 0
    %187 = vmatpush1.bf16.msra.mxu0 0
    %188 = vmatprep.subr.bf16.mxu0 0
    %189 = vmatpush1.bf16.msra.mxu0 0
    %190 = vmatprep.subr.bf16.mxu0 0
    %191 = vmatpush1.bf16.msra.mxu0 0
    %192 = vmatprep.subr.bf16.mxu0 0
    %193 = vmatpush1.bf16.msra.mxu0 0
    %194 = vmatprep.subr.bf16.mxu0 0
    %195 = vmatpush1.bf16.msra.mxu0 0
    %196 = vmatprep.subr.bf16.mxu0 0
    %197 = vmatpush1.bf16.msra.mxu0 0
    %198 = vmatprep.subr.bf16.mxu0 0
    %199 = vmatpush1.bf16.msra.mxu0 0
    %200 = vmatprep.subr.bf16.mxu0 0
    %201 = vmatpush1.bf16.msra.mxu0 0
    %202 = vmatprep.subr.bf16.mxu0 0
    %203 = vmatpush1.bf16.msra.mxu0 0
    %204 = vmatprep.subr.bf16.mxu0 0
    %205 = vmatpush1.bf16.msra.mxu0 0
    %206 = vmatprep.subr.bf16.mxu0 0
    %207 = vmatpush1.bf16.msra.mxu0 0
    %208 = vmatprep.subr.bf16.mxu0 0
    %209 = vmatpush1.bf16.msra.mxu0 0
    %210 = vmatprep.mubr.bf16.mxu0 0
    %211 = vmatmul.mubr.bf16.gmra.mrb[0].mxu0 %v155
    %v212 = vpop.f32.mrb[0].mxu0
    %v213 = vadd.f32 %v56, %v212
    %v214 = vpop.f32.mrb[0].mxu0
    %v215 = vadd.f32 %v60, %v214
    %v216 = vpop.f32.mrb[0].mxu0
    %v217 = vadd.f32 %v56, %v216
    %v218 = vpop.f32.mrb[0].mxu0
    %v219 = vadd.f32 %v60, %v218
    %220 = vmatprep.mubr.bf16.mxu0 0
    %221 = vmatmul.mubr.bf16.gmra.mrb[0].mxu0 %v158
    %v222 = vpop.f32.mrb[0].mxu0
    %v223 = vadd.f32 %v56, %v222
    %v224 = vpop.f32.mrb[0].mxu0
    %v225 = vadd.f32 %v60, %v224
    %v226 = vpop.f32.mrb[0].mxu0
    %v227 = vadd.f32 %v56, %v226
    %v228 = vpop.f32.mrb[0].mxu0
    %v229 = vadd.f32 %v60, %v228
    %230 = vmatprep.mubr.bf16.mxu0 0
    %231 = vmatmul.mubr.bf16.gmra.mrb[0].mxu0 %v161
    %v232 = vpop.f32.mrb[0].mxu0
    %v233 = vadd.f32 %v56, %v232
    %v234 = vpop.f32.mrb[0].mxu0
    %v235 = vadd.f32 %v60, %v234
    %v236 = vpop.f32.mrb[0].mxu0
    %v237 = vadd.f32 %v56, %v236
    %v238 = vpop.f32.mrb[0].mxu0
    %v239 = vadd.f32 %v60, %v238
    %240 = vmatprep.mubr.bf16.mxu0 0
    %241 = vmatmul.mubr.bf16.gmra.mrb[0].mxu0 %v164
    %v242 = vpop.f32.mrb[0].mxu0
    %v243 = vadd.f32 %v56, %v242
    %v244 = vpop.f32.mrb[0].mxu0
    %v245 = vadd.f32 %v60, %v244
    %v246 = vpop.f32.mrb[0].mxu0
    %v247 = vadd.f32 %v56, %v246
    %v248 = vpop.f32.mrb[0].mxu0
    %v249 = vadd.f32 %v60, %v248
    %250 = vmatprep.mubr.bf16.mxu0 0
    %251 = vmatmul.mubr.bf16.gmra.mrb[0].mxu0 %v167
    %v252 = vpop.f32.mrb[0].mxu0
    %v253 = vadd.f32 %v56, %v252
    %v254 = vpop.f32.mrb[0].mxu0
    %v255 = vadd.f32 %v60, %v254
    %v256 = vpop.f32.mrb[0].mxu0
    %v257 = vadd.f32 %v56, %v256
    %v258 = vpop.f32.mrb[0].mxu0
    %v259 = vadd.f32 %v60, %v258
    %260 = vmatprep.mubr.bf16.mxu0 0
    %261 = vmatmul.mubr.bf16.gmra.mrb[0].mxu0 %v170
    %v262 = vpop.f32.mrb[0].mxu0
    %v263 = vadd.f32 %v56, %v262
    %v264 = vpop.f32.mrb[0].mxu0
    %v265 = vadd.f32 %v60, %v264
    %v266 = vpop.f32.mrb[0].mxu0
    %v267 = vadd.f32 %v56, %v266
    %v268 = vpop.f32.mrb[0].mxu0
    %v269 = vadd.f32 %v60, %v268
    %270 = vmatprep.mubr.bf16.mxu0 0
    %271 = vmatmul.mubr.bf16.gmra.mrb[0].mxu0 %v173
    %v272 = vpop.f32.mrb[0].mxu0
    %v273 = vadd.f32 %v56, %v272
    %v274 = vpop.f32.mrb[0].mxu0
    %v275 = vadd.f32 %v60, %v274
    %v276 = vpop.f32.mrb[0].mxu0
    %v277 = vadd.f32 %v56, %v276
    %v278 = vpop.f32.mrb[0].mxu0
    %v279 = vadd.f32 %v60, %v278
    %280 = vmatprep.mubr.bf16.mxu0 0
    %281 = vmatmul.mubr.bf16.gmra.mrb[0].mxu0 %v176
    %v282 = vpop.f32.mrb[0].mxu0
    %v283 = vadd.f32 %v56, %v282
    %v284 = vpop.f32.mrb[0].mxu0
    %v285 = vadd.f32 %v60, %v284
    %v286 = vpop.f32.mrb[0].mxu0
    %v287 = vadd.f32 %v56, %v286
    %v288 = vpop.f32.mrb[0].mxu0
    %v289 = vadd.f32 %v60, %v288
    %290 = vdwg.mxu0
    %291 = vmatprep.subr.bf16.mxu0 %v140
    %292 = vmatpush1.bf16.msra.mxu0 %v139
    %293 = vmatprep.subr.bf16.mxu0 %v144
    %294 = vmatpush1.bf16.msra.mxu0 %v143
    %295 = vmatprep.subr.bf16.mxu0 0
    %296 = vmatpush1.bf16.msra.mxu0 0
    %297 = vmatprep.subr.bf16.mxu0 0
    %298 = vmatpush1.bf16.msra.mxu0 0
    %299 = vmatprep.subr.bf16.mxu0 0
    %300 = vmatpush1.bf16.msra.mxu0 0
    %301 = vmatprep.subr.bf16.mxu0 0
    %302 = vmatpush1.bf16.msra.mxu0 0
    %303 = vmatprep.subr.bf16.mxu0 0
    %304 = vmatpush1.bf16.msra.mxu0 0
    %305 = vmatprep.subr.bf16.mxu0 0
    %306 = vmatpush1.bf16.msra.mxu0 0
    %307 = vmatprep.subr.bf16.mxu0 0
    %308 = vmatpush1.bf16.msra.mxu0 0
    %309 = vmatprep.subr.bf16.mxu0 0
    %310 = vmatpush1.bf16.msra.mxu0 0
    %311 = vmatprep.subr.bf16.mxu0 0
    %312 = vmatpush1.bf16.msra.mxu0 0
    %313 = vmatprep.subr.bf16.mxu0 0
    %314 = vmatpush1.bf16.msra.mxu0 0
    %315 = vmatprep.subr.bf16.mxu0 0
    %316 = vmatpush1.bf16.msra.mxu0 0
    %317 = vmatprep.subr.bf16.mxu0 0
    %318 = vmatpush1.bf16.msra.mxu0 0
    %319 = vmatprep.subr.bf16.mxu0 0
    %320 = vmatpush1.bf16.msra.mxu0 0
    %321 = vmatprep.subr.bf16.mxu0 0
    %322 = vmatpush1.bf16.msra.mxu0 0
    %323 = vmatprep.mubr.bf16.mxu0 0
    %324 = vmatmul.mubr.bf16.gmra.mrb[0].mxu0 %v155
    %v325 = vpop.f32.mrb[0].mxu0
    %v326 = vadd.f32 %v64, %v325
    %v327 = vpop.f32.mrb[0].mxu0
    %v328 = vadd.f32 %v68, %v327
    %v329 = vpop.f32.mrb[0].mxu0
    %v330 = vadd.f32 %v64, %v329
    %v331 = vpop.f32.mrb[0].mxu0
    %v332 = vadd.f32 %v68, %v331
    %333 = vmatprep.mubr.bf16.mxu0 0
    %334 = vmatmul.mubr.bf16.gmra.mrb[0].mxu0 %v158
    %v335 = vpop.f32.mrb[0].mxu0
    %v336 = vadd.f32 %v64, %v335
    %v337 = vpop.f32.mrb[0].mxu0
    %v338 = vadd.f32 %v68, %v337
    %v339 = vpop.f32.mrb[0].mxu0
    %v340 = vadd.f32 %v64, %v339
    %v341 = vpop.f32.mrb[0].mxu0
    %v342 = vadd.f32 %v68, %v341
    %343 = vmatprep.mubr.bf16.mxu0 0
    %344 = vmatmul.mubr.bf16.gmra.mrb[0].mxu0 %v161
    %v345 = vpop.f32.mrb[0].mxu0
    %v346 = vadd.f32 %v64, %v345
    %v347 = vpop.f32.mrb[0].mxu0
    %v348 = vadd.f32 %v68, %v347
    %v349 = vpop.f32.mrb[0].mxu0
    %v350 = vadd.f32 %v64, %v349
    %v351 = vpop.f32.mrb[0].mxu0
    %v352 = vadd.f32 %v68, %v351
    %353 = vmatprep.mubr.bf16.mxu0 0
    %354 = vmatmul.mubr.bf16.gmra.mrb[0].mxu0 %v164
    %v355 = vpop.f32.mrb[0].mxu0
    %v356 = vadd.f32 %v64, %v355
    %v357 = vpop.f32.mrb[0].mxu0
    %v358 = vadd.f32 %v68, %v357
    %v359 = vpop.f32.mrb[0].mxu0
    %v360 = vadd.f32 %v64, %v359
    %v361 = vpop.f32.mrb[0].mxu0
    %v362 = vadd.f32 %v68, %v361
    %363 = vmatprep.mubr.bf16.mxu0 0
    %364 = vmatmul.mubr.bf16.gmra.mrb[0].mxu0 %v167
    %v365 = vpop.f32.mrb[0].mxu0
    %v366 = vadd.f32 %v64, %v365
    %v367 = vpop.f32.mrb[0].mxu0
    %v368 = vadd.f32 %v68, %v367
    %v369 = vpop.f32.mrb[0].mxu0
    %v370 = vadd.f32 %v64, %v369
    %v371 = vpop.f32.mrb[0].mxu0
    %v372 = vadd.f32 %v68, %v371
    %373 = vmatprep.mubr.bf16.mxu0 0
    %374 = vmatmul.mubr.bf16.gmra.mrb[0].mxu0 %v170
    %v375 = vpop.f32.mrb[0].mxu0
    %v376 = vadd.f32 %v64, %v375
    %v377 = vpop.f32.mrb[0].mxu0
    %v378 = vadd.f32 %v68, %v377
    %v379 = vpop.f32.mrb[0].mxu0
    %v380 = vadd.f32 %v64, %v379
    %v381 = vpop.f32.mrb[0].mxu0
    %v382 = vadd.f32 %v68, %v381
    %383 = vmatprep.mubr.bf16.mxu0 0
    %384 = vmatmul.mubr.bf16.gmra.mrb[0].mxu0 %v173
    %v385 = vpop.f32.mrb[0].mxu0
    %v386 = vadd.f32 %v64, %v385
    %v387 = vpop.f32.mrb[0].mxu0
    %v388 = vadd.f32 %v68, %v387
    %v389 = vpop.f32.mrb[0].mxu0
    %v390 = vadd.f32 %v64, %v389
    %v391 = vpop.f32.mrb[0].mxu0
    %v392 = vadd.f32 %v68, %v391
    %393 = vmatprep.mubr.bf16.mxu0 0
    %394 = vmatmul.mubr.bf16.gmra.mrb[0].mxu0 %v176
    %v395 = vpop.f32.mrb[0].mxu0
    %v396 = vadd.f32 %v64, %v395
    %v397 = vpop.f32.mrb[0].mxu0
    %v398 = vadd.f32 %v68, %v397
    %v399 = vpop.f32.mrb[0].mxu0
    %v400 = vadd.f32 %v64, %v399
    %v401 = vpop.f32.mrb[0].mxu0
    %v402 = vadd.f32 %v68, %v401
    %403 = vdwg.mxu0
    %v404 = vpack.c.bf16 %v217, %v213
    %v405 = vpack.c.bf16 %v219, %v215
    %v406 = vpack.c.bf16 %v330, %v326
    %v407 = vpack.c.bf16 %v332, %v328
    %v408 = vpack.c.bf16 %v227, %v223
    %v409 = vpack.c.bf16 %v229, %v225
    %v410 = vpack.c.bf16 %v340, %v336
    %v411 = vpack.c.bf16 %v342, %v338
    %v412 = vpack.c.bf16 %v237, %v233
    %v413 = vpack.c.bf16 %v239, %v235
    %v414 = vpack.c.bf16 %v350, %v346
    %v415 = vpack.c.bf16 %v352, %v348
    %v416 = vpack.c.bf16 %v247, %v243
    %v417 = vpack.c.bf16 %v249, %v245
    %v418 = vpack.c.bf16 %v360, %v356
    %v419 = vpack.c.bf16 %v362, %v358
    %v420 = vpack.c.bf16 %v257, %v253
    %v421 = vpack.c.bf16 %v259, %v255
    %v422 = vpack.c.bf16 %v370, %v366
    %v423 = vpack.c.bf16 %v372, %v368
    %v424 = vpack.c.bf16 %v267, %v263
    %v425 = vpack.c.bf16 %v269, %v265
    %v426 = vpack.c.bf16 %v380, %v376
    %v427 = vpack.c.bf16 %v382, %v378
    %v428 = vpack.c.bf16 %v277, %v273
    %v429 = vpack.c.bf16 %v279, %v275
    %v430 = vpack.c.bf16 %v390, %v386
    %v431 = vpack.c.bf16 %v392, %v388
    %v432 = vpack.c.bf16 %v287, %v283
    %v433 = vpack.c.bf16 %v289, %v285
    %v434 = vpack.c.bf16 %v400, %v396
    %v435 = vpack.c.bf16 %v402, %v398
    %v468 = vunpack.c.l.b16 %v404
    %v469 = vunpack.c.l.b16 %v405
    %v470 = vunpack.c.l.b16 %v406
    %v471 = vunpack.c.l.b16 %v407
    %v472 = vunpack.c.h.b16 %v404
    %v473 = vunpack.c.h.b16 %v405
    %v474 = vunpack.c.h.b16 %v406
    %v475 = vunpack.c.h.b16 %v407
    %v476 = vunpack.c.l.b16 %v408
    %v477 = vunpack.c.l.b16 %v409
    %v478 = vunpack.c.l.b16 %v410
    %v479 = vunpack.c.l.b16 %v411
    %v480 = vunpack.c.h.b16 %v408
    %v481 = vunpack.c.h.b16 %v409
    %v482 = vunpack.c.h.b16 %v410
    %v483 = vunpack.c.h.b16 %v411
    %v484 = vunpack.c.l.b16 %v412
    %v485 = vunpack.c.l.b16 %v413
    %v486 = vunpack.c.l.b16 %v414
    %v487 = vunpack.c.l.b16 %v415
    %v488 = vunpack.c.h.b16 %v412
    %v489 = vunpack.c.h.b16 %v413
    %v490 = vunpack.c.h.b16 %v414
    %v491 = vunpack.c.h.b16 %v415
    %v492 = vunpack.c.l.b16 %v416
    %v493 = vunpack.c.l.b16 %v417
    %v494 = vunpack.c.l.b16 %v418
    %v495 = vunpack.c.l.b16 %v419
    %v496 = vunpack.c.h.b16 %v416
    %v497 = vunpack.c.h.b16 %v417
    %v498 = vunpack.c.h.b16 %v418
    %v499 = vunpack.c.h.b16 %v419
    %v500 = vunpack.c.l.b16 %v420
    %v501 = vunpack.c.l.b16 %v421
    %v502 = vunpack.c.l.b16 %v422
    %v503 = vunpack.c.l.b16 %v423
    %v504 = vunpack.c.h.b16 %v420
    %v505 = vunpack.c.h.b16 %v421
    %v506 = vunpack.c.h.b16 %v422
    %v507 = vunpack.c.h.b16 %v423
    %v508 = vunpack.c.l.b16 %v424
    %v509 = vunpack.c.l.b16 %v425
    %v510 = vunpack.c.l.b16 %v426
    %v511 = vunpack.c.l.b16 %v427
    %v512 = vunpack.c.h.b16 %v424
    %v513 = vunpack.c.h.b16 %v425
    %v514 = vunpack.c.h.b16 %v426
    %v515 = vunpack.c.h.b16 %v427
    %v516 = vunpack.c.l.b16 %v428
    %v517 = vunpack.c.l.b16 %v429
    %v518 = vunpack.c.l.b16 %v430
    %v519 = vunpack.c.l.b16 %v431
    %v520 = vunpack.c.h.b16 %v428
    %v521 = vunpack.c.h.b16 %v429
    %v522 = vunpack.c.h.b16 %v430
    %v523 = vunpack.c.h.b16 %v431
    %v524 = vunpack.c.l.b16 %v432
    %v525 = vunpack.c.l.b16 %v433
    %v526 = vunpack.c.l.b16 %v434
    %v527 = vunpack.c.l.b16 %v435
    %v528 = vunpack.c.h.b16 %v432
    %v529 = vunpack.c.h.b16 %v433
    %v530 = vunpack.c.h.b16 %v434
    %v531 = vunpack.c.h.b16 %v435
    %v532 = vpack.c.b16 %v469, %v468
    %v533 = vpack.c.b16 %v471, %v470
    %v534 = vpack.c.b16 %v473, %v472
    %v535 = vpack.c.b16 %v475, %v474
    %v536 = vpack.c.b16 %v477, %v476
    %v537 = vpack.c.b16 %v479, %v478
    %v538 = vpack.c.b16 %v481, %v480
    %v539 = vpack.c.b16 %v483, %v482
    %v540 = vpack.c.b16 %v485, %v484
    %v541 = vpack.c.b16 %v487, %v486
    %v542 = vpack.c.b16 %v489, %v488
    %v543 = vpack.c.b16 %v491, %v490
    %v544 = vpack.c.b16 %v493, %v492
    %v545 = vpack.c.b16 %v495, %v494
    %v546 = vpack.c.b16 %v497, %v496
    %v547 = vpack.c.b16 %v499, %v498
    %v548 = vpack.c.b16 %v501, %v500
    %v549 = vpack.c.b16 %v503, %v502
    %v550 = vpack.c.b16 %v505, %v504
    %v551 = vpack.c.b16 %v507, %v506
    %v552 = vpack.c.b16 %v509, %v508
    %v553 = vpack.c.b16 %v511, %v510
    %v554 = vpack.c.b16 %v513, %v512
    %v555 = vpack.c.b16 %v515, %v514
    %v556 = vpack.c.b16 %v517, %v516
    %v557 = vpack.c.b16 %v519, %v518
    %v558 = vpack.c.b16 %v521, %v520
    %v559 = vpack.c.b16 %v523, %v522
    %v560 = vpack.c.b16 %v525, %v524
    %v561 = vpack.c.b16 %v527, %v526
    %v562 = vpack.c.b16 %v529, %v528
    %v563 = vpack.c.b16 %v531, %v530
    %596 = vst [vmem:[%s3] sm:$0xff] %v532
    %597 = vst [vmem:[%s3 + $0x8] sm:$0xff] %v533
    %598 = vst [vmem:[%s3 + $0x10] sm:$0xff] %v534
    %599 = vst [vmem:[%s3 + $0x18] sm:$0xff] %v535
    %600 = vst [vmem:[%s3 + $0x20] sm:$0xff] %v536
    %601 = vst [vmem:[%s3 + $0x28] sm:$0xff] %v537
    %602 = vst [vmem:[%s3 + $0x30] sm:$0xff] %v538
    %603 = vst [vmem:[%s3 + $0x38] sm:$0xff] %v539
    %604 = vst [vmem:[%s3 + $0x40] sm:$0xff] %v540
    %605 = vst [vmem:[%s3 + $0x48] sm:$0xff] %v541
    %606 = vst [vmem:[%s3 + $0x50] sm:$0xff] %v542
    %607 = vst [vmem:[%s3 + $0x58] sm:$0xff] %v543
    %608 = vst [vmem:[%s3 + $0x60] sm:$0xff] %v544
    %609 = vst [vmem:[%s3 + $0x68] sm:$0xff] %v545
    %610 = vst [vmem:[%s3 + $0x70] sm:$0xff] %v546
    %611 = vst [vmem:[%s3 + $0x78] sm:$0xff] %v547
    %612 = vst [vmem:[%s3 + $0x80] sm:$0xff] %v548
    %613 = vst [vmem:[%s3 + $0x88] sm:$0xff] %v549
    %614 = vst [vmem:[%s3 + $0x90] sm:$0xff] %v550
    %615 = vst [vmem:[%s3 + $0x98] sm:$0xff] %v551
    %616 = vst [vmem:[%s3 + $0xa0] sm:$0xff] %v552
    %617 = vst [vmem:[%s3 + $0xa8] sm:$0xff] %v553
    %618 = vst [vmem:[%s3 + $0xb0] sm:$0xff] %v554
    %619 = vst [vmem:[%s3 + $0xb8] sm:$0xff] %v555
    %620 = vst [vmem:[%s3 + $0xc0] sm:$0xff] %v556
    %621 = vst [vmem:[%s3 + $0xc8] sm:$0xff] %v557
    %622 = vst [vmem:[%s3 + $0xd0] sm:$0xff] %v558
    %623 = vst [vmem:[%s3 + $0xd8] sm:$0xff] %v559
    %624 = vst [vmem:[%s3 + $0xe0] sm:$0xff] %v560
    %625 = vst [vmem:[%s3 + $0xe8] sm:$0xff] %v561
    %626 = vst [vmem:[%s3 + $0xf0] sm:$0xff] %v562
    %627 = vst [vmem:[%s3 + $0xf8] sm:$0xff] %v563
    // Predicated region
    $region18: #{decoder_rnn_forward.3} parent=1 // pred_check
      _
    $region19: #{decoder_rnn_forward.3} parent=1 // pred_check_branch
      %629 = sbr.rel (0) target = $region21
    $region20: #{decoder_rnn_forward.3} parent=1 // pred_region
      _
    $region21: #{decoder_rnn_forward.3} parent=1 // pred_fallthru
      _
    // Predicated region
    $region22: #{decoder_rnn_forward.3} parent=1 // pred_check
      _
    $region23: #{decoder_rnn_forward.3} parent=1 // pred_check_branch
      %631 = sbr.rel (0) target = $region25
    $region24: #{decoder_rnn_forward.3} parent=1 // pred_region
      _
    $region25: #{decoder_rnn_forward.3} parent=1 // pred_fallthru
      _
    %632 = vsyncpa [#allocation3], 1

// kernel: decoder_rnn_forward.4
$region0: #{decoder_rnn_forward.4}
  #allocation0 [shape = 'u32[]', space=smem, size = 0x4, offset = 0x4, fixed_abs, tag = 'smem constant byte address 0x4 - core index']
  #allocation1 [shape = 'u32[144,128]{1,0:T(1,128)}', space=vmem, size = 0x12000, scoped, tag = 'internal scratch']
  #allocation2 [shape = 'f32[8,128]{1,0:T(8,128)}', space=vmem, size = 0x1000, scoped, tag = 'scratch operand']
  #allocation3 [shape = 'f32[8,128]{1,0:T(8,128)}', space=vmem, size = 0x1000, scoped, tag = 'scratch operand']
  %s0 = inlined_call_operand.vmem [shape: bf16[8,16,512], index: 0, kind: input, shape index: {}]
  %s1 = inlined_call_operand.vmem [shape: f32[128,512], index: 1, kind: input, shape index: {}]
  %s2 = inlined_call_operand.vmem [shape: bf16[8,16,128], index: 2, kind: output, shape index: {}]
  %s3 = sld [smem:[#allocation0]]
  $region22: #{decoder_rnn_forward.4} parent=0
    _
  %s5 = ssub.s32 1, %s3
  %s6 = scalar_select 0, %s5, %s3
  // Predicated region
  $region2: #{decoder_rnn_forward.4} parent=0 // pred_check
    _
  $region3: #{decoder_rnn_forward.4} parent=0 // pred_check_branch
    %8 = sbr.rel (0) target = $region5
  $region4: #{decoder_rnn_forward.4} parent=0 // pred_region
    _
  $region5: #{decoder_rnn_forward.4} parent=0 // pred_fallthru
    _
  // Predicated region
  $region6: #{decoder_rnn_forward.4} parent=0 // pred_check
    _
  $region7: #{decoder_rnn_forward.4} parent=0 // pred_check_branch
    %10 = sbr.rel (0) target = $region9
  $region8: #{decoder_rnn_forward.4} parent=0 // pred_region
    _
  $region9: #{decoder_rnn_forward.4} parent=0 // pred_fallthru
    _
  %p11 = scmp.eq.s32.totalorder 0, 0
  // Predicated region
  $region10: #{decoder_rnn_forward.4} parent=0 // pred_check
    %p12 = pneg %p11
  $region11: #{decoder_rnn_forward.4} parent=0 // pred_check_branch
    %14 = sbr.rel (%p12) target = $region13
  $region12: #{decoder_rnn_forward.4} parent=0 // pred_region
    %15 = vst [vmem:[#allocation2] sm:$0xff] 0.0
    %16 = vst [vmem:[#allocation3] sm:$0xff] 0.0
  $region13: #{decoder_rnn_forward.4} parent=0 // pred_fallthru
    _
  %v17 = vld [vmem:[%s1] sm:$0xff]
  %v18 = vld [vmem:[%s1 + $0x8] sm:$0xff]
  %v19 = vld [vmem:[%s1 + $0x10] sm:$0xff]
  %v20 = vld [vmem:[%s1 + $0x18] sm:$0xff]
  %v21 = vld [vmem:[%s1 + $0x20] sm:$0xff]
  %v22 = vld [vmem:[%s1 + $0x28] sm:$0xff]
  %v23 = vld [vmem:[%s1 + $0x30] sm:$0xff]
  %v24 = vld [vmem:[%s1 + $0x38] sm:$0xff]
  %v25 = vld [vmem:[%s1 + $0x40] sm:$0xff]
  %v26 = vld [vmem:[%s1 + $0x48] sm:$0xff]
  %v27 = vld [vmem:[%s1 + $0x50] sm:$0xff]
  %v28 = vld [vmem:[%s1 + $0x58] sm:$0xff]
  %v29 = vld [vmem:[%s1 + $0x60] sm:$0xff]
  %v30 = vld [vmem:[%s1 + $0x68] sm:$0xff]
  %v31 = vld [vmem:[%s1 + $0x70] sm:$0xff]
  %v32 = vld [vmem:[%s1 + $0x78] sm:$0xff]
  %v33 = vld [vmem:[%s1 + $0x80] sm:$0xff]
  %v34 = vld [vmem:[%s1 + $0x88] sm:$0xff]
  %v35 = vld [vmem:[%s1 + $0x90] sm:$0xff]
  %v36 = vld [vmem:[%s1 + $0x98] sm:$0xff]
  %v37 = vld [vmem:[%s1 + $0xa0] sm:$0xff]
  %v38 = vld [vmem:[%s1 + $0xa8] sm:$0xff]
  %v39 = vld [vmem:[%s1 + $0xb0] sm:$0xff]
  %v40 = vld [vmem:[%s1 + $0xb8] sm:$0xff]
  %v41 = vld [vmem:[%s1 + $0xc0] sm:$0xff]
  %v42 = vld [vmem:[%s1 + $0xc8] sm:$0xff]
  %v43 = vld [vmem:[%s1 + $0xd0] sm:$0xff]
  %v44 = vld [vmem:[%s1 + $0xd8] sm:$0xff]
  %v45 = vld [vmem:[%s1 + $0xe0] sm:$0xff]
  %v46 = vld [vmem:[%s1 + $0xe8] sm:$0xff]
  %v47 = vld [vmem:[%s1 + $0xf0] sm:$0xff]
  %v48 = vld [vmem:[%s1 + $0xf8] sm:$0xff]
  %v49 = vld [vmem:[%s1 + $0x100] sm:$0xff]
  %v50 = vld [vmem:[%s1 + $0x108] sm:$0xff]
  %v51 = vld [vmem:[%s1 + $0x110] sm:$0xff]
  %v52 = vld [vmem:[%s1 + $0x118] sm:$0xff]
  %v53 = vld [vmem:[%s1 + $0x120] sm:$0xff]
  %v54 = vld [vmem:[%s1 + $0x128] sm:$0xff]
  %v55 = vld [vmem:[%s1 + $0x130] sm:$0xff]
  %v56 = vld [vmem:[%s1 + $0x138] sm:$0xff]
  %v57 = vld [vmem:[%s1 + $0x140] sm:$0xff]
  %v58 = vld [vmem:[%s1 + $0x148] sm:$0xff]
  %v59 = vld [vmem:[%s1 + $0x150] sm:$0xff]
  %v60 = vld [vmem:[%s1 + $0x158] sm:$0xff]
  %v61 = vld [vmem:[%s1 + $0x160] sm:$0xff]
  %v62 = vld [vmem:[%s1 + $0x168] sm:$0xff]
  %v63 = vld [vmem:[%s1 + $0x170] sm:$0xff]
  %v64 = vld [vmem:[%s1 + $0x178] sm:$0xff]
  %v65 = vld [vmem:[%s1 + $0x180] sm:$0xff]
  %v66 = vld [vmem:[%s1 + $0x188] sm:$0xff]
  %v67 = vld [vmem:[%s1 + $0x190] sm:$0xff]
  %v68 = vld [vmem:[%s1 + $0x198] sm:$0xff]
  %v69 = vld [vmem:[%s1 + $0x1a0] sm:$0xff]
  %v70 = vld [vmem:[%s1 + $0x1a8] sm:$0xff]
  %v71 = vld [vmem:[%s1 + $0x1b0] sm:$0xff]
  %v72 = vld [vmem:[%s1 + $0x1b8] sm:$0xff]
  %v73 = vld [vmem:[%s1 + $0x1c0] sm:$0xff]
  %v74 = vld [vmem:[%s1 + $0x1c8] sm:$0xff]
  %v75 = vld [vmem:[%s1 + $0x1d0] sm:$0xff]
  %v76 = vld [vmem:[%s1 + $0x1d8] sm:$0xff]
  %v77 = vld [vmem:[%s1 + $0x1e0] sm:$0xff]
  %v78 = vld [vmem:[%s1 + $0x1e8] sm:$0xff]
  %v79 = vld [vmem:[%s1 + $0x1f0] sm:$0xff]
  %v80 = vld [vmem:[%s1 + $0x1f8] sm:$0xff]
  %v81 = vld [vmem:[#allocation2] sm:$0xff]
  %v82 = vld [vmem:[#allocation3] sm:$0xff]
  %v83 = vld [vmem:[%s0] sm:$0x11]
  %v84 = vld [vmem:[%s0 + $0x8] sm:$0x11]
  %v85 = vld [vmem:[%s0 + $0x20] sm:$0x11]
  %v86 = vld [vmem:[%s0 + $0x28] sm:$0x11]
  %v87 = vld [vmem:[%s0 + $0x40] sm:$0x11]
  %v88 = vld [vmem:[%s0 + $0x48] sm:$0x11]
  %v89 = vld [vmem:[%s0 + $0x60] sm:$0x11]
  %v90 = vld [vmem:[%s0 + $0x68] sm:$0x11]
  %v91 = vld [vmem:[%s0 + $0x80] sm:$0x11]
  %v92 = vld [vmem:[%s0 + $0x88] sm:$0x11]
  %v93 = vld [vmem:[%s0 + $0xa0] sm:$0x11]
  %v94 = vld [vmem:[%s0 + $0xa8] sm:$0x11]
  %v95 = vld [vmem:[%s0 + $0xc0] sm:$0x11]
  %v96 = vld [vmem:[%s0 + $0xc8] sm:$0x11]
  %v97 = vld [vmem:[%s0 + $0xe0] sm:$0x11]
  %v98 = vld [vmem:[%s0 + $0xe8] sm:$0x11]
  %v99 = vunpack.c.l.bf16 %v83
  %v100 = vunpack.c.h.bf16 %v83
  %v101 = vunpack.c.l.bf16 %v84
  %v102 = vunpack.c.h.bf16 %v84
  %v103 = vunpack.c.l.bf16 %v85
  %v104 = vunpack.c.h.bf16 %v85
  %v105 = vunpack.c.l.bf16 %v86
  %v106 = vunpack.c.h.bf16 %v86
  %v107 = vunpack.c.l.bf16 %v87
  %v108 = vunpack.c.h.bf16 %v87
  %v109 = vunpack.c.l.bf16 %v88
  %v110 = vunpack.c.h.bf16 %v88
  %v111 = vunpack.c.l.bf16 %v89
  %v112 = vunpack.c.h.bf16 %v89
  %v113 = vunpack.c.l.bf16 %v90
  %v114 = vunpack.c.h.bf16 %v90
  %v115 = vunpack.c.l.bf16 %v91
  %v116 = vunpack.c.h.bf16 %v91
  %v117 = vunpack.c.l.bf16 %v92
  %v118 = vunpack.c.h.bf16 %v92
  %v119 = vunpack.c.l.bf16 %v93
  %v120 = vunpack.c.h.bf16 %v93
  %v121 = vunpack.c.l.bf16 %v94
  %v122 = vunpack.c.h.bf16 %v94
  %v123 = vunpack.c.l.bf16 %v95
  %v124 = vunpack.c.h.bf16 %v95
  %v125 = vunpack.c.l.bf16 %v96
  %v126 = vunpack.c.h.bf16 %v96
  %v127 = vunpack.c.l.bf16 %v97
  %v128 = vunpack.c.h.bf16 %v97
  %v129 = vunpack.c.l.bf16 %v98
  %v130 = vunpack.c.h.bf16 %v98
  %131 = vmatprep.subr.mxu0 %v18
  %132 = vmatpush1.msra.mxu0 %v17
  %133 = vmatprep.subr.mxu0 %v22
  %134 = vmatpush1.msra.mxu0 %v21
  %135 = vmatprep.subr.mxu0 %v26
  %136 = vmatpush1.msra.mxu0 %v25
  %137 = vmatprep.subr.mxu0 %v30
  %138 = vmatpush1.msra.mxu0 %v29
  %139 = vmatprep.subr.mxu0 %v34
  %140 = vmatpush1.msra.mxu0 %v33
  %141 = vmatprep.subr.mxu0 %v38
  %142 = vmatpush1.msra.mxu0 %v37
  %143 = vmatprep.subr.mxu0 %v42
  %144 = vmatpush1.msra.mxu0 %v41
  %145 = vmatprep.subr.mxu0 %v46
  %146 = vmatpush1.msra.mxu0 %v45
  %147 = vmatprep.subr.mxu0 %v50
  %148 = vmatpush1.msra.mxu0 %v49
  %149 = vmatprep.subr.mxu0 %v54
  %150 = vmatpush1.msra.mxu0 %v53
  %151 = vmatprep.subr.mxu0 %v58
  %152 = vmatpush1.msra.mxu0 %v57
  %153 = vmatprep.subr.mxu0 %v62
  %154 = vmatpush1.msra.mxu0 %v61
  %155 = vmatprep.subr.mxu0 %v66
  %156 = vmatpush1.msra.mxu0 %v65
  %157 = vmatprep.subr.mxu0 %v70
  %158 = vmatpush1.msra.mxu0 %v69
  %159 = vmatprep.subr.mxu0 %v74
  %160 = vmatpush1.msra.mxu0 %v73
  %161 = vmatprep.subr.mxu0 %v78
  %162 = vmatpush1.msra.mxu0 %v77
  %163 = vmatprep.subr.mxu0 0.0
  %164 = vmatpush1.msra.mxu0 0.0
  %165 = vmatprep.subr.mxu0 0.0
  %166 = vmatpush1.msra.mxu0 0.0
  %167 = vmatprep.subr.mxu0 0.0
  %168 = vmatpush1.msra.mxu0 0.0
  %169 = vmatprep.subr.mxu0 0.0
  %170 = vmatpush1.msra.mxu0 0.0
  %171 = vmatprep.subr.mxu0 0.0
  %172 = vmatpush1.msra.mxu0 0.0
  %173 = vmatprep.subr.mxu0 0.0
  %174 = vmatpush1.msra.mxu0 0.0
  %175 = vmatprep.subr.mxu0 0.0
  %176 = vmatpush1.msra.mxu0 0.0
  %177 = vmatprep.subr.mxu0 0.0
  %178 = vmatpush1.msra.mxu0 0.0
  %179 = vmatprep.subr.mxu0 0.0
  %180 = vmatpush1.msra.mxu0 0.0
  %181 = vmatprep.subr.mxu0 0.0
  %182 = vmatpush1.msra.mxu0 0.0
  %183 = vmatprep.subr.mxu0 0.0
  %184 = vmatpush1.msra.mxu0 0.0
  %185 = vmatprep.subr.mxu0 0.0
  %186 = vmatpush1.msra.mxu0 0.0
  %187 = vmatprep.subr.mxu0 0.0
  %188 = vmatpush1.msra.mxu0 0.0
  %189 = vmatprep.subr.mxu0 0.0
  %190 = vmatpush1.msra.mxu0 0.0
  %191 = vmatprep.subr.mxu0 0.0
  %192 = vmatpush1.msra.mxu0 0.0
  %193 = vmatprep.subr.mxu0 0.0
  %194 = vmatpush1.msra.mxu0 0.0
  %195 = vmatprep.mubr.f32.mxu0 0.0
  %196 = vmatmul.mubr.f32.gmra.mrb[0].mxu0 %v81
  %v197 = vpop.f32.mrb[0].mxu0
  %v198 = vadd.f32 0.0, %v197
  %v199 = vpop.f32.mrb[0].mxu0
  %v200 = vadd.f32 0.0, %v199
  %201 = vdwg.mxu0
  %202 = vmatprep.subr.mxu0 %v20
  %203 = vmatpush1.msra.mxu0 %v19
  %204 = vmatprep.subr.mxu0 %v24
  %205 = vmatpush1.msra.mxu0 %v23
  %206 = vmatprep.subr.mxu0 %v28
  %207 = vmatpush1.msra.mxu0 %v27
  %208 = vmatprep.subr.mxu0 %v32
  %209 = vmatpush1.msra.mxu0 %v31
  %210 = vmatprep.subr.mxu0 %v36
  %211 = vmatpush1.msra.mxu0 %v35
  %212 = vmatprep.subr.mxu0 %v40
  %213 = vmatpush1.msra.mxu0 %v39
  %214 = vmatprep.subr.mxu0 %v44
  %215 = vmatpush1.msra.mxu0 %v43
  %216 = vmatprep.subr.mxu0 %v48
  %217 = vmatpush1.msra.mxu0 %v47
  %218 = vmatprep.subr.mxu0 %v52
  %219 = vmatpush1.msra.mxu0 %v51
  %220 = vmatprep.subr.mxu0 %v56
  %221 = vmatpush1.msra.mxu0 %v55
  %222 = vmatprep.subr.mxu0 %v60
  %223 = vmatpush1.msra.mxu0 %v59
  %224 = vmatprep.subr.mxu0 %v64
  %225 = vmatpush1.msra.mxu0 %v63
  %226 = vmatprep.subr.mxu0 %v68
  %227 = vmatpush1.msra.mxu0 %v67
  %228 = vmatprep.subr.mxu0 %v72
  %229 = vmatpush1.msra.mxu0 %v71
  %230 = vmatprep.subr.mxu0 %v76
  %231 = vmatpush1.msra.mxu0 %v75
  %232 = vmatprep.subr.mxu0 %v80
  %233 = vmatpush1.msra.mxu0 %v79
  %234 = vmatprep.subr.mxu0 0.0
  %235 = vmatpush1.msra.mxu0 0.0
  %236 = vmatprep.subr.mxu0 0.0
  %237 = vmatpush1.msra.mxu0 0.0
  %238 = vmatprep.subr.mxu0 0.0
  %239 = vmatpush1.msra.mxu0 0.0
  %240 = vmatprep.subr.mxu0 0.0
  %241 = vmatpush1.msra.mxu0 0.0
  %242 = vmatprep.subr.mxu0 0.0
  %243 = vmatpush1.msra.mxu0 0.0
  %244 = vmatprep.subr.mxu0 0.0
  %245 = vmatpush1.msra.mxu0 0.0
  %246 = vmatprep.subr.mxu0 0.0
  %247 = vmatpush1.msra.mxu0 0.0
  %248 = vmatprep.subr.mxu0 0.0
  %249 = vmatpush1.msra.mxu0 0.0
  %250 = vmatprep.subr.mxu0 0.0
  %251 = vmatpush1.msra.mxu0 0.0
  %252 = vmatprep.subr.mxu0 0.0
  %253 = vmatpush1.msra.mxu0 0.0
  %254 = vmatprep.subr.mxu0 0.0
  %255 = vmatpush1.msra.mxu0 0.0
  %256 = vmatprep.subr.mxu0 0.0
  %257 = vmatpush1.msra.mxu0 0.0
  %258 = vmatprep.subr.mxu0 0.0
  %259 = vmatpush1.msra.mxu0 0.0
  %260 = vmatprep.subr.mxu0 0.0
  %261 = vmatpush1.msra.mxu0 0.0
  %262 = vmatprep.subr.mxu0 0.0
  %263 = vmatpush1.msra.mxu0 0.0
  %264 = vmatprep.subr.mxu0 0.0
  %265 = vmatpush1.msra.mxu0 0.0
  %266 = vmatprep.mubr.f32.mxu0 0.0
  %267 = vmatmul.mubr.f32.gmra.mrb[0].mxu0 %v81
  %v268 = vpop.f32.mrb[0].mxu0
  %v269 = vadd.f32 0.0, %v268
  %v270 = vpop.f32.mrb[0].mxu0
  %v271 = vadd.f32 0.0, %v270
  %272 = vdwg.mxu0
  %v277 = vrot.slane %v198, 1
  %v278 = vrot.slane %v200, 1
  %v279 = vrot.slane %v269, 1
  %v280 = vrot.slane %v271, 1
  %v281 = vrot.slane %v198, 2
  %v282 = vrot.slane %v200, 2
  %v283 = vrot.slane %v269, 2
  %v284 = vrot.slane %v271, 2
  %v285 = vrot.slane %v198, 3
  %v286 = vrot.slane %v200, 3
  %v287 = vrot.slane %v269, 3
  %v288 = vrot.slane %v271, 3
  %v289 = vrot.slane %v198, 4
  %v290 = vrot.slane %v200, 4
  %v291 = vrot.slane %v269, 4
  %v292 = vrot.slane %v271, 4
  %v293 = vrot.slane %v198, 5
  %v294 = vrot.slane %v200, 5
  %v295 = vrot.slane %v269, 5
  %v296 = vrot.slane %v271, 5
  %v297 = vrot.slane %v198, 6
  %v298 = vrot.slane %v200, 6
  %v299 = vrot.slane %v269, 6
  %v300 = vrot.slane %v271, 6
  %v301 = vrot.slane %v198, 7
  %v302 = vrot.slane %v200, 7
  %v303 = vrot.slane %v269, 7
  %v304 = vrot.slane %v271, 7
  %v337 = vadd.f32 %v99, %v198
  %v338 = vadd.f32 %v100, %v200
  %v339 = vadd.f32 %v101, %v269
  %v340 = vadd.f32 %v102, %v271
  %v341 = vadd.f32 %v103, %v277
  %v342 = vadd.f32 %v104, %v278
  %v343 = vadd.f32 %v105, %v279
  %v344 = vadd.f32 %v106, %v280
  %v345 = vadd.f32 %v107, %v281
  %v346 = vadd.f32 %v108, %v282
  %v347 = vadd.f32 %v109, %v283
  %v348 = vadd.f32 %v110, %v284
  %v349 = vadd.f32 %v111, %v285
  %v350 = vadd.f32 %v112, %v286
  %v351 = vadd.f32 %v113, %v287
  %v352 = vadd.f32 %v114, %v288
  %v353 = vadd.f32 %v115, %v289
  %v354 = vadd.f32 %v116, %v290
  %v355 = vadd.f32 %v117, %v291
  %v356 = vadd.f32 %v118, %v292
  %v357 = vadd.f32 %v119, %v293
  %v358 = vadd.f32 %v120, %v294
  %v359 = vadd.f32 %v121, %v295
  %v360 = vadd.f32 %v122, %v296
  %v361 = vadd.f32 %v123, %v297
  %v362 = vadd.f32 %v124, %v298
  %v363 = vadd.f32 %v125, %v299
  %v364 = vadd.f32 %v126, %v300
  %v365 = vadd.f32 %v127, %v301
  %v366 = vadd.f32 %v128, %v302
  %v367 = vadd.f32 %v129, %v303
  %v368 = vadd.f32 %v130, %v304
  %v369 = vmul.f32 %v337, 0.5
  %v370 = vmul.f32 %v341, 0.5
  %v371 = vmul.f32 %v345, 0.5
  %v372 = vmul.f32 %v349, 0.5
  %v373 = vmul.f32 %v353, 0.5
  %v374 = vmul.f32 %v357, 0.5
  %v375 = vmul.f32 %v361, 0.5
  %v376 = vmul.f32 %v365, 0.5
  %v377 = vtanh.pop %v369
  %v378 = vtanh.pop %v370
  %v379 = vtanh.pop %v371
  %v380 = vtanh.pop %v372
  %v381 = vtanh.pop %v373
  %v382 = vtanh.pop %v374
  %v383 = vtanh.pop %v375
  %v384 = vtanh.pop %v376
  %v385 = vmul.f32 %v377, 0.5
  %v386 = vmul.f32 %v378, 0.5
  %v387 = vmul.f32 %v379, 0.5
  %v388 = vmul.f32 %v380, 0.5
  %v389 = vmul.f32 %v381, 0.5
  %v390 = vmul.f32 %v382, 0.5
  %v391 = vmul.f32 %v383, 0.5
  %v392 = vmul.f32 %v384, 0.5
  %v393 = vadd.f32 %v385, 0.5
  %v394 = vadd.f32 %v386, 0.5
  %v395 = vadd.f32 %v387, 0.5
  %v396 = vadd.f32 %v388, 0.5
  %v397 = vadd.f32 %v389, 0.5
  %v398 = vadd.f32 %v390, 0.5
  %v399 = vadd.f32 %v391, 0.5
  %v400 = vadd.f32 %v392, 0.5
  %v401 = vmul.f32 %v338, 0.5
  %v402 = vmul.f32 %v342, 0.5
  %v403 = vmul.f32 %v346, 0.5
  %v404 = vmul.f32 %v350, 0.5
  %v405 = vmul.f32 %v354, 0.5
  %v406 = vmul.f32 %v358, 0.5
  %v407 = vmul.f32 %v362, 0.5
  %v408 = vmul.f32 %v366, 0.5
  %v409 = vtanh.pop %v401
  %v410 = vtanh.pop %v402
  %v411 = vtanh.pop %v403
  %v412 = vtanh.pop %v404
  %v413 = vtanh.pop %v405
  %v414 = vtanh.pop %v406
  %v415 = vtanh.pop %v407
  %v416 = vtanh.pop %v408
  %v417 = vmul.f32 %v409, 0.5
  %v418 = vmul.f32 %v410, 0.5
  %v419 = vmul.f32 %v411, 0.5
  %v420 = vmul.f32 %v412, 0.5
  %v421 = vmul.f32 %v413, 0.5
  %v422 = vmul.f32 %v414, 0.5
  %v423 = vmul.f32 %v415, 0.5
  %v424 = vmul.f32 %v416, 0.5
  %v425 = vadd.f32 %v417, 0.5
  %v426 = vadd.f32 %v418, 0.5
  %v427 = vadd.f32 %v419, 0.5
  %v428 = vadd.f32 %v420, 0.5
  %v429 = vadd.f32 %v421, 0.5
  %v430 = vadd.f32 %v422, 0.5
  %v431 = vadd.f32 %v423, 0.5
  %v432 = vadd.f32 %v424, 0.5
  %v433 = vtanh.pop %v339
  %v434 = vtanh.pop %v343
  %v435 = vtanh.pop %v347
  %v436 = vtanh.pop %v351
  %v437 = vtanh.pop %v355
  %v438 = vtanh.pop %v359
  %v439 = vtanh.pop %v363
  %v440 = vtanh.pop %v367
  %v441 = vmul.f32 %v340, 0.5
  %v442 = vmul.f32 %v344, 0.5
  %v443 = vmul.f32 %v348, 0.5
  %v444 = vmul.f32 %v352, 0.5
  %v445 = vmul.f32 %v356, 0.5
  %v446 = vmul.f32 %v360, 0.5
  %v447 = vmul.f32 %v364, 0.5
  %v448 = vmul.f32 %v368, 0.5
  %v449 = vtanh.pop %v441
  %v450 = vtanh.pop %v442
  %v451 = vtanh.pop %v443
  %v452 = vtanh.pop %v444
  %v453 = vtanh.pop %v445
  %v454 = vtanh.pop %v446
  %v455 = vtanh.pop %v447
  %v456 = vtanh.pop %v448
  %v457 = vmul.f32 %v449, 0.5
  %v458 = vmul.f32 %v450, 0.5
  %v459 = vmul.f32 %v451, 0.5
  %v460 = vmul.f32 %v452, 0.5
  %v461 = vmul.f32 %v453, 0.5
  %v462 = vmul.f32 %v454, 0.5
  %v463 = vmul.f32 %v455, 0.5
  %v464 = vmul.f32 %v456, 0.5
  %v465 = vadd.f32 %v457, 0.5
  %v466 = vadd.f32 %v458, 0.5
  %v467 = vadd.f32 %v459, 0.5
  %v468 = vadd.f32 %v460, 0.5
  %v469 = vadd.f32 %v461, 0.5
  %v470 = vadd.f32 %v462, 0.5
  %v471 = vadd.f32 %v463, 0.5
  %v472 = vadd.f32 %v464, 0.5
  %v474 = vrot.slane %v82, 1
  %v475 = vrot.slane %v82, 2
  %v476 = vrot.slane %v82, 3
  %v477 = vrot.slane %v82, 4
  %v478 = vrot.slane %v82, 5
  %v479 = vrot.slane %v82, 6
  %v480 = vrot.slane %v82, 7
  %v489 = vmul.f32 %v425, %v82
  %v490 = vmul.f32 %v426, %v474
  %v491 = vmul.f32 %v427, %v475
  %v492 = vmul.f32 %v428, %v476
  %v493 = vmul.f32 %v429, %v477
  %v494 = vmul.f32 %v430, %v478
  %v495 = vmul.f32 %v431, %v479
  %v496 = vmul.f32 %v432, %v480
  %v497 = vmul.f32 %v393, %v433
  %v498 = vmul.f32 %v394, %v434
  %v499 = vmul.f32 %v395, %v435
  %v500 = vmul.f32 %v396, %v436
  %v501 = vmul.f32 %v397, %v437
  %v502 = vmul.f32 %v398, %v438
  %v503 = vmul.f32 %v399, %v439
  %v504 = vmul.f32 %v400, %v440
  %v505 = vadd.f32 %v489, %v497
  %v506 = vadd.f32 %v490, %v498
  %v507 = vadd.f32 %v491, %v499
  %v508 = vadd.f32 %v492, %v500
  %v509 = vadd.f32 %v493, %v501
  %v510 = vadd.f32 %v494, %v502
  %v511 = vadd.f32 %v495, %v503
  %v512 = vadd.f32 %v496, %v504
  %v513 = vtanh.pop %v505
  %v514 = vtanh.pop %v506
  %v515 = vtanh.pop %v507
  %v516 = vtanh.pop %v508
  %v517 = vtanh.pop %v509
  %v518 = vtanh.pop %v510
  %v519 = vtanh.pop %v511
  %v520 = vtanh.pop %v512
  %v521 = vmul.f32 %v465, %v513
  %v522 = vmul.f32 %v466, %v514
  %v523 = vmul.f32 %v467, %v515
  %v524 = vmul.f32 %v468, %v516
  %v525 = vmul.f32 %v469, %v517
  %v526 = vmul.f32 %v470, %v518
  %v527 = vmul.f32 %v471, %v519
  %v528 = vmul.f32 %v472, %v520
  %v537 = vrot.slane %v522, 7
  %vm538 = vcmask 1041409
  %v539 = vsel %vm538, %v537, %v521
  %v540 = vrot.slane %v523, 6
  %vm541 = vcmask 1042434
  %v542 = vsel %vm541, %v540, %v539
  %v543 = vrot.slane %v524, 5
  %vm544 = vcmask 1043459
  %v545 = vsel %vm544, %v543, %v542
  %v546 = vrot.slane %v525, 4
  %vm547 = vcmask 1044484
  %v548 = vsel %vm547, %v546, %v545
  %v549 = vrot.slane %v526, 3
  %vm550 = vcmask 1045509
  %v551 = vsel %vm550, %v549, %v548
  %v552 = vrot.slane %v527, 2
  %vm553 = vcmask 1046534
  %v554 = vsel %vm553, %v552, %v551
  %v555 = vrot.slane %v528, 1
  %vm556 = vcmask 1047559
  %v557 = vsel %vm556, %v555, %v554
  %559 = vst [vmem:[#allocation2] sm:$0xff] %v557
  %v568 = vrot.slane %v506, 7
  %v569 = vsel %vm538, %v568, %v505
  %v570 = vrot.slane %v507, 6
  %v571 = vsel %vm541, %v570, %v569
  %v572 = vrot.slane %v508, 5
  %v573 = vsel %vm544, %v572, %v571
  %v574 = vrot.slane %v509, 4
  %v575 = vsel %vm547, %v574, %v573
  %v576 = vrot.slane %v510, 3
  %v577 = vsel %vm550, %v576, %v575
  %v578 = vrot.slane %v511, 2
  %v579 = vsel %vm553, %v578, %v577
  %v580 = vrot.slane %v512, 1
  %v581 = vsel %vm556, %v580, %v579
  %583 = vst [vmem:[#allocation3] sm:$0xff] %v581
  %v584 = vpack.c.bf16 %v521, %v521
  %v585 = vpack.c.bf16 %v522, %v522
  %v586 = vpack.c.bf16 %v523, %v523
  %v587 = vpack.c.bf16 %v524, %v524
  %v588 = vpack.c.bf16 %v525, %v525
  %v589 = vpack.c.bf16 %v526, %v526
  %v590 = vpack.c.bf16 %v527, %v527
  %v591 = vpack.c.bf16 %v528, %v528
  %vm592 = vcmask 1040384
  %vm593 = vsmask.f32 256
  %vm594 = vmand %vm592, %vm593
  %v595 = vld [vmem:[%s2] sm:$0x1]
  %v596 = vsel %vm594, %v584, %v595
  %597 = vst [vmem:[%s2] sm:$0x1] %v596
  %v598 = vld [vmem:[%s2 + $0x8] sm:$0x1]
  %v599 = vsel %vm594, %v585, %v598
  %600 = vst [vmem:[%s2 + $0x8] sm:$0x1] %v599
  %v601 = vld [vmem:[%s2 + $0x10] sm:$0x1]
  %v602 = vsel %vm594, %v586, %v601
  %603 = vst [vmem:[%s2 + $0x10] sm:$0x1] %v602
  %v604 = vld [vmem:[%s2 + $0x18] sm:$0x1]
  %v605 = vsel %vm594, %v587, %v604
  %606 = vst [vmem:[%s2 + $0x18] sm:$0x1] %v605
  %v607 = vld [vmem:[%s2 + $0x20] sm:$0x1]
  %v608 = vsel %vm594, %v588, %v607
  %609 = vst [vmem:[%s2 + $0x20] sm:$0x1] %v608
  %v610 = vld [vmem:[%s2 + $0x28] sm:$0x1]
  %v611 = vsel %vm594, %v589, %v610
  %612 = vst [vmem:[%s2 + $0x28] sm:$0x1] %v611
  %v613 = vld [vmem:[%s2 + $0x30] sm:$0x1]
  %v614 = vsel %vm594, %v590, %v613
  %615 = vst [vmem:[%s2 + $0x30] sm:$0x1] %v614
  %v616 = vld [vmem:[%s2 + $0x38] sm:$0x1]
  %v617 = vsel %vm594, %v591, %v616
  %618 = vst [vmem:[%s2 + $0x38] sm:$0x1] %v617
  %v619 = vld [vmem:[#allocation2] sm:$0xff]
  %v620 = vld [vmem:[#allocation3] sm:$0xff]
  %v621 = vld [vmem:[%s0] sm:$0x11]
  %v622 = vld [vmem:[%s0 + $0x8] sm:$0x11]
  %v623 = vld [vmem:[%s0 + $0x20] sm:$0x11]
  %v624 = vld [vmem:[%s0 + $0x28] sm:$0x11]
  %v625 = vld [vmem:[%s0 + $0x40] sm:$0x11]
  %v626 = vld [vmem:[%s0 + $0x48] sm:$0x11]
  %v627 = vld [vmem:[%s0 + $0x60] sm:$0x11]
  %v628 = vld [vmem:[%s0 + $0x68] sm:$0x11]
  %v629 = vld [vmem:[%s0 + $0x80] sm:$0x11]
  %v630 = vld [vmem:[%s0 + $0x88] sm:$0x11]
  %v631 = vld [vmem:[%s0 + $0xa0] sm:$0x11]
  %v632 = vld [vmem:[%s0 + $0xa8] sm:$0x11]
  %v633 = vld [vmem:[%s0 + $0xc0] sm:$0x11]
  %v634 = vld [vmem:[%s0 + $0xc8] sm:$0x11]
  %v635 = vld [vmem:[%s0 + $0xe0] sm:$0x11]
  %v636 = vld [vmem:[%s0 + $0xe8] sm:$0x11]
  %v637 = vunpack.c.l.bf16 %v621
  %v638 = vunpack.c.h.bf16 %v621
  %v639 = vunpack.c.l.bf16 %v622
  %v640 = vunpack.c.h.bf16 %v622
  %v641 = vunpack.c.l.bf16 %v623
  %v642 = vunpack.c.h.bf16 %v623
  %v643 = vunpack.c.l.bf16 %v624
  %v644 = vunpack.c.h.bf16 %v624
  %v645 = vunpack.c.l.bf16 %v625
  %v646 = vunpack.c.h.bf16 %v625
  %v647 = vunpack.c.l.bf16 %v626
  %v648 = vunpack.c.h.bf16 %v626
  %v649 = vunpack.c.l.bf16 %v627
  %v650 = vunpack.c.h.bf16 %v627
  %v651 = vunpack.c.l.bf16 %v628
  %v652 = vunpack.c.h.bf16 %v628
  %v653 = vunpack.c.l.bf16 %v629
  %v654 = vunpack.c.h.bf16 %v629
  %v655 = vunpack.c.l.bf16 %v630
  %v656 = vunpack.c.h.bf16 %v630
  %v657 = vunpack.c.l.bf16 %v631
  %v658 = vunpack.c.h.bf16 %v631
  %v659 = vunpack.c.l.bf16 %v632
  %v660 = vunpack.c.h.bf16 %v632
  %v661 = vunpack.c.l.bf16 %v633
  %v662 = vunpack.c.h.bf16 %v633
  %v663 = vunpack.c.l.bf16 %v634
  %v664 = vunpack.c.h.bf16 %v634
  %v665 = vunpack.c.l.bf16 %v635
  %v666 = vunpack.c.h.bf16 %v635
  %v667 = vunpack.c.l.bf16 %v636
  %v668 = vunpack.c.h.bf16 %v636
  %669 = vmatprep.subr.mxu0 %v18
  %670 = vmatpush1.msra.mxu0 %v17
  %671 = vmatprep.subr.mxu0 %v22
  %672 = vmatpush1.msra.mxu0 %v21
  %673 = vmatprep.subr.mxu0 %v26
  %674 = vmatpush1.msra.mxu0 %v25
  %675 = vmatprep.subr.mxu0 %v30
  %676 = vmatpush1.msra.mxu0 %v29
  %677 = vmatprep.subr.mxu0 %v34
  %678 = vmatpush1.msra.mxu0 %v33
  %679 = vmatprep.subr.mxu0 %v38
  %680 = vmatpush1.msra.mxu0 %v37
  %681 = vmatprep.subr.mxu0 %v42
  %682 = vmatpush1.msra.mxu0 %v41
  %683 = vmatprep.subr.mxu0 %v46
  %684 = vmatpush1.msra.mxu0 %v45
  %685 = vmatprep.subr.mxu0 %v50
  %686 = vmatpush1.msra.mxu0 %v49
  %687 = vmatprep.subr.mxu0 %v54
  %688 = vmatpush1.msra.mxu0 %v53
  %689 = vmatprep.subr.mxu0 %v58
  %690 = vmatpush1.msra.mxu0 %v57
  %691 = vmatprep.subr.mxu0 %v62
  %692 = vmatpush1.msra.mxu0 %v61
  %693 = vmatprep.subr.mxu0 %v66
  %694 = vmatpush1.msra.mxu0 %v65
  %695 = vmatprep.subr.mxu0 %v70
  %696 = vmatpush1.msra.mxu0 %v69
  %697 = vmatprep.subr.mxu0 %v74
  %698 = vmatpush1.msra.mxu0 %v73
  %699 = vmatprep.subr.mxu0 %v78
  %700 = vmatpush1.msra.mxu0 %v77
  %701 = vmatprep.subr.mxu0 0.0
  %702 = vmatpush1.msra.mxu0 0.0
  %703 = vmatprep.subr.mxu0 0.0
  %704 = vmatpush1.msra.mxu0 0.0
  %705 = vmatprep.subr.mxu0 0.0
  %706 = vmatpush1.msra.mxu0 0.0
  %707 = vmatprep.subr.mxu0 0.0
  %708 = vmatpush1.msra.mxu0 0.0
  %709 = vmatprep.subr.mxu0 0.0
  %710 = vmatpush1.msra.mxu0 0.0
  %711 = vmatprep.subr.mxu0 0.0
  %712 = vmatpush1.msra.mxu0 0.0
  %713 = vmatprep.subr.mxu0 0.0
  %714 = vmatpush1.msra.mxu0 0.0
  %715 = vmatprep.subr.mxu0 0.0
  %716 = vmatpush1.msra.mxu0 0.0
  %717 = vmatprep.subr.mxu0 0.0
  %718 = vmatpush1.msra.mxu0 0.0
  %719 = vmatprep.subr.mxu0 0.0
  %720 = vmatpush1.msra.mxu0 0.0
  %721 = vmatprep.subr.mxu0 0.0
  %722 = vmatpush1.msra.mxu0 0.0
  %723 = vmatprep.subr.mxu0 0.0
  %724 = vmatpush1.msra.mxu0 0.0
  %725 = vmatprep.subr.mxu0 0.0
  %726 = vmatpush1.msra.mxu0 0.0
  %727 = vmatprep.subr.mxu0 0.0
  %728 = vmatpush1.msra.mxu0 0.0
  %729 = vmatprep.subr.mxu0 0.0
  %730 = vmatpush1.msra.mxu0 0.0
  %731 = vmatprep.subr.mxu0 0.0
  %732 = vmatpush1.msra.mxu0 0.0
  %733 = vmatprep.mubr.f32.mxu0 0.0
  %734 = vmatmul.mubr.f32.gmra.mrb[0].mxu0 %v619
  %v735 = vpop.f32.mrb[0].mxu0
  %v736 = vadd.f32 0.0, %v735
  %v737 = vpop.f32.mrb[0].mxu0
  %v738 = vadd.f32 0.0, %v737
  %739 = vdwg.mxu0
  %740 = vmatprep.subr.mxu0 %v20
  %741 = vmatpush1.msra.mxu0 %v19
  %742 = vmatprep.subr.mxu0 %v24
  %743 = vmatpush1.msra.mxu0 %v23
  %744 = vmatprep.subr.mxu0 %v28
  %745 = vmatpush1.msra.mxu0 %v27
  %746 = vmatprep.subr.mxu0 %v32
  %747 = vmatpush1.msra.mxu0 %v31
  %748 = vmatprep.subr.mxu0 %v36
  %749 = vmatpush1.msra.mxu0 %v35
  %750 = vmatprep.subr.mxu0 %v40
  %751 = vmatpush1.msra.mxu0 %v39
  %752 = vmatprep.subr.mxu0 %v44
  %753 = vmatpush1.msra.mxu0 %v43
  %754 = vmatprep.subr.mxu0 %v48
  %755 = vmatpush1.msra.mxu0 %v47
  %756 = vmatprep.subr.mxu0 %v52
  %757 = vmatpush1.msra.mxu0 %v51
  %758 = vmatprep.subr.mxu0 %v56
  %759 = vmatpush1.msra.mxu0 %v55
  %760 = vmatprep.subr.mxu0 %v60
  %761 = vmatpush1.msra.mxu0 %v59
  %762 = vmatprep.subr.mxu0 %v64
  %763 = vmatpush1.msra.mxu0 %v63
  %764 = vmatprep.subr.mxu0 %v68
  %765 = vmatpush1.msra.mxu0 %v67
  %766 = vmatprep.subr.mxu0 %v72
  %767 = vmatpush1.msra.mxu0 %v71
  %768 = vmatprep.subr.mxu0 %v76
  %769 = vmatpush1.msra.mxu0 %v75
  %770 = vmatprep.subr.mxu0 %v80
  %771 = vmatpush1.msra.mxu0 %v79
  %772 = vmatprep.subr.mxu0 0.0
  %773 = vmatpush1.msra.mxu0 0.0
  %774 = vmatprep.subr.mxu0 0.0
  %775 = vmatpush1.msra.mxu0 0.0
  %776 = vmatprep.subr.mxu0 0.0
  %777 = vmatpush1.msra.mxu0 0.0
  %778 = vmatprep.subr.mxu0 0.0
  %779 = vmatpush1.msra.mxu0 0.0
  %780 = vmatprep.subr.mxu0 0.0
  %781 = vmatpush1.msra.mxu0 0.0
  %782 = vmatprep.subr.mxu0 0.0
  %783 = vmatpush1.msra.mxu0 0.0
  %784 = vmatprep.subr.mxu0 0.0
  %785 = vmatpush1.msra.mxu0 0.0
  %786 = vmatprep.subr.mxu0 0.0
  %787 = vmatpush1.msra.mxu0 0.0
  %788 = vmatprep.subr.mxu0 0.0
  %789 = vmatpush1.msra.mxu0 0.0
  %790 = vmatprep.subr.mxu0 0.0
  %791 = vmatpush1.msra.mxu0 0.0
  %792 = vmatprep.subr.mxu0 0.0
  %793 = vmatpush1.msra.mxu0 0.0
  %794 = vmatprep.subr.mxu0 0.0
  %795 = vmatpush1.msra.mxu0 0.0
  %796 = vmatprep.subr.mxu0 0.0
  %797 = vmatpush1.msra.mxu0 0.0
  %798 = vmatprep.subr.mxu0 0.0
  %799 = vmatpush1.msra.mxu0 0.0
  %800 = vmatprep.subr.mxu0 0.0
  %801 = vmatpush1.msra.mxu0 0.0
  %802 = vmatprep.subr.mxu0 0.0
  %803 = vmatpush1.msra.mxu0 0.0
  %804 = vmatprep.mubr.f32.mxu0 0.0
  %805 = vmatmul.mubr.f32.gmra.mrb[0].mxu0 %v619
  %v806 = vpop.f32.mrb[0].mxu0
  %v807 = vadd.f32 0.0, %v806
  %v808 = vpop.f32.mrb[0].mxu0
  %v809 = vadd.f32 0.0, %v808
  %810 = vdwg.mxu0
  %v815 = vrot.slane %v736, 7
  %v816 = vrot.slane %v738, 7
  %v817 = vrot.slane %v807, 7
  %v818 = vrot.slane %v809, 7
  %v819 = vrot.slane %v736, 1
  %v820 = vrot.slane %v738, 1
  %v821 = vrot.slane %v807, 1
  %v822 = vrot.slane %v809, 1
  %v823 = vrot.slane %v736, 2
  %v824 = vrot.slane %v738, 2
  %v825 = vrot.slane %v807, 2
  %v826 = vrot.slane %v809, 2
  %v827 = vrot.slane %v736, 3
  %v828 = vrot.slane %v738, 3
  %v829 = vrot.slane %v807, 3
  %v830 = vrot.slane %v809, 3
  %v831 = vrot.slane %v736, 4
  %v832 = vrot.slane %v738, 4
  %v833 = vrot.slane %v807, 4
  %v834 = vrot.slane %v809, 4
  %v835 = vrot.slane %v736, 5
  %v836 = vrot.slane %v738, 5
  %v837 = vrot.slane %v807, 5
  %v838 = vrot.slane %v809, 5
  %v839 = vrot.slane %v736, 6
  %v840 = vrot.slane %v738, 6
  %v841 = vrot.slane %v807, 6
  %v842 = vrot.slane %v809, 6
  %v875 = vadd.f32 %v637, %v815
  %v876 = vadd.f32 %v638, %v816
  %v877 = vadd.f32 %v639, %v817
  %v878 = vadd.f32 %v640, %v818
  %v879 = vadd.f32 %v641, %v736
  %v880 = vadd.f32 %v642, %v738
  %v881 = vadd.f32 %v643, %v807
  %v882 = vadd.f32 %v644, %v809
  %v883 = vadd.f32 %v645, %v819
  %v884 = vadd.f32 %v646, %v820
  %v885 = vadd.f32 %v647, %v821
  %v886 = vadd.f32 %v648, %v822
  %v887 = vadd.f32 %v649, %v823
  %v888 = vadd.f32 %v650, %v824
  %v889 = vadd.f32 %v651, %v825
  %v890 = vadd.f32 %v652, %v826
  %v891 = vadd.f32 %v653, %v827
  %v892 = vadd.f32 %v654, %v828
  %v893 = vadd.f32 %v655, %v829
  %v894 = vadd.f32 %v656, %v830
  %v895 = vadd.f32 %v657, %v831
  %v896 = vadd.f32 %v658, %v832
  %v897 = vadd.f32 %v659, %v833
  %v898 = vadd.f32 %v660, %v834
  %v899 = vadd.f32 %v661, %v835
  %v900 = vadd.f32 %v662, %v836
  %v901 = vadd.f32 %v663, %v837
  %v902 = vadd.f32 %v664, %v838
  %v903 = vadd.f32 %v665, %v839
  %v904 = vadd.f32 %v666, %v840
  %v905 = vadd.f32 %v667, %v841
  %v906 = vadd.f32 %v668, %v842
  %v907 = vmul.f32 %v875, 0.5
  %v908 = vmul.f32 %v879, 0.5
  %v909 = vmul.f32 %v883, 0.5
  %v910 = vmul.f32 %v887, 0.5
  %v911 = vmul.f32 %v891, 0.5
  %v912 = vmul.f32 %v895, 0.5
  %v913 = vmul.f32 %v899, 0.5
  %v914 = vmul.f32 %v903, 0.5
  %v915 = vtanh.pop %v907
  %v916 = vtanh.pop %v908
  %v917 = vtanh.pop %v909
  %v918 = vtanh.pop %v910
  %v919 = vtanh.pop %v911
  %v920 = vtanh.pop %v912
  %v921 = vtanh.pop %v913
  %v922 = vtanh.pop %v914
  %v923 = vmul.f32 %v915, 0.5
  %v924 = vmul.f32 %v916, 0.5
  %v925 = vmul.f32 %v917, 0.5
  %v926 = vmul.f32 %v918, 0.5
  %v927 = vmul.f32 %v919, 0.5
  %v928 = vmul.f32 %v920, 0.5
  %v929 = vmul.f32 %v921, 0.5
  %v930 = vmul.f32 %v922, 0.5
  %v931 = vadd.f32 %v923, 0.5
  %v932 = vadd.f32 %v924, 0.5
  %v933 = vadd.f32 %v925, 0.5
  %v934 = vadd.f32 %v926, 0.5
  %v935 = vadd.f32 %v927, 0.5
  %v936 = vadd.f32 %v928, 0.5
  %v937 = vadd.f32 %v929, 0.5
  %v938 = vadd.f32 %v930, 0.5
  %v939 = vmul.f32 %v876, 0.5
  %v940 = vmul.f32 %v880, 0.5
  %v941 = vmul.f32 %v884, 0.5
  %v942 = vmul.f32 %v888, 0.5
  %v943 = vmul.f32 %v892, 0.5
  %v944 = vmul.f32 %v896, 0.5
  %v945 = vmul.f32 %v900, 0.5
  %v946 = vmul.f32 %v904, 0.5
  %v947 = vtanh.pop %v939
  %v948 = vtanh.pop %v940
  %v949 = vtanh.pop %v941
  %v950 = vtanh.pop %v942
  %v951 = vtanh.pop %v943
  %v952 = vtanh.pop %v944
  %v953 = vtanh.pop %v945
  %v954 = vtanh.pop %v946
  %v955 = vmul.f32 %v947, 0.5
  %v956 = vmul.f32 %v948, 0.5
  %v957 = vmul.f32 %v949, 0.5
  %v958 = vmul.f32 %v950, 0.5
  %v959 = vmul.f32 %v951, 0.5
  %v960 = vmul.f32 %v952, 0.5
  %v961 = vmul.f32 %v953, 0.5
  %v962 = vmul.f32 %v954, 0.5
  %v963 = vadd.f32 %v955, 0.5
  %v964 = vadd.f32 %v956, 0.5
  %v965 = vadd.f32 %v957, 0.5
  %v966 = vadd.f32 %v958, 0.5
  %v967 = vadd.f32 %v959, 0.5
  %v968 = vadd.f32 %v960, 0.5
  %v969 = vadd.f32 %v961, 0.5
  %v970 = vadd.f32 %v962, 0.5
  %v971 = vtanh.pop %v877
  %v972 = vtanh.pop %v881
  %v973 = vtanh.pop %v885
  %v974 = vtanh.pop %v889
  %v975 = vtanh.pop %v893
  %v976 = vtanh.pop %v897
  %v977 = vtanh.pop %v901
  %v978 = vtanh.pop %v905
  %v979 = vmul.f32 %v878, 0.5
  %v980 = vmul.f32 %v882, 0.5
  %v981 = vmul.f32 %v886, 0.5
  %v982 = vmul.f32 %v890, 0.5
  %v983 = vmul.f32 %v894, 0.5
  %v984 = vmul.f32 %v898, 0.5
  %v985 = vmul.f32 %v902, 0.5
  %v986 = vmul.f32 %v906, 0.5
  %v987 = vtanh.pop %v979
  %v988 = vtanh.pop %v980
  %v989 = vtanh.pop %v981
  %v990 = vtanh.pop %v982
  %v991 = vtanh.pop %v983
  %v992 = vtanh.pop %v984
  %v993 = vtanh.pop %v985
  %v994 = vtanh.pop %v986
  %v995 = vmul.f32 %v987, 0.5
  %v996 = vmul.f32 %v988, 0.5
  %v997 = vmul.f32 %v989, 0.5
  %v998 = vmul.f32 %v990, 0.5
  %v999 = vmul.f32 %v991, 0.5
  %v1000 = vmul.f32 %v992, 0.5
  %v1001 = vmul.f32 %v993, 0.5
  %v1002 = vmul.f32 %v994, 0.5
  %v1003 = vadd.f32 %v995, 0.5
  %v1004 = vadd.f32 %v996, 0.5
  %v1005 = vadd.f32 %v997, 0.5
  %v1006 = vadd.f32 %v998, 0.5
  %v1007 = vadd.f32 %v999, 0.5
  %v1008 = vadd.f32 %v1000, 0.5
  %v1009 = vadd.f32 %v1001, 0.5
  %v1010 = vadd.f32 %v1002, 0.5
  %v1012 = vrot.slane %v620, 7
  %v1013 = vrot.slane %v620, 1
  %v1014 = vrot.slane %v620, 2
  %v1015 = vrot.slane %v620, 3
  %v1016 = vrot.slane %v620, 4
  %v1017 = vrot.slane %v620, 5
  %v1018 = vrot.slane %v620, 6
  %v1027 = vmul.f32 %v963, %v1012
  %v1028 = vmul.f32 %v964, %v620
  %v1029 = vmul.f32 %v965, %v1013
  %v1030 = vmul.f32 %v966, %v1014
  %v1031 = vmul.f32 %v967, %v1015
  %v1032 = vmul.f32 %v968, %v1016
  %v1033 = vmul.f32 %v969, %v1017
  %v1034 = vmul.f32 %v970, %v1018
  %v1035 = vmul.f32 %v931, %v971
  %v1036 = vmul.f32 %v932, %v972
  %v1037 = vmul.f32 %v933, %v973
  %v1038 = vmul.f32 %v934, %v974
  %v1039 = vmul.f32 %v935, %v975
  %v1040 = vmul.f32 %v936, %v976
  %v1041 = vmul.f32 %v937, %v977
  %v1042 = vmul.f32 %v938, %v978
  %v1043 = vadd.f32 %v1027, %v1035
  %v1044 = vadd.f32 %v1028, %v1036
  %v1045 = vadd.f32 %v1029, %v1037
  %v1046 = vadd.f32 %v1030, %v1038
  %v1047 = vadd.f32 %v1031, %v1039
  %v1048 = vadd.f32 %v1032, %v1040
  %v1049 = vadd.f32 %v1033, %v1041
  %v1050 = vadd.f32 %v1034, %v1042
  %v1051 = vtanh.pop %v1043
  %v1052 = vtanh.pop %v1044
  %v1053 = vtanh.pop %v1045
  %v1054 = vtanh.pop %v1046
  %v1055 = vtanh.pop %v1047
  %v1056 = vtanh.pop %v1048
  %v1057 = vtanh.pop %v1049
  %v1058 = vtanh.pop %v1050
  %v1059 = vmul.f32 %v1003, %v1051
  %v1060 = vmul.f32 %v1004, %v1052
  %v1061 = vmul.f32 %v1005, %v1053
  %v1062 = vmul.f32 %v1006, %v1054
  %v1063 = vmul.f32 %v1007, %v1055
  %v1064 = vmul.f32 %v1008, %v1056
  %v1065 = vmul.f32 %v1009, %v1057
  %v1066 = vmul.f32 %v1010, %v1058
  %v1075 = vrot.slane %v1060, 7
  %v1076 = vsel %vm541, %v1075, %v1059
  %v1077 = vrot.slane %v1061, 6
  %v1078 = vsel %vm544, %v1077, %v1076
  %v1079 = vrot.slane %v1062, 5
  %v1080 = vsel %vm547, %v1079, %v1078
  %v1081 = vrot.slane %v1063, 4
  %v1082 = vsel %vm550, %v1081, %v1080
  %v1083 = vrot.slane %v1064, 3
  %v1084 = vsel %vm553, %v1083, %v1082
  %v1085 = vrot.slane %v1065, 2
  %v1086 = vsel %vm556, %v1085, %v1084
  %v1087 = vrot.slane %v1066, 1
  %1090 = vst [vmem:[#allocation2 - $0x1] sm:$0xfe] %v1086
  %1091 = vst [vmem:[#allocation2 + $0x7] sm:$0x1] %v1087
  %v1100 = vrot.slane %v1044, 7
  %v1101 = vsel %vm541, %v1100, %v1043
  %v1102 = vrot.slane %v1045, 6
  %v1103 = vsel %vm544, %v1102, %v1101
  %v1104 = vrot.slane %v1046, 5
  %v1105 = vsel %vm547, %v1104, %v1103
  %v1106 = vrot.slane %v1047, 4
  %v1107 = vsel %vm550, %v1106, %v1105
  %v1108 = vrot.slane %v1048, 3
  %v1109 = vsel %vm553, %v1108, %v1107
  %v1110 = vrot.slane %v1049, 2
  %v1111 = vsel %vm556, %v1110, %v1109
  %v1112 = vrot.slane %v1050, 1
  %1115 = vst [vmem:[#allocation3 - $0x1] sm:$0xfe] %v1111
  %1116 = vst [vmem:[#allocation3 + $0x7] sm:$0x1] %v1112
  %v1117 = vpack.c.bf16 %v1059, %v1059
  %v1118 = vpack.c.bf16 %v1060, %v1060
  %v1119 = vpack.c.bf16 %v1061, %v1061
  %v1120 = vpack.c.bf16 %v1062, %v1062
  %v1121 = vpack.c.bf16 %v1063, %v1063
  %v1122 = vpack.c.bf16 %v1064, %v1064
  %v1123 = vpack.c.bf16 %v1065, %v1065
  %v1124 = vpack.c.bf16 %v1066, %v1066
  %vm1125 = vsmask.f32 7938
  %vm1126 = vmand %vm592, %vm1125
  %v1127 = vld [vmem:[%s2] sm:$0x1]
  %v1128 = vsel %vm1126, %v1117, %v1127
  %1129 = vst [vmem:[%s2] sm:$0x1] %v1128
  %v1130 = vld [vmem:[%s2 + $0x8] sm:$0x1]
  %v1131 = vsel %vm1126, %v1118, %v1130
  %1132 = vst [vmem:[%s2 + $0x8] sm:$0x1] %v1131
  %v1133 = vld [vmem:[%s2 + $0x10] sm:$0x1]
  %v1134 = vsel %vm1126, %v1119, %v1133
  %1135 = vst [vmem:[%s2 + $0x10] sm:$0x1] %v1134
  %v1136 = vld [vmem:[%s2 + $0x18] sm:$0x1]
  %v1137 = vsel %vm1126, %v1120, %v1136
  %1138 = vst [vmem:[%s2 + $0x18] sm:$0x1] %v1137
  %v1139 = vld [vmem:[%s2 + $0x20] sm:$0x1]
  %v1140 = vsel %vm1126, %v1121, %v1139
  %1141 = vst [vmem:[%s2 + $0x20] sm:$0x1] %v1140
  %v1142 = vld [vmem:[%s2 + $0x28] sm:$0x1]
  %v1143 = vsel %vm1126, %v1122, %v1142
  %1144 = vst [vmem:[%s2 + $0x28] sm:$0x1] %v1143
  %v1145 = vld [vmem:[%s2 + $0x30] sm:$0x1]
  %v1146 = vsel %vm1126, %v1123, %v1145
  %1147 = vst [vmem:[%s2 + $0x30] sm:$0x1] %v1146
  %v1148 = vld [vmem:[%s2 + $0x38] sm:$0x1]
  %v1149 = vsel %vm1126, %v1124, %v1148
  %1150 = vst [vmem:[%s2 + $0x38] sm:$0x1] %v1149
  %v1151 = vld [vmem:[#allocation2] sm:$0xff]
  %v1152 = vld [vmem:[#allocation3] sm:$0xff]
  %v1153 = vld [vmem:[%s0] sm:$0x22]
  %v1154 = vld [vmem:[%s0 + $0x8] sm:$0x22]
  %v1155 = vld [vmem:[%s0 + $0x20] sm:$0x22]
  %v1156 = vld [vmem:[%s0 + $0x28] sm:$0x22]
  %v1157 = vld [vmem:[%s0 + $0x40] sm:$0x22]
  %v1158 = vld [vmem:[%s0 + $0x48] sm:$0x22]
  %v1159 = vld [vmem:[%s0 + $0x60] sm:$0x22]
  %v1160 = vld [vmem:[%s0 + $0x68] sm:$0x22]
  %v1161 = vld [vmem:[%s0 + $0x80] sm:$0x22]
  %v1162 = vld [vmem:[%s0 + $0x88] sm:$0x22]
  %v1163 = vld [vmem:[%s0 + $0xa0] sm:$0x22]
  %v1164 = vld [vmem:[%s0 + $0xa8] sm:$0x22]
  %v1165 = vld [vmem:[%s0 + $0xc0] sm:$0x22]
  %v1166 = vld [vmem:[%s0 + $0xc8] sm:$0x22]
  %v1167 = vld [vmem:[%s0 + $0xe0] sm:$0x22]
  %v1168 = vld [vmem:[%s0 + $0xe8] sm:$0x22]
  %v1169 = vunpack.c.l.bf16 %v1153
  %v1170 = vunpack.c.h.bf16 %v1153
  %v1171 = vunpack.c.l.bf16 %v1154
  %v1172 = vunpack.c.h.bf16 %v1154
  %v1173 = vunpack.c.l.bf16 %v1155
  %v1174 = vunpack.c.h.bf16 %v1155
  %v1175 = vunpack.c.l.bf16 %v1156
  %v1176 = vunpack.c.h.bf16 %v1156
  %v1177 = vunpack.c.l.bf16 %v1157
  %v1178 = vunpack.c.h.bf16 %v1157
  %v1179 = vunpack.c.l.bf16 %v1158
  %v1180 = vunpack.c.h.bf16 %v1158
  %v1181 = vunpack.c.l.bf16 %v1159
  %v1182 = vunpack.c.h.bf16 %v1159
  %v1183 = vunpack.c.l.bf16 %v1160
  %v1184 = vunpack.c.h.bf16 %v1160
  %v1185 = vunpack.c.l.bf16 %v1161
  %v1186 = vunpack.c.h.bf16 %v1161
  %v1187 = vunpack.c.l.bf16 %v1162
  %v1188 = vunpack.c.h.bf16 %v1162
  %v1189 = vunpack.c.l.bf16 %v1163
  %v1190 = vunpack.c.h.bf16 %v1163
  %v1191 = vunpack.c.l.bf16 %v1164
  %v1192 = vunpack.c.h.bf16 %v1164
  %v1193 = vunpack.c.l.bf16 %v1165
  %v1194 = vunpack.c.h.bf16 %v1165
  %v1195 = vunpack.c.l.bf16 %v1166
  %v1196 = vunpack.c.h.bf16 %v1166
  %v1197 = vunpack.c.l.bf16 %v1167
  %v1198 = vunpack.c.h.bf16 %v1167
  %v1199 = vunpack.c.l.bf16 %v1168
  %v1200 = vunpack.c.h.bf16 %v1168
  %1201 = vmatprep.subr.mxu0 %v18
  %1202 = vmatpush1.msra.mxu0 %v17
  %1203 = vmatprep.subr.mxu0 %v22
  %1204 = vmatpush1.msra.mxu0 %v21
  %1205 = vmatprep.subr.mxu0 %v26
  %1206 = vmatpush1.msra.mxu0 %v25
  %1207 = vmatprep.subr.mxu0 %v30
  %1208 = vmatpush1.msra.mxu0 %v29
  %1209 = vmatprep.subr.mxu0 %v34
  %1210 = vmatpush1.msra.mxu0 %v33
  %1211 = vmatprep.subr.mxu0 %v38
  %1212 = vmatpush1.msra.mxu0 %v37
  %1213 = vmatprep.subr.mxu0 %v42
  %1214 = vmatpush1.msra.mxu0 %v41
  %1215 = vmatprep.subr.mxu0 %v46
  %1216 = vmatpush1.msra.mxu0 %v45
  %1217 = vmatprep.subr.mxu0 %v50
  %1218 = vmatpush1.msra.mxu0 %v49
  %1219 = vmatprep.subr.mxu0 %v54
  %1220 = vmatpush1.msra.mxu0 %v53
  %1221 = vmatprep.subr.mxu0 %v58
  %1222 = vmatpush1.msra.mxu0 %v57
  %1223 = vmatprep.subr.mxu0 %v62
  %1224 = vmatpush1.msra.mxu0 %v61
  %1225 = vmatprep.subr.mxu0 %v66
  %1226 = vmatpush1.msra.mxu0 %v65
  %1227 = vmatprep.subr.mxu0 %v70
  %1228 = vmatpush1.msra.mxu0 %v69
  %1229 = vmatprep.subr.mxu0 %v74
  %1230 = vmatpush1.msra.mxu0 %v73
  %1231 = vmatprep.subr.mxu0 %v78
  %1232 = vmatpush1.msra.mxu0 %v77
  %1233 = vmatprep.subr.mxu0 0.0
  %1234 = vmatpush1.msra.mxu0 0.0
  %1235 = vmatprep.subr.mxu0 0.0
  %1236 = vmatpush1.msra.mxu0 0.0
  %1237 = vmatprep.subr.mxu0 0.0
  %1238 = vmatpush1.msra.mxu0 0.0
  %1239 = vmatprep.subr.mxu0 0.0
  %1240 = vmatpush1.msra.mxu0 0.0
  %1241 = vmatprep.subr.mxu0 0.0
  %1242 = vmatpush1.msra.mxu0 0.0
  %1243 = vmatprep.subr.mxu0 0.0
  %1244 = vmatpush1.msra.mxu0 0.0
  %1245 = vmatprep.subr.mxu0 0.0
  %1246 = vmatpush1.msra.mxu0 0.0
  %1247 = vmatprep.subr.mxu0 0.0
  %1248 = vmatpush1.msra.mxu0 0.0
  %1249 = vmatprep.subr.mxu0 0.0
  %1250 = vmatpush1.msra.mxu0 0.0
  %1251 = vmatprep.subr.mxu0 0.0
  %1252 = vmatpush1.msra.mxu0 0.0
  %1253 = vmatprep.subr.mxu0 0.0
  %1254 = vmatpush1.msra.mxu0 0.0
  %1255 = vmatprep.subr.mxu0 0.0
  %1256 = vmatpush1.msra.mxu0 0.0
  %1257 = vmatprep.subr.mxu0 0.0
  %1258 = vmatpush1.msra.mxu0 0.0
  %1259 = vmatprep.subr.mxu0 0.0
  %1260 = vmatpush1.msra.mxu0 0.0
  %1261 = vmatprep.subr.mxu0 0.0
  %1262 = vmatpush1.msra.mxu0 0.0
  %1263 = vmatprep.subr.mxu0 0.0
  %1264 = vmatpush1.msra.mxu0 0.0
  %1265 = vmatprep.mubr.f32.mxu0 0.0
  %1266 = vmatmul.mubr.f32.gmra.mrb[0].mxu0 %v1151
  %v1267 = vpop.f32.mrb[0].mxu0
  %v1268 = vadd.f32 0.0, %v1267
  %v1269 = vpop.f32.mrb[0].mxu0
  %v1270 = vadd.f32 0.0, %v1269
  %1271 = vdwg.mxu0
  %1272 = vmatprep.subr.mxu0 %v20
  %1273 = vmatpush1.msra.mxu0 %v19
  %1274 = vmatprep.subr.mxu0 %v24
  %1275 = vmatpush1.msra.mxu0 %v23
  %1276 = vmatprep.subr.mxu0 %v28
  %1277 = vmatpush1.msra.mxu0 %v27
  %1278 = vmatprep.subr.mxu0 %v32
  %1279 = vmatpush1.msra.mxu0 %v31
  %1280 = vmatprep.subr.mxu0 %v36
  %1281 = vmatpush1.msra.mxu0 %v35
  %1282 = vmatprep.subr.mxu0 %v40
  %1283 = vmatpush1.msra.mxu0 %v39
  %1284 = vmatprep.subr.mxu0 %v44
  %1285 = vmatpush1.msra.mxu0 %v43
  %1286 = vmatprep.subr.mxu0 %v48
  %1287 = vmatpush1.msra.mxu0 %v47
  %1288 = vmatprep.subr.mxu0 %v52
  %1289 = vmatpush1.msra.mxu0 %v51
  %1290 = vmatprep.subr.mxu0 %v56
  %1291 = vmatpush1.msra.mxu0 %v55
  %1292 = vmatprep.subr.mxu0 %v60
  %1293 = vmatpush1.msra.mxu0 %v59
  %1294 = vmatprep.subr.mxu0 %v64
  %1295 = vmatpush1.msra.mxu0 %v63
  %1296 = vmatprep.subr.mxu0 %v68
  %1297 = vmatpush1.msra.mxu0 %v67
  %1298 = vmatprep.subr.mxu0 %v72
  %1299 = vmatpush1.msra.mxu0 %v71
  %1300 = vmatprep.subr.mxu0 %v76
  %1301 = vmatpush1.msra.mxu0 %v75
  %1302 = vmatprep.subr.mxu0 %v80
  %1303 = vmatpush1.msra.mxu0 %v79
  %1304 = vmatprep.subr.mxu0 0.0
  %1305 = vmatpush1.msra.mxu0 0.0
  %1306 = vmatprep.subr.mxu0 0.0
  %1307 = vmatpush1.msra.mxu0 0.0
  %1308 = vmatprep.subr.mxu0 0.0
  %1309 = vmatpush1.msra.mxu0 0.0
  %1310 = vmatprep.subr.mxu0 0.0
  %1311 = vmatpush1.msra.mxu0 0.0
  %1312 = vmatprep.subr.mxu0 0.0
  %1313 = vmatpush1.msra.mxu0 0.0
  %1314 = vmatprep.subr.mxu0 0.0
  %1315 = vmatpush1.msra.mxu0 0.0
  %1316 = vmatprep.subr.mxu0 0.0
  %1317 = vmatpush1.msra.mxu0 0.0
  %1318 = vmatprep.subr.mxu0 0.0
  %1319 = vmatpush1.msra.mxu0 0.0
  %1320 = vmatprep.subr.mxu0 0.0
  %1321 = vmatpush1.msra.mxu0 0.0
  %1322 = vmatprep.subr.mxu0 0.0
  %1323 = vmatpush1.msra.mxu0 0.0
  %1324 = vmatprep.subr.mxu0 0.0
  %1325 = vmatpush1.msra.mxu0 0.0
  %1326 = vmatprep.subr.mxu0 0.0
  %1327 = vmatpush1.msra.mxu0 0.0
  %1328 = vmatprep.subr.mxu0 0.0
  %1329 = vmatpush1.msra.mxu0 0.0
  %1330 = vmatprep.subr.mxu0 0.0
  %1331 = vmatpush1.msra.mxu0 0.0
  %1332 = vmatprep.subr.mxu0 0.0
  %1333 = vmatpush1.msra.mxu0 0.0
  %1334 = vmatprep.subr.mxu0 0.0
  %1335 = vmatpush1.msra.mxu0 0.0
  %1336 = vmatprep.mubr.f32.mxu0 0.0
  %1337 = vmatmul.mubr.f32.gmra.mrb[0].mxu0 %v1151
  %v1338 = vpop.f32.mrb[0].mxu0
  %v1339 = vadd.f32 0.0, %v1338
  %v1340 = vpop.f32.mrb[0].mxu0
  %v1341 = vadd.f32 0.0, %v1340
  %1342 = vdwg.mxu0
  %v1347 = vrot.slane %v1268, 6
  %v1348 = vrot.slane %v1270, 6
  %v1349 = vrot.slane %v1339, 6
  %v1350 = vrot.slane %v1341, 6
  %v1351 = vrot.slane %v1268, 7
  %v1352 = vrot.slane %v1270, 7
  %v1353 = vrot.slane %v1339, 7
  %v1354 = vrot.slane %v1341, 7
  %v1355 = vrot.slane %v1268, 1
  %v1356 = vrot.slane %v1270, 1
  %v1357 = vrot.slane %v1339, 1
  %v1358 = vrot.slane %v1341, 1
  %v1359 = vrot.slane %v1268, 2
  %v1360 = vrot.slane %v1270, 2
  %v1361 = vrot.slane %v1339, 2
  %v1362 = vrot.slane %v1341, 2
  %v1363 = vrot.slane %v1268, 3
  %v1364 = vrot.slane %v1270, 3
  %v1365 = vrot.slane %v1339, 3
  %v1366 = vrot.slane %v1341, 3
  %v1367 = vrot.slane %v1268, 4
  %v1368 = vrot.slane %v1270, 4
  %v1369 = vrot.slane %v1339, 4
  %v1370 = vrot.slane %v1341, 4
  %v1371 = vrot.slane %v1268, 5
  %v1372 = vrot.slane %v1270, 5
  %v1373 = vrot.slane %v1339, 5
  %v1374 = vrot.slane %v1341, 5
  %v1407 = vadd.f32 %v1169, %v1347
  %v1408 = vadd.f32 %v1170, %v1348
  %v1409 = vadd.f32 %v1171, %v1349
  %v1410 = vadd.f32 %v1172, %v1350
  %v1411 = vadd.f32 %v1173, %v1351
  %v1412 = vadd.f32 %v1174, %v1352
  %v1413 = vadd.f32 %v1175, %v1353
  %v1414 = vadd.f32 %v1176, %v1354
  %v1415 = vadd.f32 %v1177, %v1268
  %v1416 = vadd.f32 %v1178, %v1270
  %v1417 = vadd.f32 %v1179, %v1339
  %v1418 = vadd.f32 %v1180, %v1341
  %v1419 = vadd.f32 %v1181, %v1355
  %v1420 = vadd.f32 %v1182, %v1356
  %v1421 = vadd.f32 %v1183, %v1357
  %v1422 = vadd.f32 %v1184, %v1358
  %v1423 = vadd.f32 %v1185, %v1359
  %v1424 = vadd.f32 %v1186, %v1360
  %v1425 = vadd.f32 %v1187, %v1361
  %v1426 = vadd.f32 %v1188, %v1362
  %v1427 = vadd.f32 %v1189, %v1363
  %v1428 = vadd.f32 %v1190, %v1364
  %v1429 = vadd.f32 %v1191, %v1365
  %v1430 = vadd.f32 %v1192, %v1366
  %v1431 = vadd.f32 %v1193, %v1367
  %v1432 = vadd.f32 %v1194, %v1368
  %v1433 = vadd.f32 %v1195, %v1369
  %v1434 = vadd.f32 %v1196, %v1370
  %v1435 = vadd.f32 %v1197, %v1371
  %v1436 = vadd.f32 %v1198, %v1372
  %v1437 = vadd.f32 %v1199, %v1373
  %v1438 = vadd.f32 %v1200, %v1374
  %v1439 = vmul.f32 %v1407, 0.5
  %v1440 = vmul.f32 %v1411, 0.5
  %v1441 = vmul.f32 %v1415, 0.5
  %v1442 = vmul.f32 %v1419, 0.5
  %v1443 = vmul.f32 %v1423, 0.5
  %v1444 = vmul.f32 %v1427, 0.5
  %v1445 = vmul.f32 %v1431, 0.5
  %v1446 = vmul.f32 %v1435, 0.5
  %v1447 = vtanh.pop %v1439
  %v1448 = vtanh.pop %v1440
  %v1449 = vtanh.pop %v1441
  %v1450 = vtanh.pop %v1442
  %v1451 = vtanh.pop %v1443
  %v1452 = vtanh.pop %v1444
  %v1453 = vtanh.pop %v1445
  %v1454 = vtanh.pop %v1446
  %v1455 = vmul.f32 %v1447, 0.5
  %v1456 = vmul.f32 %v1448, 0.5
  %v1457 = vmul.f32 %v1449, 0.5
  %v1458 = vmul.f32 %v1450, 0.5
  %v1459 = vmul.f32 %v1451, 0.5
  %v1460 = vmul.f32 %v1452, 0.5
  %v1461 = vmul.f32 %v1453, 0.5
  %v1462 = vmul.f32 %v1454, 0.5
  %v1463 = vadd.f32 %v1455, 0.5
  %v1464 = vadd.f32 %v1456, 0.5
  %v1465 = vadd.f32 %v1457, 0.5
  %v1466 = vadd.f32 %v1458, 0.5
  %v1467 = vadd.f32 %v1459, 0.5
  %v1468 = vadd.f32 %v1460, 0.5
  %v1469 = vadd.f32 %v1461, 0.5
  %v1470 = vadd.f32 %v1462, 0.5
  %v1471 = vmul.f32 %v1408, 0.5
  %v1472 = vmul.f32 %v1412, 0.5
  %v1473 = vmul.f32 %v1416, 0.5
  %v1474 = vmul.f32 %v1420, 0.5
  %v1475 = vmul.f32 %v1424, 0.5
  %v1476 = vmul.f32 %v1428, 0.5
  %v1477 = vmul.f32 %v1432, 0.5
  %v1478 = vmul.f32 %v1436, 0.5
  %v1479 = vtanh.pop %v1471
  %v1480 = vtanh.pop %v1472
  %v1481 = vtanh.pop %v1473
  %v1482 = vtanh.pop %v1474
  %v1483 = vtanh.pop %v1475
  %v1484 = vtanh.pop %v1476
  %v1485 = vtanh.pop %v1477
  %v1486 = vtanh.pop %v1478
  %v1487 = vmul.f32 %v1479, 0.5
  %v1488 = vmul.f32 %v1480, 0.5
  %v1489 = vmul.f32 %v1481, 0.5
  %v1490 = vmul.f32 %v1482, 0.5
  %v1491 = vmul.f32 %v1483, 0.5
  %v1492 = vmul.f32 %v1484, 0.5
  %v1493 = vmul.f32 %v1485, 0.5
  %v1494 = vmul.f32 %v1486, 0.5
  %v1495 = vadd.f32 %v1487, 0.5
  %v1496 = vadd.f32 %v1488, 0.5
  %v1497 = vadd.f32 %v1489, 0.5
  %v1498 = vadd.f32 %v1490, 0.5
  %v1499 = vadd.f32 %v1491, 0.5
  %v1500 = vadd.f32 %v1492, 0.5
  %v1501 = vadd.f32 %v1493, 0.5
  %v1502 = vadd.f32 %v1494, 0.5
  %v1503 = vtanh.pop %v1409
  %v1504 = vtanh.pop %v1413
  %v1505 = vtanh.pop %v1417
  %v1506 = vtanh.pop %v1421
  %v1507 = vtanh.pop %v1425
  %v1508 = vtanh.pop %v1429
  %v1509 = vtanh.pop %v1433
  %v1510 = vtanh.pop %v1437
  %v1511 = vmul.f32 %v1410, 0.5
  %v1512 = vmul.f32 %v1414, 0.5
  %v1513 = vmul.f32 %v1418, 0.5
  %v1514 = vmul.f32 %v1422, 0.5
  %v1515 = vmul.f32 %v1426, 0.5
  %v1516 = vmul.f32 %v1430, 0.5
  %v1517 = vmul.f32 %v1434, 0.5
  %v1518 = vmul.f32 %v1438, 0.5
  %v1519 = vtanh.pop %v1511
  %v1520 = vtanh.pop %v1512
  %v1521 = vtanh.pop %v1513
  %v1522 = vtanh.pop %v1514
  %v1523 = vtanh.pop %v1515
  %v1524 = vtanh.pop %v1516
  %v1525 = vtanh.pop %v1517
  %v1526 = vtanh.pop %v1518
  %v1527 = vmul.f32 %v1519, 0.5
  %v1528 = vmul.f32 %v1520, 0.5
  %v1529 = vmul.f32 %v1521, 0.5
  %v1530 = vmul.f32 %v1522, 0.5
  %v1531 = vmul.f32 %v1523, 0.5
  %v1532 = vmul.f32 %v1524, 0.5
  %v1533 = vmul.f32 %v1525, 0.5
  %v1534 = vmul.f32 %v1526, 0.5
  %v1535 = vadd.f32 %v1527, 0.5
  %v1536 = vadd.f32 %v1528, 0.5
  %v1537 = vadd.f32 %v1529, 0.5
  %v1538 = vadd.f32 %v1530, 0.5
  %v1539 = vadd.f32 %v1531, 0.5
  %v1540 = vadd.f32 %v1532, 0.5
  %v1541 = vadd.f32 %v1533, 0.5
  %v1542 = vadd.f32 %v1534, 0.5
  %v1544 = vrot.slane %v1152, 6
  %v1545 = vrot.slane %v1152, 7
  %v1546 = vrot.slane %v1152, 1
  %v1547 = vrot.slane %v1152, 2
  %v1548 = vrot.slane %v1152, 3
  %v1549 = vrot.slane %v1152, 4
  %v1550 = vrot.slane %v1152, 5
  %v1559 = vmul.f32 %v1495, %v1544
  %v1560 = vmul.f32 %v1496, %v1545
  %v1561 = vmul.f32 %v1497, %v1152
  %v1562 = vmul.f32 %v1498, %v1546
  %v1563 = vmul.f32 %v1499, %v1547
  %v1564 = vmul.f32 %v1500, %v1548
  %v1565 = vmul.f32 %v1501, %v1549
  %v1566 = vmul.f32 %v1502, %v1550
  %v1567 = vmul.f32 %v1463, %v1503
  %v1568 = vmul.f32 %v1464, %v1504
  %v1569 = vmul.f32 %v1465, %v1505
  %v1570 = vmul.f32 %v1466, %v1506
  %v1571 = vmul.f32 %v1467, %v1507
  %v1572 = vmul.f32 %v1468, %v1508
  %v1573 = vmul.f32 %v1469, %v1509
  %v1574 = vmul.f32 %v1470, %v1510
  %v1575 = vadd.f32 %v1559, %v1567
  %v1576 = vadd.f32 %v1560, %v1568
  %v1577 = vadd.f32 %v1561, %v1569
  %v1578 = vadd.f32 %v1562, %v1570
  %v1579 = vadd.f32 %v1563, %v1571
  %v1580 = vadd.f32 %v1564, %v1572
  %v1581 = vadd.f32 %v1565, %v1573
  %v1582 = vadd.f32 %v1566, %v1574
  %v1583 = vtanh.pop %v1575
  %v1584 = vtanh.pop %v1576
  %v1585 = vtanh.pop %v1577
  %v1586 = vtanh.pop %v1578
  %v1587 = vtanh.pop %v1579
  %v1588 = vtanh.pop %v1580
  %v1589 = vtanh.pop %v1581
  %v1590 = vtanh.pop %v1582
  %v1591 = vmul.f32 %v1535, %v1583
  %v1592 = vmul.f32 %v1536, %v1584
  %v1593 = vmul.f32 %v1537, %v1585
  %v1594 = vmul.f32 %v1538, %v1586
  %v1595 = vmul.f32 %v1539, %v1587
  %v1596 = vmul.f32 %v1540, %v1588
  %v1597 = vmul.f32 %v1541, %v1589
  %v1598 = vmul.f32 %v1542, %v1590
  %v1607 = vrot.slane %v1592, 7
  %v1608 = vsel %vm544, %v1607, %v1591
  %v1609 = vrot.slane %v1593, 6
  %v1610 = vsel %vm547, %v1609, %v1608
  %v1611 = vrot.slane %v1594, 5
  %v1612 = vsel %vm550, %v1611, %v1610
  %v1613 = vrot.slane %v1595, 4
  %v1614 = vsel %vm553, %v1613, %v1612
  %v1615 = vrot.slane %v1596, 3
  %v1616 = vsel %vm556, %v1615, %v1614
  %v1617 = vrot.slane %v1597, 2
  %v1618 = vrot.slane %v1598, 1
  %v1619 = vsel %vm538, %v1618, %v1617
  %1622 = vst [vmem:[#allocation2 - $0x2] sm:$0xfc] %v1616
  %1623 = vst [vmem:[#allocation2 + $0x6] sm:$0x3] %v1619
  %v1632 = vrot.slane %v1576, 7
  %v1633 = vsel %vm544, %v1632, %v1575
  %v1634 = vrot.slane %v1577, 6
  %v1635 = vsel %vm547, %v1634, %v1633
  %v1636 = vrot.slane %v1578, 5
  %v1637 = vsel %vm550, %v1636, %v1635
  %v1638 = vrot.slane %v1579, 4
  %v1639 = vsel %vm553, %v1638, %v1637
  %v1640 = vrot.slane %v1580, 3
  %v1641 = vsel %vm556, %v1640, %v1639
  %v1642 = vrot.slane %v1581, 2
  %v1643 = vrot.slane %v1582, 1
  %v1644 = vsel %vm538, %v1643, %v1642
  %1647 = vst [vmem:[#allocation3 - $0x2] sm:$0xfc] %v1641
  %1648 = vst [vmem:[#allocation3 + $0x6] sm:$0x3] %v1644
  %v1649 = vpack.c.bf16 %v1591, %v1591
  %v1650 = vpack.c.bf16 %v1592, %v1592
  %v1651 = vpack.c.bf16 %v1593, %v1593
  %v1652 = vpack.c.bf16 %v1594, %v1594
  %v1653 = vpack.c.bf16 %v1595, %v1595
  %v1654 = vpack.c.bf16 %v1596, %v1596
  %v1655 = vpack.c.bf16 %v1597, %v1597
  %v1656 = vpack.c.bf16 %v1598, %v1598
  %vm1657 = vcmask 1041409
  %vm1658 = vsmask.f32 1280
  %vm1659 = vmand %vm1657, %vm1658
  %v1660 = vld [vmem:[%s2] sm:$0x2]
  %v1661 = vsel %vm1659, %v1649, %v1660
  %1662 = vst [vmem:[%s2] sm:$0x2] %v1661
  %v1663 = vld [vmem:[%s2 + $0x8] sm:$0x2]
  %v1664 = vsel %vm1659, %v1650, %v1663
  %1665 = vst [vmem:[%s2 + $0x8] sm:$0x2] %v1664
  %v1666 = vld [vmem:[%s2 + $0x10] sm:$0x2]
  %v1667 = vsel %vm1659, %v1651, %v1666
  %1668 = vst [vmem:[%s2 + $0x10] sm:$0x2] %v1667
  %v1669 = vld [vmem:[%s2 + $0x18] sm:$0x2]
  %v1670 = vsel %vm1659, %v1652, %v1669
  %1671 = vst [vmem:[%s2 + $0x18] sm:$0x2] %v1670
  %v1672 = vld [vmem:[%s2 + $0x20] sm:$0x2]
  %v1673 = vsel %vm1659, %v1653, %v1672
  %1674 = vst [vmem:[%s2 + $0x20] sm:$0x2] %v1673
  %v1675 = vld [vmem:[%s2 + $0x28] sm:$0x2]
  %v1676 = vsel %vm1659, %v1654, %v1675
  %1677 = vst [vmem:[%s2 + $0x28] sm:$0x2] %v1676
  %v1678 = vld [vmem:[%s2 + $0x30] sm:$0x2]
  %v1679 = vsel %vm1659, %v1655, %v1678
  %1680 = vst [vmem:[%s2 + $0x30] sm:$0x2] %v1679
  %v1681 = vld [vmem:[%s2 + $0x38] sm:$0x2]
  %v1682 = vsel %vm1659, %v1656, %v1681
  %1683 = vst [vmem:[%s2 + $0x38] sm:$0x2] %v1682
  %v1684 = vld [vmem:[#allocation2] sm:$0xff]
  %v1685 = vld [vmem:[#allocation3] sm:$0xff]
  %v1686 = vld [vmem:[%s0] sm:$0x22]
  %v1687 = vld [vmem:[%s0 + $0x8] sm:$0x22]
  %v1688 = vld [vmem:[%s0 + $0x20] sm:$0x22]
  %v1689 = vld [vmem:[%s0 + $0x28] sm:$0x22]
  %v1690 = vld [vmem:[%s0 + $0x40] sm:$0x22]
  %v1691 = vld [vmem:[%s0 + $0x48] sm:$0x22]
  %v1692 = vld [vmem:[%s0 + $0x60] sm:$0x22]
  %v1693 = vld [vmem:[%s0 + $0x68] sm:$0x22]
  %v1694 = vld [vmem:[%s0 + $0x80] sm:$0x22]
  %v1695 = vld [vmem:[%s0 + $0x88] sm:$0x22]
  %v1696 = vld [vmem:[%s0 + $0xa0] sm:$0x22]
  %v1697 = vld [vmem:[%s0 + $0xa8] sm:$0x22]
  %v1698 = vld [vmem:[%s0 + $0xc0] sm:$0x22]
  %v1699 = vld [vmem:[%s0 + $0xc8] sm:$0x22]
  %v1700 = vld [vmem:[%s0 + $0xe0] sm:$0x22]
  %v1701 = vld [vmem:[%s0 + $0xe8] sm:$0x22]
  %v1702 = vunpack.c.l.bf16 %v1686
  %v1703 = vunpack.c.h.bf16 %v1686
  %v1704 = vunpack.c.l.bf16 %v1687
  %v1705 = vunpack.c.h.bf16 %v1687
  %v1706 = vunpack.c.l.bf16 %v1688
  %v1707 = vunpack.c.h.bf16 %v1688
  %v1708 = vunpack.c.l.bf16 %v1689
  %v1709 = vunpack.c.h.bf16 %v1689
  %v1710 = vunpack.c.l.bf16 %v1690
  %v1711 = vunpack.c.h.bf16 %v1690
  %v1712 = vunpack.c.l.bf16 %v1691
  %v1713 = vunpack.c.h.bf16 %v1691
  %v1714 = vunpack.c.l.bf16 %v1692
  %v1715 = vunpack.c.h.bf16 %v1692
  %v1716 = vunpack.c.l.bf16 %v1693
  %v1717 = vunpack.c.h.bf16 %v1693
  %v1718 = vunpack.c.l.bf16 %v1694
  %v1719 = vunpack.c.h.bf16 %v1694
  %v1720 = vunpack.c.l.bf16 %v1695
  %v1721 = vunpack.c.h.bf16 %v1695
  %v1722 = vunpack.c.l.bf16 %v1696
  %v1723 = vunpack.c.h.bf16 %v1696
  %v1724 = vunpack.c.l.bf16 %v1697
  %v1725 = vunpack.c.h.bf16 %v1697
  %v1726 = vunpack.c.l.bf16 %v1698
  %v1727 = vunpack.c.h.bf16 %v1698
  %v1728 = vunpack.c.l.bf16 %v1699
  %v1729 = vunpack.c.h.bf16 %v1699
  %v1730 = vunpack.c.l.bf16 %v1700
  %v1731 = vunpack.c.h.bf16 %v1700
  %v1732 = vunpack.c.l.bf16 %v1701
  %v1733 = vunpack.c.h.bf16 %v1701
  %1734 = vmatprep.subr.mxu0 %v18
  %1735 = vmatpush1.msra.mxu0 %v17
  %1736 = vmatprep.subr.mxu0 %v22
  %1737 = vmatpush1.msra.mxu0 %v21
  %1738 = vmatprep.subr.mxu0 %v26
  %1739 = vmatpush1.msra.mxu0 %v25
  %1740 = vmatprep.subr.mxu0 %v30
  %1741 = vmatpush1.msra.mxu0 %v29
  %1742 = vmatprep.subr.mxu0 %v34
  %1743 = vmatpush1.msra.mxu0 %v33
  %1744 = vmatprep.subr.mxu0 %v38
  %1745 = vmatpush1.msra.mxu0 %v37
  %1746 = vmatprep.subr.mxu0 %v42
  %1747 = vmatpush1.msra.mxu0 %v41
  %1748 = vmatprep.subr.mxu0 %v46
  %1749 = vmatpush1.msra.mxu0 %v45
  %1750 = vmatprep.subr.mxu0 %v50
  %1751 = vmatpush1.msra.mxu0 %v49
  %1752 = vmatprep.subr.mxu0 %v54
  %1753 = vmatpush1.msra.mxu0 %v53
  %1754 = vmatprep.subr.mxu0 %v58
  %1755 = vmatpush1.msra.mxu0 %v57
  %1756 = vmatprep.subr.mxu0 %v62
  %1757 = vmatpush1.msra.mxu0 %v61
  %1758 = vmatprep.subr.mxu0 %v66
  %1759 = vmatpush1.msra.mxu0 %v65
  %1760 = vmatprep.subr.mxu0 %v70
  %1761 = vmatpush1.msra.mxu0 %v69
  %1762 = vmatprep.subr.mxu0 %v74
  %1763 = vmatpush1.msra.mxu0 %v73
  %1764 = vmatprep.subr.mxu0 %v78
  %1765 = vmatpush1.msra.mxu0 %v77
  %1766 = vmatprep.subr.mxu0 0.0
  %1767 = vmatpush1.msra.mxu0 0.0
  %1768 = vmatprep.subr.mxu0 0.0
  %1769 = vmatpush1.msra.mxu0 0.0
  %1770 = vmatprep.subr.mxu0 0.0
  %1771 = vmatpush1.msra.mxu0 0.0
  %1772 = vmatprep.subr.mxu0 0.0
  %1773 = vmatpush1.msra.mxu0 0.0
  %1774 = vmatprep.subr.mxu0 0.0
  %1775 = vmatpush1.msra.mxu0 0.0
  %1776 = vmatprep.subr.mxu0 0.0
  %1777 = vmatpush1.msra.mxu0 0.0
  %1778 = vmatprep.subr.mxu0 0.0
  %1779 = vmatpush1.msra.mxu0 0.0
  %1780 = vmatprep.subr.mxu0 0.0
  %1781 = vmatpush1.msra.mxu0 0.0
  %1782 = vmatprep.subr.mxu0 0.0
  %1783 = vmatpush1.msra.mxu0 0.0
  %1784 = vmatprep.subr.mxu0 0.0
  %1785 = vmatpush1.msra.mxu0 0.0
  %1786 = vmatprep.subr.mxu0 0.0
  %1787 = vmatpush1.msra.mxu0 0.0
  %1788 = vmatprep.subr.mxu0 0.0
  %1789 = vmatpush1.msra.mxu0 0.0
  %1790 = vmatprep.subr.mxu0 0.0
  %1791 = vmatpush1.msra.mxu0 0.0
  %1792 = vmatprep.subr.mxu0 0.0
  %1793 = vmatpush1.msra.mxu0 0.0
  %1794 = vmatprep.subr.mxu0 0.0
  %1795 = vmatpush1.msra.mxu0 0.0
  %1796 = vmatprep.subr.mxu0 0.0
  %1797 = vmatpush1.msra.mxu0 0.0
  %1798 = vmatprep.mubr.f32.mxu0 0.0
  %1799 = vmatmul.mubr.f32.gmra.mrb[0].mxu0 %v1684
  %v1800 = vpop.f32.mrb[0].mxu0
  %v1801 = vadd.f32 0.0, %v1800
  %v1802 = vpop.f32.mrb[0].mxu0
  %v1803 = vadd.f32 0.0, %v1802
  %1804 = vdwg.mxu0
  %1805 = vmatprep.subr.mxu0 %v20
  %1806 = vmatpush1.msra.mxu0 %v19
  %1807 = vmatprep.subr.mxu0 %v24
  %1808 = vmatpush1.msra.mxu0 %v23
  %1809 = vmatprep.subr.mxu0 %v28
  %1810 = vmatpush1.msra.mxu0 %v27
  %1811 = vmatprep.subr.mxu0 %v32
  %1812 = vmatpush1.msra.mxu0 %v31
  %1813 = vmatprep.subr.mxu0 %v36
  %1814 = vmatpush1.msra.mxu0 %v35
  %1815 = vmatprep.subr.mxu0 %v40
  %1816 = vmatpush1.msra.mxu0 %v39
  %1817 = vmatprep.subr.mxu0 %v44
  %1818 = vmatpush1.msra.mxu0 %v43
  %1819 = vmatprep.subr.mxu0 %v48
  %1820 = vmatpush1.msra.mxu0 %v47
  %1821 = vmatprep.subr.mxu0 %v52
  %1822 = vmatpush1.msra.mxu0 %v51
  %1823 = vmatprep.subr.mxu0 %v56
  %1824 = vmatpush1.msra.mxu0 %v55
  %1825 = vmatprep.subr.mxu0 %v60
  %1826 = vmatpush1.msra.mxu0 %v59
  %1827 = vmatprep.subr.mxu0 %v64
  %1828 = vmatpush1.msra.mxu0 %v63
  %1829 = vmatprep.subr.mxu0 %v68
  %1830 = vmatpush1.msra.mxu0 %v67
  %1831 = vmatprep.subr.mxu0 %v72
  %1832 = vmatpush1.msra.mxu0 %v71
  %1833 = vmatprep.subr.mxu0 %v76
  %1834 = vmatpush1.msra.mxu0 %v75
  %1835 = vmatprep.subr.mxu0 %v80
  %1836 = vmatpush1.msra.mxu0 %v79
  %1837 = vmatprep.subr.mxu0 0.0
  %1838 = vmatpush1.msra.mxu0 0.0
  %1839 = vmatprep.subr.mxu0 0.0
  %1840 = vmatpush1.msra.mxu0 0.0
  %1841 = vmatprep.subr.mxu0 0.0
  %1842 = vmatpush1.msra.mxu0 0.0
  %1843 = vmatprep.subr.mxu0 0.0
  %1844 = vmatpush1.msra.mxu0 0.0
  %1845 = vmatprep.subr.mxu0 0.0
  %1846 = vmatpush1.msra.mxu0 0.0
  %1847 = vmatprep.subr.mxu0 0.0
  %1848 = vmatpush1.msra.mxu0 0.0
  %1849 = vmatprep.subr.mxu0 0.0
  %1850 = vmatpush1.msra.mxu0 0.0
  %1851 = vmatprep.subr.mxu0 0.0
  %1852 = vmatpush1.msra.mxu0 0.0
  %1853 = vmatprep.subr.mxu0 0.0
  %1854 = vmatpush1.msra.mxu0 0.0
  %1855 = vmatprep.subr.mxu0 0.0
  %1856 = vmatpush1.msra.mxu0 0.0
  %1857 = vmatprep.subr.mxu0 0.0
  %1858 = vmatpush1.msra.mxu0 0.0
  %1859 = vmatprep.subr.mxu0 0.0
  %1860 = vmatpush1.msra.mxu0 0.0
  %1861 = vmatprep.subr.mxu0 0.0
  %1862 = vmatpush1.msra.mxu0 0.0
  %1863 = vmatprep.subr.mxu0 0.0
  %1864 = vmatpush1.msra.mxu0 0.0
  %1865 = vmatprep.subr.mxu0 0.0
  %1866 = vmatpush1.msra.mxu0 0.0
  %1867 = vmatprep.subr.mxu0 0.0
  %1868 = vmatpush1.msra.mxu0 0.0
  %1869 = vmatprep.mubr.f32.mxu0 0.0
  %1870 = vmatmul.mubr.f32.gmra.mrb[0].mxu0 %v1684
  %v1871 = vpop.f32.mrb[0].mxu0
  %v1872 = vadd.f32 0.0, %v1871
  %v1873 = vpop.f32.mrb[0].mxu0
  %v1874 = vadd.f32 0.0, %v1873
  %1875 = vdwg.mxu0
  %v1880 = vrot.slane %v1801, 5
  %v1881 = vrot.slane %v1803, 5
  %v1882 = vrot.slane %v1872, 5
  %v1883 = vrot.slane %v1874, 5
  %v1884 = vrot.slane %v1801, 6
  %v1885 = vrot.slane %v1803, 6
  %v1886 = vrot.slane %v1872, 6
  %v1887 = vrot.slane %v1874, 6
  %v1888 = vrot.slane %v1801, 7
  %v1889 = vrot.slane %v1803, 7
  %v1890 = vrot.slane %v1872, 7
  %v1891 = vrot.slane %v1874, 7
  %v1892 = vrot.slane %v1801, 1
  %v1893 = vrot.slane %v1803, 1
  %v1894 = vrot.slane %v1872, 1
  %v1895 = vrot.slane %v1874, 1
  %v1896 = vrot.slane %v1801, 2
  %v1897 = vrot.slane %v1803, 2
  %v1898 = vrot.slane %v1872, 2
  %v1899 = vrot.slane %v1874, 2
  %v1900 = vrot.slane %v1801, 3
  %v1901 = vrot.slane %v1803, 3
  %v1902 = vrot.slane %v1872, 3
  %v1903 = vrot.slane %v1874, 3
  %v1904 = vrot.slane %v1801, 4
  %v1905 = vrot.slane %v1803, 4
  %v1906 = vrot.slane %v1872, 4
  %v1907 = vrot.slane %v1874, 4
  %v1940 = vadd.f32 %v1702, %v1880
  %v1941 = vadd.f32 %v1703, %v1881
  %v1942 = vadd.f32 %v1704, %v1882
  %v1943 = vadd.f32 %v1705, %v1883
  %v1944 = vadd.f32 %v1706, %v1884
  %v1945 = vadd.f32 %v1707, %v1885
  %v1946 = vadd.f32 %v1708, %v1886
  %v1947 = vadd.f32 %v1709, %v1887
  %v1948 = vadd.f32 %v1710, %v1888
  %v1949 = vadd.f32 %v1711, %v1889
  %v1950 = vadd.f32 %v1712, %v1890
  %v1951 = vadd.f32 %v1713, %v1891
  %v1952 = vadd.f32 %v1714, %v1801
  %v1953 = vadd.f32 %v1715, %v1803
  %v1954 = vadd.f32 %v1716, %v1872
  %v1955 = vadd.f32 %v1717, %v1874
  %v1956 = vadd.f32 %v1718, %v1892
  %v1957 = vadd.f32 %v1719, %v1893
  %v1958 = vadd.f32 %v1720, %v1894
  %v1959 = vadd.f32 %v1721, %v1895
  %v1960 = vadd.f32 %v1722, %v1896
  %v1961 = vadd.f32 %v1723, %v1897
  %v1962 = vadd.f32 %v1724, %v1898
  %v1963 = vadd.f32 %v1725, %v1899
  %v1964 = vadd.f32 %v1726, %v1900
  %v1965 = vadd.f32 %v1727, %v1901
  %v1966 = vadd.f32 %v1728, %v1902
  %v1967 = vadd.f32 %v1729, %v1903
  %v1968 = vadd.f32 %v1730, %v1904
  %v1969 = vadd.f32 %v1731, %v1905
  %v1970 = vadd.f32 %v1732, %v1906
  %v1971 = vadd.f32 %v1733, %v1907
  %v1972 = vmul.f32 %v1940, 0.5
  %v1973 = vmul.f32 %v1944, 0.5
  %v1974 = vmul.f32 %v1948, 0.5
  %v1975 = vmul.f32 %v1952, 0.5
  %v1976 = vmul.f32 %v1956, 0.5
  %v1977 = vmul.f32 %v1960, 0.5
  %v1978 = vmul.f32 %v1964, 0.5
  %v1979 = vmul.f32 %v1968, 0.5
  %v1980 = vtanh.pop %v1972
  %v1981 = vtanh.pop %v1973
  %v1982 = vtanh.pop %v1974
  %v1983 = vtanh.pop %v1975
  %v1984 = vtanh.pop %v1976
  %v1985 = vtanh.pop %v1977
  %v1986 = vtanh.pop %v1978
  %v1987 = vtanh.pop %v1979
  %v1988 = vmul.f32 %v1980, 0.5
  %v1989 = vmul.f32 %v1981, 0.5
  %v1990 = vmul.f32 %v1982, 0.5
  %v1991 = vmul.f32 %v1983, 0.5
  %v1992 = vmul.f32 %v1984, 0.5
  %v1993 = vmul.f32 %v1985, 0.5
  %v1994 = vmul.f32 %v1986, 0.5
  %v1995 = vmul.f32 %v1987, 0.5
  %v1996 = vadd.f32 %v1988, 0.5
  %v1997 = vadd.f32 %v1989, 0.5
  %v1998 = vadd.f32 %v1990, 0.5
  %v1999 = vadd.f32 %v1991, 0.5
  %v2000 = vadd.f32 %v1992, 0.5
  %v2001 = vadd.f32 %v1993, 0.5
  %v2002 = vadd.f32 %v1994, 0.5
  %v2003 = vadd.f32 %v1995, 0.5
  %v2004 = vmul.f32 %v1941, 0.5
  %v2005 = vmul.f32 %v1945, 0.5
  %v2006 = vmul.f32 %v1949, 0.5
  %v2007 = vmul.f32 %v1953, 0.5
  %v2008 = vmul.f32 %v1957, 0.5
  %v2009 = vmul.f32 %v1961, 0.5
  %v2010 = vmul.f32 %v1965, 0.5
  %v2011 = vmul.f32 %v1969, 0.5
  %v2012 = vtanh.pop %v2004
  %v2013 = vtanh.pop %v2005
  %v2014 = vtanh.pop %v2006
  %v2015 = vtanh.pop %v2007
  %v2016 = vtanh.pop %v2008
  %v2017 = vtanh.pop %v2009
  %v2018 = vtanh.pop %v2010
  %v2019 = vtanh.pop %v2011
  %v2020 = vmul.f32 %v2012, 0.5
  %v2021 = vmul.f32 %v2013, 0.5
  %v2022 = vmul.f32 %v2014, 0.5
  %v2023 = vmul.f32 %v2015, 0.5
  %v2024 = vmul.f32 %v2016, 0.5
  %v2025 = vmul.f32 %v2017, 0.5
  %v2026 = vmul.f32 %v2018, 0.5
  %v2027 = vmul.f32 %v2019, 0.5
  %v2028 = vadd.f32 %v2020, 0.5
  %v2029 = vadd.f32 %v2021, 0.5
  %v2030 = vadd.f32 %v2022, 0.5
  %v2031 = vadd.f32 %v2023, 0.5
  %v2032 = vadd.f32 %v2024, 0.5
  %v2033 = vadd.f32 %v2025, 0.5
  %v2034 = vadd.f32 %v2026, 0.5
  %v2035 = vadd.f32 %v2027, 0.5
  %v2036 = vtanh.pop %v1942
  %v2037 = vtanh.pop %v1946
  %v2038 = vtanh.pop %v1950
  %v2039 = vtanh.pop %v1954
  %v2040 = vtanh.pop %v1958
  %v2041 = vtanh.pop %v1962
  %v2042 = vtanh.pop %v1966
  %v2043 = vtanh.pop %v1970
  %v2044 = vmul.f32 %v1943, 0.5
  %v2045 = vmul.f32 %v1947, 0.5
  %v2046 = vmul.f32 %v1951, 0.5
  %v2047 = vmul.f32 %v1955, 0.5
  %v2048 = vmul.f32 %v1959, 0.5
  %v2049 = vmul.f32 %v1963, 0.5
  %v2050 = vmul.f32 %v1967, 0.5
  %v2051 = vmul.f32 %v1971, 0.5
  %v2052 = vtanh.pop %v2044
  %v2053 = vtanh.pop %v2045
  %v2054 = vtanh.pop %v2046
  %v2055 = vtanh.pop %v2047
  %v2056 = vtanh.pop %v2048
  %v2057 = vtanh.pop %v2049
  %v2058 = vtanh.pop %v2050
  %v2059 = vtanh.pop %v2051
  %v2060 = vmul.f32 %v2052, 0.5
  %v2061 = vmul.f32 %v2053, 0.5
  %v2062 = vmul.f32 %v2054, 0.5
  %v2063 = vmul.f32 %v2055, 0.5
  %v2064 = vmul.f32 %v2056, 0.5
  %v2065 = vmul.f32 %v2057, 0.5
  %v2066 = vmul.f32 %v2058, 0.5
  %v2067 = vmul.f32 %v2059, 0.5
  %v2068 = vadd.f32 %v2060, 0.5
  %v2069 = vadd.f32 %v2061, 0.5
  %v2070 = vadd.f32 %v2062, 0.5
  %v2071 = vadd.f32 %v2063, 0.5
  %v2072 = vadd.f32 %v2064, 0.5
  %v2073 = vadd.f32 %v2065, 0.5
  %v2074 = vadd.f32 %v2066, 0.5
  %v2075 = vadd.f32 %v2067, 0.5
  %v2077 = vrot.slane %v1685, 5
  %v2078 = vrot.slane %v1685, 6
  %v2079 = vrot.slane %v1685, 7
  %v2080 = vrot.slane %v1685, 1
  %v2081 = vrot.slane %v1685, 2
  %v2082 = vrot.slane %v1685, 3
  %v2083 = vrot.slane %v1685, 4
  %v2092 = vmul.f32 %v2028, %v2077
  %v2093 = vmul.f32 %v2029, %v2078
  %v2094 = vmul.f32 %v2030, %v2079
  %v2095 = vmul.f32 %v2031, %v1685
  %v2096 = vmul.f32 %v2032, %v2080
  %v2097 = vmul.f32 %v2033, %v2081
  %v2098 = vmul.f32 %v2034, %v2082
  %v2099 = vmul.f32 %v2035, %v2083
  %v2100 = vmul.f32 %v1996, %v2036
  %v2101 = vmul.f32 %v1997, %v2037
  %v2102 = vmul.f32 %v1998, %v2038
  %v2103 = vmul.f32 %v1999, %v2039
  %v2104 = vmul.f32 %v2000, %v2040
  %v2105 = vmul.f32 %v2001, %v2041
  %v2106 = vmul.f32 %v2002, %v2042
  %v2107 = vmul.f32 %v2003, %v2043
  %v2108 = vadd.f32 %v2092, %v2100
  %v2109 = vadd.f32 %v2093, %v2101
  %v2110 = vadd.f32 %v2094, %v2102
  %v2111 = vadd.f32 %v2095, %v2103
  %v2112 = vadd.f32 %v2096, %v2104
  %v2113 = vadd.f32 %v2097, %v2105
  %v2114 = vadd.f32 %v2098, %v2106
  %v2115 = vadd.f32 %v2099, %v2107
  %v2116 = vtanh.pop %v2108
  %v2117 = vtanh.pop %v2109
  %v2118 = vtanh.pop %v2110
  %v2119 = vtanh.pop %v2111
  %v2120 = vtanh.pop %v2112
  %v2121 = vtanh.pop %v2113
  %v2122 = vtanh.pop %v2114
  %v2123 = vtanh.pop %v2115
  %v2124 = vmul.f32 %v2068, %v2116
  %v2125 = vmul.f32 %v2069, %v2117
  %v2126 = vmul.f32 %v2070, %v2118
  %v2127 = vmul.f32 %v2071, %v2119
  %v2128 = vmul.f32 %v2072, %v2120
  %v2129 = vmul.f32 %v2073, %v2121
  %v2130 = vmul.f32 %v2074, %v2122
  %v2131 = vmul.f32 %v2075, %v2123
  %v2140 = vrot.slane %v2125, 7
  %v2141 = vsel %vm547, %v2140, %v2124
  %v2142 = vrot.slane %v2126, 6
  %v2143 = vsel %vm550, %v2142, %v2141
  %v2144 = vrot.slane %v2127, 5
  %v2145 = vsel %vm553, %v2144, %v2143
  %v2146 = vrot.slane %v2128, 4
  %v2147 = vsel %vm556, %v2146, %v2145
  %v2148 = vrot.slane %v2129, 3
  %v2149 = vrot.slane %v2130, 2
  %v2150 = vsel %vm538, %v2149, %v2148
  %v2151 = vrot.slane %v2131, 1
  %v2152 = vsel %vm541, %v2151, %v2150
  %2155 = vst [vmem:[#allocation2 - $0x3] sm:$0xf8] %v2147
  %2156 = vst [vmem:[#allocation2 + $0x5] sm:$0x7] %v2152
  %v2165 = vrot.slane %v2109, 7
  %v2166 = vsel %vm547, %v2165, %v2108
  %v2167 = vrot.slane %v2110, 6
  %v2168 = vsel %vm550, %v2167, %v2166
  %v2169 = vrot.slane %v2111, 5
  %v2170 = vsel %vm553, %v2169, %v2168
  %v2171 = vrot.slane %v2112, 4
  %v2172 = vsel %vm556, %v2171, %v2170
  %v2173 = vrot.slane %v2113, 3
  %v2174 = vrot.slane %v2114, 2
  %v2175 = vsel %vm538, %v2174, %v2173
  %v2176 = vrot.slane %v2115, 1
  %v2177 = vsel %vm541, %v2176, %v2175
  %2180 = vst [vmem:[#allocation3 - $0x3] sm:$0xf8] %v2172
  %2181 = vst [vmem:[#allocation3 + $0x5] sm:$0x7] %v2177
  %v2182 = vpack.c.bf16 %v2124, %v2124
  %v2183 = vpack.c.bf16 %v2125, %v2125
  %v2184 = vpack.c.bf16 %v2126, %v2126
  %v2185 = vpack.c.bf16 %v2127, %v2127
  %v2186 = vpack.c.bf16 %v2128, %v2128
  %v2187 = vpack.c.bf16 %v2129, %v2129
  %v2188 = vpack.c.bf16 %v2130, %v2130
  %v2189 = vpack.c.bf16 %v2131, %v2131
  %vm2190 = vsmask.f32 7942
  %vm2191 = vmand %vm1657, %vm2190
  %v2192 = vld [vmem:[%s2] sm:$0x2]
  %v2193 = vsel %vm2191, %v2182, %v2192
  %2194 = vst [vmem:[%s2] sm:$0x2] %v2193
  %v2195 = vld [vmem:[%s2 + $0x8] sm:$0x2]
  %v2196 = vsel %vm2191, %v2183, %v2195
  %2197 = vst [vmem:[%s2 + $0x8] sm:$0x2] %v2196
  %v2198 = vld [vmem:[%s2 + $0x10] sm:$0x2]
  %v2199 = vsel %vm2191, %v2184, %v2198
  %2200 = vst [vmem:[%s2 + $0x10] sm:$0x2] %v2199
  %v2201 = vld [vmem:[%s2 + $0x18] sm:$0x2]
  %v2202 = vsel %vm2191, %v2185, %v2201
  %2203 = vst [vmem:[%s2 + $0x18] sm:$0x2] %v2202
  %v2204 = vld [vmem:[%s2 + $0x20] sm:$0x2]
  %v2205 = vsel %vm2191, %v2186, %v2204
  %2206 = vst [vmem:[%s2 + $0x20] sm:$0x2] %v2205
  %v2207 = vld [vmem:[%s2 + $0x28] sm:$0x2]
  %v2208 = vsel %vm2191, %v2187, %v2207
  %2209 = vst [vmem:[%s2 + $0x28] sm:$0x2] %v2208
  %v2210 = vld [vmem:[%s2 + $0x30] sm:$0x2]
  %v2211 = vsel %vm2191, %v2188, %v2210
  %2212 = vst [vmem:[%s2 + $0x30] sm:$0x2] %v2211
  %v2213 = vld [vmem:[%s2 + $0x38] sm:$0x2]
  %v2214 = vsel %vm2191, %v2189, %v2213
  %2215 = vst [vmem:[%s2 + $0x38] sm:$0x2] %v2214
  %v2216 = vld [vmem:[#allocation2] sm:$0xff]
  %v2217 = vld [vmem:[#allocation3] sm:$0xff]
  %v2218 = vld [vmem:[%s0] sm:$0x44]
  %v2219 = vld [vmem:[%s0 + $0x8] sm:$0x44]
  %v2220 = vld [vmem:[%s0 + $0x20] sm:$0x44]
  %v2221 = vld [vmem:[%s0 + $0x28] sm:$0x44]
  %v2222 = vld [vmem:[%s0 + $0x40] sm:$0x44]
  %v2223 = vld [vmem:[%s0 + $0x48] sm:$0x44]
  %v2224 = vld [vmem:[%s0 + $0x60] sm:$0x44]
  %v2225 = vld [vmem:[%s0 + $0x68] sm:$0x44]
  %v2226 = vld [vmem:[%s0 + $0x80] sm:$0x44]
  %v2227 = vld [vmem:[%s0 + $0x88] sm:$0x44]
  %v2228 = vld [vmem:[%s0 + $0xa0] sm:$0x44]
  %v2229 = vld [vmem:[%s0 + $0xa8] sm:$0x44]
  %v2230 = vld [vmem:[%s0 + $0xc0] sm:$0x44]
  %v2231 = vld [vmem:[%s0 + $0xc8] sm:$0x44]
  %v2232 = vld [vmem:[%s0 + $0xe0] sm:$0x44]
  %v2233 = vld [vmem:[%s0 + $0xe8] sm:$0x44]
  %v2234 = vunpack.c.l.bf16 %v2218
  %v2235 = vunpack.c.h.bf16 %v2218
  %v2236 = vunpack.c.l.bf16 %v2219
  %v2237 = vunpack.c.h.bf16 %v2219
  %v2238 = vunpack.c.l.bf16 %v2220
  %v2239 = vunpack.c.h.bf16 %v2220
  %v2240 = vunpack.c.l.bf16 %v2221
  %v2241 = vunpack.c.h.bf16 %v2221
  %v2242 = vunpack.c.l.bf16 %v2222
  %v2243 = vunpack.c.h.bf16 %v2222
  %v2244 = vunpack.c.l.bf16 %v2223
  %v2245 = vunpack.c.h.bf16 %v2223
  %v2246 = vunpack.c.l.bf16 %v2224
  %v2247 = vunpack.c.h.bf16 %v2224
  %v2248 = vunpack.c.l.bf16 %v2225
  %v2249 = vunpack.c.h.bf16 %v2225
  %v2250 = vunpack.c.l.bf16 %v2226
  %v2251 = vunpack.c.h.bf16 %v2226
  %v2252 = vunpack.c.l.bf16 %v2227
  %v2253 = vunpack.c.h.bf16 %v2227
  %v2254 = vunpack.c.l.bf16 %v2228
  %v2255 = vunpack.c.h.bf16 %v2228
  %v2256 = vunpack.c.l.bf16 %v2229
  %v2257 = vunpack.c.h.bf16 %v2229
  %v2258 = vunpack.c.l.bf16 %v2230
  %v2259 = vunpack.c.h.bf16 %v2230
  %v2260 = vunpack.c.l.bf16 %v2231
  %v2261 = vunpack.c.h.bf16 %v2231
  %v2262 = vunpack.c.l.bf16 %v2232
  %v2263 = vunpack.c.h.bf16 %v2232
  %v2264 = vunpack.c.l.bf16 %v2233
  %v2265 = vunpack.c.h.bf16 %v2233
  %2266 = vmatprep.subr.mxu0 %v18
  %2267 = vmatpush1.msra.mxu0 %v17
  %2268 = vmatprep.subr.mxu0 %v22
  %2269 = vmatpush1.msra.mxu0 %v21
  %2270 = vmatprep.subr.mxu0 %v26
  %2271 = vmatpush1.msra.mxu0 %v25
  %2272 = vmatprep.subr.mxu0 %v30
  %2273 = vmatpush1.msra.mxu0 %v29
  %2274 = vmatprep.subr.mxu0 %v34
  %2275 = vmatpush1.msra.mxu0 %v33
  %2276 = vmatprep.subr.mxu0 %v38
  %2277 = vmatpush1.msra.mxu0 %v37
  %2278 = vmatprep.subr.mxu0 %v42
  %2279 = vmatpush1.msra.mxu0 %v41
  %2280 = vmatprep.subr.mxu0 %v46
  %2281 = vmatpush1.msra.mxu0 %v45
  %2282 = vmatprep.subr.mxu0 %v50
  %2283 = vmatpush1.msra.mxu0 %v49
  %2284 = vmatprep.subr.mxu0 %v54
  %2285 = vmatpush1.msra.mxu0 %v53
  %2286 = vmatprep.subr.mxu0 %v58
  %2287 = vmatpush1.msra.mxu0 %v57
  %2288 = vmatprep.subr.mxu0 %v62
  %2289 = vmatpush1.msra.mxu0 %v61
  %2290 = vmatprep.subr.mxu0 %v66
  %2291 = vmatpush1.msra.mxu0 %v65
  %2292 = vmatprep.subr.mxu0 %v70
  %2293 = vmatpush1.msra.mxu0 %v69
  %2294 = vmatprep.subr.mxu0 %v74
  %2295 = vmatpush1.msra.mxu0 %v73
  %2296 = vmatprep.subr.mxu0 %v78
  %2297 = vmatpush1.msra.mxu0 %v77
  %2298 = vmatprep.subr.mxu0 0.0
  %2299 = vmatpush1.msra.mxu0 0.0
  %2300 = vmatprep.subr.mxu0 0.0
  %2301 = vmatpush1.msra.mxu0 0.0
  %2302 = vmatprep.subr.mxu0 0.0
  %2303 = vmatpush1.msra.mxu0 0.0
  %2304 = vmatprep.subr.mxu0 0.0
  %2305 = vmatpush1.msra.mxu0 0.0
  %2306 = vmatprep.subr.mxu0 0.0
  %2307 = vmatpush1.msra.mxu0 0.0
  %2308 = vmatprep.subr.mxu0 0.0
  %2309 = vmatpush1.msra.mxu0 0.0
  %2310 = vmatprep.subr.mxu0 0.0
  %2311 = vmatpush1.msra.mxu0 0.0
  %2312 = vmatprep.subr.mxu0 0.0
  %2313 = vmatpush1.msra.mxu0 0.0
  %2314 = vmatprep.subr.mxu0 0.0
  %2315 = vmatpush1.msra.mxu0 0.0
  %2316 = vmatprep.subr.mxu0 0.0
  %2317 = vmatpush1.msra.mxu0 0.0
  %2318 = vmatprep.subr.mxu0 0.0
  %2319 = vmatpush1.msra.mxu0 0.0
  %2320 = vmatprep.subr.mxu0 0.0
  %2321 = vmatpush1.msra.mxu0 0.0
  %2322 = vmatprep.subr.mxu0 0.0
  %2323 = vmatpush1.msra.mxu0 0.0
  %2324 = vmatprep.subr.mxu0 0.0
  %2325 = vmatpush1.msra.mxu0 0.0
  %2326 = vmatprep.subr.mxu0 0.0
  %2327 = vmatpush1.msra.mxu0 0.0
  %2328 = vmatprep.subr.mxu0 0.0
  %2329 = vmatpush1.msra.mxu0 0.0
  %2330 = vmatprep.mubr.f32.mxu0 0.0
  %2331 = vmatmul.mubr.f32.gmra.mrb[0].mxu0 %v2216
  %v2332 = vpop.f32.mrb[0].mxu0
  %v2333 = vadd.f32 0.0, %v2332
  %v2334 = vpop.f32.mrb[0].mxu0
  %v2335 = vadd.f32 0.0, %v2334
  %2336 = vdwg.mxu0
  %2337 = vmatprep.subr.mxu0 %v20
  %2338 = vmatpush1.msra.mxu0 %v19
  %2339 = vmatprep.subr.mxu0 %v24
  %2340 = vmatpush1.msra.mxu0 %v23
  %2341 = vmatprep.subr.mxu0 %v28
  %2342 = vmatpush1.msra.mxu0 %v27
  %2343 = vmatprep.subr.mxu0 %v32
  %2344 = vmatpush1.msra.mxu0 %v31
  %2345 = vmatprep.subr.mxu0 %v36
  %2346 = vmatpush1.msra.mxu0 %v35
  %2347 = vmatprep.subr.mxu0 %v40
  %2348 = vmatpush1.msra.mxu0 %v39
  %2349 = vmatprep.subr.mxu0 %v44
  %2350 = vmatpush1.msra.mxu0 %v43
  %2351 = vmatprep.subr.mxu0 %v48
  %2352 = vmatpush1.msra.mxu0 %v47
  %2353 = vmatprep.subr.mxu0 %v52
  %2354 = vmatpush1.msra.mxu0 %v51
  %2355 = vmatprep.subr.mxu0 %v56
  %2356 = vmatpush1.msra.mxu0 %v55
  %2357 = vmatprep.subr.mxu0 %v60
  %2358 = vmatpush1.msra.mxu0 %v59
  %2359 = vmatprep.subr.mxu0 %v64
  %2360 = vmatpush1.msra.mxu0 %v63
  %2361 = vmatprep.subr.mxu0 %v68
  %2362 = vmatpush1.msra.mxu0 %v67
  %2363 = vmatprep.subr.mxu0 %v72
  %2364 = vmatpush1.msra.mxu0 %v71
  %2365 = vmatprep.subr.mxu0 %v76
  %2366 = vmatpush1.msra.mxu0 %v75
  %2367 = vmatprep.subr.mxu0 %v80
  %2368 = vmatpush1.msra.mxu0 %v79
  %2369 = vmatprep.subr.mxu0 0.0
  %2370 = vmatpush1.msra.mxu0 0.0
  %2371 = vmatprep.subr.mxu0 0.0
  %2372 = vmatpush1.msra.mxu0 0.0
  %2373 = vmatprep.subr.mxu0 0.0
  %2374 = vmatpush1.msra.mxu0 0.0
  %2375 = vmatprep.subr.mxu0 0.0
  %2376 = vmatpush1.msra.mxu0 0.0
  %2377 = vmatprep.subr.mxu0 0.0
  %2378 = vmatpush1.msra.mxu0 0.0
  %2379 = vmatprep.subr.mxu0 0.0
  %2380 = vmatpush1.msra.mxu0 0.0
  %2381 = vmatprep.subr.mxu0 0.0
  %2382 = vmatpush1.msra.mxu0 0.0
  %2383 = vmatprep.subr.mxu0 0.0
  %2384 = vmatpush1.msra.mxu0 0.0
  %2385 = vmatprep.subr.mxu0 0.0
  %2386 = vmatpush1.msra.mxu0 0.0
  %2387 = vmatprep.subr.mxu0 0.0
  %2388 = vmatpush1.msra.mxu0 0.0
  %2389 = vmatprep.subr.mxu0 0.0
  %2390 = vmatpush1.msra.mxu0 0.0
  %2391 = vmatprep.subr.mxu0 0.0
  %2392 = vmatpush1.msra.mxu0 0.0
  %2393 = vmatprep.subr.mxu0 0.0
  %2394 = vmatpush1.msra.mxu0 0.0
  %2395 = vmatprep.subr.mxu0 0.0
  %2396 = vmatpush1.msra.mxu0 0.0
  %2397 = vmatprep.subr.mxu0 0.0
  %2398 = vmatpush1.msra.mxu0 0.0
  %2399 = vmatprep.subr.mxu0 0.0
  %2400 = vmatpush1.msra.mxu0 0.0
  %2401 = vmatprep.mubr.f32.mxu0 0.0
  %2402 = vmatmul.mubr.f32.gmra.mrb[0].mxu0 %v2216
  %v2403 = vpop.f32.mrb[0].mxu0
  %v2404 = vadd.f32 0.0, %v2403
  %v2405 = vpop.f32.mrb[0].mxu0
  %v2406 = vadd.f32 0.0, %v2405
  %2407 = vdwg.mxu0
  %v2412 = vrot.slane %v2333, 4
  %v2413 = vrot.slane %v2335, 4
  %v2414 = vrot.slane %v2404, 4
  %v2415 = vrot.slane %v2406, 4
  %v2416 = vrot.slane %v2333, 5
  %v2417 = vrot.slane %v2335, 5
  %v2418 = vrot.slane %v2404, 5
  %v2419 = vrot.slane %v2406, 5
  %v2420 = vrot.slane %v2333, 6
  %v2421 = vrot.slane %v2335, 6
  %v2422 = vrot.slane %v2404, 6
  %v2423 = vrot.slane %v2406, 6
  %v2424 = vrot.slane %v2333, 7
  %v2425 = vrot.slane %v2335, 7
  %v2426 = vrot.slane %v2404, 7
  %v2427 = vrot.slane %v2406, 7
  %v2428 = vrot.slane %v2333, 1
  %v2429 = vrot.slane %v2335, 1
  %v2430 = vrot.slane %v2404, 1
  %v2431 = vrot.slane %v2406, 1
  %v2432 = vrot.slane %v2333, 2
  %v2433 = vrot.slane %v2335, 2
  %v2434 = vrot.slane %v2404, 2
  %v2435 = vrot.slane %v2406, 2
  %v2436 = vrot.slane %v2333, 3
  %v2437 = vrot.slane %v2335, 3
  %v2438 = vrot.slane %v2404, 3
  %v2439 = vrot.slane %v2406, 3
  %v2472 = vadd.f32 %v2234, %v2412
  %v2473 = vadd.f32 %v2235, %v2413
  %v2474 = vadd.f32 %v2236, %v2414
  %v2475 = vadd.f32 %v2237, %v2415
  %v2476 = vadd.f32 %v2238, %v2416
  %v2477 = vadd.f32 %v2239, %v2417
  %v2478 = vadd.f32 %v2240, %v2418
  %v2479 = vadd.f32 %v2241, %v2419
  %v2480 = vadd.f32 %v2242, %v2420
  %v2481 = vadd.f32 %v2243, %v2421
  %v2482 = vadd.f32 %v2244, %v2422
  %v2483 = vadd.f32 %v2245, %v2423
  %v2484 = vadd.f32 %v2246, %v2424
  %v2485 = vadd.f32 %v2247, %v2425
  %v2486 = vadd.f32 %v2248, %v2426
  %v2487 = vadd.f32 %v2249, %v2427
  %v2488 = vadd.f32 %v2250, %v2333
  %v2489 = vadd.f32 %v2251, %v2335
  %v2490 = vadd.f32 %v2252, %v2404
  %v2491 = vadd.f32 %v2253, %v2406
  %v2492 = vadd.f32 %v2254, %v2428
  %v2493 = vadd.f32 %v2255, %v2429
  %v2494 = vadd.f32 %v2256, %v2430
  %v2495 = vadd.f32 %v2257, %v2431
  %v2496 = vadd.f32 %v2258, %v2432
  %v2497 = vadd.f32 %v2259, %v2433
  %v2498 = vadd.f32 %v2260, %v2434
  %v2499 = vadd.f32 %v2261, %v2435
  %v2500 = vadd.f32 %v2262, %v2436
  %v2501 = vadd.f32 %v2263, %v2437
  %v2502 = vadd.f32 %v2264, %v2438
  %v2503 = vadd.f32 %v2265, %v2439
  %v2504 = vmul.f32 %v2472, 0.5
  %v2505 = vmul.f32 %v2476, 0.5
  %v2506 = vmul.f32 %v2480, 0.5
  %v2507 = vmul.f32 %v2484, 0.5
  %v2508 = vmul.f32 %v2488, 0.5
  %v2509 = vmul.f32 %v2492, 0.5
  %v2510 = vmul.f32 %v2496, 0.5
  %v2511 = vmul.f32 %v2500, 0.5
  %v2512 = vtanh.pop %v2504
  %v2513 = vtanh.pop %v2505
  %v2514 = vtanh.pop %v2506
  %v2515 = vtanh.pop %v2507
  %v2516 = vtanh.pop %v2508
  %v2517 = vtanh.pop %v2509
  %v2518 = vtanh.pop %v2510
  %v2519 = vtanh.pop %v2511
  %v2520 = vmul.f32 %v2512, 0.5
  %v2521 = vmul.f32 %v2513, 0.5
  %v2522 = vmul.f32 %v2514, 0.5
  %v2523 = vmul.f32 %v2515, 0.5
  %v2524 = vmul.f32 %v2516, 0.5
  %v2525 = vmul.f32 %v2517, 0.5
  %v2526 = vmul.f32 %v2518, 0.5
  %v2527 = vmul.f32 %v2519, 0.5
  %v2528 = vadd.f32 %v2520, 0.5
  %v2529 = vadd.f32 %v2521, 0.5
  %v2530 = vadd.f32 %v2522, 0.5
  %v2531 = vadd.f32 %v2523, 0.5
  %v2532 = vadd.f32 %v2524, 0.5
  %v2533 = vadd.f32 %v2525, 0.5
  %v2534 = vadd.f32 %v2526, 0.5
  %v2535 = vadd.f32 %v2527, 0.5
  %v2536 = vmul.f32 %v2473, 0.5
  %v2537 = vmul.f32 %v2477, 0.5
  %v2538 = vmul.f32 %v2481, 0.5
  %v2539 = vmul.f32 %v2485, 0.5
  %v2540 = vmul.f32 %v2489, 0.5
  %v2541 = vmul.f32 %v2493, 0.5
  %v2542 = vmul.f32 %v2497, 0.5
  %v2543 = vmul.f32 %v2501, 0.5
  %v2544 = vtanh.pop %v2536
  %v2545 = vtanh.pop %v2537
  %v2546 = vtanh.pop %v2538
  %v2547 = vtanh.pop %v2539
  %v2548 = vtanh.pop %v2540
  %v2549 = vtanh.pop %v2541
  %v2550 = vtanh.pop %v2542
  %v2551 = vtanh.pop %v2543
  %v2552 = vmul.f32 %v2544, 0.5
  %v2553 = vmul.f32 %v2545, 0.5
  %v2554 = vmul.f32 %v2546, 0.5
  %v2555 = vmul.f32 %v2547, 0.5
  %v2556 = vmul.f32 %v2548, 0.5
  %v2557 = vmul.f32 %v2549, 0.5
  %v2558 = vmul.f32 %v2550, 0.5
  %v2559 = vmul.f32 %v2551, 0.5
  %v2560 = vadd.f32 %v2552, 0.5
  %v2561 = vadd.f32 %v2553, 0.5
  %v2562 = vadd.f32 %v2554, 0.5
  %v2563 = vadd.f32 %v2555, 0.5
  %v2564 = vadd.f32 %v2556, 0.5
  %v2565 = vadd.f32 %v2557, 0.5
  %v2566 = vadd.f32 %v2558, 0.5
  %v2567 = vadd.f32 %v2559, 0.5
  %v2568 = vtanh.pop %v2474
  %v2569 = vtanh.pop %v2478
  %v2570 = vtanh.pop %v2482
  %v2571 = vtanh.pop %v2486
  %v2572 = vtanh.pop %v2490
  %v2573 = vtanh.pop %v2494
  %v2574 = vtanh.pop %v2498
  %v2575 = vtanh.pop %v2502
  %v2576 = vmul.f32 %v2475, 0.5
  %v2577 = vmul.f32 %v2479, 0.5
  %v2578 = vmul.f32 %v2483, 0.5
  %v2579 = vmul.f32 %v2487, 0.5
  %v2580 = vmul.f32 %v2491, 0.5
  %v2581 = vmul.f32 %v2495, 0.5
  %v2582 = vmul.f32 %v2499, 0.5
  %v2583 = vmul.f32 %v2503, 0.5
  %v2584 = vtanh.pop %v2576
  %v2585 = vtanh.pop %v2577
  %v2586 = vtanh.pop %v2578
  %v2587 = vtanh.pop %v2579
  %v2588 = vtanh.pop %v2580
  %v2589 = vtanh.pop %v2581
  %v2590 = vtanh.pop %v2582
  %v2591 = vtanh.pop %v2583
  %v2592 = vmul.f32 %v2584, 0.5
  %v2593 = vmul.f32 %v2585, 0.5
  %v2594 = vmul.f32 %v2586, 0.5
  %v2595 = vmul.f32 %v2587, 0.5
  %v2596 = vmul.f32 %v2588, 0.5
  %v2597 = vmul.f32 %v2589, 0.5
  %v2598 = vmul.f32 %v2590, 0.5
  %v2599 = vmul.f32 %v2591, 0.5
  %v2600 = vadd.f32 %v2592, 0.5
  %v2601 = vadd.f32 %v2593, 0.5
  %v2602 = vadd.f32 %v2594, 0.5
  %v2603 = vadd.f32 %v2595, 0.5
  %v2604 = vadd.f32 %v2596, 0.5
  %v2605 = vadd.f32 %v2597, 0.5
  %v2606 = vadd.f32 %v2598, 0.5
  %v2607 = vadd.f32 %v2599, 0.5
  %v2609 = vrot.slane %v2217, 4
  %v2610 = vrot.slane %v2217, 5
  %v2611 = vrot.slane %v2217, 6
  %v2612 = vrot.slane %v2217, 7
  %v2613 = vrot.slane %v2217, 1
  %v2614 = vrot.slane %v2217, 2
  %v2615 = vrot.slane %v2217, 3
  %v2624 = vmul.f32 %v2560, %v2609
  %v2625 = vmul.f32 %v2561, %v2610
  %v2626 = vmul.f32 %v2562, %v2611
  %v2627 = vmul.f32 %v2563, %v2612
  %v2628 = vmul.f32 %v2564, %v2217
  %v2629 = vmul.f32 %v2565, %v2613
  %v2630 = vmul.f32 %v2566, %v2614
  %v2631 = vmul.f32 %v2567, %v2615
  %v2632 = vmul.f32 %v2528, %v2568
  %v2633 = vmul.f32 %v2529, %v2569
  %v2634 = vmul.f32 %v2530, %v2570
  %v2635 = vmul.f32 %v2531, %v2571
  %v2636 = vmul.f32 %v2532, %v2572
  %v2637 = vmul.f32 %v2533, %v2573
  %v2638 = vmul.f32 %v2534, %v2574
  %v2639 = vmul.f32 %v2535, %v2575
  %v2640 = vadd.f32 %v2624, %v2632
  %v2641 = vadd.f32 %v2625, %v2633
  %v2642 = vadd.f32 %v2626, %v2634
  %v2643 = vadd.f32 %v2627, %v2635
  %v2644 = vadd.f32 %v2628, %v2636
  %v2645 = vadd.f32 %v2629, %v2637
  %v2646 = vadd.f32 %v2630, %v2638
  %v2647 = vadd.f32 %v2631, %v2639
  %v2648 = vtanh.pop %v2640
  %v2649 = vtanh.pop %v2641
  %v2650 = vtanh.pop %v2642
  %v2651 = vtanh.pop %v2643
  %v2652 = vtanh.pop %v2644
  %v2653 = vtanh.pop %v2645
  %v2654 = vtanh.pop %v2646
  %v2655 = vtanh.pop %v2647
  %v2656 = vmul.f32 %v2600, %v2648
  %v2657 = vmul.f32 %v2601, %v2649
  %v2658 = vmul.f32 %v2602, %v2650
  %v2659 = vmul.f32 %v2603, %v2651
  %v2660 = vmul.f32 %v2604, %v2652
  %v2661 = vmul.f32 %v2605, %v2653
  %v2662 = vmul.f32 %v2606, %v2654
  %v2663 = vmul.f32 %v2607, %v2655
  %v2672 = vrot.slane %v2657, 7
  %v2673 = vsel %vm550, %v2672, %v2656
  %v2674 = vrot.slane %v2658, 6
  %v2675 = vsel %vm553, %v2674, %v2673
  %v2676 = vrot.slane %v2659, 5
  %v2677 = vsel %vm556, %v2676, %v2675
  %v2678 = vrot.slane %v2660, 4
  %v2679 = vrot.slane %v2661, 3
  %v2680 = vsel %vm538, %v2679, %v2678
  %v2681 = vrot.slane %v2662, 2
  %v2682 = vsel %vm541, %v2681, %v2680
  %v2683 = vrot.slane %v2663, 1
  %v2684 = vsel %vm544, %v2683, %v2682
  %2687 = vst [vmem:[#allocation2 - $0x4] sm:$0xf0] %v2677
  %2688 = vst [vmem:[#allocation2 + $0x4] sm:$0xf] %v2684
  %v2697 = vrot.slane %v2641, 7
  %v2698 = vsel %vm550, %v2697, %v2640
  %v2699 = vrot.slane %v2642, 6
  %v2700 = vsel %vm553, %v2699, %v2698
  %v2701 = vrot.slane %v2643, 5
  %v2702 = vsel %vm556, %v2701, %v2700
  %v2703 = vrot.slane %v2644, 4
  %v2704 = vrot.slane %v2645, 3
  %v2705 = vsel %vm538, %v2704, %v2703
  %v2706 = vrot.slane %v2646, 2
  %v2707 = vsel %vm541, %v2706, %v2705
  %v2708 = vrot.slane %v2647, 1
  %v2709 = vsel %vm544, %v2708, %v2707
  %2712 = vst [vmem:[#allocation3 - $0x4] sm:$0xf0] %v2702
  %2713 = vst [vmem:[#allocation3 + $0x4] sm:$0xf] %v2709
  %v2714 = vpack.c.bf16 %v2656, %v2656
  %v2715 = vpack.c.bf16 %v2657, %v2657
  %v2716 = vpack.c.bf16 %v2658, %v2658
  %v2717 = vpack.c.bf16 %v2659, %v2659
  %v2718 = vpack.c.bf16 %v2660, %v2660
  %v2719 = vpack.c.bf16 %v2661, %v2661
  %v2720 = vpack.c.bf16 %v2662, %v2662
  %v2721 = vpack.c.bf16 %v2663, %v2663
  %vm2722 = vcmask 1042434
  %vm2723 = vsmask.f32 2304
  %vm2724 = vmand %vm2722, %vm2723
  %v2725 = vld [vmem:[%s2] sm:$0x4]
  %v2726 = vsel %vm2724, %v2714, %v2725
  %2727 = vst [vmem:[%s2] sm:$0x4] %v2726
  %v2728 = vld [vmem:[%s2 + $0x8] sm:$0x4]
  %v2729 = vsel %vm2724, %v2715, %v2728
  %2730 = vst [vmem:[%s2 + $0x8] sm:$0x4] %v2729
  %v2731 = vld [vmem:[%s2 + $0x10] sm:$0x4]
  %v2732 = vsel %vm2724, %v2716, %v2731
  %2733 = vst [vmem:[%s2 + $0x10] sm:$0x4] %v2732
  %v2734 = vld [vmem:[%s2 + $0x18] sm:$0x4]
  %v2735 = vsel %vm2724, %v2717, %v2734
  %2736 = vst [vmem:[%s2 + $0x18] sm:$0x4] %v2735
  %v2737 = vld [vmem:[%s2 + $0x20] sm:$0x4]
  %v2738 = vsel %vm2724, %v2718, %v2737
  %2739 = vst [vmem:[%s2 + $0x20] sm:$0x4] %v2738
  %v2740 = vld [vmem:[%s2 + $0x28] sm:$0x4]
  %v2741 = vsel %vm2724, %v2719, %v2740
  %2742 = vst [vmem:[%s2 + $0x28] sm:$0x4] %v2741
  %v2743 = vld [vmem:[%s2 + $0x30] sm:$0x4]
  %v2744 = vsel %vm2724, %v2720, %v2743
  %2745 = vst [vmem:[%s2 + $0x30] sm:$0x4] %v2744
  %v2746 = vld [vmem:[%s2 + $0x38] sm:$0x4]
  %v2747 = vsel %vm2724, %v2721, %v2746
  %2748 = vst [vmem:[%s2 + $0x38] sm:$0x4] %v2747
  %v2749 = vld [vmem:[#allocation2] sm:$0xff]
  %v2750 = vld [vmem:[#allocation3] sm:$0xff]
  %v2751 = vld [vmem:[%s0] sm:$0x44]
  %v2752 = vld [vmem:[%s0 + $0x8] sm:$0x44]
  %v2753 = vld [vmem:[%s0 + $0x20] sm:$0x44]
  %v2754 = vld [vmem:[%s0 + $0x28] sm:$0x44]
  %v2755 = vld [vmem:[%s0 + $0x40] sm:$0x44]
  %v2756 = vld [vmem:[%s0 + $0x48] sm:$0x44]
  %v2757 = vld [vmem:[%s0 + $0x60] sm:$0x44]
  %v2758 = vld [vmem:[%s0 + $0x68] sm:$0x44]
  %v2759 = vld [vmem:[%s0 + $0x80] sm:$0x44]
  %v2760 = vld [vmem:[%s0 + $0x88] sm:$0x44]
  %v2761 = vld [vmem:[%s0 + $0xa0] sm:$0x44]
  %v2762 = vld [vmem:[%s0 + $0xa8] sm:$0x44]
  %v2763 = vld [vmem:[%s0 + $0xc0] sm:$0x44]
  %v2764 = vld [vmem:[%s0 + $0xc8] sm:$0x44]
  %v2765 = vld [vmem:[%s0 + $0xe0] sm:$0x44]
  %v2766 = vld [vmem:[%s0 + $0xe8] sm:$0x44]
  %v2767 = vunpack.c.l.bf16 %v2751
  %v2768 = vunpack.c.h.bf16 %v2751
  %v2769 = vunpack.c.l.bf16 %v2752
  %v2770 = vunpack.c.h.bf16 %v2752
  %v2771 = vunpack.c.l.bf16 %v2753
  %v2772 = vunpack.c.h.bf16 %v2753
  %v2773 = vunpack.c.l.bf16 %v2754
  %v2774 = vunpack.c.h.bf16 %v2754
  %v2775 = vunpack.c.l.bf16 %v2755
  %v2776 = vunpack.c.h.bf16 %v2755
  %v2777 = vunpack.c.l.bf16 %v2756
  %v2778 = vunpack.c.h.bf16 %v2756
  %v2779 = vunpack.c.l.bf16 %v2757
  %v2780 = vunpack.c.h.bf16 %v2757
  %v2781 = vunpack.c.l.bf16 %v2758
  %v2782 = vunpack.c.h.bf16 %v2758
  %v2783 = vunpack.c.l.bf16 %v2759
  %v2784 = vunpack.c.h.bf16 %v2759
  %v2785 = vunpack.c.l.bf16 %v2760
  %v2786 = vunpack.c.h.bf16 %v2760
  %v2787 = vunpack.c.l.bf16 %v2761
  %v2788 = vunpack.c.h.bf16 %v2761
  %v2789 = vunpack.c.l.bf16 %v2762
  %v2790 = vunpack.c.h.bf16 %v2762
  %v2791 = vunpack.c.l.bf16 %v2763
  %v2792 = vunpack.c.h.bf16 %v2763
  %v2793 = vunpack.c.l.bf16 %v2764
  %v2794 = vunpack.c.h.bf16 %v2764
  %v2795 = vunpack.c.l.bf16 %v2765
  %v2796 = vunpack.c.h.bf16 %v2765
  %v2797 = vunpack.c.l.bf16 %v2766
  %v2798 = vunpack.c.h.bf16 %v2766
  %2799 = vmatprep.subr.mxu0 %v18
  %2800 = vmatpush1.msra.mxu0 %v17
  %2801 = vmatprep.subr.mxu0 %v22
  %2802 = vmatpush1.msra.mxu0 %v21
  %2803 = vmatprep.subr.mxu0 %v26
  %2804 = vmatpush1.msra.mxu0 %v25
  %2805 = vmatprep.subr.mxu0 %v30
  %2806 = vmatpush1.msra.mxu0 %v29
  %2807 = vmatprep.subr.mxu0 %v34
  %2808 = vmatpush1.msra.mxu0 %v33
  %2809 = vmatprep.subr.mxu0 %v38
  %2810 = vmatpush1.msra.mxu0 %v37
  %2811 = vmatprep.subr.mxu0 %v42
  %2812 = vmatpush1.msra.mxu0 %v41
  %2813 = vmatprep.subr.mxu0 %v46
  %2814 = vmatpush1.msra.mxu0 %v45
  %2815 = vmatprep.subr.mxu0 %v50
  %2816 = vmatpush1.msra.mxu0 %v49
  %2817 = vmatprep.subr.mxu0 %v54
  %2818 = vmatpush1.msra.mxu0 %v53
  %2819 = vmatprep.subr.mxu0 %v58
  %2820 = vmatpush1.msra.mxu0 %v57
  %2821 = vmatprep.subr.mxu0 %v62
  %2822 = vmatpush1.msra.mxu0 %v61
  %2823 = vmatprep.subr.mxu0 %v66
  %2824 = vmatpush1.msra.mxu0 %v65
  %2825 = vmatprep.subr.mxu0 %v70
  %2826 = vmatpush1.msra.mxu0 %v69
  %2827 = vmatprep.subr.mxu0 %v74
  %2828 = vmatpush1.msra.mxu0 %v73
  %2829 = vmatprep.subr.mxu0 %v78
  %2830 = vmatpush1.msra.mxu0 %v77
  %2831 = vmatprep.subr.mxu0 0.0
  %2832 = vmatpush1.msra.mxu0 0.0
  %2833 = vmatprep.subr.mxu0 0.0
  %2834 = vmatpush1.msra.mxu0 0.0
  %2835 = vmatprep.subr.mxu0 0.0
  %2836 = vmatpush1.msra.mxu0 0.0
  %2837 = vmatprep.subr.mxu0 0.0
  %2838 = vmatpush1.msra.mxu0 0.0
  %2839 = vmatprep.subr.mxu0 0.0
  %2840 = vmatpush1.msra.mxu0 0.0
  %2841 = vmatprep.subr.mxu0 0.0
  %2842 = vmatpush1.msra.mxu0 0.0
  %2843 = vmatprep.subr.mxu0 0.0
  %2844 = vmatpush1.msra.mxu0 0.0
  %2845 = vmatprep.subr.mxu0 0.0
  %2846 = vmatpush1.msra.mxu0 0.0
  %2847 = vmatprep.subr.mxu0 0.0
  %2848 = vmatpush1.msra.mxu0 0.0
  %2849 = vmatprep.subr.mxu0 0.0
  %2850 = vmatpush1.msra.mxu0 0.0
  %2851 = vmatprep.subr.mxu0 0.0
  %2852 = vmatpush1.msra.mxu0 0.0
  %2853 = vmatprep.subr.mxu0 0.0
  %2854 = vmatpush1.msra.mxu0 0.0
  %2855 = vmatprep.subr.mxu0 0.0
  %2856 = vmatpush1.msra.mxu0 0.0
  %2857 = vmatprep.subr.mxu0 0.0
  %2858 = vmatpush1.msra.mxu0 0.0
  %2859 = vmatprep.subr.mxu0 0.0
  %2860 = vmatpush1.msra.mxu0 0.0
  %2861 = vmatprep.subr.mxu0 0.0
  %2862 = vmatpush1.msra.mxu0 0.0
  %2863 = vmatprep.mubr.f32.mxu0 0.0
  %2864 = vmatmul.mubr.f32.gmra.mrb[0].mxu0 %v2749
  %v2865 = vpop.f32.mrb[0].mxu0
  %v2866 = vadd.f32 0.0, %v2865
  %v2867 = vpop.f32.mrb[0].mxu0
  %v2868 = vadd.f32 0.0, %v2867
  %2869 = vdwg.mxu0
  %2870 = vmatprep.subr.mxu0 %v20
  %2871 = vmatpush1.msra.mxu0 %v19
  %2872 = vmatprep.subr.mxu0 %v24
  %2873 = vmatpush1.msra.mxu0 %v23
  %2874 = vmatprep.subr.mxu0 %v28
  %2875 = vmatpush1.msra.mxu0 %v27
  %2876 = vmatprep.subr.mxu0 %v32
  %2877 = vmatpush1.msra.mxu0 %v31
  %2878 = vmatprep.subr.mxu0 %v36
  %2879 = vmatpush1.msra.mxu0 %v35
  %2880 = vmatprep.subr.mxu0 %v40
  %2881 = vmatpush1.msra.mxu0 %v39
  %2882 = vmatprep.subr.mxu0 %v44
  %2883 = vmatpush1.msra.mxu0 %v43
  %2884 = vmatprep.subr.mxu0 %v48
  %2885 = vmatpush1.msra.mxu0 %v47
  %2886 = vmatprep.subr.mxu0 %v52
  %2887 = vmatpush1.msra.mxu0 %v51
  %2888 = vmatprep.subr.mxu0 %v56
  %2889 = vmatpush1.msra.mxu0 %v55
  %2890 = vmatprep.subr.mxu0 %v60
  %2891 = vmatpush1.msra.mxu0 %v59
  %2892 = vmatprep.subr.mxu0 %v64
  %2893 = vmatpush1.msra.mxu0 %v63
  %2894 = vmatprep.subr.mxu0 %v68
  %2895 = vmatpush1.msra.mxu0 %v67
  %2896 = vmatprep.subr.mxu0 %v72
  %2897 = vmatpush1.msra.mxu0 %v71
  %2898 = vmatprep.subr.mxu0 %v76
  %2899 = vmatpush1.msra.mxu0 %v75
  %2900 = vmatprep.subr.mxu0 %v80
  %2901 = vmatpush1.msra.mxu0 %v79
  %2902 = vmatprep.subr.mxu0 0.0
  %2903 = vmatpush1.msra.mxu0 0.0
  %2904 = vmatprep.subr.mxu0 0.0
  %2905 = vmatpush1.msra.mxu0 0.0
  %2906 = vmatprep.subr.mxu0 0.0
  %2907 = vmatpush1.msra.mxu0 0.0
  %2908 = vmatprep.subr.mxu0 0.0
  %2909 = vmatpush1.msra.mxu0 0.0
  %2910 = vmatprep.subr.mxu0 0.0
  %2911 = vmatpush1.msra.mxu0 0.0
  %2912 = vmatprep.subr.mxu0 0.0
  %2913 = vmatpush1.msra.mxu0 0.0
  %2914 = vmatprep.subr.mxu0 0.0
  %2915 = vmatpush1.msra.mxu0 0.0
  %2916 = vmatprep.subr.mxu0 0.0
  %2917 = vmatpush1.msra.mxu0 0.0
  %2918 = vmatprep.subr.mxu0 0.0
  %2919 = vmatpush1.msra.mxu0 0.0
  %2920 = vmatprep.subr.mxu0 0.0
  %2921 = vmatpush1.msra.mxu0 0.0
  %2922 = vmatprep.subr.mxu0 0.0
  %2923 = vmatpush1.msra.mxu0 0.0
  %2924 = vmatprep.subr.mxu0 0.0
  %2925 = vmatpush1.msra.mxu0 0.0
  %2926 = vmatprep.subr.mxu0 0.0
  %2927 = vmatpush1.msra.mxu0 0.0
  %2928 = vmatprep.subr.mxu0 0.0
  %2929 = vmatpush1.msra.mxu0 0.0
  %2930 = vmatprep.subr.mxu0 0.0
  %2931 = vmatpush1.msra.mxu0 0.0
  %2932 = vmatprep.subr.mxu0 0.0
  %2933 = vmatpush1.msra.mxu0 0.0
  %2934 = vmatprep.mubr.f32.mxu0 0.0
  %2935 = vmatmul.mubr.f32.gmra.mrb[0].mxu0 %v2749
  %v2936 = vpop.f32.mrb[0].mxu0
  %v2937 = vadd.f32 0.0, %v2936
  %v2938 = vpop.f32.mrb[0].mxu0
  %v2939 = vadd.f32 0.0, %v2938
  %2940 = vdwg.mxu0
  %v2945 = vrot.slane %v2866, 3
  %v2946 = vrot.slane %v2868, 3
  %v2947 = vrot.slane %v2937, 3
  %v2948 = vrot.slane %v2939, 3
  %v2949 = vrot.slane %v2866, 4
  %v2950 = vrot.slane %v2868, 4
  %v2951 = vrot.slane %v2937, 4
  %v2952 = vrot.slane %v2939, 4
  %v2953 = vrot.slane %v2866, 5
  %v2954 = vrot.slane %v2868, 5
  %v2955 = vrot.slane %v2937, 5
  %v2956 = vrot.slane %v2939, 5
  %v2957 = vrot.slane %v2866, 6
  %v2958 = vrot.slane %v2868, 6
  %v2959 = vrot.slane %v2937, 6
  %v2960 = vrot.slane %v2939, 6
  %v2961 = vrot.slane %v2866, 7
  %v2962 = vrot.slane %v2868, 7
  %v2963 = vrot.slane %v2937, 7
  %v2964 = vrot.slane %v2939, 7
  %v2965 = vrot.slane %v2866, 1
  %v2966 = vrot.slane %v2868, 1
  %v2967 = vrot.slane %v2937, 1
  %v2968 = vrot.slane %v2939, 1
  %v2969 = vrot.slane %v2866, 2
  %v2970 = vrot.slane %v2868, 2
  %v2971 = vrot.slane %v2937, 2
  %v2972 = vrot.slane %v2939, 2
  %v3005 = vadd.f32 %v2767, %v2945
  %v3006 = vadd.f32 %v2768, %v2946
  %v3007 = vadd.f32 %v2769, %v2947
  %v3008 = vadd.f32 %v2770, %v2948
  %v3009 = vadd.f32 %v2771, %v2949
  %v3010 = vadd.f32 %v2772, %v2950
  %v3011 = vadd.f32 %v2773, %v2951
  %v3012 = vadd.f32 %v2774, %v2952
  %v3013 = vadd.f32 %v2775, %v2953
  %v3014 = vadd.f32 %v2776, %v2954
  %v3015 = vadd.f32 %v2777, %v2955
  %v3016 = vadd.f32 %v2778, %v2956
  %v3017 = vadd.f32 %v2779, %v2957
  %v3018 = vadd.f32 %v2780, %v2958
  %v3019 = vadd.f32 %v2781, %v2959
  %v3020 = vadd.f32 %v2782, %v2960
  %v3021 = vadd.f32 %v2783, %v2961
  %v3022 = vadd.f32 %v2784, %v2962
  %v3023 = vadd.f32 %v2785, %v2963
  %v3024 = vadd.f32 %v2786, %v2964
  %v3025 = vadd.f32 %v2787, %v2866
  %v3026 = vadd.f32 %v2788, %v2868
  %v3027 = vadd.f32 %v2789, %v2937
  %v3028 = vadd.f32 %v2790, %v2939
  %v3029 = vadd.f32 %v2791, %v2965
  %v3030 = vadd.f32 %v2792, %v2966
  %v3031 = vadd.f32 %v2793, %v2967
  %v3032 = vadd.f32 %v2794, %v2968
  %v3033 = vadd.f32 %v2795, %v2969
  %v3034 = vadd.f32 %v2796, %v2970
  %v3035 = vadd.f32 %v2797, %v2971
  %v3036 = vadd.f32 %v2798, %v2972
  %v3037 = vmul.f32 %v3005, 0.5
  %v3038 = vmul.f32 %v3009, 0.5
  %v3039 = vmul.f32 %v3013, 0.5
  %v3040 = vmul.f32 %v3017, 0.5
  %v3041 = vmul.f32 %v3021, 0.5
  %v3042 = vmul.f32 %v3025, 0.5
  %v3043 = vmul.f32 %v3029, 0.5
  %v3044 = vmul.f32 %v3033, 0.5
  %v3045 = vtanh.pop %v3037
  %v3046 = vtanh.pop %v3038
  %v3047 = vtanh.pop %v3039
  %v3048 = vtanh.pop %v3040
  %v3049 = vtanh.pop %v3041
  %v3050 = vtanh.pop %v3042
  %v3051 = vtanh.pop %v3043
  %v3052 = vtanh.pop %v3044
  %v3053 = vmul.f32 %v3045, 0.5
  %v3054 = vmul.f32 %v3046, 0.5
  %v3055 = vmul.f32 %v3047, 0.5
  %v3056 = vmul.f32 %v3048, 0.5
  %v3057 = vmul.f32 %v3049, 0.5
  %v3058 = vmul.f32 %v3050, 0.5
  %v3059 = vmul.f32 %v3051, 0.5
  %v3060 = vmul.f32 %v3052, 0.5
  %v3061 = vadd.f32 %v3053, 0.5
  %v3062 = vadd.f32 %v3054, 0.5
  %v3063 = vadd.f32 %v3055, 0.5
  %v3064 = vadd.f32 %v3056, 0.5
  %v3065 = vadd.f32 %v3057, 0.5
  %v3066 = vadd.f32 %v3058, 0.5
  %v3067 = vadd.f32 %v3059, 0.5
  %v3068 = vadd.f32 %v3060, 0.5
  %v3069 = vmul.f32 %v3006, 0.5
  %v3070 = vmul.f32 %v3010, 0.5
  %v3071 = vmul.f32 %v3014, 0.5
  %v3072 = vmul.f32 %v3018, 0.5
  %v3073 = vmul.f32 %v3022, 0.5
  %v3074 = vmul.f32 %v3026, 0.5
  %v3075 = vmul.f32 %v3030, 0.5
  %v3076 = vmul.f32 %v3034, 0.5
  %v3077 = vtanh.pop %v3069
  %v3078 = vtanh.pop %v3070
  %v3079 = vtanh.pop %v3071
  %v3080 = vtanh.pop %v3072
  %v3081 = vtanh.pop %v3073
  %v3082 = vtanh.pop %v3074
  %v3083 = vtanh.pop %v3075
  %v3084 = vtanh.pop %v3076
  %v3085 = vmul.f32 %v3077, 0.5
  %v3086 = vmul.f32 %v3078, 0.5
  %v3087 = vmul.f32 %v3079, 0.5
  %v3088 = vmul.f32 %v3080, 0.5
  %v3089 = vmul.f32 %v3081, 0.5
  %v3090 = vmul.f32 %v3082, 0.5
  %v3091 = vmul.f32 %v3083, 0.5
  %v3092 = vmul.f32 %v3084, 0.5
  %v3093 = vadd.f32 %v3085, 0.5
  %v3094 = vadd.f32 %v3086, 0.5
  %v3095 = vadd.f32 %v3087, 0.5
  %v3096 = vadd.f32 %v3088, 0.5
  %v3097 = vadd.f32 %v3089, 0.5
  %v3098 = vadd.f32 %v3090, 0.5
  %v3099 = vadd.f32 %v3091, 0.5
  %v3100 = vadd.f32 %v3092, 0.5
  %v3101 = vtanh.pop %v3007
  %v3102 = vtanh.pop %v3011
  %v3103 = vtanh.pop %v3015
  %v3104 = vtanh.pop %v3019
  %v3105 = vtanh.pop %v3023
  %v3106 = vtanh.pop %v3027
  %v3107 = vtanh.pop %v3031
  %v3108 = vtanh.pop %v3035
  %v3109 = vmul.f32 %v3008, 0.5
  %v3110 = vmul.f32 %v3012, 0.5
  %v3111 = vmul.f32 %v3016, 0.5
  %v3112 = vmul.f32 %v3020, 0.5
  %v3113 = vmul.f32 %v3024, 0.5
  %v3114 = vmul.f32 %v3028, 0.5
  %v3115 = vmul.f32 %v3032, 0.5
  %v3116 = vmul.f32 %v3036, 0.5
  %v3117 = vtanh.pop %v3109
  %v3118 = vtanh.pop %v3110
  %v3119 = vtanh.pop %v3111
  %v3120 = vtanh.pop %v3112
  %v3121 = vtanh.pop %v3113
  %v3122 = vtanh.pop %v3114
  %v3123 = vtanh.pop %v3115
  %v3124 = vtanh.pop %v3116
  %v3125 = vmul.f32 %v3117, 0.5
  %v3126 = vmul.f32 %v3118, 0.5
  %v3127 = vmul.f32 %v3119, 0.5
  %v3128 = vmul.f32 %v3120, 0.5
  %v3129 = vmul.f32 %v3121, 0.5
  %v3130 = vmul.f32 %v3122, 0.5
  %v3131 = vmul.f32 %v3123, 0.5
  %v3132 = vmul.f32 %v3124, 0.5
  %v3133 = vadd.f32 %v3125, 0.5
  %v3134 = vadd.f32 %v3126, 0.5
  %v3135 = vadd.f32 %v3127, 0.5
  %v3136 = vadd.f32 %v3128, 0.5
  %v3137 = vadd.f32 %v3129, 0.5
  %v3138 = vadd.f32 %v3130, 0.5
  %v3139 = vadd.f32 %v3131, 0.5
  %v3140 = vadd.f32 %v3132, 0.5
  %v3142 = vrot.slane %v2750, 3
  %v3143 = vrot.slane %v2750, 4
  %v3144 = vrot.slane %v2750, 5
  %v3145 = vrot.slane %v2750, 6
  %v3146 = vrot.slane %v2750, 7
  %v3147 = vrot.slane %v2750, 1
  %v3148 = vrot.slane %v2750, 2
  %v3157 = vmul.f32 %v3093, %v3142
  %v3158 = vmul.f32 %v3094, %v3143
  %v3159 = vmul.f32 %v3095, %v3144
  %v3160 = vmul.f32 %v3096, %v3145
  %v3161 = vmul.f32 %v3097, %v3146
  %v3162 = vmul.f32 %v3098, %v2750
  %v3163 = vmul.f32 %v3099, %v3147
  %v3164 = vmul.f32 %v3100, %v3148
  %v3165 = vmul.f32 %v3061, %v3101
  %v3166 = vmul.f32 %v3062, %v3102
  %v3167 = vmul.f32 %v3063, %v3103
  %v3168 = vmul.f32 %v3064, %v3104
  %v3169 = vmul.f32 %v3065, %v3105
  %v3170 = vmul.f32 %v3066, %v3106
  %v3171 = vmul.f32 %v3067, %v3107
  %v3172 = vmul.f32 %v3068, %v3108
  %v3173 = vadd.f32 %v3157, %v3165
  %v3174 = vadd.f32 %v3158, %v3166
  %v3175 = vadd.f32 %v3159, %v3167
  %v3176 = vadd.f32 %v3160, %v3168
  %v3177 = vadd.f32 %v3161, %v3169
  %v3178 = vadd.f32 %v3162, %v3170
  %v3179 = vadd.f32 %v3163, %v3171
  %v3180 = vadd.f32 %v3164, %v3172
  %v3181 = vtanh.pop %v3173
  %v3182 = vtanh.pop %v3174
  %v3183 = vtanh.pop %v3175
  %v3184 = vtanh.pop %v3176
  %v3185 = vtanh.pop %v3177
  %v3186 = vtanh.pop %v3178
  %v3187 = vtanh.pop %v3179
  %v3188 = vtanh.pop %v3180
  %v3189 = vmul.f32 %v3133, %v3181
  %v3190 = vmul.f32 %v3134, %v3182
  %v3191 = vmul.f32 %v3135, %v3183
  %v3192 = vmul.f32 %v3136, %v3184
  %v3193 = vmul.f32 %v3137, %v3185
  %v3194 = vmul.f32 %v3138, %v3186
  %v3195 = vmul.f32 %v3139, %v3187
  %v3196 = vmul.f32 %v3140, %v3188
  %v3205 = vrot.slane %v3190, 7
  %v3206 = vsel %vm553, %v3205, %v3189
  %v3207 = vrot.slane %v3191, 6
  %v3208 = vsel %vm556, %v3207, %v3206
  %v3209 = vrot.slane %v3192, 5
  %v3210 = vrot.slane %v3193, 4
  %v3211 = vsel %vm538, %v3210, %v3209
  %v3212 = vrot.slane %v3194, 3
  %v3213 = vsel %vm541, %v3212, %v3211
  %v3214 = vrot.slane %v3195, 2
  %v3215 = vsel %vm544, %v3214, %v3213
  %v3216 = vrot.slane %v3196, 1
  %v3217 = vsel %vm547, %v3216, %v3215
  %3220 = vst [vmem:[#allocation2 - $0x5] sm:$0xe0] %v3208
  %3221 = vst [vmem:[#allocation2 + $0x3] sm:$0x1f] %v3217
  %v3230 = vrot.slane %v3174, 7
  %v3231 = vsel %vm553, %v3230, %v3173
  %v3232 = vrot.slane %v3175, 6
  %v3233 = vsel %vm556, %v3232, %v3231
  %v3234 = vrot.slane %v3176, 5
  %v3235 = vrot.slane %v3177, 4
  %v3236 = vsel %vm538, %v3235, %v3234
  %v3237 = vrot.slane %v3178, 3
  %v3238 = vsel %vm541, %v3237, %v3236
  %v3239 = vrot.slane %v3179, 2
  %v3240 = vsel %vm544, %v3239, %v3238
  %v3241 = vrot.slane %v3180, 1
  %v3242 = vsel %vm547, %v3241, %v3240
  %3245 = vst [vmem:[#allocation3 - $0x5] sm:$0xe0] %v3233
  %3246 = vst [vmem:[#allocation3 + $0x3] sm:$0x1f] %v3242
  %v3247 = vpack.c.bf16 %v3189, %v3189
  %v3248 = vpack.c.bf16 %v3190, %v3190
  %v3249 = vpack.c.bf16 %v3191, %v3191
  %v3250 = vpack.c.bf16 %v3192, %v3192
  %v3251 = vpack.c.bf16 %v3193, %v3193
  %v3252 = vpack.c.bf16 %v3194, %v3194
  %v3253 = vpack.c.bf16 %v3195, %v3195
  %v3254 = vpack.c.bf16 %v3196, %v3196
  %vm3255 = vsmask.f32 7946
  %vm3256 = vmand %vm2722, %vm3255
  %v3257 = vld [vmem:[%s2] sm:$0x4]
  %v3258 = vsel %vm3256, %v3247, %v3257
  %3259 = vst [vmem:[%s2] sm:$0x4] %v3258
  %v3260 = vld [vmem:[%s2 + $0x8] sm:$0x4]
  %v3261 = vsel %vm3256, %v3248, %v3260
  %3262 = vst [vmem:[%s2 + $0x8] sm:$0x4] %v3261
  %v3263 = vld [vmem:[%s2 + $0x10] sm:$0x4]
  %v3264 = vsel %vm3256, %v3249, %v3263
  %3265 = vst [vmem:[%s2 + $0x10] sm:$0x4] %v3264
  %v3266 = vld [vmem:[%s2 + $0x18] sm:$0x4]
  %v3267 = vsel %vm3256, %v3250, %v3266
  %3268 = vst [vmem:[%s2 + $0x18] sm:$0x4] %v3267
  %v3269 = vld [vmem:[%s2 + $0x20] sm:$0x4]
  %v3270 = vsel %vm3256, %v3251, %v3269
  %3271 = vst [vmem:[%s2 + $0x20] sm:$0x4] %v3270
  %v3272 = vld [vmem:[%s2 + $0x28] sm:$0x4]
  %v3273 = vsel %vm3256, %v3252, %v3272
  %3274 = vst [vmem:[%s2 + $0x28] sm:$0x4] %v3273
  %v3275 = vld [vmem:[%s2 + $0x30] sm:$0x4]
  %v3276 = vsel %vm3256, %v3253, %v3275
  %3277 = vst [vmem:[%s2 + $0x30] sm:$0x4] %v3276
  %v3278 = vld [vmem:[%s2 + $0x38] sm:$0x4]
  %v3279 = vsel %vm3256, %v3254, %v3278
  %3280 = vst [vmem:[%s2 + $0x38] sm:$0x4] %v3279
  %v3281 = vld [vmem:[#allocation2] sm:$0xff]
  %v3282 = vld [vmem:[#allocation3] sm:$0xff]
  %v3283 = vld [vmem:[%s0] sm:$0x88]
  %v3284 = vld [vmem:[%s0 + $0x8] sm:$0x88]
  %v3285 = vld [vmem:[%s0 + $0x20] sm:$0x88]
  %v3286 = vld [vmem:[%s0 + $0x28] sm:$0x88]
  %v3287 = vld [vmem:[%s0 + $0x40] sm:$0x88]
  %v3288 = vld [vmem:[%s0 + $0x48] sm:$0x88]
  %v3289 = vld [vmem:[%s0 + $0x60] sm:$0x88]
  %v3290 = vld [vmem:[%s0 + $0x68] sm:$0x88]
  %v3291 = vld [vmem:[%s0 + $0x80] sm:$0x88]
  %v3292 = vld [vmem:[%s0 + $0x88] sm:$0x88]
  %v3293 = vld [vmem:[%s0 + $0xa0] sm:$0x88]
  %v3294 = vld [vmem:[%s0 + $0xa8] sm:$0x88]
  %v3295 = vld [vmem:[%s0 + $0xc0] sm:$0x88]
  %v3296 = vld [vmem:[%s0 + $0xc8] sm:$0x88]
  %v3297 = vld [vmem:[%s0 + $0xe0] sm:$0x88]
  %v3298 = vld [vmem:[%s0 + $0xe8] sm:$0x88]
  %v3299 = vunpack.c.l.bf16 %v3283
  %v3300 = vunpack.c.h.bf16 %v3283
  %v3301 = vunpack.c.l.bf16 %v3284
  %v3302 = vunpack.c.h.bf16 %v3284
  %v3303 = vunpack.c.l.bf16 %v3285
  %v3304 = vunpack.c.h.bf16 %v3285
  %v3305 = vunpack.c.l.bf16 %v3286
  %v3306 = vunpack.c.h.bf16 %v3286
  %v3307 = vunpack.c.l.bf16 %v3287
  %v3308 = vunpack.c.h.bf16 %v3287
  %v3309 = vunpack.c.l.bf16 %v3288
  %v3310 = vunpack.c.h.bf16 %v3288
  %v3311 = vunpack.c.l.bf16 %v3289
  %v3312 = vunpack.c.h.bf16 %v3289
  %v3313 = vunpack.c.l.bf16 %v3290
  %v3314 = vunpack.c.h.bf16 %v3290
  %v3315 = vunpack.c.l.bf16 %v3291
  %v3316 = vunpack.c.h.bf16 %v3291
  %v3317 = vunpack.c.l.bf16 %v3292
  %v3318 = vunpack.c.h.bf16 %v3292
  %v3319 = vunpack.c.l.bf16 %v3293
  %v3320 = vunpack.c.h.bf16 %v3293
  %v3321 = vunpack.c.l.bf16 %v3294
  %v3322 = vunpack.c.h.bf16 %v3294
  %v3323 = vunpack.c.l.bf16 %v3295
  %v3324 = vunpack.c.h.bf16 %v3295
  %v3325 = vunpack.c.l.bf16 %v3296
  %v3326 = vunpack.c.h.bf16 %v3296
  %v3327 = vunpack.c.l.bf16 %v3297
  %v3328 = vunpack.c.h.bf16 %v3297
  %v3329 = vunpack.c.l.bf16 %v3298
  %v3330 = vunpack.c.h.bf16 %v3298
  %3331 = vmatprep.subr.mxu0 %v18
  %3332 = vmatpush1.msra.mxu0 %v17
  %3333 = vmatprep.subr.mxu0 %v22
  %3334 = vmatpush1.msra.mxu0 %v21
  %3335 = vmatprep.subr.mxu0 %v26
  %3336 = vmatpush1.msra.mxu0 %v25
  %3337 = vmatprep.subr.mxu0 %v30
  %3338 = vmatpush1.msra.mxu0 %v29
  %3339 = vmatprep.subr.mxu0 %v34
  %3340 = vmatpush1.msra.mxu0 %v33
  %3341 = vmatprep.subr.mxu0 %v38
  %3342 = vmatpush1.msra.mxu0 %v37
  %3343 = vmatprep.subr.mxu0 %v42
  %3344 = vmatpush1.msra.mxu0 %v41
  %3345 = vmatprep.subr.mxu0 %v46
  %3346 = vmatpush1.msra.mxu0 %v45
  %3347 = vmatprep.subr.mxu0 %v50
  %3348 = vmatpush1.msra.mxu0 %v49
  %3349 = vmatprep.subr.mxu0 %v54
  %3350 = vmatpush1.msra.mxu0 %v53
  %3351 = vmatprep.subr.mxu0 %v58
  %3352 = vmatpush1.msra.mxu0 %v57
  %3353 = vmatprep.subr.mxu0 %v62
  %3354 = vmatpush1.msra.mxu0 %v61
  %3355 = vmatprep.subr.mxu0 %v66
  %3356 = vmatpush1.msra.mxu0 %v65
  %3357 = vmatprep.subr.mxu0 %v70
  %3358 = vmatpush1.msra.mxu0 %v69
  %3359 = vmatprep.subr.mxu0 %v74
  %3360 = vmatpush1.msra.mxu0 %v73
  %3361 = vmatprep.subr.mxu0 %v78
  %3362 = vmatpush1.msra.mxu0 %v77
  %3363 = vmatprep.subr.mxu0 0.0
  %3364 = vmatpush1.msra.mxu0 0.0
  %3365 = vmatprep.subr.mxu0 0.0
  %3366 = vmatpush1.msra.mxu0 0.0
  %3367 = vmatprep.subr.mxu0 0.0
  %3368 = vmatpush1.msra.mxu0 0.0
  %3369 = vmatprep.subr.mxu0 0.0
  %3370 = vmatpush1.msra.mxu0 0.0
  %3371 = vmatprep.subr.mxu0 0.0
  %3372 = vmatpush1.msra.mxu0 0.0
  %3373 = vmatprep.subr.mxu0 0.0
  %3374 = vmatpush1.msra.mxu0 0.0
  %3375 = vmatprep.subr.mxu0 0.0
  %3376 = vmatpush1.msra.mxu0 0.0
  %3377 = vmatprep.subr.mxu0 0.0
  %3378 = vmatpush1.msra.mxu0 0.0
  %3379 = vmatprep.subr.mxu0 0.0
  %3380 = vmatpush1.msra.mxu0 0.0
  %3381 = vmatprep.subr.mxu0 0.0
  %3382 = vmatpush1.msra.mxu0 0.0
  %3383 = vmatprep.subr.mxu0 0.0
  %3384 = vmatpush1.msra.mxu0 0.0
  %3385 = vmatprep.subr.mxu0 0.0
  %3386 = vmatpush1.msra.mxu0 0.0
  %3387 = vmatprep.subr.mxu0 0.0
  %3388 = vmatpush1.msra.mxu0 0.0
  %3389 = vmatprep.subr.mxu0 0.0
  %3390 = vmatpush1.msra.mxu0 0.0
  %3391 = vmatprep.subr.mxu0 0.0
  %3392 = vmatpush1.msra.mxu0 0.0
  %3393 = vmatprep.subr.mxu0 0.0
  %3394 = vmatpush1.msra.mxu0 0.0
  %3395 = vmatprep.mubr.f32.mxu0 0.0
  %3396 = vmatmul.mubr.f32.gmra.mrb[0].mxu0 %v3281
  %v3397 = vpop.f32.mrb[0].mxu0
  %v3398 = vadd.f32 0.0, %v3397
  %v3399 = vpop.f32.mrb[0].mxu0
  %v3400 = vadd.f32 0.0, %v3399
  %3401 = vdwg.mxu0
  %3402 = vmatprep.subr.mxu0 %v20
  %3403 = vmatpush1.msra.mxu0 %v19
  %3404 = vmatprep.subr.mxu0 %v24
  %3405 = vmatpush1.msra.mxu0 %v23
  %3406 = vmatprep.subr.mxu0 %v28
  %3407 = vmatpush1.msra.mxu0 %v27
  %3408 = vmatprep.subr.mxu0 %v32
  %3409 = vmatpush1.msra.mxu0 %v31
  %3410 = vmatprep.subr.mxu0 %v36
  %3411 = vmatpush1.msra.mxu0 %v35
  %3412 = vmatprep.subr.mxu0 %v40
  %3413 = vmatpush1.msra.mxu0 %v39
  %3414 = vmatprep.subr.mxu0 %v44
  %3415 = vmatpush1.msra.mxu0 %v43
  %3416 = vmatprep.subr.mxu0 %v48
  %3417 = vmatpush1.msra.mxu0 %v47
  %3418 = vmatprep.subr.mxu0 %v52
  %3419 = vmatpush1.msra.mxu0 %v51
  %3420 = vmatprep.subr.mxu0 %v56
  %3421 = vmatpush1.msra.mxu0 %v55
  %3422 = vmatprep.subr.mxu0 %v60
  %3423 = vmatpush1.msra.mxu0 %v59
  %3424 = vmatprep.subr.mxu0 %v64
  %3425 = vmatpush1.msra.mxu0 %v63
  %3426 = vmatprep.subr.mxu0 %v68
  %3427 = vmatpush1.msra.mxu0 %v67
  %3428 = vmatprep.subr.mxu0 %v72
  %3429 = vmatpush1.msra.mxu0 %v71
  %3430 = vmatprep.subr.mxu0 %v76
  %3431 = vmatpush1.msra.mxu0 %v75
  %3432 = vmatprep.subr.mxu0 %v80
  %3433 = vmatpush1.msra.mxu0 %v79
  %3434 = vmatprep.subr.mxu0 0.0
  %3435 = vmatpush1.msra.mxu0 0.0
  %3436 = vmatprep.subr.mxu0 0.0
  %3437 = vmatpush1.msra.mxu0 0.0
  %3438 = vmatprep.subr.mxu0 0.0
  %3439 = vmatpush1.msra.mxu0 0.0
  %3440 = vmatprep.subr.mxu0 0.0
  %3441 = vmatpush1.msra.mxu0 0.0
  %3442 = vmatprep.subr.mxu0 0.0
  %3443 = vmatpush1.msra.mxu0 0.0
  %3444 = vmatprep.subr.mxu0 0.0
  %3445 = vmatpush1.msra.mxu0 0.0
  %3446 = vmatprep.subr.mxu0 0.0
  %3447 = vmatpush1.msra.mxu0 0.0
  %3448 = vmatprep.subr.mxu0 0.0
  %3449 = vmatpush1.msra.mxu0 0.0
  %3450 = vmatprep.subr.mxu0 0.0
  %3451 = vmatpush1.msra.mxu0 0.0
  %3452 = vmatprep.subr.mxu0 0.0
  %3453 = vmatpush1.msra.mxu0 0.0
  %3454 = vmatprep.subr.mxu0 0.0
  %3455 = vmatpush1.msra.mxu0 0.0
  %3456 = vmatprep.subr.mxu0 0.0
  %3457 = vmatpush1.msra.mxu0 0.0
  %3458 = vmatprep.subr.mxu0 0.0
  %3459 = vmatpush1.msra.mxu0 0.0
  %3460 = vmatprep.subr.mxu0 0.0
  %3461 = vmatpush1.msra.mxu0 0.0
  %3462 = vmatprep.subr.mxu0 0.0
  %3463 = vmatpush1.msra.mxu0 0.0
  %3464 = vmatprep.subr.mxu0 0.0
  %3465 = vmatpush1.msra.mxu0 0.0
  %3466 = vmatprep.mubr.f32.mxu0 0.0
  %3467 = vmatmul.mubr.f32.gmra.mrb[0].mxu0 %v3281
  %v3468 = vpop.f32.mrb[0].mxu0
  %v3469 = vadd.f32 0.0, %v3468
  %v3470 = vpop.f32.mrb[0].mxu0
  %v3471 = vadd.f32 0.0, %v3470
  %3472 = vdwg.mxu0
  %v3477 = vrot.slane %v3398, 2
  %v3478 = vrot.slane %v3400, 2
  %v3479 = vrot.slane %v3469, 2
  %v3480 = vrot.slane %v3471, 2
  %v3481 = vrot.slane %v3398, 3
  %v3482 = vrot.slane %v3400, 3
  %v3483 = vrot.slane %v3469, 3
  %v3484 = vrot.slane %v3471, 3
  %v3485 = vrot.slane %v3398, 4
  %v3486 = vrot.slane %v3400, 4
  %v3487 = vrot.slane %v3469, 4
  %v3488 = vrot.slane %v3471, 4
  %v3489 = vrot.slane %v3398, 5
  %v3490 = vrot.slane %v3400, 5
  %v3491 = vrot.slane %v3469, 5
  %v3492 = vrot.slane %v3471, 5
  %v3493 = vrot.slane %v3398, 6
  %v3494 = vrot.slane %v3400, 6
  %v3495 = vrot.slane %v3469, 6
  %v3496 = vrot.slane %v3471, 6
  %v3497 = vrot.slane %v3398, 7
  %v3498 = vrot.slane %v3400, 7
  %v3499 = vrot.slane %v3469, 7
  %v3500 = vrot.slane %v3471, 7
  %v3501 = vrot.slane %v3398, 1
  %v3502 = vrot.slane %v3400, 1
  %v3503 = vrot.slane %v3469, 1
  %v3504 = vrot.slane %v3471, 1
  %v3537 = vadd.f32 %v3299, %v3477
  %v3538 = vadd.f32 %v3300, %v3478
  %v3539 = vadd.f32 %v3301, %v3479
  %v3540 = vadd.f32 %v3302, %v3480
  %v3541 = vadd.f32 %v3303, %v3481
  %v3542 = vadd.f32 %v3304, %v3482
  %v3543 = vadd.f32 %v3305, %v3483
  %v3544 = vadd.f32 %v3306, %v3484
  %v3545 = vadd.f32 %v3307, %v3485
  %v3546 = vadd.f32 %v3308, %v3486
  %v3547 = vadd.f32 %v3309, %v3487
  %v3548 = vadd.f32 %v3310, %v3488
  %v3549 = vadd.f32 %v3311, %v3489
  %v3550 = vadd.f32 %v3312, %v3490
  %v3551 = vadd.f32 %v3313, %v3491
  %v3552 = vadd.f32 %v3314, %v3492
  %v3553 = vadd.f32 %v3315, %v3493
  %v3554 = vadd.f32 %v3316, %v3494
  %v3555 = vadd.f32 %v3317, %v3495
  %v3556 = vadd.f32 %v3318, %v3496
  %v3557 = vadd.f32 %v3319, %v3497
  %v3558 = vadd.f32 %v3320, %v3498
  %v3559 = vadd.f32 %v3321, %v3499
  %v3560 = vadd.f32 %v3322, %v3500
  %v3561 = vadd.f32 %v3323, %v3398
  %v3562 = vadd.f32 %v3324, %v3400
  %v3563 = vadd.f32 %v3325, %v3469
  %v3564 = vadd.f32 %v3326, %v3471
  %v3565 = vadd.f32 %v3327, %v3501
  %v3566 = vadd.f32 %v3328, %v3502
  %v3567 = vadd.f32 %v3329, %v3503
  %v3568 = vadd.f32 %v3330, %v3504
  %v3569 = vmul.f32 %v3537, 0.5
  %v3570 = vmul.f32 %v3541, 0.5
  %v3571 = vmul.f32 %v3545, 0.5
  %v3572 = vmul.f32 %v3549, 0.5
  %v3573 = vmul.f32 %v3553, 0.5
  %v3574 = vmul.f32 %v3557, 0.5
  %v3575 = vmul.f32 %v3561, 0.5
  %v3576 = vmul.f32 %v3565, 0.5
  %v3577 = vtanh.pop %v3569
  %v3578 = vtanh.pop %v3570
  %v3579 = vtanh.pop %v3571
  %v3580 = vtanh.pop %v3572
  %v3581 = vtanh.pop %v3573
  %v3582 = vtanh.pop %v3574
  %v3583 = vtanh.pop %v3575
  %v3584 = vtanh.pop %v3576
  %v3585 = vmul.f32 %v3577, 0.5
  %v3586 = vmul.f32 %v3578, 0.5
  %v3587 = vmul.f32 %v3579, 0.5
  %v3588 = vmul.f32 %v3580, 0.5
  %v3589 = vmul.f32 %v3581, 0.5
  %v3590 = vmul.f32 %v3582, 0.5
  %v3591 = vmul.f32 %v3583, 0.5
  %v3592 = vmul.f32 %v3584, 0.5
  %v3593 = vadd.f32 %v3585, 0.5
  %v3594 = vadd.f32 %v3586, 0.5
  %v3595 = vadd.f32 %v3587, 0.5
  %v3596 = vadd.f32 %v3588, 0.5
  %v3597 = vadd.f32 %v3589, 0.5
  %v3598 = vadd.f32 %v3590, 0.5
  %v3599 = vadd.f32 %v3591, 0.5
  %v3600 = vadd.f32 %v3592, 0.5
  %v3601 = vmul.f32 %v3538, 0.5
  %v3602 = vmul.f32 %v3542, 0.5
  %v3603 = vmul.f32 %v3546, 0.5
  %v3604 = vmul.f32 %v3550, 0.5
  %v3605 = vmul.f32 %v3554, 0.5
  %v3606 = vmul.f32 %v3558, 0.5
  %v3607 = vmul.f32 %v3562, 0.5
  %v3608 = vmul.f32 %v3566, 0.5
  %v3609 = vtanh.pop %v3601
  %v3610 = vtanh.pop %v3602
  %v3611 = vtanh.pop %v3603
  %v3612 = vtanh.pop %v3604
  %v3613 = vtanh.pop %v3605
  %v3614 = vtanh.pop %v3606
  %v3615 = vtanh.pop %v3607
  %v3616 = vtanh.pop %v3608
  %v3617 = vmul.f32 %v3609, 0.5
  %v3618 = vmul.f32 %v3610, 0.5
  %v3619 = vmul.f32 %v3611, 0.5
  %v3620 = vmul.f32 %v3612, 0.5
  %v3621 = vmul.f32 %v3613, 0.5
  %v3622 = vmul.f32 %v3614, 0.5
  %v3623 = vmul.f32 %v3615, 0.5
  %v3624 = vmul.f32 %v3616, 0.5
  %v3625 = vadd.f32 %v3617, 0.5
  %v3626 = vadd.f32 %v3618, 0.5
  %v3627 = vadd.f32 %v3619, 0.5
  %v3628 = vadd.f32 %v3620, 0.5
  %v3629 = vadd.f32 %v3621, 0.5
  %v3630 = vadd.f32 %v3622, 0.5
  %v3631 = vadd.f32 %v3623, 0.5
  %v3632 = vadd.f32 %v3624, 0.5
  %v3633 = vtanh.pop %v3539
  %v3634 = vtanh.pop %v3543
  %v3635 = vtanh.pop %v3547
  %v3636 = vtanh.pop %v3551
  %v3637 = vtanh.pop %v3555
  %v3638 = vtanh.pop %v3559
  %v3639 = vtanh.pop %v3563
  %v3640 = vtanh.pop %v3567
  %v3641 = vmul.f32 %v3540, 0.5
  %v3642 = vmul.f32 %v3544, 0.5
  %v3643 = vmul.f32 %v3548, 0.5
  %v3644 = vmul.f32 %v3552, 0.5
  %v3645 = vmul.f32 %v3556, 0.5
  %v3646 = vmul.f32 %v3560, 0.5
  %v3647 = vmul.f32 %v3564, 0.5
  %v3648 = vmul.f32 %v3568, 0.5
  %v3649 = vtanh.pop %v3641
  %v3650 = vtanh.pop %v3642
  %v3651 = vtanh.pop %v3643
  %v3652 = vtanh.pop %v3644
  %v3653 = vtanh.pop %v3645
  %v3654 = vtanh.pop %v3646
  %v3655 = vtanh.pop %v3647
  %v3656 = vtanh.pop %v3648
  %v3657 = vmul.f32 %v3649, 0.5
  %v3658 = vmul.f32 %v3650, 0.5
  %v3659 = vmul.f32 %v3651, 0.5
  %v3660 = vmul.f32 %v3652, 0.5
  %v3661 = vmul.f32 %v3653, 0.5
  %v3662 = vmul.f32 %v3654, 0.5
  %v3663 = vmul.f32 %v3655, 0.5
  %v3664 = vmul.f32 %v3656, 0.5
  %v3665 = vadd.f32 %v3657, 0.5
  %v3666 = vadd.f32 %v3658, 0.5
  %v3667 = vadd.f32 %v3659, 0.5
  %v3668 = vadd.f32 %v3660, 0.5
  %v3669 = vadd.f32 %v3661, 0.5
  %v3670 = vadd.f32 %v3662, 0.5
  %v3671 = vadd.f32 %v3663, 0.5
  %v3672 = vadd.f32 %v3664, 0.5
  %v3674 = vrot.slane %v3282, 2
  %v3675 = vrot.slane %v3282, 3
  %v3676 = vrot.slane %v3282, 4
  %v3677 = vrot.slane %v3282, 5
  %v3678 = vrot.slane %v3282, 6
  %v3679 = vrot.slane %v3282, 7
  %v3680 = vrot.slane %v3282, 1
  %v3689 = vmul.f32 %v3625, %v3674
  %v3690 = vmul.f32 %v3626, %v3675
  %v3691 = vmul.f32 %v3627, %v3676
  %v3692 = vmul.f32 %v3628, %v3677
  %v3693 = vmul.f32 %v3629, %v3678
  %v3694 = vmul.f32 %v3630, %v3679
  %v3695 = vmul.f32 %v3631, %v3282
  %v3696 = vmul.f32 %v3632, %v3680
  %v3697 = vmul.f32 %v3593, %v3633
  %v3698 = vmul.f32 %v3594, %v3634
  %v3699 = vmul.f32 %v3595, %v3635
  %v3700 = vmul.f32 %v3596, %v3636
  %v3701 = vmul.f32 %v3597, %v3637
  %v3702 = vmul.f32 %v3598, %v3638
  %v3703 = vmul.f32 %v3599, %v3639
  %v3704 = vmul.f32 %v3600, %v3640
  %v3705 = vadd.f32 %v3689, %v3697
  %v3706 = vadd.f32 %v3690, %v3698
  %v3707 = vadd.f32 %v3691, %v3699
  %v3708 = vadd.f32 %v3692, %v3700
  %v3709 = vadd.f32 %v3693, %v3701
  %v3710 = vadd.f32 %v3694, %v3702
  %v3711 = vadd.f32 %v3695, %v3703
  %v3712 = vadd.f32 %v3696, %v3704
  %v3713 = vtanh.pop %v3705
  %v3714 = vtanh.pop %v3706
  %v3715 = vtanh.pop %v3707
  %v3716 = vtanh.pop %v3708
  %v3717 = vtanh.pop %v3709
  %v3718 = vtanh.pop %v3710
  %v3719 = vtanh.pop %v3711
  %v3720 = vtanh.pop %v3712
  %v3721 = vmul.f32 %v3665, %v3713
  %v3722 = vmul.f32 %v3666, %v3714
  %v3723 = vmul.f32 %v3667, %v3715
  %v3724 = vmul.f32 %v3668, %v3716
  %v3725 = vmul.f32 %v3669, %v3717
  %v3726 = vmul.f32 %v3670, %v3718
  %v3727 = vmul.f32 %v3671, %v3719
  %v3728 = vmul.f32 %v3672, %v3720
  %v3737 = vrot.slane %v3722, 7
  %v3738 = vsel %vm556, %v3737, %v3721
  %v3739 = vrot.slane %v3723, 6
  %v3740 = vrot.slane %v3724, 5
  %v3741 = vsel %vm538, %v3740, %v3739
  %v3742 = vrot.slane %v3725, 4
  %v3743 = vsel %vm541, %v3742, %v3741
  %v3744 = vrot.slane %v3726, 3
  %v3745 = vsel %vm544, %v3744, %v3743
  %v3746 = vrot.slane %v3727, 2
  %v3747 = vsel %vm547, %v3746, %v3745
  %v3748 = vrot.slane %v3728, 1
  %v3749 = vsel %vm550, %v3748, %v3747
  %3752 = vst [vmem:[#allocation2 - $0x6] sm:$0xc0] %v3738
  %3753 = vst [vmem:[#allocation2 + $0x2] sm:$0x3f] %v3749
  %v3762 = vrot.slane %v3706, 7
  %v3763 = vsel %vm556, %v3762, %v3705
  %v3764 = vrot.slane %v3707, 6
  %v3765 = vrot.slane %v3708, 5
  %v3766 = vsel %vm538, %v3765, %v3764
  %v3767 = vrot.slane %v3709, 4
  %v3768 = vsel %vm541, %v3767, %v3766
  %v3769 = vrot.slane %v3710, 3
  %v3770 = vsel %vm544, %v3769, %v3768
  %v3771 = vrot.slane %v3711, 2
  %v3772 = vsel %vm547, %v3771, %v3770
  %v3773 = vrot.slane %v3712, 1
  %v3774 = vsel %vm550, %v3773, %v3772
  %3777 = vst [vmem:[#allocation3 - $0x6] sm:$0xc0] %v3763
  %3778 = vst [vmem:[#allocation3 + $0x2] sm:$0x3f] %v3774
  %v3779 = vpack.c.bf16 %v3721, %v3721
  %v3780 = vpack.c.bf16 %v3722, %v3722
  %v3781 = vpack.c.bf16 %v3723, %v3723
  %v3782 = vpack.c.bf16 %v3724, %v3724
  %v3783 = vpack.c.bf16 %v3725, %v3725
  %v3784 = vpack.c.bf16 %v3726, %v3726
  %v3785 = vpack.c.bf16 %v3727, %v3727
  %v3786 = vpack.c.bf16 %v3728, %v3728
  %vm3787 = vcmask 1043459
  %vm3788 = vsmask.f32 3328
  %vm3789 = vmand %vm3787, %vm3788
  %v3790 = vld [vmem:[%s2] sm:$0x8]
  %v3791 = vsel %vm3789, %v3779, %v3790
  %3792 = vst [vmem:[%s2] sm:$0x8] %v3791
  %v3793 = vld [vmem:[%s2 + $0x8] sm:$0x8]
  %v3794 = vsel %vm3789, %v3780, %v3793
  %3795 = vst [vmem:[%s2 + $0x8] sm:$0x8] %v3794
  %v3796 = vld [vmem:[%s2 + $0x10] sm:$0x8]
  %v3797 = vsel %vm3789, %v3781, %v3796
  %3798 = vst [vmem:[%s2 + $0x10] sm:$0x8] %v3797
  %v3799 = vld [vmem:[%s2 + $0x18] sm:$0x8]
  %v3800 = vsel %vm3789, %v3782, %v3799
  %3801 = vst [vmem:[%s2 + $0x18] sm:$0x8] %v3800
  %v3802 = vld [vmem:[%s2 + $0x20] sm:$0x8]
  %v3803 = vsel %vm3789, %v3783, %v3802
  %3804 = vst [vmem:[%s2 + $0x20] sm:$0x8] %v3803
  %v3805 = vld [vmem:[%s2 + $0x28] sm:$0x8]
  %v3806 = vsel %vm3789, %v3784, %v3805
  %3807 = vst [vmem:[%s2 + $0x28] sm:$0x8] %v3806
  %v3808 = vld [vmem:[%s2 + $0x30] sm:$0x8]
  %v3809 = vsel %vm3789, %v3785, %v3808
  %3810 = vst [vmem:[%s2 + $0x30] sm:$0x8] %v3809
  %v3811 = vld [vmem:[%s2 + $0x38] sm:$0x8]
  %v3812 = vsel %vm3789, %v3786, %v3811
  %3813 = vst [vmem:[%s2 + $0x38] sm:$0x8] %v3812
  %v3814 = vld [vmem:[#allocation2] sm:$0xff]
  %v3815 = vld [vmem:[#allocation3] sm:$0xff]
  %v3816 = vld [vmem:[%s0] sm:$0x88]
  %v3817 = vld [vmem:[%s0 + $0x8] sm:$0x88]
  %v3818 = vld [vmem:[%s0 + $0x20] sm:$0x88]
  %v3819 = vld [vmem:[%s0 + $0x28] sm:$0x88]
  %v3820 = vld [vmem:[%s0 + $0x40] sm:$0x88]
  %v3821 = vld [vmem:[%s0 + $0x48] sm:$0x88]
  %v3822 = vld [vmem:[%s0 + $0x60] sm:$0x88]
  %v3823 = vld [vmem:[%s0 + $0x68] sm:$0x88]
  %v3824 = vld [vmem:[%s0 + $0x80] sm:$0x88]
  %v3825 = vld [vmem:[%s0 + $0x88] sm:$0x88]
  %v3826 = vld [vmem:[%s0 + $0xa0] sm:$0x88]
  %v3827 = vld [vmem:[%s0 + $0xa8] sm:$0x88]
  %v3828 = vld [vmem:[%s0 + $0xc0] sm:$0x88]
  %v3829 = vld [vmem:[%s0 + $0xc8] sm:$0x88]
  %v3830 = vld [vmem:[%s0 + $0xe0] sm:$0x88]
  %v3831 = vld [vmem:[%s0 + $0xe8] sm:$0x88]
  %v3832 = vunpack.c.l.bf16 %v3816
  %v3833 = vunpack.c.h.bf16 %v3816
  %v3834 = vunpack.c.l.bf16 %v3817
  %v3835 = vunpack.c.h.bf16 %v3817
  %v3836 = vunpack.c.l.bf16 %v3818
  %v3837 = vunpack.c.h.bf16 %v3818
  %v3838 = vunpack.c.l.bf16 %v3819
  %v3839 = vunpack.c.h.bf16 %v3819
  %v3840 = vunpack.c.l.bf16 %v3820
  %v3841 = vunpack.c.h.bf16 %v3820
  %v3842 = vunpack.c.l.bf16 %v3821
  %v3843 = vunpack.c.h.bf16 %v3821
  %v3844 = vunpack.c.l.bf16 %v3822
  %v3845 = vunpack.c.h.bf16 %v3822
  %v3846 = vunpack.c.l.bf16 %v3823
  %v3847 = vunpack.c.h.bf16 %v3823
  %v3848 = vunpack.c.l.bf16 %v3824
  %v3849 = vunpack.c.h.bf16 %v3824
  %v3850 = vunpack.c.l.bf16 %v3825
  %v3851 = vunpack.c.h.bf16 %v3825
  %v3852 = vunpack.c.l.bf16 %v3826
  %v3853 = vunpack.c.h.bf16 %v3826
  %v3854 = vunpack.c.l.bf16 %v3827
  %v3855 = vunpack.c.h.bf16 %v3827
  %v3856 = vunpack.c.l.bf16 %v3828
  %v3857 = vunpack.c.h.bf16 %v3828
  %v3858 = vunpack.c.l.bf16 %v3829
  %v3859 = vunpack.c.h.bf16 %v3829
  %v3860 = vunpack.c.l.bf16 %v3830
  %v3861 = vunpack.c.h.bf16 %v3830
  %v3862 = vunpack.c.l.bf16 %v3831
  %v3863 = vunpack.c.h.bf16 %v3831
  %3864 = vmatprep.subr.mxu0 %v18
  %3865 = vmatpush1.msra.mxu0 %v17
  %3866 = vmatprep.subr.mxu0 %v22
  %3867 = vmatpush1.msra.mxu0 %v21
  %3868 = vmatprep.subr.mxu0 %v26
  %3869 = vmatpush1.msra.mxu0 %v25
  %3870 = vmatprep.subr.mxu0 %v30
  %3871 = vmatpush1.msra.mxu0 %v29
  %3872 = vmatprep.subr.mxu0 %v34
  %3873 = vmatpush1.msra.mxu0 %v33
  %3874 = vmatprep.subr.mxu0 %v38
  %3875 = vmatpush1.msra.mxu0 %v37
  %3876 = vmatprep.subr.mxu0 %v42
  %3877 = vmatpush1.msra.mxu0 %v41
  %3878 = vmatprep.subr.mxu0 %v46
  %3879 = vmatpush1.msra.mxu0 %v45
  %3880 = vmatprep.subr.mxu0 %v50
  %3881 = vmatpush1.msra.mxu0 %v49
  %3882 = vmatprep.subr.mxu0 %v54
  %3883 = vmatpush1.msra.mxu0 %v53
  %3884 = vmatprep.subr.mxu0 %v58
  %3885 = vmatpush1.msra.mxu0 %v57
  %3886 = vmatprep.subr.mxu0 %v62
  %3887 = vmatpush1.msra.mxu0 %v61
  %3888 = vmatprep.subr.mxu0 %v66
  %3889 = vmatpush1.msra.mxu0 %v65
  %3890 = vmatprep.subr.mxu0 %v70
  %3891 = vmatpush1.msra.mxu0 %v69
  %3892 = vmatprep.subr.mxu0 %v74
  %3893 = vmatpush1.msra.mxu0 %v73
  %3894 = vmatprep.subr.mxu0 %v78
  %3895 = vmatpush1.msra.mxu0 %v77
  %3896 = vmatprep.subr.mxu0 0.0
  %3897 = vmatpush1.msra.mxu0 0.0
  %3898 = vmatprep.subr.mxu0 0.0
  %3899 = vmatpush1.msra.mxu0 0.0
  %3900 = vmatprep.subr.mxu0 0.0
  %3901 = vmatpush1.msra.mxu0 0.0
  %3902 = vmatprep.subr.mxu0 0.0
  %3903 = vmatpush1.msra.mxu0 0.0
  %3904 = vmatprep.subr.mxu0 0.0
  %3905 = vmatpush1.msra.mxu0 0.0
  %3906 = vmatprep.subr.mxu0 0.0
  %3907 = vmatpush1.msra.mxu0 0.0
  %3908 = vmatprep.subr.mxu0 0.0
  %3909 = vmatpush1.msra.mxu0 0.0
  %3910 = vmatprep.subr.mxu0 0.0
  %3911 = vmatpush1.msra.mxu0 0.0
  %3912 = vmatprep.subr.mxu0 0.0
  %3913 = vmatpush1.msra.mxu0 0.0
  %3914 = vmatprep.subr.mxu0 0.0
  %3915 = vmatpush1.msra.mxu0 0.0
  %3916 = vmatprep.subr.mxu0 0.0
  %3917 = vmatpush1.msra.mxu0 0.0
  %3918 = vmatprep.subr.mxu0 0.0
  %3919 = vmatpush1.msra.mxu0 0.0
  %3920 = vmatprep.subr.mxu0 0.0
  %3921 = vmatpush1.msra.mxu0 0.0
  %3922 = vmatprep.subr.mxu0 0.0
  %3923 = vmatpush1.msra.mxu0 0.0
  %3924 = vmatprep.subr.mxu0 0.0
  %3925 = vmatpush1.msra.mxu0 0.0
  %3926 = vmatprep.subr.mxu0 0.0
  %3927 = vmatpush1.msra.mxu0 0.0
  %3928 = vmatprep.mubr.f32.mxu0 0.0
  %3929 = vmatmul.mubr.f32.gmra.mrb[0].mxu0 %v3814
  %v3930 = vpop.f32.mrb[0].mxu0
  %v3931 = vadd.f32 0.0, %v3930
  %v3932 = vpop.f32.mrb[0].mxu0
  %v3933 = vadd.f32 0.0, %v3932
  %3934 = vdwg.mxu0
  %3935 = vmatprep.subr.mxu0 %v20
  %3936 = vmatpush1.msra.mxu0 %v19
  %3937 = vmatprep.subr.mxu0 %v24
  %3938 = vmatpush1.msra.mxu0 %v23
  %3939 = vmatprep.subr.mxu0 %v28
  %3940 = vmatpush1.msra.mxu0 %v27
  %3941 = vmatprep.subr.mxu0 %v32
  %3942 = vmatpush1.msra.mxu0 %v31
  %3943 = vmatprep.subr.mxu0 %v36
  %3944 = vmatpush1.msra.mxu0 %v35
  %3945 = vmatprep.subr.mxu0 %v40
  %3946 = vmatpush1.msra.mxu0 %v39
  %3947 = vmatprep.subr.mxu0 %v44
  %3948 = vmatpush1.msra.mxu0 %v43
  %3949 = vmatprep.subr.mxu0 %v48
  %3950 = vmatpush1.msra.mxu0 %v47
  %3951 = vmatprep.subr.mxu0 %v52
  %3952 = vmatpush1.msra.mxu0 %v51
  %3953 = vmatprep.subr.mxu0 %v56
  %3954 = vmatpush1.msra.mxu0 %v55
  %3955 = vmatprep.subr.mxu0 %v60
  %3956 = vmatpush1.msra.mxu0 %v59
  %3957 = vmatprep.subr.mxu0 %v64
  %3958 = vmatpush1.msra.mxu0 %v63
  %3959 = vmatprep.subr.mxu0 %v68
  %3960 = vmatpush1.msra.mxu0 %v67
  %3961 = vmatprep.subr.mxu0 %v72
  %3962 = vmatpush1.msra.mxu0 %v71
  %3963 = vmatprep.subr.mxu0 %v76
  %3964 = vmatpush1.msra.mxu0 %v75
  %3965 = vmatprep.subr.mxu0 %v80
  %3966 = vmatpush1.msra.mxu0 %v79
  %3967 = vmatprep.subr.mxu0 0.0
  %3968 = vmatpush1.msra.mxu0 0.0
  %3969 = vmatprep.subr.mxu0 0.0
  %3970 = vmatpush1.msra.mxu0 0.0
  %3971 = vmatprep.subr.mxu0 0.0
  %3972 = vmatpush1.msra.mxu0 0.0
  %3973 = vmatprep.subr.mxu0 0.0
  %3974 = vmatpush1.msra.mxu0 0.0
  %3975 = vmatprep.subr.mxu0 0.0
  %3976 = vmatpush1.msra.mxu0 0.0
  %3977 = vmatprep.subr.mxu0 0.0
  %3978 = vmatpush1.msra.mxu0 0.0
  %3979 = vmatprep.subr.mxu0 0.0
  %3980 = vmatpush1.msra.mxu0 0.0
  %3981 = vmatprep.subr.mxu0 0.0
  %3982 = vmatpush1.msra.mxu0 0.0
  %3983 = vmatprep.subr.mxu0 0.0
  %3984 = vmatpush1.msra.mxu0 0.0
  %3985 = vmatprep.subr.mxu0 0.0
  %3986 = vmatpush1.msra.mxu0 0.0
  %3987 = vmatprep.subr.mxu0 0.0
  %3988 = vmatpush1.msra.mxu0 0.0
  %3989 = vmatprep.subr.mxu0 0.0
  %3990 = vmatpush1.msra.mxu0 0.0
  %3991 = vmatprep.subr.mxu0 0.0
  %3992 = vmatpush1.msra.mxu0 0.0
  %3993 = vmatprep.subr.mxu0 0.0
  %3994 = vmatpush1.msra.mxu0 0.0
  %3995 = vmatprep.subr.mxu0 0.0
  %3996 = vmatpush1.msra.mxu0 0.0
  %3997 = vmatprep.subr.mxu0 0.0
  %3998 = vmatpush1.msra.mxu0 0.0
  %3999 = vmatprep.mubr.f32.mxu0 0.0
  %4000 = vmatmul.mubr.f32.gmra.mrb[0].mxu0 %v3814
  %v4001 = vpop.f32.mrb[0].mxu0
  %v4002 = vadd.f32 0.0, %v4001
  %v4003 = vpop.f32.mrb[0].mxu0
  %v4004 = vadd.f32 0.0, %v4003
  %4005 = vdwg.mxu0
  %v4010 = vrot.slane %v3931, 1
  %v4011 = vrot.slane %v3933, 1
  %v4012 = vrot.slane %v4002, 1
  %v4013 = vrot.slane %v4004, 1
  %v4014 = vrot.slane %v3931, 2
  %v4015 = vrot.slane %v3933, 2
  %v4016 = vrot.slane %v4002, 2
  %v4017 = vrot.slane %v4004, 2
  %v4018 = vrot.slane %v3931, 3
  %v4019 = vrot.slane %v3933, 3
  %v4020 = vrot.slane %v4002, 3
  %v4021 = vrot.slane %v4004, 3
  %v4022 = vrot.slane %v3931, 4
  %v4023 = vrot.slane %v3933, 4
  %v4024 = vrot.slane %v4002, 4
  %v4025 = vrot.slane %v4004, 4
  %v4026 = vrot.slane %v3931, 5
  %v4027 = vrot.slane %v3933, 5
  %v4028 = vrot.slane %v4002, 5
  %v4029 = vrot.slane %v4004, 5
  %v4030 = vrot.slane %v3931, 6
  %v4031 = vrot.slane %v3933, 6
  %v4032 = vrot.slane %v4002, 6
  %v4033 = vrot.slane %v4004, 6
  %v4034 = vrot.slane %v3931, 7
  %v4035 = vrot.slane %v3933, 7
  %v4036 = vrot.slane %v4002, 7
  %v4037 = vrot.slane %v4004, 7
  %v4070 = vadd.f32 %v3832, %v4010
  %v4071 = vadd.f32 %v3833, %v4011
  %v4072 = vadd.f32 %v3834, %v4012
  %v4073 = vadd.f32 %v3835, %v4013
  %v4074 = vadd.f32 %v3836, %v4014
  %v4075 = vadd.f32 %v3837, %v4015
  %v4076 = vadd.f32 %v3838, %v4016
  %v4077 = vadd.f32 %v3839, %v4017
  %v4078 = vadd.f32 %v3840, %v4018
  %v4079 = vadd.f32 %v3841, %v4019
  %v4080 = vadd.f32 %v3842, %v4020
  %v4081 = vadd.f32 %v3843, %v4021
  %v4082 = vadd.f32 %v3844, %v4022
  %v4083 = vadd.f32 %v3845, %v4023
  %v4084 = vadd.f32 %v3846, %v4024
  %v4085 = vadd.f32 %v3847, %v4025
  %v4086 = vadd.f32 %v3848, %v4026
  %v4087 = vadd.f32 %v3849, %v4027
  %v4088 = vadd.f32 %v3850, %v4028
  %v4089 = vadd.f32 %v3851, %v4029
  %v4090 = vadd.f32 %v3852, %v4030
  %v4091 = vadd.f32 %v3853, %v4031
  %v4092 = vadd.f32 %v3854, %v4032
  %v4093 = vadd.f32 %v3855, %v4033
  %v4094 = vadd.f32 %v3856, %v4034
  %v4095 = vadd.f32 %v3857, %v4035
  %v4096 = vadd.f32 %v3858, %v4036
  %v4097 = vadd.f32 %v3859, %v4037
  %v4098 = vadd.f32 %v3860, %v3931
  %v4099 = vadd.f32 %v3861, %v3933
  %v4100 = vadd.f32 %v3862, %v4002
  %v4101 = vadd.f32 %v3863, %v4004
  %v4102 = vmul.f32 %v4070, 0.5
  %v4103 = vmul.f32 %v4074, 0.5
  %v4104 = vmul.f32 %v4078, 0.5
  %v4105 = vmul.f32 %v4082, 0.5
  %v4106 = vmul.f32 %v4086, 0.5
  %v4107 = vmul.f32 %v4090, 0.5
  %v4108 = vmul.f32 %v4094, 0.5
  %v4109 = vmul.f32 %v4098, 0.5
  %v4110 = vtanh.pop %v4102
  %v4111 = vtanh.pop %v4103
  %v4112 = vtanh.pop %v4104
  %v4113 = vtanh.pop %v4105
  %v4114 = vtanh.pop %v4106
  %v4115 = vtanh.pop %v4107
  %v4116 = vtanh.pop %v4108
  %v4117 = vtanh.pop %v4109
  %v4118 = vmul.f32 %v4110, 0.5
  %v4119 = vmul.f32 %v4111, 0.5
  %v4120 = vmul.f32 %v4112, 0.5
  %v4121 = vmul.f32 %v4113, 0.5
  %v4122 = vmul.f32 %v4114, 0.5
  %v4123 = vmul.f32 %v4115, 0.5
  %v4124 = vmul.f32 %v4116, 0.5
  %v4125 = vmul.f32 %v4117, 0.5
  %v4126 = vadd.f32 %v4118, 0.5
  %v4127 = vadd.f32 %v4119, 0.5
  %v4128 = vadd.f32 %v4120, 0.5
  %v4129 = vadd.f32 %v4121, 0.5
  %v4130 = vadd.f32 %v4122, 0.5
  %v4131 = vadd.f32 %v4123, 0.5
  %v4132 = vadd.f32 %v4124, 0.5
  %v4133 = vadd.f32 %v4125, 0.5
  %v4134 = vmul.f32 %v4071, 0.5
  %v4135 = vmul.f32 %v4075, 0.5
  %v4136 = vmul.f32 %v4079, 0.5
  %v4137 = vmul.f32 %v4083, 0.5
  %v4138 = vmul.f32 %v4087, 0.5
  %v4139 = vmul.f32 %v4091, 0.5
  %v4140 = vmul.f32 %v4095, 0.5
  %v4141 = vmul.f32 %v4099, 0.5
  %v4142 = vtanh.pop %v4134
  %v4143 = vtanh.pop %v4135
  %v4144 = vtanh.pop %v4136
  %v4145 = vtanh.pop %v4137
  %v4146 = vtanh.pop %v4138
  %v4147 = vtanh.pop %v4139
  %v4148 = vtanh.pop %v4140
  %v4149 = vtanh.pop %v4141
  %v4150 = vmul.f32 %v4142, 0.5
  %v4151 = vmul.f32 %v4143, 0.5
  %v4152 = vmul.f32 %v4144, 0.5
  %v4153 = vmul.f32 %v4145, 0.5
  %v4154 = vmul.f32 %v4146, 0.5
  %v4155 = vmul.f32 %v4147, 0.5
  %v4156 = vmul.f32 %v4148, 0.5
  %v4157 = vmul.f32 %v4149, 0.5
  %v4158 = vadd.f32 %v4150, 0.5
  %v4159 = vadd.f32 %v4151, 0.5
  %v4160 = vadd.f32 %v4152, 0.5
  %v4161 = vadd.f32 %v4153, 0.5
  %v4162 = vadd.f32 %v4154, 0.5
  %v4163 = vadd.f32 %v4155, 0.5
  %v4164 = vadd.f32 %v4156, 0.5
  %v4165 = vadd.f32 %v4157, 0.5
  %v4166 = vtanh.pop %v4072
  %v4167 = vtanh.pop %v4076
  %v4168 = vtanh.pop %v4080
  %v4169 = vtanh.pop %v4084
  %v4170 = vtanh.pop %v4088
  %v4171 = vtanh.pop %v4092
  %v4172 = vtanh.pop %v4096
  %v4173 = vtanh.pop %v4100
  %v4174 = vmul.f32 %v4073, 0.5
  %v4175 = vmul.f32 %v4077, 0.5
  %v4176 = vmul.f32 %v4081, 0.5
  %v4177 = vmul.f32 %v4085, 0.5
  %v4178 = vmul.f32 %v4089, 0.5
  %v4179 = vmul.f32 %v4093, 0.5
  %v4180 = vmul.f32 %v4097, 0.5
  %v4181 = vmul.f32 %v4101, 0.5
  %v4182 = vtanh.pop %v4174
  %v4183 = vtanh.pop %v4175
  %v4184 = vtanh.pop %v4176
  %v4185 = vtanh.pop %v4177
  %v4186 = vtanh.pop %v4178
  %v4187 = vtanh.pop %v4179
  %v4188 = vtanh.pop %v4180
  %v4189 = vtanh.pop %v4181
  %v4190 = vmul.f32 %v4182, 0.5
  %v4191 = vmul.f32 %v4183, 0.5
  %v4192 = vmul.f32 %v4184, 0.5
  %v4193 = vmul.f32 %v4185, 0.5
  %v4194 = vmul.f32 %v4186, 0.5
  %v4195 = vmul.f32 %v4187, 0.5
  %v4196 = vmul.f32 %v4188, 0.5
  %v4197 = vmul.f32 %v4189, 0.5
  %v4198 = vadd.f32 %v4190, 0.5
  %v4199 = vadd.f32 %v4191, 0.5
  %v4200 = vadd.f32 %v4192, 0.5
  %v4201 = vadd.f32 %v4193, 0.5
  %v4202 = vadd.f32 %v4194, 0.5
  %v4203 = vadd.f32 %v4195, 0.5
  %v4204 = vadd.f32 %v4196, 0.5
  %v4205 = vadd.f32 %v4197, 0.5
  %v4207 = vrot.slane %v3815, 1
  %v4208 = vrot.slane %v3815, 2
  %v4209 = vrot.slane %v3815, 3
  %v4210 = vrot.slane %v3815, 4
  %v4211 = vrot.slane %v3815, 5
  %v4212 = vrot.slane %v3815, 6
  %v4213 = vrot.slane %v3815, 7
  %v4222 = vmul.f32 %v4158, %v4207
  %v4223 = vmul.f32 %v4159, %v4208
  %v4224 = vmul.f32 %v4160, %v4209
  %v4225 = vmul.f32 %v4161, %v4210
  %v4226 = vmul.f32 %v4162, %v4211
  %v4227 = vmul.f32 %v4163, %v4212
  %v4228 = vmul.f32 %v4164, %v4213
  %v4229 = vmul.f32 %v4165, %v3815
  %v4230 = vmul.f32 %v4126, %v4166
  %v4231 = vmul.f32 %v4127, %v4167
  %v4232 = vmul.f32 %v4128, %v4168
  %v4233 = vmul.f32 %v4129, %v4169
  %v4234 = vmul.f32 %v4130, %v4170
  %v4235 = vmul.f32 %v4131, %v4171
  %v4236 = vmul.f32 %v4132, %v4172
  %v4237 = vmul.f32 %v4133, %v4173
  %v4238 = vadd.f32 %v4222, %v4230
  %v4239 = vadd.f32 %v4223, %v4231
  %v4240 = vadd.f32 %v4224, %v4232
  %v4241 = vadd.f32 %v4225, %v4233
  %v4242 = vadd.f32 %v4226, %v4234
  %v4243 = vadd.f32 %v4227, %v4235
  %v4244 = vadd.f32 %v4228, %v4236
  %v4245 = vadd.f32 %v4229, %v4237
  %v4246 = vtanh.pop %v4238
  %v4247 = vtanh.pop %v4239
  %v4248 = vtanh.pop %v4240
  %v4249 = vtanh.pop %v4241
  %v4250 = vtanh.pop %v4242
  %v4251 = vtanh.pop %v4243
  %v4252 = vtanh.pop %v4244
  %v4253 = vtanh.pop %v4245
  %v4254 = vmul.f32 %v4198, %v4246
  %v4255 = vmul.f32 %v4199, %v4247
  %v4256 = vmul.f32 %v4200, %v4248
  %v4257 = vmul.f32 %v4201, %v4249
  %v4258 = vmul.f32 %v4202, %v4250
  %v4259 = vmul.f32 %v4203, %v4251
  %v4260 = vmul.f32 %v4204, %v4252
  %v4261 = vmul.f32 %v4205, %v4253
  %v4270 = vrot.slane %v4255, 7
  %v4271 = vrot.slane %v4256, 6
  %v4272 = vsel %vm538, %v4271, %v4270
  %v4273 = vrot.slane %v4257, 5
  %v4274 = vsel %vm541, %v4273, %v4272
  %v4275 = vrot.slane %v4258, 4
  %v4276 = vsel %vm544, %v4275, %v4274
  %v4277 = vrot.slane %v4259, 3
  %v4278 = vsel %vm547, %v4277, %v4276
  %v4279 = vrot.slane %v4260, 2
  %v4280 = vsel %vm550, %v4279, %v4278
  %v4281 = vrot.slane %v4261, 1
  %v4282 = vsel %vm553, %v4281, %v4280
  %4285 = vst [vmem:[#allocation2 - $0x7] sm:$0x80] %v4254
  %4286 = vst [vmem:[#allocation2 + $0x1] sm:$0x7f] %v4282
  %v4295 = vrot.slane %v4239, 7
  %v4296 = vrot.slane %v4240, 6
  %v4297 = vsel %vm538, %v4296, %v4295
  %v4298 = vrot.slane %v4241, 5
  %v4299 = vsel %vm541, %v4298, %v4297
  %v4300 = vrot.slane %v4242, 4
  %v4301 = vsel %vm544, %v4300, %v4299
  %v4302 = vrot.slane %v4243, 3
  %v4303 = vsel %vm547, %v4302, %v4301
  %v4304 = vrot.slane %v4244, 2
  %v4305 = vsel %vm550, %v4304, %v4303
  %v4306 = vrot.slane %v4245, 1
  %v4307 = vsel %vm553, %v4306, %v4305
  %4310 = vst [vmem:[#allocation3 - $0x7] sm:$0x80] %v4238
  %4311 = vst [vmem:[#allocation3 + $0x1] sm:$0x7f] %v4307
  %v4312 = vpack.c.bf16 %v4254, %v4254
  %v4313 = vpack.c.bf16 %v4255, %v4255
  %v4314 = vpack.c.bf16 %v4256, %v4256
  %v4315 = vpack.c.bf16 %v4257, %v4257
  %v4316 = vpack.c.bf16 %v4258, %v4258
  %v4317 = vpack.c.bf16 %v4259, %v4259
  %v4318 = vpack.c.bf16 %v4260, %v4260
  %v4319 = vpack.c.bf16 %v4261, %v4261
  %vm4320 = vsmask.f32 7950
  %vm4321 = vmand %vm3787, %vm4320
  %v4322 = vld [vmem:[%s2] sm:$0x8]
  %v4323 = vsel %vm4321, %v4312, %v4322
  %4324 = vst [vmem:[%s2] sm:$0x8] %v4323
  %v4325 = vld [vmem:[%s2 + $0x8] sm:$0x8]
  %v4326 = vsel %vm4321, %v4313, %v4325
  %4327 = vst [vmem:[%s2 + $0x8] sm:$0x8] %v4326
  %v4328 = vld [vmem:[%s2 + $0x10] sm:$0x8]
  %v4329 = vsel %vm4321, %v4314, %v4328
  %4330 = vst [vmem:[%s2 + $0x10] sm:$0x8] %v4329
  %v4331 = vld [vmem:[%s2 + $0x18] sm:$0x8]
  %v4332 = vsel %vm4321, %v4315, %v4331
  %4333 = vst [vmem:[%s2 + $0x18] sm:$0x8] %v4332
  %v4334 = vld [vmem:[%s2 + $0x20] sm:$0x8]
  %v4335 = vsel %vm4321, %v4316, %v4334
  %4336 = vst [vmem:[%s2 + $0x20] sm:$0x8] %v4335
  %v4337 = vld [vmem:[%s2 + $0x28] sm:$0x8]
  %v4338 = vsel %vm4321, %v4317, %v4337
  %4339 = vst [vmem:[%s2 + $0x28] sm:$0x8] %v4338
  %v4340 = vld [vmem:[%s2 + $0x30] sm:$0x8]
  %v4341 = vsel %vm4321, %v4318, %v4340
  %4342 = vst [vmem:[%s2 + $0x30] sm:$0x8] %v4341
  %v4343 = vld [vmem:[%s2 + $0x38] sm:$0x8]
  %v4344 = vsel %vm4321, %v4319, %v4343
  %4345 = vst [vmem:[%s2 + $0x38] sm:$0x8] %v4344
  %v4346 = vld [vmem:[#allocation2] sm:$0xff]
  %v4347 = vld [vmem:[#allocation3] sm:$0xff]
  %v4348 = vld [vmem:[%s0 + $0x10] sm:$0x11]
  %v4349 = vld [vmem:[%s0 + $0x18] sm:$0x11]
  %v4350 = vld [vmem:[%s0 + $0x30] sm:$0x11]
  %v4351 = vld [vmem:[%s0 + $0x38] sm:$0x11]
  %v4352 = vld [vmem:[%s0 + $0x50] sm:$0x11]
  %v4353 = vld [vmem:[%s0 + $0x58] sm:$0x11]
  %v4354 = vld [vmem:[%s0 + $0x70] sm:$0x11]
  %v4355 = vld [vmem:[%s0 + $0x78] sm:$0x11]
  %v4356 = vld [vmem:[%s0 + $0x90] sm:$0x11]
  %v4357 = vld [vmem:[%s0 + $0x98] sm:$0x11]
  %v4358 = vld [vmem:[%s0 + $0xb0] sm:$0x11]
  %v4359 = vld [vmem:[%s0 + $0xb8] sm:$0x11]
  %v4360 = vld [vmem:[%s0 + $0xd0] sm:$0x11]
  %v4361 = vld [vmem:[%s0 + $0xd8] sm:$0x11]
  %v4362 = vld [vmem:[%s0 + $0xf0] sm:$0x11]
  %v4363 = vld [vmem:[%s0 + $0xf8] sm:$0x11]
  %v4364 = vunpack.c.l.bf16 %v4348
  %v4365 = vunpack.c.h.bf16 %v4348
  %v4366 = vunpack.c.l.bf16 %v4349
  %v4367 = vunpack.c.h.bf16 %v4349
  %v4368 = vunpack.c.l.bf16 %v4350
  %v4369 = vunpack.c.h.bf16 %v4350
  %v4370 = vunpack.c.l.bf16 %v4351
  %v4371 = vunpack.c.h.bf16 %v4351
  %v4372 = vunpack.c.l.bf16 %v4352
  %v4373 = vunpack.c.h.bf16 %v4352
  %v4374 = vunpack.c.l.bf16 %v4353
  %v4375 = vunpack.c.h.bf16 %v4353
  %v4376 = vunpack.c.l.bf16 %v4354
  %v4377 = vunpack.c.h.bf16 %v4354
  %v4378 = vunpack.c.l.bf16 %v4355
  %v4379 = vunpack.c.h.bf16 %v4355
  %v4380 = vunpack.c.l.bf16 %v4356
  %v4381 = vunpack.c.h.bf16 %v4356
  %v4382 = vunpack.c.l.bf16 %v4357
  %v4383 = vunpack.c.h.bf16 %v4357
  %v4384 = vunpack.c.l.bf16 %v4358
  %v4385 = vunpack.c.h.bf16 %v4358
  %v4386 = vunpack.c.l.bf16 %v4359
  %v4387 = vunpack.c.h.bf16 %v4359
  %v4388 = vunpack.c.l.bf16 %v4360
  %v4389 = vunpack.c.h.bf16 %v4360
  %v4390 = vunpack.c.l.bf16 %v4361
  %v4391 = vunpack.c.h.bf16 %v4361
  %v4392 = vunpack.c.l.bf16 %v4362
  %v4393 = vunpack.c.h.bf16 %v4362
  %v4394 = vunpack.c.l.bf16 %v4363
  %v4395 = vunpack.c.h.bf16 %v4363
  %4396 = vmatprep.subr.mxu0 %v18
  %4397 = vmatpush1.msra.mxu0 %v17
  %4398 = vmatprep.subr.mxu0 %v22
  %4399 = vmatpush1.msra.mxu0 %v21
  %4400 = vmatprep.subr.mxu0 %v26
  %4401 = vmatpush1.msra.mxu0 %v25
  %4402 = vmatprep.subr.mxu0 %v30
  %4403 = vmatpush1.msra.mxu0 %v29
  %4404 = vmatprep.subr.mxu0 %v34
  %4405 = vmatpush1.msra.mxu0 %v33
  %4406 = vmatprep.subr.mxu0 %v38
  %4407 = vmatpush1.msra.mxu0 %v37
  %4408 = vmatprep.subr.mxu0 %v42
  %4409 = vmatpush1.msra.mxu0 %v41
  %4410 = vmatprep.subr.mxu0 %v46
  %4411 = vmatpush1.msra.mxu0 %v45
  %4412 = vmatprep.subr.mxu0 %v50
  %4413 = vmatpush1.msra.mxu0 %v49
  %4414 = vmatprep.subr.mxu0 %v54
  %4415 = vmatpush1.msra.mxu0 %v53
  %4416 = vmatprep.subr.mxu0 %v58
  %4417 = vmatpush1.msra.mxu0 %v57
  %4418 = vmatprep.subr.mxu0 %v62
  %4419 = vmatpush1.msra.mxu0 %v61
  %4420 = vmatprep.subr.mxu0 %v66
  %4421 = vmatpush1.msra.mxu0 %v65
  %4422 = vmatprep.subr.mxu0 %v70
  %4423 = vmatpush1.msra.mxu0 %v69
  %4424 = vmatprep.subr.mxu0 %v74
  %4425 = vmatpush1.msra.mxu0 %v73
  %4426 = vmatprep.subr.mxu0 %v78
  %4427 = vmatpush1.msra.mxu0 %v77
  %4428 = vmatprep.subr.mxu0 0.0
  %4429 = vmatpush1.msra.mxu0 0.0
  %4430 = vmatprep.subr.mxu0 0.0
  %4431 = vmatpush1.msra.mxu0 0.0
  %4432 = vmatprep.subr.mxu0 0.0
  %4433 = vmatpush1.msra.mxu0 0.0
  %4434 = vmatprep.subr.mxu0 0.0
  %4435 = vmatpush1.msra.mxu0 0.0
  %4436 = vmatprep.subr.mxu0 0.0
  %4437 = vmatpush1.msra.mxu0 0.0
  %4438 = vmatprep.subr.mxu0 0.0
  %4439 = vmatpush1.msra.mxu0 0.0
  %4440 = vmatprep.subr.mxu0 0.0
  %4441 = vmatpush1.msra.mxu0 0.0
  %4442 = vmatprep.subr.mxu0 0.0
  %4443 = vmatpush1.msra.mxu0 0.0
  %4444 = vmatprep.subr.mxu0 0.0
  %4445 = vmatpush1.msra.mxu0 0.0
  %4446 = vmatprep.subr.mxu0 0.0
  %4447 = vmatpush1.msra.mxu0 0.0
  %4448 = vmatprep.subr.mxu0 0.0
  %4449 = vmatpush1.msra.mxu0 0.0
  %4450 = vmatprep.subr.mxu0 0.0
  %4451 = vmatpush1.msra.mxu0 0.0
  %4452 = vmatprep.subr.mxu0 0.0
  %4453 = vmatpush1.msra.mxu0 0.0
  %4454 = vmatprep.subr.mxu0 0.0
  %4455 = vmatpush1.msra.mxu0 0.0
  %4456 = vmatprep.subr.mxu0 0.0
  %4457 = vmatpush1.msra.mxu0 0.0
  %4458 = vmatprep.subr.mxu0 0.0
  %4459 = vmatpush1.msra.mxu0 0.0
  %4460 = vmatprep.mubr.f32.mxu0 0.0
  %4461 = vmatmul.mubr.f32.gmra.mrb[0].mxu0 %v4346
  %v4462 = vpop.f32.mrb[0].mxu0
  %v4463 = vadd.f32 0.0, %v4462
  %v4464 = vpop.f32.mrb[0].mxu0
  %v4465 = vadd.f32 0.0, %v4464
  %4466 = vdwg.mxu0
  %4467 = vmatprep.subr.mxu0 %v20
  %4468 = vmatpush1.msra.mxu0 %v19
  %4469 = vmatprep.subr.mxu0 %v24
  %4470 = vmatpush1.msra.mxu0 %v23
  %4471 = vmatprep.subr.mxu0 %v28
  %4472 = vmatpush1.msra.mxu0 %v27
  %4473 = vmatprep.subr.mxu0 %v32
  %4474 = vmatpush1.msra.mxu0 %v31
  %4475 = vmatprep.subr.mxu0 %v36
  %4476 = vmatpush1.msra.mxu0 %v35
  %4477 = vmatprep.subr.mxu0 %v40
  %4478 = vmatpush1.msra.mxu0 %v39
  %4479 = vmatprep.subr.mxu0 %v44
  %4480 = vmatpush1.msra.mxu0 %v43
  %4481 = vmatprep.subr.mxu0 %v48
  %4482 = vmatpush1.msra.mxu0 %v47
  %4483 = vmatprep.subr.mxu0 %v52
  %4484 = vmatpush1.msra.mxu0 %v51
  %4485 = vmatprep.subr.mxu0 %v56
  %4486 = vmatpush1.msra.mxu0 %v55
  %4487 = vmatprep.subr.mxu0 %v60
  %4488 = vmatpush1.msra.mxu0 %v59
  %4489 = vmatprep.subr.mxu0 %v64
  %4490 = vmatpush1.msra.mxu0 %v63
  %4491 = vmatprep.subr.mxu0 %v68
  %4492 = vmatpush1.msra.mxu0 %v67
  %4493 = vmatprep.subr.mxu0 %v72
  %4494 = vmatpush1.msra.mxu0 %v71
  %4495 = vmatprep.subr.mxu0 %v76
  %4496 = vmatpush1.msra.mxu0 %v75
  %4497 = vmatprep.subr.mxu0 %v80
  %4498 = vmatpush1.msra.mxu0 %v79
  %4499 = vmatprep.subr.mxu0 0.0
  %4500 = vmatpush1.msra.mxu0 0.0
  %4501 = vmatprep.subr.mxu0 0.0
  %4502 = vmatpush1.msra.mxu0 0.0
  %4503 = vmatprep.subr.mxu0 0.0
  %4504 = vmatpush1.msra.mxu0 0.0
  %4505 = vmatprep.subr.mxu0 0.0
  %4506 = vmatpush1.msra.mxu0 0.0
  %4507 = vmatprep.subr.mxu0 0.0
  %4508 = vmatpush1.msra.mxu0 0.0
  %4509 = vmatprep.subr.mxu0 0.0
  %4510 = vmatpush1.msra.mxu0 0.0
  %4511 = vmatprep.subr.mxu0 0.0
  %4512 = vmatpush1.msra.mxu0 0.0
  %4513 = vmatprep.subr.mxu0 0.0
  %4514 = vmatpush1.msra.mxu0 0.0
  %4515 = vmatprep.subr.mxu0 0.0
  %4516 = vmatpush1.msra.mxu0 0.0
  %4517 = vmatprep.subr.mxu0 0.0
  %4518 = vmatpush1.msra.mxu0 0.0
  %4519 = vmatprep.subr.mxu0 0.0
  %4520 = vmatpush1.msra.mxu0 0.0
  %4521 = vmatprep.subr.mxu0 0.0
  %4522 = vmatpush1.msra.mxu0 0.0
  %4523 = vmatprep.subr.mxu0 0.0
  %4524 = vmatpush1.msra.mxu0 0.0
  %4525 = vmatprep.subr.mxu0 0.0
  %4526 = vmatpush1.msra.mxu0 0.0
  %4527 = vmatprep.subr.mxu0 0.0
  %4528 = vmatpush1.msra.mxu0 0.0
  %4529 = vmatprep.subr.mxu0 0.0
  %4530 = vmatpush1.msra.mxu0 0.0
  %4531 = vmatprep.mubr.f32.mxu0 0.0
  %4532 = vmatmul.mubr.f32.gmra.mrb[0].mxu0 %v4346
  %v4533 = vpop.f32.mrb[0].mxu0
  %v4534 = vadd.f32 0.0, %v4533
  %v4535 = vpop.f32.mrb[0].mxu0
  %v4536 = vadd.f32 0.0, %v4535
  %4537 = vdwg.mxu0
  %v4542 = vrot.slane %v4463, 1
  %v4543 = vrot.slane %v4465, 1
  %v4544 = vrot.slane %v4534, 1
  %v4545 = vrot.slane %v4536, 1
  %v4546 = vrot.slane %v4463, 2
  %v4547 = vrot.slane %v4465, 2
  %v4548 = vrot.slane %v4534, 2
  %v4549 = vrot.slane %v4536, 2
  %v4550 = vrot.slane %v4463, 3
  %v4551 = vrot.slane %v4465, 3
  %v4552 = vrot.slane %v4534, 3
  %v4553 = vrot.slane %v4536, 3
  %v4554 = vrot.slane %v4463, 4
  %v4555 = vrot.slane %v4465, 4
  %v4556 = vrot.slane %v4534, 4
  %v4557 = vrot.slane %v4536, 4
  %v4558 = vrot.slane %v4463, 5
  %v4559 = vrot.slane %v4465, 5
  %v4560 = vrot.slane %v4534, 5
  %v4561 = vrot.slane %v4536, 5
  %v4562 = vrot.slane %v4463, 6
  %v4563 = vrot.slane %v4465, 6
  %v4564 = vrot.slane %v4534, 6
  %v4565 = vrot.slane %v4536, 6
  %v4566 = vrot.slane %v4463, 7
  %v4567 = vrot.slane %v4465, 7
  %v4568 = vrot.slane %v4534, 7
  %v4569 = vrot.slane %v4536, 7
  %v4602 = vadd.f32 %v4364, %v4463
  %v4603 = vadd.f32 %v4365, %v4465
  %v4604 = vadd.f32 %v4366, %v4534
  %v4605 = vadd.f32 %v4367, %v4536
  %v4606 = vadd.f32 %v4368, %v4542
  %v4607 = vadd.f32 %v4369, %v4543
  %v4608 = vadd.f32 %v4370, %v4544
  %v4609 = vadd.f32 %v4371, %v4545
  %v4610 = vadd.f32 %v4372, %v4546
  %v4611 = vadd.f32 %v4373, %v4547
  %v4612 = vadd.f32 %v4374, %v4548
  %v4613 = vadd.f32 %v4375, %v4549
  %v4614 = vadd.f32 %v4376, %v4550
  %v4615 = vadd.f32 %v4377, %v4551
  %v4616 = vadd.f32 %v4378, %v4552
  %v4617 = vadd.f32 %v4379, %v4553
  %v4618 = vadd.f32 %v4380, %v4554
  %v4619 = vadd.f32 %v4381, %v4555
  %v4620 = vadd.f32 %v4382, %v4556
  %v4621 = vadd.f32 %v4383, %v4557
  %v4622 = vadd.f32 %v4384, %v4558
  %v4623 = vadd.f32 %v4385, %v4559
  %v4624 = vadd.f32 %v4386, %v4560
  %v4625 = vadd.f32 %v4387, %v4561
  %v4626 = vadd.f32 %v4388, %v4562
  %v4627 = vadd.f32 %v4389, %v4563
  %v4628 = vadd.f32 %v4390, %v4564
  %v4629 = vadd.f32 %v4391, %v4565
  %v4630 = vadd.f32 %v4392, %v4566
  %v4631 = vadd.f32 %v4393, %v4567
  %v4632 = vadd.f32 %v4394, %v4568
  %v4633 = vadd.f32 %v4395, %v4569
  %v4634 = vmul.f32 %v4602, 0.5
  %v4635 = vmul.f32 %v4606, 0.5
  %v4636 = vmul.f32 %v4610, 0.5
  %v4637 = vmul.f32 %v4614, 0.5
  %v4638 = vmul.f32 %v4618, 0.5
  %v4639 = vmul.f32 %v4622, 0.5
  %v4640 = vmul.f32 %v4626, 0.5
  %v4641 = vmul.f32 %v4630, 0.5
  %v4642 = vtanh.pop %v4634
  %v4643 = vtanh.pop %v4635
  %v4644 = vtanh.pop %v4636
  %v4645 = vtanh.pop %v4637
  %v4646 = vtanh.pop %v4638
  %v4647 = vtanh.pop %v4639
  %v4648 = vtanh.pop %v4640
  %v4649 = vtanh.pop %v4641
  %v4650 = vmul.f32 %v4642, 0.5
  %v4651 = vmul.f32 %v4643, 0.5
  %v4652 = vmul.f32 %v4644, 0.5
  %v4653 = vmul.f32 %v4645, 0.5
  %v4654 = vmul.f32 %v4646, 0.5
  %v4655 = vmul.f32 %v4647, 0.5
  %v4656 = vmul.f32 %v4648, 0.5
  %v4657 = vmul.f32 %v4649, 0.5
  %v4658 = vadd.f32 %v4650, 0.5
  %v4659 = vadd.f32 %v4651, 0.5
  %v4660 = vadd.f32 %v4652, 0.5
  %v4661 = vadd.f32 %v4653, 0.5
  %v4662 = vadd.f32 %v4654, 0.5
  %v4663 = vadd.f32 %v4655, 0.5
  %v4664 = vadd.f32 %v4656, 0.5
  %v4665 = vadd.f32 %v4657, 0.5
  %v4666 = vmul.f32 %v4603, 0.5
  %v4667 = vmul.f32 %v4607, 0.5
  %v4668 = vmul.f32 %v4611, 0.5
  %v4669 = vmul.f32 %v4615, 0.5
  %v4670 = vmul.f32 %v4619, 0.5
  %v4671 = vmul.f32 %v4623, 0.5
  %v4672 = vmul.f32 %v4627, 0.5
  %v4673 = vmul.f32 %v4631, 0.5
  %v4674 = vtanh.pop %v4666
  %v4675 = vtanh.pop %v4667
  %v4676 = vtanh.pop %v4668
  %v4677 = vtanh.pop %v4669
  %v4678 = vtanh.pop %v4670
  %v4679 = vtanh.pop %v4671
  %v4680 = vtanh.pop %v4672
  %v4681 = vtanh.pop %v4673
  %v4682 = vmul.f32 %v4674, 0.5
  %v4683 = vmul.f32 %v4675, 0.5
  %v4684 = vmul.f32 %v4676, 0.5
  %v4685 = vmul.f32 %v4677, 0.5
  %v4686 = vmul.f32 %v4678, 0.5
  %v4687 = vmul.f32 %v4679, 0.5
  %v4688 = vmul.f32 %v4680, 0.5
  %v4689 = vmul.f32 %v4681, 0.5
  %v4690 = vadd.f32 %v4682, 0.5
  %v4691 = vadd.f32 %v4683, 0.5
  %v4692 = vadd.f32 %v4684, 0.5
  %v4693 = vadd.f32 %v4685, 0.5
  %v4694 = vadd.f32 %v4686, 0.5
  %v4695 = vadd.f32 %v4687, 0.5
  %v4696 = vadd.f32 %v4688, 0.5
  %v4697 = vadd.f32 %v4689, 0.5
  %v4698 = vtanh.pop %v4604
  %v4699 = vtanh.pop %v4608
  %v4700 = vtanh.pop %v4612
  %v4701 = vtanh.pop %v4616
  %v4702 = vtanh.pop %v4620
  %v4703 = vtanh.pop %v4624
  %v4704 = vtanh.pop %v4628
  %v4705 = vtanh.pop %v4632
  %v4706 = vmul.f32 %v4605, 0.5
  %v4707 = vmul.f32 %v4609, 0.5
  %v4708 = vmul.f32 %v4613, 0.5
  %v4709 = vmul.f32 %v4617, 0.5
  %v4710 = vmul.f32 %v4621, 0.5
  %v4711 = vmul.f32 %v4625, 0.5
  %v4712 = vmul.f32 %v4629, 0.5
  %v4713 = vmul.f32 %v4633, 0.5
  %v4714 = vtanh.pop %v4706
  %v4715 = vtanh.pop %v4707
  %v4716 = vtanh.pop %v4708
  %v4717 = vtanh.pop %v4709
  %v4718 = vtanh.pop %v4710
  %v4719 = vtanh.pop %v4711
  %v4720 = vtanh.pop %v4712
  %v4721 = vtanh.pop %v4713
  %v4722 = vmul.f32 %v4714, 0.5
  %v4723 = vmul.f32 %v4715, 0.5
  %v4724 = vmul.f32 %v4716, 0.5
  %v4725 = vmul.f32 %v4717, 0.5
  %v4726 = vmul.f32 %v4718, 0.5
  %v4727 = vmul.f32 %v4719, 0.5
  %v4728 = vmul.f32 %v4720, 0.5
  %v4729 = vmul.f32 %v4721, 0.5
  %v4730 = vadd.f32 %v4722, 0.5
  %v4731 = vadd.f32 %v4723, 0.5
  %v4732 = vadd.f32 %v4724, 0.5
  %v4733 = vadd.f32 %v4725, 0.5
  %v4734 = vadd.f32 %v4726, 0.5
  %v4735 = vadd.f32 %v4727, 0.5
  %v4736 = vadd.f32 %v4728, 0.5
  %v4737 = vadd.f32 %v4729, 0.5
  %v4739 = vrot.slane %v4347, 1
  %v4740 = vrot.slane %v4347, 2
  %v4741 = vrot.slane %v4347, 3
  %v4742 = vrot.slane %v4347, 4
  %v4743 = vrot.slane %v4347, 5
  %v4744 = vrot.slane %v4347, 6
  %v4745 = vrot.slane %v4347, 7
  %v4754 = vmul.f32 %v4690, %v4347
  %v4755 = vmul.f32 %v4691, %v4739
  %v4756 = vmul.f32 %v4692, %v4740
  %v4757 = vmul.f32 %v4693, %v4741
  %v4758 = vmul.f32 %v4694, %v4742
  %v4759 = vmul.f32 %v4695, %v4743
  %v4760 = vmul.f32 %v4696, %v4744
  %v4761 = vmul.f32 %v4697, %v4745
  %v4762 = vmul.f32 %v4658, %v4698
  %v4763 = vmul.f32 %v4659, %v4699
  %v4764 = vmul.f32 %v4660, %v4700
  %v4765 = vmul.f32 %v4661, %v4701
  %v4766 = vmul.f32 %v4662, %v4702
  %v4767 = vmul.f32 %v4663, %v4703
  %v4768 = vmul.f32 %v4664, %v4704
  %v4769 = vmul.f32 %v4665, %v4705
  %v4770 = vadd.f32 %v4754, %v4762
  %v4771 = vadd.f32 %v4755, %v4763
  %v4772 = vadd.f32 %v4756, %v4764
  %v4773 = vadd.f32 %v4757, %v4765
  %v4774 = vadd.f32 %v4758, %v4766
  %v4775 = vadd.f32 %v4759, %v4767
  %v4776 = vadd.f32 %v4760, %v4768
  %v4777 = vadd.f32 %v4761, %v4769
  %v4778 = vtanh.pop %v4770
  %v4779 = vtanh.pop %v4771
  %v4780 = vtanh.pop %v4772
  %v4781 = vtanh.pop %v4773
  %v4782 = vtanh.pop %v4774
  %v4783 = vtanh.pop %v4775
  %v4784 = vtanh.pop %v4776
  %v4785 = vtanh.pop %v4777
  %v4786 = vmul.f32 %v4730, %v4778
  %v4787 = vmul.f32 %v4731, %v4779
  %v4788 = vmul.f32 %v4732, %v4780
  %v4789 = vmul.f32 %v4733, %v4781
  %v4790 = vmul.f32 %v4734, %v4782
  %v4791 = vmul.f32 %v4735, %v4783
  %v4792 = vmul.f32 %v4736, %v4784
  %v4793 = vmul.f32 %v4737, %v4785
  %v4802 = vrot.slane %v4787, 7
  %v4803 = vsel %vm538, %v4802, %v4786
  %v4804 = vrot.slane %v4788, 6
  %v4805 = vsel %vm541, %v4804, %v4803
  %v4806 = vrot.slane %v4789, 5
  %v4807 = vsel %vm544, %v4806, %v4805
  %v4808 = vrot.slane %v4790, 4
  %v4809 = vsel %vm547, %v4808, %v4807
  %v4810 = vrot.slane %v4791, 3
  %v4811 = vsel %vm550, %v4810, %v4809
  %v4812 = vrot.slane %v4792, 2
  %v4813 = vsel %vm553, %v4812, %v4811
  %v4814 = vrot.slane %v4793, 1
  %v4815 = vsel %vm556, %v4814, %v4813
  %4817 = vst [vmem:[#allocation2] sm:$0xff] %v4815
  %v4826 = vrot.slane %v4771, 7
  %v4827 = vsel %vm538, %v4826, %v4770
  %v4828 = vrot.slane %v4772, 6
  %v4829 = vsel %vm541, %v4828, %v4827
  %v4830 = vrot.slane %v4773, 5
  %v4831 = vsel %vm544, %v4830, %v4829
  %v4832 = vrot.slane %v4774, 4
  %v4833 = vsel %vm547, %v4832, %v4831
  %v4834 = vrot.slane %v4775, 3
  %v4835 = vsel %vm550, %v4834, %v4833
  %v4836 = vrot.slane %v4776, 2
  %v4837 = vsel %vm553, %v4836, %v4835
  %v4838 = vrot.slane %v4777, 1
  %v4839 = vsel %vm556, %v4838, %v4837
  %4841 = vst [vmem:[#allocation3] sm:$0xff] %v4839
  %v4842 = vpack.c.bf16 %v4786, %v4786
  %v4843 = vpack.c.bf16 %v4787, %v4787
  %v4844 = vpack.c.bf16 %v4788, %v4788
  %v4845 = vpack.c.bf16 %v4789, %v4789
  %v4846 = vpack.c.bf16 %v4790, %v4790
  %v4847 = vpack.c.bf16 %v4791, %v4791
  %v4848 = vpack.c.bf16 %v4792, %v4792
  %v4849 = vpack.c.bf16 %v4793, %v4793
  %v4850 = vld [vmem:[%s2 + $0x4] sm:$0x1]
  %v4851 = vsel %vm594, %v4842, %v4850
  %4852 = vst [vmem:[%s2 + $0x4] sm:$0x1] %v4851
  %v4853 = vld [vmem:[%s2 + $0xc] sm:$0x1]
  %v4854 = vsel %vm594, %v4843, %v4853
  %4855 = vst [vmem:[%s2 + $0xc] sm:$0x1] %v4854
  %v4856 = vld [vmem:[%s2 + $0x14] sm:$0x1]
  %v4857 = vsel %vm594, %v4844, %v4856
  %4858 = vst [vmem:[%s2 + $0x14] sm:$0x1] %v4857
  %v4859 = vld [vmem:[%s2 + $0x1c] sm:$0x1]
  %v4860 = vsel %vm594, %v4845, %v4859
  %4861 = vst [vmem:[%s2 + $0x1c] sm:$0x1] %v4860
  %v4862 = vld [vmem:[%s2 + $0x24] sm:$0x1]
  %v4863 = vsel %vm594, %v4846, %v4862
  %4864 = vst [vmem:[%s2 + $0x24] sm:$0x1] %v4863
  %v4865 = vld [vmem:[%s2 + $0x2c] sm:$0x1]
  %v4866 = vsel %vm594, %v4847, %v4865
  %4867 = vst [vmem:[%s2 + $0x2c] sm:$0x1] %v4866
  %v4868 = vld [vmem:[%s2 + $0x34] sm:$0x1]
  %v4869 = vsel %vm594, %v4848, %v4868
  %4870 = vst [vmem:[%s2 + $0x34] sm:$0x1] %v4869
  %v4871 = vld [vmem:[%s2 + $0x3c] sm:$0x1]
  %v4872 = vsel %vm594, %v4849, %v4871
  %4873 = vst [vmem:[%s2 + $0x3c] sm:$0x1] %v4872
  %v4874 = vld [vmem:[#allocation2] sm:$0xff]
  %v4875 = vld [vmem:[#allocation3] sm:$0xff]
  %v4876 = vld [vmem:[%s0 + $0x10] sm:$0x11]
  %v4877 = vld [vmem:[%s0 + $0x18] sm:$0x11]
  %v4878 = vld [vmem:[%s0 + $0x30] sm:$0x11]
  %v4879 = vld [vmem:[%s0 + $0x38] sm:$0x11]
  %v4880 = vld [vmem:[%s0 + $0x50] sm:$0x11]
  %v4881 = vld [vmem:[%s0 + $0x58] sm:$0x11]
  %v4882 = vld [vmem:[%s0 + $0x70] sm:$0x11]
  %v4883 = vld [vmem:[%s0 + $0x78] sm:$0x11]
  %v4884 = vld [vmem:[%s0 + $0x90] sm:$0x11]
  %v4885 = vld [vmem:[%s0 + $0x98] sm:$0x11]
  %v4886 = vld [vmem:[%s0 + $0xb0] sm:$0x11]
  %v4887 = vld [vmem:[%s0 + $0xb8] sm:$0x11]
  %v4888 = vld [vmem:[%s0 + $0xd0] sm:$0x11]
  %v4889 = vld [vmem:[%s0 + $0xd8] sm:$0x11]
  %v4890 = vld [vmem:[%s0 + $0xf0] sm:$0x11]
  %v4891 = vld [vmem:[%s0 + $0xf8] sm:$0x11]
  %v4892 = vunpack.c.l.bf16 %v4876
  %v4893 = vunpack.c.h.bf16 %v4876
  %v4894 = vunpack.c.l.bf16 %v4877
  %v4895 = vunpack.c.h.bf16 %v4877
  %v4896 = vunpack.c.l.bf16 %v4878
  %v4897 = vunpack.c.h.bf16 %v4878
  %v4898 = vunpack.c.l.bf16 %v4879
  %v4899 = vunpack.c.h.bf16 %v4879
  %v4900 = vunpack.c.l.bf16 %v4880
  %v4901 = vunpack.c.h.bf16 %v4880
  %v4902 = vunpack.c.l.bf16 %v4881
  %v4903 = vunpack.c.h.bf16 %v4881
  %v4904 = vunpack.c.l.bf16 %v4882
  %v4905 = vunpack.c.h.bf16 %v4882
  %v4906 = vunpack.c.l.bf16 %v4883
  %v4907 = vunpack.c.h.bf16 %v4883
  %v4908 = vunpack.c.l.bf16 %v4884
  %v4909 = vunpack.c.h.bf16 %v4884
  %v4910 = vunpack.c.l.bf16 %v4885
  %v4911 = vunpack.c.h.bf16 %v4885
  %v4912 = vunpack.c.l.bf16 %v4886
  %v4913 = vunpack.c.h.bf16 %v4886
  %v4914 = vunpack.c.l.bf16 %v4887
  %v4915 = vunpack.c.h.bf16 %v4887
  %v4916 = vunpack.c.l.bf16 %v4888
  %v4917 = vunpack.c.h.bf16 %v4888
  %v4918 = vunpack.c.l.bf16 %v4889
  %v4919 = vunpack.c.h.bf16 %v4889
  %v4920 = vunpack.c.l.bf16 %v4890
  %v4921 = vunpack.c.h.bf16 %v4890
  %v4922 = vunpack.c.l.bf16 %v4891
  %v4923 = vunpack.c.h.bf16 %v4891
  %4924 = vmatprep.subr.mxu0 %v18
  %4925 = vmatpush1.msra.mxu0 %v17
  %4926 = vmatprep.subr.mxu0 %v22
  %4927 = vmatpush1.msra.mxu0 %v21
  %4928 = vmatprep.subr.mxu0 %v26
  %4929 = vmatpush1.msra.mxu0 %v25
  %4930 = vmatprep.subr.mxu0 %v30
  %4931 = vmatpush1.msra.mxu0 %v29
  %4932 = vmatprep.subr.mxu0 %v34
  %4933 = vmatpush1.msra.mxu0 %v33
  %4934 = vmatprep.subr.mxu0 %v38
  %4935 = vmatpush1.msra.mxu0 %v37
  %4936 = vmatprep.subr.mxu0 %v42
  %4937 = vmatpush1.msra.mxu0 %v41
  %4938 = vmatprep.subr.mxu0 %v46
  %4939 = vmatpush1.msra.mxu0 %v45
  %4940 = vmatprep.subr.mxu0 %v50
  %4941 = vmatpush1.msra.mxu0 %v49
  %4942 = vmatprep.subr.mxu0 %v54
  %4943 = vmatpush1.msra.mxu0 %v53
  %4944 = vmatprep.subr.mxu0 %v58
  %4945 = vmatpush1.msra.mxu0 %v57
  %4946 = vmatprep.subr.mxu0 %v62
  %4947 = vmatpush1.msra.mxu0 %v61
  %4948 = vmatprep.subr.mxu0 %v66
  %4949 = vmatpush1.msra.mxu0 %v65
  %4950 = vmatprep.subr.mxu0 %v70
  %4951 = vmatpush1.msra.mxu0 %v69
  %4952 = vmatprep.subr.mxu0 %v74
  %4953 = vmatpush1.msra.mxu0 %v73
  %4954 = vmatprep.subr.mxu0 %v78
  %4955 = vmatpush1.msra.mxu0 %v77
  %4956 = vmatprep.subr.mxu0 0.0
  %4957 = vmatpush1.msra.mxu0 0.0
  %4958 = vmatprep.subr.mxu0 0.0
  %4959 = vmatpush1.msra.mxu0 0.0
  %4960 = vmatprep.subr.mxu0 0.0
  %4961 = vmatpush1.msra.mxu0 0.0
  %4962 = vmatprep.subr.mxu0 0.0
  %4963 = vmatpush1.msra.mxu0 0.0
  %4964 = vmatprep.subr.mxu0 0.0
  %4965 = vmatpush1.msra.mxu0 0.0
  %4966 = vmatprep.subr.mxu0 0.0
  %4967 = vmatpush1.msra.mxu0 0.0
  %4968 = vmatprep.subr.mxu0 0.0
  %4969 = vmatpush1.msra.mxu0 0.0
  %4970 = vmatprep.subr.mxu0 0.0
  %4971 = vmatpush1.msra.mxu0 0.0
  %4972 = vmatprep.subr.mxu0 0.0
  %4973 = vmatpush1.msra.mxu0 0.0
  %4974 = vmatprep.subr.mxu0 0.0
  %4975 = vmatpush1.msra.mxu0 0.0
  %4976 = vmatprep.subr.mxu0 0.0
  %4977 = vmatpush1.msra.mxu0 0.0
  %4978 = vmatprep.subr.mxu0 0.0
  %4979 = vmatpush1.msra.mxu0 0.0
  %4980 = vmatprep.subr.mxu0 0.0
  %4981 = vmatpush1.msra.mxu0 0.0
  %4982 = vmatprep.subr.mxu0 0.0
  %4983 = vmatpush1.msra.mxu0 0.0
  %4984 = vmatprep.subr.mxu0 0.0
  %4985 = vmatpush1.msra.mxu0 0.0
  %4986 = vmatprep.subr.mxu0 0.0
  %4987 = vmatpush1.msra.mxu0 0.0
  %4988 = vmatprep.mubr.f32.mxu0 0.0
  %4989 = vmatmul.mubr.f32.gmra.mrb[0].mxu0 %v4874
  %v4990 = vpop.f32.mrb[0].mxu0
  %v4991 = vadd.f32 0.0, %v4990
  %v4992 = vpop.f32.mrb[0].mxu0
  %v4993 = vadd.f32 0.0, %v4992
  %4994 = vdwg.mxu0
  %4995 = vmatprep.subr.mxu0 %v20
  %4996 = vmatpush1.msra.mxu0 %v19
  %4997 = vmatprep.subr.mxu0 %v24
  %4998 = vmatpush1.msra.mxu0 %v23
  %4999 = vmatprep.subr.mxu0 %v28
  %5000 = vmatpush1.msra.mxu0 %v27
  %5001 = vmatprep.subr.mxu0 %v32
  %5002 = vmatpush1.msra.mxu0 %v31
  %5003 = vmatprep.subr.mxu0 %v36
  %5004 = vmatpush1.msra.mxu0 %v35
  %5005 = vmatprep.subr.mxu0 %v40
  %5006 = vmatpush1.msra.mxu0 %v39
  %5007 = vmatprep.subr.mxu0 %v44
  %5008 = vmatpush1.msra.mxu0 %v43
  %5009 = vmatprep.subr.mxu0 %v48
  %5010 = vmatpush1.msra.mxu0 %v47
  %5011 = vmatprep.subr.mxu0 %v52
  %5012 = vmatpush1.msra.mxu0 %v51
  %5013 = vmatprep.subr.mxu0 %v56
  %5014 = vmatpush1.msra.mxu0 %v55
  %5015 = vmatprep.subr.mxu0 %v60
  %5016 = vmatpush1.msra.mxu0 %v59
  %5017 = vmatprep.subr.mxu0 %v64
  %5018 = vmatpush1.msra.mxu0 %v63
  %5019 = vmatprep.subr.mxu0 %v68
  %5020 = vmatpush1.msra.mxu0 %v67
  %5021 = vmatprep.subr.mxu0 %v72
  %5022 = vmatpush1.msra.mxu0 %v71
  %5023 = vmatprep.subr.mxu0 %v76
  %5024 = vmatpush1.msra.mxu0 %v75
  %5025 = vmatprep.subr.mxu0 %v80
  %5026 = vmatpush1.msra.mxu0 %v79
  %5027 = vmatprep.subr.mxu0 0.0
  %5028 = vmatpush1.msra.mxu0 0.0
  %5029 = vmatprep.subr.mxu0 0.0
  %5030 = vmatpush1.msra.mxu0 0.0
  %5031 = vmatprep.subr.mxu0 0.0
  %5032 = vmatpush1.msra.mxu0 0.0
  %5033 = vmatprep.subr.mxu0 0.0
  %5034 = vmatpush1.msra.mxu0 0.0
  %5035 = vmatprep.subr.mxu0 0.0
  %5036 = vmatpush1.msra.mxu0 0.0
  %5037 = vmatprep.subr.mxu0 0.0
  %5038 = vmatpush1.msra.mxu0 0.0
  %5039 = vmatprep.subr.mxu0 0.0
  %5040 = vmatpush1.msra.mxu0 0.0
  %5041 = vmatprep.subr.mxu0 0.0
  %5042 = vmatpush1.msra.mxu0 0.0
  %5043 = vmatprep.subr.mxu0 0.0
  %5044 = vmatpush1.msra.mxu0 0.0
  %5045 = vmatprep.subr.mxu0 0.0
  %5046 = vmatpush1.msra.mxu0 0.0
  %5047 = vmatprep.subr.mxu0 0.0
  %5048 = vmatpush1.msra.mxu0 0.0
  %5049 = vmatprep.subr.mxu0 0.0
  %5050 = vmatpush1.msra.mxu0 0.0
  %5051 = vmatprep.subr.mxu0 0.0
  %5052 = vmatpush1.msra.mxu0 0.0
  %5053 = vmatprep.subr.mxu0 0.0
  %5054 = vmatpush1.msra.mxu0 0.0
  %5055 = vmatprep.subr.mxu0 0.0
  %5056 = vmatpush1.msra.mxu0 0.0
  %5057 = vmatprep.subr.mxu0 0.0
  %5058 = vmatpush1.msra.mxu0 0.0
  %5059 = vmatprep.mubr.f32.mxu0 0.0
  %5060 = vmatmul.mubr.f32.gmra.mrb[0].mxu0 %v4874
  %v5061 = vpop.f32.mrb[0].mxu0
  %v5062 = vadd.f32 0.0, %v5061
  %v5063 = vpop.f32.mrb[0].mxu0
  %v5064 = vadd.f32 0.0, %v5063
  %5065 = vdwg.mxu0
  %v5070 = vrot.slane %v4991, 7
  %v5071 = vrot.slane %v4993, 7
  %v5072 = vrot.slane %v5062, 7
  %v5073 = vrot.slane %v5064, 7
  %v5074 = vrot.slane %v4991, 1
  %v5075 = vrot.slane %v4993, 1
  %v5076 = vrot.slane %v5062, 1
  %v5077 = vrot.slane %v5064, 1
  %v5078 = vrot.slane %v4991, 2
  %v5079 = vrot.slane %v4993, 2
  %v5080 = vrot.slane %v5062, 2
  %v5081 = vrot.slane %v5064, 2
  %v5082 = vrot.slane %v4991, 3
  %v5083 = vrot.slane %v4993, 3
  %v5084 = vrot.slane %v5062, 3
  %v5085 = vrot.slane %v5064, 3
  %v5086 = vrot.slane %v4991, 4
  %v5087 = vrot.slane %v4993, 4
  %v5088 = vrot.slane %v5062, 4
  %v5089 = vrot.slane %v5064, 4
  %v5090 = vrot.slane %v4991, 5
  %v5091 = vrot.slane %v4993, 5
  %v5092 = vrot.slane %v5062, 5
  %v5093 = vrot.slane %v5064, 5
  %v5094 = vrot.slane %v4991, 6
  %v5095 = vrot.slane %v4993, 6
  %v5096 = vrot.slane %v5062, 6
  %v5097 = vrot.slane %v5064, 6
  %v5130 = vadd.f32 %v4892, %v5070
  %v5131 = vadd.f32 %v4893, %v5071
  %v5132 = vadd.f32 %v4894, %v5072
  %v5133 = vadd.f32 %v4895, %v5073
  %v5134 = vadd.f32 %v4896, %v4991
  %v5135 = vadd.f32 %v4897, %v4993
  %v5136 = vadd.f32 %v4898, %v5062
  %v5137 = vadd.f32 %v4899, %v5064
  %v5138 = vadd.f32 %v4900, %v5074
  %v5139 = vadd.f32 %v4901, %v5075
  %v5140 = vadd.f32 %v4902, %v5076
  %v5141 = vadd.f32 %v4903, %v5077
  %v5142 = vadd.f32 %v4904, %v5078
  %v5143 = vadd.f32 %v4905, %v5079
  %v5144 = vadd.f32 %v4906, %v5080
  %v5145 = vadd.f32 %v4907, %v5081
  %v5146 = vadd.f32 %v4908, %v5082
  %v5147 = vadd.f32 %v4909, %v5083
  %v5148 = vadd.f32 %v4910, %v5084
  %v5149 = vadd.f32 %v4911, %v5085
  %v5150 = vadd.f32 %v4912, %v5086
  %v5151 = vadd.f32 %v4913, %v5087
  %v5152 = vadd.f32 %v4914, %v5088
  %v5153 = vadd.f32 %v4915, %v5089
  %v5154 = vadd.f32 %v4916, %v5090
  %v5155 = vadd.f32 %v4917, %v5091
  %v5156 = vadd.f32 %v4918, %v5092
  %v5157 = vadd.f32 %v4919, %v5093
  %v5158 = vadd.f32 %v4920, %v5094
  %v5159 = vadd.f32 %v4921, %v5095
  %v5160 = vadd.f32 %v4922, %v5096
  %v5161 = vadd.f32 %v4923, %v5097
  %v5162 = vmul.f32 %v5130, 0.5
  %v5163 = vmul.f32 %v5134, 0.5
  %v5164 = vmul.f32 %v5138, 0.5
  %v5165 = vmul.f32 %v5142, 0.5
  %v5166 = vmul.f32 %v5146, 0.5
  %v5167 = vmul.f32 %v5150, 0.5
  %v5168 = vmul.f32 %v5154, 0.5
  %v5169 = vmul.f32 %v5158, 0.5
  %v5170 = vtanh.pop %v5162
  %v5171 = vtanh.pop %v5163
  %v5172 = vtanh.pop %v5164
  %v5173 = vtanh.pop %v5165
  %v5174 = vtanh.pop %v5166
  %v5175 = vtanh.pop %v5167
  %v5176 = vtanh.pop %v5168
  %v5177 = vtanh.pop %v5169
  %v5178 = vmul.f32 %v5170, 0.5
  %v5179 = vmul.f32 %v5171, 0.5
  %v5180 = vmul.f32 %v5172, 0.5
  %v5181 = vmul.f32 %v5173, 0.5
  %v5182 = vmul.f32 %v5174, 0.5
  %v5183 = vmul.f32 %v5175, 0.5
  %v5184 = vmul.f32 %v5176, 0.5
  %v5185 = vmul.f32 %v5177, 0.5
  %v5186 = vadd.f32 %v5178, 0.5
  %v5187 = vadd.f32 %v5179, 0.5
  %v5188 = vadd.f32 %v5180, 0.5
  %v5189 = vadd.f32 %v5181, 0.5
  %v5190 = vadd.f32 %v5182, 0.5
  %v5191 = vadd.f32 %v5183, 0.5
  %v5192 = vadd.f32 %v5184, 0.5
  %v5193 = vadd.f32 %v5185, 0.5
  %v5194 = vmul.f32 %v5131, 0.5
  %v5195 = vmul.f32 %v5135, 0.5
  %v5196 = vmul.f32 %v5139, 0.5
  %v5197 = vmul.f32 %v5143, 0.5
  %v5198 = vmul.f32 %v5147, 0.5
  %v5199 = vmul.f32 %v5151, 0.5
  %v5200 = vmul.f32 %v5155, 0.5
  %v5201 = vmul.f32 %v5159, 0.5
  %v5202 = vtanh.pop %v5194
  %v5203 = vtanh.pop %v5195
  %v5204 = vtanh.pop %v5196
  %v5205 = vtanh.pop %v5197
  %v5206 = vtanh.pop %v5198
  %v5207 = vtanh.pop %v5199
  %v5208 = vtanh.pop %v5200
  %v5209 = vtanh.pop %v5201
  %v5210 = vmul.f32 %v5202, 0.5
  %v5211 = vmul.f32 %v5203, 0.5
  %v5212 = vmul.f32 %v5204, 0.5
  %v5213 = vmul.f32 %v5205, 0.5
  %v5214 = vmul.f32 %v5206, 0.5
  %v5215 = vmul.f32 %v5207, 0.5
  %v5216 = vmul.f32 %v5208, 0.5
  %v5217 = vmul.f32 %v5209, 0.5
  %v5218 = vadd.f32 %v5210, 0.5
  %v5219 = vadd.f32 %v5211, 0.5
  %v5220 = vadd.f32 %v5212, 0.5
  %v5221 = vadd.f32 %v5213, 0.5
  %v5222 = vadd.f32 %v5214, 0.5
  %v5223 = vadd.f32 %v5215, 0.5
  %v5224 = vadd.f32 %v5216, 0.5
  %v5225 = vadd.f32 %v5217, 0.5
  %v5226 = vtanh.pop %v5132
  %v5227 = vtanh.pop %v5136
  %v5228 = vtanh.pop %v5140
  %v5229 = vtanh.pop %v5144
  %v5230 = vtanh.pop %v5148
  %v5231 = vtanh.pop %v5152
  %v5232 = vtanh.pop %v5156
  %v5233 = vtanh.pop %v5160
  %v5234 = vmul.f32 %v5133, 0.5
  %v5235 = vmul.f32 %v5137, 0.5
  %v5236 = vmul.f32 %v5141, 0.5
  %v5237 = vmul.f32 %v5145, 0.5
  %v5238 = vmul.f32 %v5149, 0.5
  %v5239 = vmul.f32 %v5153, 0.5
  %v5240 = vmul.f32 %v5157, 0.5
  %v5241 = vmul.f32 %v5161, 0.5
  %v5242 = vtanh.pop %v5234
  %v5243 = vtanh.pop %v5235
  %v5244 = vtanh.pop %v5236
  %v5245 = vtanh.pop %v5237
  %v5246 = vtanh.pop %v5238
  %v5247 = vtanh.pop %v5239
  %v5248 = vtanh.pop %v5240
  %v5249 = vtanh.pop %v5241
  %v5250 = vmul.f32 %v5242, 0.5
  %v5251 = vmul.f32 %v5243, 0.5
  %v5252 = vmul.f32 %v5244, 0.5
  %v5253 = vmul.f32 %v5245, 0.5
  %v5254 = vmul.f32 %v5246, 0.5
  %v5255 = vmul.f32 %v5247, 0.5
  %v5256 = vmul.f32 %v5248, 0.5
  %v5257 = vmul.f32 %v5249, 0.5
  %v5258 = vadd.f32 %v5250, 0.5
  %v5259 = vadd.f32 %v5251, 0.5
  %v5260 = vadd.f32 %v5252, 0.5
  %v5261 = vadd.f32 %v5253, 0.5
  %v5262 = vadd.f32 %v5254, 0.5
  %v5263 = vadd.f32 %v5255, 0.5
  %v5264 = vadd.f32 %v5256, 0.5
  %v5265 = vadd.f32 %v5257, 0.5
  %v5267 = vrot.slane %v4875, 7
  %v5268 = vrot.slane %v4875, 1
  %v5269 = vrot.slane %v4875, 2
  %v5270 = vrot.slane %v4875, 3
  %v5271 = vrot.slane %v4875, 4
  %v5272 = vrot.slane %v4875, 5
  %v5273 = vrot.slane %v4875, 6
  %v5282 = vmul.f32 %v5218, %v5267
  %v5283 = vmul.f32 %v5219, %v4875
  %v5284 = vmul.f32 %v5220, %v5268
  %v5285 = vmul.f32 %v5221, %v5269
  %v5286 = vmul.f32 %v5222, %v5270
  %v5287 = vmul.f32 %v5223, %v5271
  %v5288 = vmul.f32 %v5224, %v5272
  %v5289 = vmul.f32 %v5225, %v5273
  %v5290 = vmul.f32 %v5186, %v5226
  %v5291 = vmul.f32 %v5187, %v5227
  %v5292 = vmul.f32 %v5188, %v5228
  %v5293 = vmul.f32 %v5189, %v5229
  %v5294 = vmul.f32 %v5190, %v5230
  %v5295 = vmul.f32 %v5191, %v5231
  %v5296 = vmul.f32 %v5192, %v5232
  %v5297 = vmul.f32 %v5193, %v5233
  %v5298 = vadd.f32 %v5282, %v5290
  %v5299 = vadd.f32 %v5283, %v5291
  %v5300 = vadd.f32 %v5284, %v5292
  %v5301 = vadd.f32 %v5285, %v5293
  %v5302 = vadd.f32 %v5286, %v5294
  %v5303 = vadd.f32 %v5287, %v5295
  %v5304 = vadd.f32 %v5288, %v5296
  %v5305 = vadd.f32 %v5289, %v5297
  %v5306 = vtanh.pop %v5298
  %v5307 = vtanh.pop %v5299
  %v5308 = vtanh.pop %v5300
  %v5309 = vtanh.pop %v5301
  %v5310 = vtanh.pop %v5302
  %v5311 = vtanh.pop %v5303
  %v5312 = vtanh.pop %v5304
  %v5313 = vtanh.pop %v5305
  %v5314 = vmul.f32 %v5258, %v5306
  %v5315 = vmul.f32 %v5259, %v5307
  %v5316 = vmul.f32 %v5260, %v5308
  %v5317 = vmul.f32 %v5261, %v5309
  %v5318 = vmul.f32 %v5262, %v5310
  %v5319 = vmul.f32 %v5263, %v5311
  %v5320 = vmul.f32 %v5264, %v5312
  %v5321 = vmul.f32 %v5265, %v5313
  %v5330 = vrot.slane %v5315, 7
  %v5331 = vsel %vm541, %v5330, %v5314
  %v5332 = vrot.slane %v5316, 6
  %v5333 = vsel %vm544, %v5332, %v5331
  %v5334 = vrot.slane %v5317, 5
  %v5335 = vsel %vm547, %v5334, %v5333
  %v5336 = vrot.slane %v5318, 4
  %v5337 = vsel %vm550, %v5336, %v5335
  %v5338 = vrot.slane %v5319, 3
  %v5339 = vsel %vm553, %v5338, %v5337
  %v5340 = vrot.slane %v5320, 2
  %v5341 = vsel %vm556, %v5340, %v5339
  %v5342 = vrot.slane %v5321, 1
  %5345 = vst [vmem:[#allocation2 - $0x1] sm:$0xfe] %v5341
  %5346 = vst [vmem:[#allocation2 + $0x7] sm:$0x1] %v5342
  %v5355 = vrot.slane %v5299, 7
  %v5356 = vsel %vm541, %v5355, %v5298
  %v5357 = vrot.slane %v5300, 6
  %v5358 = vsel %vm544, %v5357, %v5356
  %v5359 = vrot.slane %v5301, 5
  %v5360 = vsel %vm547, %v5359, %v5358
  %v5361 = vrot.slane %v5302, 4
  %v5362 = vsel %vm550, %v5361, %v5360
  %v5363 = vrot.slane %v5303, 3
  %v5364 = vsel %vm553, %v5363, %v5362
  %v5365 = vrot.slane %v5304, 2
  %v5366 = vsel %vm556, %v5365, %v5364
  %v5367 = vrot.slane %v5305, 1
  %5370 = vst [vmem:[#allocation3 - $0x1] sm:$0xfe] %v5366
  %5371 = vst [vmem:[#allocation3 + $0x7] sm:$0x1] %v5367
  %v5372 = vpack.c.bf16 %v5314, %v5314
  %v5373 = vpack.c.bf16 %v5315, %v5315
  %v5374 = vpack.c.bf16 %v5316, %v5316
  %v5375 = vpack.c.bf16 %v5317, %v5317
  %v5376 = vpack.c.bf16 %v5318, %v5318
  %v5377 = vpack.c.bf16 %v5319, %v5319
  %v5378 = vpack.c.bf16 %v5320, %v5320
  %v5379 = vpack.c.bf16 %v5321, %v5321
  %v5380 = vld [vmem:[%s2 + $0x4] sm:$0x1]
  %v5381 = vsel %vm1126, %v5372, %v5380
  %5382 = vst [vmem:[%s2 + $0x4] sm:$0x1] %v5381
  %v5383 = vld [vmem:[%s2 + $0xc] sm:$0x1]
  %v5384 = vsel %vm1126, %v5373, %v5383
  %5385 = vst [vmem:[%s2 + $0xc] sm:$0x1] %v5384
  %v5386 = vld [vmem:[%s2 + $0x14] sm:$0x1]
  %v5387 = vsel %vm1126, %v5374, %v5386
  %5388 = vst [vmem:[%s2 + $0x14] sm:$0x1] %v5387
  %v5389 = vld [vmem:[%s2 + $0x1c] sm:$0x1]
  %v5390 = vsel %vm1126, %v5375, %v5389
  %5391 = vst [vmem:[%s2 + $0x1c] sm:$0x1] %v5390
  %v5392 = vld [vmem:[%s2 + $0x24] sm:$0x1]
  %v5393 = vsel %vm1126, %v5376, %v5392
  %5394 = vst [vmem:[%s2 + $0x24] sm:$0x1] %v5393
  %v5395 = vld [vmem:[%s2 + $0x2c] sm:$0x1]
  %v5396 = vsel %vm1126, %v5377, %v5395
  %5397 = vst [vmem:[%s2 + $0x2c] sm:$0x1] %v5396
  %v5398 = vld [vmem:[%s2 + $0x34] sm:$0x1]
  %v5399 = vsel %vm1126, %v5378, %v5398
  %5400 = vst [vmem:[%s2 + $0x34] sm:$0x1] %v5399
  %v5401 = vld [vmem:[%s2 + $0x3c] sm:$0x1]
  %v5402 = vsel %vm1126, %v5379, %v5401
  %5403 = vst [vmem:[%s2 + $0x3c] sm:$0x1] %v5402
  %v5404 = vld [vmem:[#allocation2] sm:$0xff]
  %v5405 = vld [vmem:[#allocation3] sm:$0xff]
  %v5406 = vld [vmem:[%s0 + $0x10] sm:$0x22]
  %v5407 = vld [vmem:[%s0 + $0x18] sm:$0x22]
  %v5408 = vld [vmem:[%s0 + $0x30] sm:$0x22]
  %v5409 = vld [vmem:[%s0 + $0x38] sm:$0x22]
  %v5410 = vld [vmem:[%s0 + $0x50] sm:$0x22]
  %v5411 = vld [vmem:[%s0 + $0x58] sm:$0x22]
  %v5412 = vld [vmem:[%s0 + $0x70] sm:$0x22]
  %v5413 = vld [vmem:[%s0 + $0x78] sm:$0x22]
  %v5414 = vld [vmem:[%s0 + $0x90] sm:$0x22]
  %v5415 = vld [vmem:[%s0 + $0x98] sm:$0x22]
  %v5416 = vld [vmem:[%s0 + $0xb0] sm:$0x22]
  %v5417 = vld [vmem:[%s0 + $0xb8] sm:$0x22]
  %v5418 = vld [vmem:[%s0 + $0xd0] sm:$0x22]
  %v5419 = vld [vmem:[%s0 + $0xd8] sm:$0x22]
  %v5420 = vld [vmem:[%s0 + $0xf0] sm:$0x22]
  %v5421 = vld [vmem:[%s0 + $0xf8] sm:$0x22]
  %v5422 = vunpack.c.l.bf16 %v5406
  %v5423 = vunpack.c.h.bf16 %v5406
  %v5424 = vunpack.c.l.bf16 %v5407
  %v5425 = vunpack.c.h.bf16 %v5407
  %v5426 = vunpack.c.l.bf16 %v5408
  %v5427 = vunpack.c.h.bf16 %v5408
  %v5428 = vunpack.c.l.bf16 %v5409
  %v5429 = vunpack.c.h.bf16 %v5409
  %v5430 = vunpack.c.l.bf16 %v5410
  %v5431 = vunpack.c.h.bf16 %v5410
  %v5432 = vunpack.c.l.bf16 %v5411
  %v5433 = vunpack.c.h.bf16 %v5411
  %v5434 = vunpack.c.l.bf16 %v5412
  %v5435 = vunpack.c.h.bf16 %v5412
  %v5436 = vunpack.c.l.bf16 %v5413
  %v5437 = vunpack.c.h.bf16 %v5413
  %v5438 = vunpack.c.l.bf16 %v5414
  %v5439 = vunpack.c.h.bf16 %v5414
  %v5440 = vunpack.c.l.bf16 %v5415
  %v5441 = vunpack.c.h.bf16 %v5415
  %v5442 = vunpack.c.l.bf16 %v5416
  %v5443 = vunpack.c.h.bf16 %v5416
  %v5444 = vunpack.c.l.bf16 %v5417
  %v5445 = vunpack.c.h.bf16 %v5417
  %v5446 = vunpack.c.l.bf16 %v5418
  %v5447 = vunpack.c.h.bf16 %v5418
  %v5448 = vunpack.c.l.bf16 %v5419
  %v5449 = vunpack.c.h.bf16 %v5419
  %v5450 = vunpack.c.l.bf16 %v5420
  %v5451 = vunpack.c.h.bf16 %v5420
  %v5452 = vunpack.c.l.bf16 %v5421
  %v5453 = vunpack.c.h.bf16 %v5421
  %5454 = vmatprep.subr.mxu0 %v18
  %5455 = vmatpush1.msra.mxu0 %v17
  %5456 = vmatprep.subr.mxu0 %v22
  %5457 = vmatpush1.msra.mxu0 %v21
  %5458 = vmatprep.subr.mxu0 %v26
  %5459 = vmatpush1.msra.mxu0 %v25
  %5460 = vmatprep.subr.mxu0 %v30
  %5461 = vmatpush1.msra.mxu0 %v29
  %5462 = vmatprep.subr.mxu0 %v34
  %5463 = vmatpush1.msra.mxu0 %v33
  %5464 = vmatprep.subr.mxu0 %v38
  %5465 = vmatpush1.msra.mxu0 %v37
  %5466 = vmatprep.subr.mxu0 %v42
  %5467 = vmatpush1.msra.mxu0 %v41
  %5468 = vmatprep.subr.mxu0 %v46
  %5469 = vmatpush1.msra.mxu0 %v45
  %5470 = vmatprep.subr.mxu0 %v50
  %5471 = vmatpush1.msra.mxu0 %v49
  %5472 = vmatprep.subr.mxu0 %v54
  %5473 = vmatpush1.msra.mxu0 %v53
  %5474 = vmatprep.subr.mxu0 %v58
  %5475 = vmatpush1.msra.mxu0 %v57
  %5476 = vmatprep.subr.mxu0 %v62
  %5477 = vmatpush1.msra.mxu0 %v61
  %5478 = vmatprep.subr.mxu0 %v66
  %5479 = vmatpush1.msra.mxu0 %v65
  %5480 = vmatprep.subr.mxu0 %v70
  %5481 = vmatpush1.msra.mxu0 %v69
  %5482 = vmatprep.subr.mxu0 %v74
  %5483 = vmatpush1.msra.mxu0 %v73
  %5484 = vmatprep.subr.mxu0 %v78
  %5485 = vmatpush1.msra.mxu0 %v77
  %5486 = vmatprep.subr.mxu0 0.0
  %5487 = vmatpush1.msra.mxu0 0.0
  %5488 = vmatprep.subr.mxu0 0.0
  %5489 = vmatpush1.msra.mxu0 0.0
  %5490 = vmatprep.subr.mxu0 0.0
  %5491 = vmatpush1.msra.mxu0 0.0
  %5492 = vmatprep.subr.mxu0 0.0
  %5493 = vmatpush1.msra.mxu0 0.0
  %5494 = vmatprep.subr.mxu0 0.0
  %5495 = vmatpush1.msra.mxu0 0.0
  %5496 = vmatprep.subr.mxu0 0.0
  %5497 = vmatpush1.msra.mxu0 0.0
  %5498 = vmatprep.subr.mxu0 0.0
  %5499 = vmatpush1.msra.mxu0 0.0
  %5500 = vmatprep.subr.mxu0 0.0
  %5501 = vmatpush1.msra.mxu0 0.0
  %5502 = vmatprep.subr.mxu0 0.0
  %5503 = vmatpush1.msra.mxu0 0.0
  %5504 = vmatprep.subr.mxu0 0.0
  %5505 = vmatpush1.msra.mxu0 0.0
  %5506 = vmatprep.subr.mxu0 0.0
  %5507 = vmatpush1.msra.mxu0 0.0
  %5508 = vmatprep.subr.mxu0 0.0
  %5509 = vmatpush1.msra.mxu0 0.0
  %5510 = vmatprep.subr.mxu0 0.0
  %5511 = vmatpush1.msra.mxu0 0.0
  %5512 = vmatprep.subr.mxu0 0.0
  %5513 = vmatpush1.msra.mxu0 0.0
  %5514 = vmatprep.subr.mxu0 0.0
  %5515 = vmatpush1.msra.mxu0 0.0
  %5516 = vmatprep.subr.mxu0 0.0
  %5517 = vmatpush1.msra.mxu0 0.0
  %5518 = vmatprep.mubr.f32.mxu0 0.0
  %5519 = vmatmul.mubr.f32.gmra.mrb[0].mxu0 %v5404
  %v5520 = vpop.f32.mrb[0].mxu0
  %v5521 = vadd.f32 0.0, %v5520
  %v5522 = vpop.f32.mrb[0].mxu0
  %v5523 = vadd.f32 0.0, %v5522
  %5524 = vdwg.mxu0
  %5525 = vmatprep.subr.mxu0 %v20
  %5526 = vmatpush1.msra.mxu0 %v19
  %5527 = vmatprep.subr.mxu0 %v24
  %5528 = vmatpush1.msra.mxu0 %v23
  %5529 = vmatprep.subr.mxu0 %v28
  %5530 = vmatpush1.msra.mxu0 %v27
  %5531 = vmatprep.subr.mxu0 %v32
  %5532 = vmatpush1.msra.mxu0 %v31
  %5533 = vmatprep.subr.mxu0 %v36
  %5534 = vmatpush1.msra.mxu0 %v35
  %5535 = vmatprep.subr.mxu0 %v40
  %5536 = vmatpush1.msra.mxu0 %v39
  %5537 = vmatprep.subr.mxu0 %v44
  %5538 = vmatpush1.msra.mxu0 %v43
  %5539 = vmatprep.subr.mxu0 %v48
  %5540 = vmatpush1.msra.mxu0 %v47
  %5541 = vmatprep.subr.mxu0 %v52
  %5542 = vmatpush1.msra.mxu0 %v51
  %5543 = vmatprep.subr.mxu0 %v56
  %5544 = vmatpush1.msra.mxu0 %v55
  %5545 = vmatprep.subr.mxu0 %v60
  %5546 = vmatpush1.msra.mxu0 %v59
  %5547 = vmatprep.subr.mxu0 %v64
  %5548 = vmatpush1.msra.mxu0 %v63
  %5549 = vmatprep.subr.mxu0 %v68
  %5550 = vmatpush1.msra.mxu0 %v67
  %5551 = vmatprep.subr.mxu0 %v72
  %5552 = vmatpush1.msra.mxu0 %v71
  %5553 = vmatprep.subr.mxu0 %v76
  %5554 = vmatpush1.msra.mxu0 %v75
  %5555 = vmatprep.subr.mxu0 %v80
  %5556 = vmatpush1.msra.mxu0 %v79
  %5557 = vmatprep.subr.mxu0 0.0
  %5558 = vmatpush1.msra.mxu0 0.0
  %5559 = vmatprep.subr.mxu0 0.0
  %5560 = vmatpush1.msra.mxu0 0.0
  %5561 = vmatprep.subr.mxu0 0.0
  %5562 = vmatpush1.msra.mxu0 0.0
  %5563 = vmatprep.subr.mxu0 0.0
  %5564 = vmatpush1.msra.mxu0 0.0
  %5565 = vmatprep.subr.mxu0 0.0
  %5566 = vmatpush1.msra.mxu0 0.0
  %5567 = vmatprep.subr.mxu0 0.0
  %5568 = vmatpush1.msra.mxu0 0.0
  %5569 = vmatprep.subr.mxu0 0.0
  %5570 = vmatpush1.msra.mxu0 0.0
  %5571 = vmatprep.subr.mxu0 0.0
  %5572 = vmatpush1.msra.mxu0 0.0
  %5573 = vmatprep.subr.mxu0 0.0
  %5574 = vmatpush1.msra.mxu0 0.0
  %5575 = vmatprep.subr.mxu0 0.0
  %5576 = vmatpush1.msra.mxu0 0.0
  %5577 = vmatprep.subr.mxu0 0.0
  %5578 = vmatpush1.msra.mxu0 0.0
  %5579 = vmatprep.subr.mxu0 0.0
  %5580 = vmatpush1.msra.mxu0 0.0
  %5581 = vmatprep.subr.mxu0 0.0
  %5582 = vmatpush1.msra.mxu0 0.0
  %5583 = vmatprep.subr.mxu0 0.0
  %5584 = vmatpush1.msra.mxu0 0.0
  %5585 = vmatprep.subr.mxu0 0.0
  %5586 = vmatpush1.msra.mxu0 0.0
  %5587 = vmatprep.subr.mxu0 0.0
  %5588 = vmatpush1.msra.mxu0 0.0
  %5589 = vmatprep.mubr.f32.mxu0 0.0
  %5590 = vmatmul.mubr.f32.gmra.mrb[0].mxu0 %v5404
  %v5591 = vpop.f32.mrb[0].mxu0
  %v5592 = vadd.f32 0.0, %v5591
  %v5593 = vpop.f32.mrb[0].mxu0
  %v5594 = vadd.f32 0.0, %v5593
  %5595 = vdwg.mxu0
  %v5600 = vrot.slane %v5521, 6
  %v5601 = vrot.slane %v5523, 6
  %v5602 = vrot.slane %v5592, 6
  %v5603 = vrot.slane %v5594, 6
  %v5604 = vrot.slane %v5521, 7
  %v5605 = vrot.slane %v5523, 7
  %v5606 = vrot.slane %v5592, 7
  %v5607 = vrot.slane %v5594, 7
  %v5608 = vrot.slane %v5521, 1
  %v5609 = vrot.slane %v5523, 1
  %v5610 = vrot.slane %v5592, 1
  %v5611 = vrot.slane %v5594, 1
  %v5612 = vrot.slane %v5521, 2
  %v5613 = vrot.slane %v5523, 2
  %v5614 = vrot.slane %v5592, 2
  %v5615 = vrot.slane %v5594, 2
  %v5616 = vrot.slane %v5521, 3
  %v5617 = vrot.slane %v5523, 3
  %v5618 = vrot.slane %v5592, 3
  %v5619 = vrot.slane %v5594, 3
  %v5620 = vrot.slane %v5521, 4
  %v5621 = vrot.slane %v5523, 4
  %v5622 = vrot.slane %v5592, 4
  %v5623 = vrot.slane %v5594, 4
  %v5624 = vrot.slane %v5521, 5
  %v5625 = vrot.slane %v5523, 5
  %v5626 = vrot.slane %v5592, 5
  %v5627 = vrot.slane %v5594, 5
  %v5660 = vadd.f32 %v5422, %v5600
  %v5661 = vadd.f32 %v5423, %v5601
  %v5662 = vadd.f32 %v5424, %v5602
  %v5663 = vadd.f32 %v5425, %v5603
  %v5664 = vadd.f32 %v5426, %v5604
  %v5665 = vadd.f32 %v5427, %v5605
  %v5666 = vadd.f32 %v5428, %v5606
  %v5667 = vadd.f32 %v5429, %v5607
  %v5668 = vadd.f32 %v5430, %v5521
  %v5669 = vadd.f32 %v5431, %v5523
  %v5670 = vadd.f32 %v5432, %v5592
  %v5671 = vadd.f32 %v5433, %v5594
  %v5672 = vadd.f32 %v5434, %v5608
  %v5673 = vadd.f32 %v5435, %v5609
  %v5674 = vadd.f32 %v5436, %v5610
  %v5675 = vadd.f32 %v5437, %v5611
  %v5676 = vadd.f32 %v5438, %v5612
  %v5677 = vadd.f32 %v5439, %v5613
  %v5678 = vadd.f32 %v5440, %v5614
  %v5679 = vadd.f32 %v5441, %v5615
  %v5680 = vadd.f32 %v5442, %v5616
  %v5681 = vadd.f32 %v5443, %v5617
  %v5682 = vadd.f32 %v5444, %v5618
  %v5683 = vadd.f32 %v5445, %v5619
  %v5684 = vadd.f32 %v5446, %v5620
  %v5685 = vadd.f32 %v5447, %v5621
  %v5686 = vadd.f32 %v5448, %v5622
  %v5687 = vadd.f32 %v5449, %v5623
  %v5688 = vadd.f32 %v5450, %v5624
  %v5689 = vadd.f32 %v5451, %v5625
  %v5690 = vadd.f32 %v5452, %v5626
  %v5691 = vadd.f32 %v5453, %v5627
  %v5692 = vmul.f32 %v5660, 0.5
  %v5693 = vmul.f32 %v5664, 0.5
  %v5694 = vmul.f32 %v5668, 0.5
  %v5695 = vmul.f32 %v5672, 0.5
  %v5696 = vmul.f32 %v5676, 0.5
  %v5697 = vmul.f32 %v5680, 0.5
  %v5698 = vmul.f32 %v5684, 0.5
  %v5699 = vmul.f32 %v5688, 0.5
  %v5700 = vtanh.pop %v5692
  %v5701 = vtanh.pop %v5693
  %v5702 = vtanh.pop %v5694
  %v5703 = vtanh.pop %v5695
  %v5704 = vtanh.pop %v5696
  %v5705 = vtanh.pop %v5697
  %v5706 = vtanh.pop %v5698
  %v5707 = vtanh.pop %v5699
  %v5708 = vmul.f32 %v5700, 0.5
  %v5709 = vmul.f32 %v5701, 0.5
  %v5710 = vmul.f32 %v5702, 0.5
  %v5711 = vmul.f32 %v5703, 0.5
  %v5712 = vmul.f32 %v5704, 0.5
  %v5713 = vmul.f32 %v5705, 0.5
  %v5714 = vmul.f32 %v5706, 0.5
  %v5715 = vmul.f32 %v5707, 0.5
  %v5716 = vadd.f32 %v5708, 0.5
  %v5717 = vadd.f32 %v5709, 0.5
  %v5718 = vadd.f32 %v5710, 0.5
  %v5719 = vadd.f32 %v5711, 0.5
  %v5720 = vadd.f32 %v5712, 0.5
  %v5721 = vadd.f32 %v5713, 0.5
  %v5722 = vadd.f32 %v5714, 0.5
  %v5723 = vadd.f32 %v5715, 0.5
  %v5724 = vmul.f32 %v5661, 0.5
  %v5725 = vmul.f32 %v5665, 0.5
  %v5726 = vmul.f32 %v5669, 0.5
  %v5727 = vmul.f32 %v5673, 0.5
  %v5728 = vmul.f32 %v5677, 0.5
  %v5729 = vmul.f32 %v5681, 0.5
  %v5730 = vmul.f32 %v5685, 0.5
  %v5731 = vmul.f32 %v5689, 0.5
  %v5732 = vtanh.pop %v5724
  %v5733 = vtanh.pop %v5725
  %v5734 = vtanh.pop %v5726
  %v5735 = vtanh.pop %v5727
  %v5736 = vtanh.pop %v5728
  %v5737 = vtanh.pop %v5729
  %v5738 = vtanh.pop %v5730
  %v5739 = vtanh.pop %v5731
  %v5740 = vmul.f32 %v5732, 0.5
  %v5741 = vmul.f32 %v5733, 0.5
  %v5742 = vmul.f32 %v5734, 0.5
  %v5743 = vmul.f32 %v5735, 0.5
  %v5744 = vmul.f32 %v5736, 0.5
  %v5745 = vmul.f32 %v5737, 0.5
  %v5746 = vmul.f32 %v5738, 0.5
  %v5747 = vmul.f32 %v5739, 0.5
  %v5748 = vadd.f32 %v5740, 0.5
  %v5749 = vadd.f32 %v5741, 0.5
  %v5750 = vadd.f32 %v5742, 0.5
  %v5751 = vadd.f32 %v5743, 0.5
  %v5752 = vadd.f32 %v5744, 0.5
  %v5753 = vadd.f32 %v5745, 0.5
  %v5754 = vadd.f32 %v5746, 0.5
  %v5755 = vadd.f32 %v5747, 0.5
  %v5756 = vtanh.pop %v5662
  %v5757 = vtanh.pop %v5666
  %v5758 = vtanh.pop %v5670
  %v5759 = vtanh.pop %v5674
  %v5760 = vtanh.pop %v5678
  %v5761 = vtanh.pop %v5682
  %v5762 = vtanh.pop %v5686
  %v5763 = vtanh.pop %v5690
  %v5764 = vmul.f32 %v5663, 0.5
  %v5765 = vmul.f32 %v5667, 0.5
  %v5766 = vmul.f32 %v5671, 0.5
  %v5767 = vmul.f32 %v5675, 0.5
  %v5768 = vmul.f32 %v5679, 0.5
  %v5769 = vmul.f32 %v5683, 0.5
  %v5770 = vmul.f32 %v5687, 0.5
  %v5771 = vmul.f32 %v5691, 0.5
  %v5772 = vtanh.pop %v5764
  %v5773 = vtanh.pop %v5765
  %v5774 = vtanh.pop %v5766
  %v5775 = vtanh.pop %v5767
  %v5776 = vtanh.pop %v5768
  %v5777 = vtanh.pop %v5769
  %v5778 = vtanh.pop %v5770
  %v5779 = vtanh.pop %v5771
  %v5780 = vmul.f32 %v5772, 0.5
  %v5781 = vmul.f32 %v5773, 0.5
  %v5782 = vmul.f32 %v5774, 0.5
  %v5783 = vmul.f32 %v5775, 0.5
  %v5784 = vmul.f32 %v5776, 0.5
  %v5785 = vmul.f32 %v5777, 0.5
  %v5786 = vmul.f32 %v5778, 0.5
  %v5787 = vmul.f32 %v5779, 0.5
  %v5788 = vadd.f32 %v5780, 0.5
  %v5789 = vadd.f32 %v5781, 0.5
  %v5790 = vadd.f32 %v5782, 0.5
  %v5791 = vadd.f32 %v5783, 0.5
  %v5792 = vadd.f32 %v5784, 0.5
  %v5793 = vadd.f32 %v5785, 0.5
  %v5794 = vadd.f32 %v5786, 0.5
  %v5795 = vadd.f32 %v5787, 0.5
  %v5797 = vrot.slane %v5405, 6
  %v5798 = vrot.slane %v5405, 7
  %v5799 = vrot.slane %v5405, 1
  %v5800 = vrot.slane %v5405, 2
  %v5801 = vrot.slane %v5405, 3
  %v5802 = vrot.slane %v5405, 4
  %v5803 = vrot.slane %v5405, 5
  %v5812 = vmul.f32 %v5748, %v5797
  %v5813 = vmul.f32 %v5749, %v5798
  %v5814 = vmul.f32 %v5750, %v5405
  %v5815 = vmul.f32 %v5751, %v5799
  %v5816 = vmul.f32 %v5752, %v5800
  %v5817 = vmul.f32 %v5753, %v5801
  %v5818 = vmul.f32 %v5754, %v5802
  %v5819 = vmul.f32 %v5755, %v5803
  %v5820 = vmul.f32 %v5716, %v5756
  %v5821 = vmul.f32 %v5717, %v5757
  %v5822 = vmul.f32 %v5718, %v5758
  %v5823 = vmul.f32 %v5719, %v5759
  %v5824 = vmul.f32 %v5720, %v5760
  %v5825 = vmul.f32 %v5721, %v5761
  %v5826 = vmul.f32 %v5722, %v5762
  %v5827 = vmul.f32 %v5723, %v5763
  %v5828 = vadd.f32 %v5812, %v5820
  %v5829 = vadd.f32 %v5813, %v5821
  %v5830 = vadd.f32 %v5814, %v5822
  %v5831 = vadd.f32 %v5815, %v5823
  %v5832 = vadd.f32 %v5816, %v5824
  %v5833 = vadd.f32 %v5817, %v5825
  %v5834 = vadd.f32 %v5818, %v5826
  %v5835 = vadd.f32 %v5819, %v5827
  %v5836 = vtanh.pop %v5828
  %v5837 = vtanh.pop %v5829
  %v5838 = vtanh.pop %v5830
  %v5839 = vtanh.pop %v5831
  %v5840 = vtanh.pop %v5832
  %v5841 = vtanh.pop %v5833
  %v5842 = vtanh.pop %v5834
  %v5843 = vtanh.pop %v5835
  %v5844 = vmul.f32 %v5788, %v5836
  %v5845 = vmul.f32 %v5789, %v5837
  %v5846 = vmul.f32 %v5790, %v5838
  %v5847 = vmul.f32 %v5791, %v5839
  %v5848 = vmul.f32 %v5792, %v5840
  %v5849 = vmul.f32 %v5793, %v5841
  %v5850 = vmul.f32 %v5794, %v5842
  %v5851 = vmul.f32 %v5795, %v5843
  %v5860 = vrot.slane %v5845, 7
  %v5861 = vsel %vm544, %v5860, %v5844
  %v5862 = vrot.slane %v5846, 6
  %v5863 = vsel %vm547, %v5862, %v5861
  %v5864 = vrot.slane %v5847, 5
  %v5865 = vsel %vm550, %v5864, %v5863
  %v5866 = vrot.slane %v5848, 4
  %v5867 = vsel %vm553, %v5866, %v5865
  %v5868 = vrot.slane %v5849, 3
  %v5869 = vsel %vm556, %v5868, %v5867
  %v5870 = vrot.slane %v5850, 2
  %v5871 = vrot.slane %v5851, 1
  %v5872 = vsel %vm538, %v5871, %v5870
  %5875 = vst [vmem:[#allocation2 - $0x2] sm:$0xfc] %v5869
  %5876 = vst [vmem:[#allocation2 + $0x6] sm:$0x3] %v5872
  %v5885 = vrot.slane %v5829, 7
  %v5886 = vsel %vm544, %v5885, %v5828
  %v5887 = vrot.slane %v5830, 6
  %v5888 = vsel %vm547, %v5887, %v5886
  %v5889 = vrot.slane %v5831, 5
  %v5890 = vsel %vm550, %v5889, %v5888
  %v5891 = vrot.slane %v5832, 4
  %v5892 = vsel %vm553, %v5891, %v5890
  %v5893 = vrot.slane %v5833, 3
  %v5894 = vsel %vm556, %v5893, %v5892
  %v5895 = vrot.slane %v5834, 2
  %v5896 = vrot.slane %v5835, 1
  %v5897 = vsel %vm538, %v5896, %v5895
  %5900 = vst [vmem:[#allocation3 - $0x2] sm:$0xfc] %v5894
  %5901 = vst [vmem:[#allocation3 + $0x6] sm:$0x3] %v5897
  %v5902 = vpack.c.bf16 %v5844, %v5844
  %v5903 = vpack.c.bf16 %v5845, %v5845
  %v5904 = vpack.c.bf16 %v5846, %v5846
  %v5905 = vpack.c.bf16 %v5847, %v5847
  %v5906 = vpack.c.bf16 %v5848, %v5848
  %v5907 = vpack.c.bf16 %v5849, %v5849
  %v5908 = vpack.c.bf16 %v5850, %v5850
  %v5909 = vpack.c.bf16 %v5851, %v5851
  %v5910 = vld [vmem:[%s2 + $0x4] sm:$0x2]
  %v5911 = vsel %vm1659, %v5902, %v5910
  %5912 = vst [vmem:[%s2 + $0x4] sm:$0x2] %v5911
  %v5913 = vld [vmem:[%s2 + $0xc] sm:$0x2]
  %v5914 = vsel %vm1659, %v5903, %v5913
  %5915 = vst [vmem:[%s2 + $0xc] sm:$0x2] %v5914
  %v5916 = vld [vmem:[%s2 + $0x14] sm:$0x2]
  %v5917 = vsel %vm1659, %v5904, %v5916
  %5918 = vst [vmem:[%s2 + $0x14] sm:$0x2] %v5917
  %v5919 = vld [vmem:[%s2 + $0x1c] sm:$0x2]
  %v5920 = vsel %vm1659, %v5905, %v5919
  %5921 = vst [vmem:[%s2 + $0x1c] sm:$0x2] %v5920
  %v5922 = vld [vmem:[%s2 + $0x24] sm:$0x2]
  %v5923 = vsel %vm1659, %v5906, %v5922
  %5924 = vst [vmem:[%s2 + $0x24] sm:$0x2] %v5923
  %v5925 = vld [vmem:[%s2 + $0x2c] sm:$0x2]
  %v5926 = vsel %vm1659, %v5907, %v5925
  %5927 = vst [vmem:[%s2 + $0x2c] sm:$0x2] %v5926
  %v5928 = vld [vmem:[%s2 + $0x34] sm:$0x2]
  %v5929 = vsel %vm1659, %v5908, %v5928
  %5930 = vst [vmem:[%s2 + $0x34] sm:$0x2] %v5929
  %v5931 = vld [vmem:[%s2 + $0x3c] sm:$0x2]
  %v5932 = vsel %vm1659, %v5909, %v5931
  %5933 = vst [vmem:[%s2 + $0x3c] sm:$0x2] %v5932
  %v5934 = vld [vmem:[#allocation2] sm:$0xff]
  %v5935 = vld [vmem:[#allocation3] sm:$0xff]
  %v5936 = vld [vmem:[%s0 + $0x10] sm:$0x22]
  %v5937 = vld [vmem:[%s0 + $0x18] sm:$0x22]
  %v5938 = vld [vmem:[%s0 + $0x30] sm:$0x22]
  %v5939 = vld [vmem:[%s0 + $0x38] sm:$0x22]
  %v5940 = vld [vmem:[%s0 + $0x50] sm:$0x22]
  %v5941 = vld [vmem:[%s0 + $0x58] sm:$0x22]
  %v5942 = vld [vmem:[%s0 + $0x70] sm:$0x22]
  %v5943 = vld [vmem:[%s0 + $0x78] sm:$0x22]
  %v5944 = vld [vmem:[%s0 + $0x90] sm:$0x22]
  %v5945 = vld [vmem:[%s0 + $0x98] sm:$0x22]
  %v5946 = vld [vmem:[%s0 + $0xb0] sm:$0x22]
  %v5947 = vld [vmem:[%s0 + $0xb8] sm:$0x22]
  %v5948 = vld [vmem:[%s0 + $0xd0] sm:$0x22]
  %v5949 = vld [vmem:[%s0 + $0xd8] sm:$0x22]
  %v5950 = vld [vmem:[%s0 + $0xf0] sm:$0x22]
  %v5951 = vld [vmem:[%s0 + $0xf8] sm:$0x22]
  %v5952 = vunpack.c.l.bf16 %v5936
  %v5953 = vunpack.c.h.bf16 %v5936
  %v5954 = vunpack.c.l.bf16 %v5937
  %v5955 = vunpack.c.h.bf16 %v5937
  %v5956 = vunpack.c.l.bf16 %v5938
  %v5957 = vunpack.c.h.bf16 %v5938
  %v5958 = vunpack.c.l.bf16 %v5939
  %v5959 = vunpack.c.h.bf16 %v5939
  %v5960 = vunpack.c.l.bf16 %v5940
  %v5961 = vunpack.c.h.bf16 %v5940
  %v5962 = vunpack.c.l.bf16 %v5941
  %v5963 = vunpack.c.h.bf16 %v5941
  %v5964 = vunpack.c.l.bf16 %v5942
  %v5965 = vunpack.c.h.bf16 %v5942
  %v5966 = vunpack.c.l.bf16 %v5943
  %v5967 = vunpack.c.h.bf16 %v5943
  %v5968 = vunpack.c.l.bf16 %v5944
  %v5969 = vunpack.c.h.bf16 %v5944
  %v5970 = vunpack.c.l.bf16 %v5945
  %v5971 = vunpack.c.h.bf16 %v5945
  %v5972 = vunpack.c.l.bf16 %v5946
  %v5973 = vunpack.c.h.bf16 %v5946
  %v5974 = vunpack.c.l.bf16 %v5947
  %v5975 = vunpack.c.h.bf16 %v5947
  %v5976 = vunpack.c.l.bf16 %v5948
  %v5977 = vunpack.c.h.bf16 %v5948
  %v5978 = vunpack.c.l.bf16 %v5949
  %v5979 = vunpack.c.h.bf16 %v5949
  %v5980 = vunpack.c.l.bf16 %v5950
  %v5981 = vunpack.c.h.bf16 %v5950
  %v5982 = vunpack.c.l.bf16 %v5951
  %v5983 = vunpack.c.h.bf16 %v5951
  %5984 = vmatprep.subr.mxu0 %v18
  %5985 = vmatpush1.msra.mxu0 %v17
  %5986 = vmatprep.subr.mxu0 %v22
  %5987 = vmatpush1.msra.mxu0 %v21
  %5988 = vmatprep.subr.mxu0 %v26
  %5989 = vmatpush1.msra.mxu0 %v25
  %5990 = vmatprep.subr.mxu0 %v30
  %5991 = vmatpush1.msra.mxu0 %v29
  %5992 = vmatprep.subr.mxu0 %v34
  %5993 = vmatpush1.msra.mxu0 %v33
  %5994 = vmatprep.subr.mxu0 %v38
  %5995 = vmatpush1.msra.mxu0 %v37
  %5996 = vmatprep.subr.mxu0 %v42
  %5997 = vmatpush1.msra.mxu0 %v41
  %5998 = vmatprep.subr.mxu0 %v46
  %5999 = vmatpush1.msra.mxu0 %v45
  %6000 = vmatprep.subr.mxu0 %v50
  %6001 = vmatpush1.msra.mxu0 %v49
  %6002 = vmatprep.subr.mxu0 %v54
  %6003 = vmatpush1.msra.mxu0 %v53
  %6004 = vmatprep.subr.mxu0 %v58
  %6005 = vmatpush1.msra.mxu0 %v57
  %6006 = vmatprep.subr.mxu0 %v62
  %6007 = vmatpush1.msra.mxu0 %v61
  %6008 = vmatprep.subr.mxu0 %v66
  %6009 = vmatpush1.msra.mxu0 %v65
  %6010 = vmatprep.subr.mxu0 %v70
  %6011 = vmatpush1.msra.mxu0 %v69
  %6012 = vmatprep.subr.mxu0 %v74
  %6013 = vmatpush1.msra.mxu0 %v73
  %6014 = vmatprep.subr.mxu0 %v78
  %6015 = vmatpush1.msra.mxu0 %v77
  %6016 = vmatprep.subr.mxu0 0.0
  %6017 = vmatpush1.msra.mxu0 0.0
  %6018 = vmatprep.subr.mxu0 0.0
  %6019 = vmatpush1.msra.mxu0 0.0
  %6020 = vmatprep.subr.mxu0 0.0
  %6021 = vmatpush1.msra.mxu0 0.0
  %6022 = vmatprep.subr.mxu0 0.0
  %6023 = vmatpush1.msra.mxu0 0.0
  %6024 = vmatprep.subr.mxu0 0.0
  %6025 = vmatpush1.msra.mxu0 0.0
  %6026 = vmatprep.subr.mxu0 0.0
  %6027 = vmatpush1.msra.mxu0 0.0
  %6028 = vmatprep.subr.mxu0 0.0
  %6029 = vmatpush1.msra.mxu0 0.0
  %6030 = vmatprep.subr.mxu0 0.0
  %6031 = vmatpush1.msra.mxu0 0.0
  %6032 = vmatprep.subr.mxu0 0.0
  %6033 = vmatpush1.msra.mxu0 0.0
  %6034 = vmatprep.subr.mxu0 0.0
  %6035 = vmatpush1.msra.mxu0 0.0
  %6036 = vmatprep.subr.mxu0 0.0
  %6037 = vmatpush1.msra.mxu0 0.0
  %6038 = vmatprep.subr.mxu0 0.0
  %6039 = vmatpush1.msra.mxu0 0.0
  %6040 = vmatprep.subr.mxu0 0.0
  %6041 = vmatpush1.msra.mxu0 0.0
  %6042 = vmatprep.subr.mxu0 0.0
  %6043 = vmatpush1.msra.mxu0 0.0
  %6044 = vmatprep.subr.mxu0 0.0
  %6045 = vmatpush1.msra.mxu0 0.0
  %6046 = vmatprep.subr.mxu0 0.0
  %6047 = vmatpush1.msra.mxu0 0.0
  %6048 = vmatprep.mubr.f32.mxu0 0.0
  %6049 = vmatmul.mubr.f32.gmra.mrb[0].mxu0 %v5934
  %v6050 = vpop.f32.mrb[0].mxu0
  %v6051 = vadd.f32 0.0, %v6050
  %v6052 = vpop.f32.mrb[0].mxu0
  %v6053 = vadd.f32 0.0, %v6052
  %6054 = vdwg.mxu0
  %6055 = vmatprep.subr.mxu0 %v20
  %6056 = vmatpush1.msra.mxu0 %v19
  %6057 = vmatprep.subr.mxu0 %v24
  %6058 = vmatpush1.msra.mxu0 %v23
  %6059 = vmatprep.subr.mxu0 %v28
  %6060 = vmatpush1.msra.mxu0 %v27
  %6061 = vmatprep.subr.mxu0 %v32
  %6062 = vmatpush1.msra.mxu0 %v31
  %6063 = vmatprep.subr.mxu0 %v36
  %6064 = vmatpush1.msra.mxu0 %v35
  %6065 = vmatprep.subr.mxu0 %v40
  %6066 = vmatpush1.msra.mxu0 %v39
  %6067 = vmatprep.subr.mxu0 %v44
  %6068 = vmatpush1.msra.mxu0 %v43
  %6069 = vmatprep.subr.mxu0 %v48
  %6070 = vmatpush1.msra.mxu0 %v47
  %6071 = vmatprep.subr.mxu0 %v52
  %6072 = vmatpush1.msra.mxu0 %v51
  %6073 = vmatprep.subr.mxu0 %v56
  %6074 = vmatpush1.msra.mxu0 %v55
  %6075 = vmatprep.subr.mxu0 %v60
  %6076 = vmatpush1.msra.mxu0 %v59
  %6077 = vmatprep.subr.mxu0 %v64
  %6078 = vmatpush1.msra.mxu0 %v63
  %6079 = vmatprep.subr.mxu0 %v68
  %6080 = vmatpush1.msra.mxu0 %v67
  %6081 = vmatprep.subr.mxu0 %v72
  %6082 = vmatpush1.msra.mxu0 %v71
  %6083 = vmatprep.subr.mxu0 %v76
  %6084 = vmatpush1.msra.mxu0 %v75
  %6085 = vmatprep.subr.mxu0 %v80
  %6086 = vmatpush1.msra.mxu0 %v79
  %6087 = vmatprep.subr.mxu0 0.0
  %6088 = vmatpush1.msra.mxu0 0.0
  %6089 = vmatprep.subr.mxu0 0.0
  %6090 = vmatpush1.msra.mxu0 0.0
  %6091 = vmatprep.subr.mxu0 0.0
  %6092 = vmatpush1.msra.mxu0 0.0
  %6093 = vmatprep.subr.mxu0 0.0
  %6094 = vmatpush1.msra.mxu0 0.0
  %6095 = vmatprep.subr.mxu0 0.0
  %6096 = vmatpush1.msra.mxu0 0.0
  %6097 = vmatprep.subr.mxu0 0.0
  %6098 = vmatpush1.msra.mxu0 0.0
  %6099 = vmatprep.subr.mxu0 0.0
  %6100 = vmatpush1.msra.mxu0 0.0
  %6101 = vmatprep.subr.mxu0 0.0
  %6102 = vmatpush1.msra.mxu0 0.0
  %6103 = vmatprep.subr.mxu0 0.0
  %6104 = vmatpush1.msra.mxu0 0.0
  %6105 = vmatprep.subr.mxu0 0.0
  %6106 = vmatpush1.msra.mxu0 0.0
  %6107 = vmatprep.subr.mxu0 0.0
  %6108 = vmatpush1.msra.mxu0 0.0
  %6109 = vmatprep.subr.mxu0 0.0
  %6110 = vmatpush1.msra.mxu0 0.0
  %6111 = vmatprep.subr.mxu0 0.0
  %6112 = vmatpush1.msra.mxu0 0.0
  %6113 = vmatprep.subr.mxu0 0.0
  %6114 = vmatpush1.msra.mxu0 0.0
  %6115 = vmatprep.subr.mxu0 0.0
  %6116 = vmatpush1.msra.mxu0 0.0
  %6117 = vmatprep.subr.mxu0 0.0
  %6118 = vmatpush1.msra.mxu0 0.0
  %6119 = vmatprep.mubr.f32.mxu0 0.0
  %6120 = vmatmul.mubr.f32.gmra.mrb[0].mxu0 %v5934
  %v6121 = vpop.f32.mrb[0].mxu0
  %v6122 = vadd.f32 0.0, %v6121
  %v6123 = vpop.f32.mrb[0].mxu0
  %v6124 = vadd.f32 0.0, %v6123
  %6125 = vdwg.mxu0
  %v6130 = vrot.slane %v6051, 5
  %v6131 = vrot.slane %v6053, 5
  %v6132 = vrot.slane %v6122, 5
  %v6133 = vrot.slane %v6124, 5
  %v6134 = vrot.slane %v6051, 6
  %v6135 = vrot.slane %v6053, 6
  %v6136 = vrot.slane %v6122, 6
  %v6137 = vrot.slane %v6124, 6
  %v6138 = vrot.slane %v6051, 7
  %v6139 = vrot.slane %v6053, 7
  %v6140 = vrot.slane %v6122, 7
  %v6141 = vrot.slane %v6124, 7
  %v6142 = vrot.slane %v6051, 1
  %v6143 = vrot.slane %v6053, 1
  %v6144 = vrot.slane %v6122, 1
  %v6145 = vrot.slane %v6124, 1
  %v6146 = vrot.slane %v6051, 2
  %v6147 = vrot.slane %v6053, 2
  %v6148 = vrot.slane %v6122, 2
  %v6149 = vrot.slane %v6124, 2
  %v6150 = vrot.slane %v6051, 3
  %v6151 = vrot.slane %v6053, 3
  %v6152 = vrot.slane %v6122, 3
  %v6153 = vrot.slane %v6124, 3
  %v6154 = vrot.slane %v6051, 4
  %v6155 = vrot.slane %v6053, 4
  %v6156 = vrot.slane %v6122, 4
  %v6157 = vrot.slane %v6124, 4
  %v6190 = vadd.f32 %v5952, %v6130
  %v6191 = vadd.f32 %v5953, %v6131
  %v6192 = vadd.f32 %v5954, %v6132
  %v6193 = vadd.f32 %v5955, %v6133
  %v6194 = vadd.f32 %v5956, %v6134
  %v6195 = vadd.f32 %v5957, %v6135
  %v6196 = vadd.f32 %v5958, %v6136
  %v6197 = vadd.f32 %v5959, %v6137
  %v6198 = vadd.f32 %v5960, %v6138
  %v6199 = vadd.f32 %v5961, %v6139
  %v6200 = vadd.f32 %v5962, %v6140
  %v6201 = vadd.f32 %v5963, %v6141
  %v6202 = vadd.f32 %v5964, %v6051
  %v6203 = vadd.f32 %v5965, %v6053
  %v6204 = vadd.f32 %v5966, %v6122
  %v6205 = vadd.f32 %v5967, %v6124
  %v6206 = vadd.f32 %v5968, %v6142
  %v6207 = vadd.f32 %v5969, %v6143
  %v6208 = vadd.f32 %v5970, %v6144
  %v6209 = vadd.f32 %v5971, %v6145
  %v6210 = vadd.f32 %v5972, %v6146
  %v6211 = vadd.f32 %v5973, %v6147
  %v6212 = vadd.f32 %v5974, %v6148
  %v6213 = vadd.f32 %v5975, %v6149
  %v6214 = vadd.f32 %v5976, %v6150
  %v6215 = vadd.f32 %v5977, %v6151
  %v6216 = vadd.f32 %v5978, %v6152
  %v6217 = vadd.f32 %v5979, %v6153
  %v6218 = vadd.f32 %v5980, %v6154
  %v6219 = vadd.f32 %v5981, %v6155
  %v6220 = vadd.f32 %v5982, %v6156
  %v6221 = vadd.f32 %v5983, %v6157
  %v6222 = vmul.f32 %v6190, 0.5
  %v6223 = vmul.f32 %v6194, 0.5
  %v6224 = vmul.f32 %v6198, 0.5
  %v6225 = vmul.f32 %v6202, 0.5
  %v6226 = vmul.f32 %v6206, 0.5
  %v6227 = vmul.f32 %v6210, 0.5
  %v6228 = vmul.f32 %v6214, 0.5
  %v6229 = vmul.f32 %v6218, 0.5
  %v6230 = vtanh.pop %v6222
  %v6231 = vtanh.pop %v6223
  %v6232 = vtanh.pop %v6224
  %v6233 = vtanh.pop %v6225
  %v6234 = vtanh.pop %v6226
  %v6235 = vtanh.pop %v6227
  %v6236 = vtanh.pop %v6228
  %v6237 = vtanh.pop %v6229
  %v6238 = vmul.f32 %v6230, 0.5
  %v6239 = vmul.f32 %v6231, 0.5
  %v6240 = vmul.f32 %v6232, 0.5
  %v6241 = vmul.f32 %v6233, 0.5
  %v6242 = vmul.f32 %v6234, 0.5
  %v6243 = vmul.f32 %v6235, 0.5
  %v6244 = vmul.f32 %v6236, 0.5
  %v6245 = vmul.f32 %v6237, 0.5
  %v6246 = vadd.f32 %v6238, 0.5
  %v6247 = vadd.f32 %v6239, 0.5
  %v6248 = vadd.f32 %v6240, 0.5
  %v6249 = vadd.f32 %v6241, 0.5
  %v6250 = vadd.f32 %v6242, 0.5
  %v6251 = vadd.f32 %v6243, 0.5
  %v6252 = vadd.f32 %v6244, 0.5
  %v6253 = vadd.f32 %v6245, 0.5
  %v6254 = vmul.f32 %v6191, 0.5
  %v6255 = vmul.f32 %v6195, 0.5
  %v6256 = vmul.f32 %v6199, 0.5
  %v6257 = vmul.f32 %v6203, 0.5
  %v6258 = vmul.f32 %v6207, 0.5
  %v6259 = vmul.f32 %v6211, 0.5
  %v6260 = vmul.f32 %v6215, 0.5
  %v6261 = vmul.f32 %v6219, 0.5
  %v6262 = vtanh.pop %v6254
  %v6263 = vtanh.pop %v6255
  %v6264 = vtanh.pop %v6256
  %v6265 = vtanh.pop %v6257
  %v6266 = vtanh.pop %v6258
  %v6267 = vtanh.pop %v6259
  %v6268 = vtanh.pop %v6260
  %v6269 = vtanh.pop %v6261
  %v6270 = vmul.f32 %v6262, 0.5
  %v6271 = vmul.f32 %v6263, 0.5
  %v6272 = vmul.f32 %v6264, 0.5
  %v6273 = vmul.f32 %v6265, 0.5
  %v6274 = vmul.f32 %v6266, 0.5
  %v6275 = vmul.f32 %v6267, 0.5
  %v6276 = vmul.f32 %v6268, 0.5
  %v6277 = vmul.f32 %v6269, 0.5
  %v6278 = vadd.f32 %v6270, 0.5
  %v6279 = vadd.f32 %v6271, 0.5
  %v6280 = vadd.f32 %v6272, 0.5
  %v6281 = vadd.f32 %v6273, 0.5
  %v6282 = vadd.f32 %v6274, 0.5
  %v6283 = vadd.f32 %v6275, 0.5
  %v6284 = vadd.f32 %v6276, 0.5
  %v6285 = vadd.f32 %v6277, 0.5
  %v6286 = vtanh.pop %v6192
  %v6287 = vtanh.pop %v6196
  %v6288 = vtanh.pop %v6200
  %v6289 = vtanh.pop %v6204
  %v6290 = vtanh.pop %v6208
  %v6291 = vtanh.pop %v6212
  %v6292 = vtanh.pop %v6216
  %v6293 = vtanh.pop %v6220
  %v6294 = vmul.f32 %v6193, 0.5
  %v6295 = vmul.f32 %v6197, 0.5
  %v6296 = vmul.f32 %v6201, 0.5
  %v6297 = vmul.f32 %v6205, 0.5
  %v6298 = vmul.f32 %v6209, 0.5
  %v6299 = vmul.f32 %v6213, 0.5
  %v6300 = vmul.f32 %v6217, 0.5
  %v6301 = vmul.f32 %v6221, 0.5
  %v6302 = vtanh.pop %v6294
  %v6303 = vtanh.pop %v6295
  %v6304 = vtanh.pop %v6296
  %v6305 = vtanh.pop %v6297
  %v6306 = vtanh.pop %v6298
  %v6307 = vtanh.pop %v6299
  %v6308 = vtanh.pop %v6300
  %v6309 = vtanh.pop %v6301
  %v6310 = vmul.f32 %v6302, 0.5
  %v6311 = vmul.f32 %v6303, 0.5
  %v6312 = vmul.f32 %v6304, 0.5
  %v6313 = vmul.f32 %v6305, 0.5
  %v6314 = vmul.f32 %v6306, 0.5
  %v6315 = vmul.f32 %v6307, 0.5
  %v6316 = vmul.f32 %v6308, 0.5
  %v6317 = vmul.f32 %v6309, 0.5
  %v6318 = vadd.f32 %v6310, 0.5
  %v6319 = vadd.f32 %v6311, 0.5
  %v6320 = vadd.f32 %v6312, 0.5
  %v6321 = vadd.f32 %v6313, 0.5
  %v6322 = vadd.f32 %v6314, 0.5
  %v6323 = vadd.f32 %v6315, 0.5
  %v6324 = vadd.f32 %v6316, 0.5
  %v6325 = vadd.f32 %v6317, 0.5
  %v6327 = vrot.slane %v5935, 5
  %v6328 = vrot.slane %v5935, 6
  %v6329 = vrot.slane %v5935, 7
  %v6330 = vrot.slane %v5935, 1
  %v6331 = vrot.slane %v5935, 2
  %v6332 = vrot.slane %v5935, 3
  %v6333 = vrot.slane %v5935, 4
  %v6342 = vmul.f32 %v6278, %v6327
  %v6343 = vmul.f32 %v6279, %v6328
  %v6344 = vmul.f32 %v6280, %v6329
  %v6345 = vmul.f32 %v6281, %v5935
  %v6346 = vmul.f32 %v6282, %v6330
  %v6347 = vmul.f32 %v6283, %v6331
  %v6348 = vmul.f32 %v6284, %v6332
  %v6349 = vmul.f32 %v6285, %v6333
  %v6350 = vmul.f32 %v6246, %v6286
  %v6351 = vmul.f32 %v6247, %v6287
  %v6352 = vmul.f32 %v6248, %v6288
  %v6353 = vmul.f32 %v6249, %v6289
  %v6354 = vmul.f32 %v6250, %v6290
  %v6355 = vmul.f32 %v6251, %v6291
  %v6356 = vmul.f32 %v6252, %v6292
  %v6357 = vmul.f32 %v6253, %v6293
  %v6358 = vadd.f32 %v6342, %v6350
  %v6359 = vadd.f32 %v6343, %v6351
  %v6360 = vadd.f32 %v6344, %v6352
  %v6361 = vadd.f32 %v6345, %v6353
  %v6362 = vadd.f32 %v6346, %v6354
  %v6363 = vadd.f32 %v6347, %v6355
  %v6364 = vadd.f32 %v6348, %v6356
  %v6365 = vadd.f32 %v6349, %v6357
  %v6366 = vtanh.pop %v6358
  %v6367 = vtanh.pop %v6359
  %v6368 = vtanh.pop %v6360
  %v6369 = vtanh.pop %v6361
  %v6370 = vtanh.pop %v6362
  %v6371 = vtanh.pop %v6363
  %v6372 = vtanh.pop %v6364
  %v6373 = vtanh.pop %v6365
  %v6374 = vmul.f32 %v6318, %v6366
  %v6375 = vmul.f32 %v6319, %v6367
  %v6376 = vmul.f32 %v6320, %v6368
  %v6377 = vmul.f32 %v6321, %v6369
  %v6378 = vmul.f32 %v6322, %v6370
  %v6379 = vmul.f32 %v6323, %v6371
  %v6380 = vmul.f32 %v6324, %v6372
  %v6381 = vmul.f32 %v6325, %v6373
  %v6390 = vrot.slane %v6375, 7
  %v6391 = vsel %vm547, %v6390, %v6374
  %v6392 = vrot.slane %v6376, 6
  %v6393 = vsel %vm550, %v6392, %v6391
  %v6394 = vrot.slane %v6377, 5
  %v6395 = vsel %vm553, %v6394, %v6393
  %v6396 = vrot.slane %v6378, 4
  %v6397 = vsel %vm556, %v6396, %v6395
  %v6398 = vrot.slane %v6379, 3
  %v6399 = vrot.slane %v6380, 2
  %v6400 = vsel %vm538, %v6399, %v6398
  %v6401 = vrot.slane %v6381, 1
  %v6402 = vsel %vm541, %v6401, %v6400
  %6405 = vst [vmem:[#allocation2 - $0x3] sm:$0xf8] %v6397
  %6406 = vst [vmem:[#allocation2 + $0x5] sm:$0x7] %v6402
  %v6415 = vrot.slane %v6359, 7
  %v6416 = vsel %vm547, %v6415, %v6358
  %v6417 = vrot.slane %v6360, 6
  %v6418 = vsel %vm550, %v6417, %v6416
  %v6419 = vrot.slane %v6361, 5
  %v6420 = vsel %vm553, %v6419, %v6418
  %v6421 = vrot.slane %v6362, 4
  %v6422 = vsel %vm556, %v6421, %v6420
  %v6423 = vrot.slane %v6363, 3
  %v6424 = vrot.slane %v6364, 2
  %v6425 = vsel %vm538, %v6424, %v6423
  %v6426 = vrot.slane %v6365, 1
  %v6427 = vsel %vm541, %v6426, %v6425
  %6430 = vst [vmem:[#allocation3 - $0x3] sm:$0xf8] %v6422
  %6431 = vst [vmem:[#allocation3 + $0x5] sm:$0x7] %v6427
  %v6432 = vpack.c.bf16 %v6374, %v6374
  %v6433 = vpack.c.bf16 %v6375, %v6375
  %v6434 = vpack.c.bf16 %v6376, %v6376
  %v6435 = vpack.c.bf16 %v6377, %v6377
  %v6436 = vpack.c.bf16 %v6378, %v6378
  %v6437 = vpack.c.bf16 %v6379, %v6379
  %v6438 = vpack.c.bf16 %v6380, %v6380
  %v6439 = vpack.c.bf16 %v6381, %v6381
  %v6440 = vld [vmem:[%s2 + $0x4] sm:$0x2]
  %v6441 = vsel %vm2191, %v6432, %v6440
  %6442 = vst [vmem:[%s2 + $0x4] sm:$0x2] %v6441
  %v6443 = vld [vmem:[%s2 + $0xc] sm:$0x2]
  %v6444 = vsel %vm2191, %v6433, %v6443
  %6445 = vst [vmem:[%s2 + $0xc] sm:$0x2] %v6444
  %v6446 = vld [vmem:[%s2 + $0x14] sm:$0x2]
  %v6447 = vsel %vm2191, %v6434, %v6446
  %6448 = vst [vmem:[%s2 + $0x14] sm:$0x2] %v6447
  %v6449 = vld [vmem:[%s2 + $0x1c] sm:$0x2]
  %v6450 = vsel %vm2191, %v6435, %v6449
  %6451 = vst [vmem:[%s2 + $0x1c] sm:$0x2] %v6450
  %v6452 = vld [vmem:[%s2 + $0x24] sm:$0x2]
  %v6453 = vsel %vm2191, %v6436, %v6452
  %6454 = vst [vmem:[%s2 + $0x24] sm:$0x2] %v6453
  %v6455 = vld [vmem:[%s2 + $0x2c] sm:$0x2]
  %v6456 = vsel %vm2191, %v6437, %v6455
  %6457 = vst [vmem:[%s2 + $0x2c] sm:$0x2] %v6456
  %v6458 = vld [vmem:[%s2 + $0x34] sm:$0x2]
  %v6459 = vsel %vm2191, %v6438, %v6458
  %6460 = vst [vmem:[%s2 + $0x34] sm:$0x2] %v6459
  %v6461 = vld [vmem:[%s2 + $0x3c] sm:$0x2]
  %v6462 = vsel %vm2191, %v6439, %v6461
  %6463 = vst [vmem:[%s2 + $0x3c] sm:$0x2] %v6462
  %v6464 = vld [vmem:[#allocation2] sm:$0xff]
  %v6465 = vld [vmem:[#allocation3] sm:$0xff]
  %v6466 = vld [vmem:[%s0 + $0x10] sm:$0x44]
  %v6467 = vld [vmem:[%s0 + $0x18] sm:$0x44]
  %v6468 = vld [vmem:[%s0 + $0x30] sm:$0x44]
  %v6469 = vld [vmem:[%s0 + $0x38] sm:$0x44]
  %v6470 = vld [vmem:[%s0 + $0x50] sm:$0x44]
  %v6471 = vld [vmem:[%s0 + $0x58] sm:$0x44]
  %v6472 = vld [vmem:[%s0 + $0x70] sm:$0x44]
  %v6473 = vld [vmem:[%s0 + $0x78] sm:$0x44]
  %v6474 = vld [vmem:[%s0 + $0x90] sm:$0x44]
  %v6475 = vld [vmem:[%s0 + $0x98] sm:$0x44]
  %v6476 = vld [vmem:[%s0 + $0xb0] sm:$0x44]
  %v6477 = vld [vmem:[%s0 + $0xb8] sm:$0x44]
  %v6478 = vld [vmem:[%s0 + $0xd0] sm:$0x44]
  %v6479 = vld [vmem:[%s0 + $0xd8] sm:$0x44]
  %v6480 = vld [vmem:[%s0 + $0xf0] sm:$0x44]
  %v6481 = vld [vmem:[%s0 + $0xf8] sm:$0x44]
  %v6482 = vunpack.c.l.bf16 %v6466
  %v6483 = vunpack.c.h.bf16 %v6466
  %v6484 = vunpack.c.l.bf16 %v6467
  %v6485 = vunpack.c.h.bf16 %v6467
  %v6486 = vunpack.c.l.bf16 %v6468
  %v6487 = vunpack.c.h.bf16 %v6468
  %v6488 = vunpack.c.l.bf16 %v6469
  %v6489 = vunpack.c.h.bf16 %v6469
  %v6490 = vunpack.c.l.bf16 %v6470
  %v6491 = vunpack.c.h.bf16 %v6470
  %v6492 = vunpack.c.l.bf16 %v6471
  %v6493 = vunpack.c.h.bf16 %v6471
  %v6494 = vunpack.c.l.bf16 %v6472
  %v6495 = vunpack.c.h.bf16 %v6472
  %v6496 = vunpack.c.l.bf16 %v6473
  %v6497 = vunpack.c.h.bf16 %v6473
  %v6498 = vunpack.c.l.bf16 %v6474
  %v6499 = vunpack.c.h.bf16 %v6474
  %v6500 = vunpack.c.l.bf16 %v6475
  %v6501 = vunpack.c.h.bf16 %v6475
  %v6502 = vunpack.c.l.bf16 %v6476
  %v6503 = vunpack.c.h.bf16 %v6476
  %v6504 = vunpack.c.l.bf16 %v6477
  %v6505 = vunpack.c.h.bf16 %v6477
  %v6506 = vunpack.c.l.bf16 %v6478
  %v6507 = vunpack.c.h.bf16 %v6478
  %v6508 = vunpack.c.l.bf16 %v6479
  %v6509 = vunpack.c.h.bf16 %v6479
  %v6510 = vunpack.c.l.bf16 %v6480
  %v6511 = vunpack.c.h.bf16 %v6480
  %v6512 = vunpack.c.l.bf16 %v6481
  %v6513 = vunpack.c.h.bf16 %v6481
  %6514 = vmatprep.subr.mxu0 %v18
  %6515 = vmatpush1.msra.mxu0 %v17
  %6516 = vmatprep.subr.mxu0 %v22
  %6517 = vmatpush1.msra.mxu0 %v21
  %6518 = vmatprep.subr.mxu0 %v26
  %6519 = vmatpush1.msra.mxu0 %v25
  %6520 = vmatprep.subr.mxu0 %v30
  %6521 = vmatpush1.msra.mxu0 %v29
  %6522 = vmatprep.subr.mxu0 %v34
  %6523 = vmatpush1.msra.mxu0 %v33
  %6524 = vmatprep.subr.mxu0 %v38
  %6525 = vmatpush1.msra.mxu0 %v37
  %6526 = vmatprep.subr.mxu0 %v42
  %6527 = vmatpush1.msra.mxu0 %v41
  %6528 = vmatprep.subr.mxu0 %v46
  %6529 = vmatpush1.msra.mxu0 %v45
  %6530 = vmatprep.subr.mxu0 %v50
  %6531 = vmatpush1.msra.mxu0 %v49
  %6532 = vmatprep.subr.mxu0 %v54
  %6533 = vmatpush1.msra.mxu0 %v53
  %6534 = vmatprep.subr.mxu0 %v58
  %6535 = vmatpush1.msra.mxu0 %v57
  %6536 = vmatprep.subr.mxu0 %v62
  %6537 = vmatpush1.msra.mxu0 %v61
  %6538 = vmatprep.subr.mxu0 %v66
  %6539 = vmatpush1.msra.mxu0 %v65
  %6540 = vmatprep.subr.mxu0 %v70
  %6541 = vmatpush1.msra.mxu0 %v69
  %6542 = vmatprep.subr.mxu0 %v74
  %6543 = vmatpush1.msra.mxu0 %v73
  %6544 = vmatprep.subr.mxu0 %v78
  %6545 = vmatpush1.msra.mxu0 %v77
  %6546 = vmatprep.subr.mxu0 0.0
  %6547 = vmatpush1.msra.mxu0 0.0
  %6548 = vmatprep.subr.mxu0 0.0
  %6549 = vmatpush1.msra.mxu0 0.0
  %6550 = vmatprep.subr.mxu0 0.0
  %6551 = vmatpush1.msra.mxu0 0.0
  %6552 = vmatprep.subr.mxu0 0.0
  %6553 = vmatpush1.msra.mxu0 0.0
  %6554 = vmatprep.subr.mxu0 0.0
  %6555 = vmatpush1.msra.mxu0 0.0
  %6556 = vmatprep.subr.mxu0 0.0
  %6557 = vmatpush1.msra.mxu0 0.0
  %6558 = vmatprep.subr.mxu0 0.0
  %6559 = vmatpush1.msra.mxu0 0.0
  %6560 = vmatprep.subr.mxu0 0.0
  %6561 = vmatpush1.msra.mxu0 0.0
  %6562 = vmatprep.subr.mxu0 0.0
  %6563 = vmatpush1.msra.mxu0 0.0
  %6564 = vmatprep.subr.mxu0 0.0
  %6565 = vmatpush1.msra.mxu0 0.0
  %6566 = vmatprep.subr.mxu0 0.0
  %6567 = vmatpush1.msra.mxu0 0.0
  %6568 = vmatprep.subr.mxu0 0.0
  %6569 = vmatpush1.msra.mxu0 0.0
  %6570 = vmatprep.subr.mxu0 0.0
  %6571 = vmatpush1.msra.mxu0 0.0
  %6572 = vmatprep.subr.mxu0 0.0
  %6573 = vmatpush1.msra.mxu0 0.0
  %6574 = vmatprep.subr.mxu0 0.0
  %6575 = vmatpush1.msra.mxu0 0.0
  %6576 = vmatprep.subr.mxu0 0.0
  %6577 = vmatpush1.msra.mxu0 0.0
  %6578 = vmatprep.mubr.f32.mxu0 0.0
  %6579 = vmatmul.mubr.f32.gmra.mrb[0].mxu0 %v6464
  %v6580 = vpop.f32.mrb[0].mxu0
  %v6581 = vadd.f32 0.0, %v6580
  %v6582 = vpop.f32.mrb[0].mxu0
  %v6583 = vadd.f32 0.0, %v6582
  %6584 = vdwg.mxu0
  %6585 = vmatprep.subr.mxu0 %v20
  %6586 = vmatpush1.msra.mxu0 %v19
  %6587 = vmatprep.subr.mxu0 %v24
  %6588 = vmatpush1.msra.mxu0 %v23
  %6589 = vmatprep.subr.mxu0 %v28
  %6590 = vmatpush1.msra.mxu0 %v27
  %6591 = vmatprep.subr.mxu0 %v32
  %6592 = vmatpush1.msra.mxu0 %v31
  %6593 = vmatprep.subr.mxu0 %v36
  %6594 = vmatpush1.msra.mxu0 %v35
  %6595 = vmatprep.subr.mxu0 %v40
  %6596 = vmatpush1.msra.mxu0 %v39
  %6597 = vmatprep.subr.mxu0 %v44
  %6598 = vmatpush1.msra.mxu0 %v43
  %6599 = vmatprep.subr.mxu0 %v48
  %6600 = vmatpush1.msra.mxu0 %v47
  %6601 = vmatprep.subr.mxu0 %v52
  %6602 = vmatpush1.msra.mxu0 %v51
  %6603 = vmatprep.subr.mxu0 %v56
  %6604 = vmatpush1.msra.mxu0 %v55
  %6605 = vmatprep.subr.mxu0 %v60
  %6606 = vmatpush1.msra.mxu0 %v59
  %6607 = vmatprep.subr.mxu0 %v64
  %6608 = vmatpush1.msra.mxu0 %v63
  %6609 = vmatprep.subr.mxu0 %v68
  %6610 = vmatpush1.msra.mxu0 %v67
  %6611 = vmatprep.subr.mxu0 %v72
  %6612 = vmatpush1.msra.mxu0 %v71
  %6613 = vmatprep.subr.mxu0 %v76
  %6614 = vmatpush1.msra.mxu0 %v75
  %6615 = vmatprep.subr.mxu0 %v80
  %6616 = vmatpush1.msra.mxu0 %v79
  %6617 = vmatprep.subr.mxu0 0.0
  %6618 = vmatpush1.msra.mxu0 0.0
  %6619 = vmatprep.subr.mxu0 0.0
  %6620 = vmatpush1.msra.mxu0 0.0
  %6621 = vmatprep.subr.mxu0 0.0
  %6622 = vmatpush1.msra.mxu0 0.0
  %6623 = vmatprep.subr.mxu0 0.0
  %6624 = vmatpush1.msra.mxu0 0.0
  %6625 = vmatprep.subr.mxu0 0.0
  %6626 = vmatpush1.msra.mxu0 0.0
  %6627 = vmatprep.subr.mxu0 0.0
  %6628 = vmatpush1.msra.mxu0 0.0
  %6629 = vmatprep.subr.mxu0 0.0
  %6630 = vmatpush1.msra.mxu0 0.0
  %6631 = vmatprep.subr.mxu0 0.0
  %6632 = vmatpush1.msra.mxu0 0.0
  %6633 = vmatprep.subr.mxu0 0.0
  %6634 = vmatpush1.msra.mxu0 0.0
  %6635 = vmatprep.subr.mxu0 0.0
  %6636 = vmatpush1.msra.mxu0 0.0
  %6637 = vmatprep.subr.mxu0 0.0
  %6638 = vmatpush1.msra.mxu0 0.0
  %6639 = vmatprep.subr.mxu0 0.0
  %6640 = vmatpush1.msra.mxu0 0.0
  %6641 = vmatprep.subr.mxu0 0.0
  %6642 = vmatpush1.msra.mxu0 0.0
  %6643 = vmatprep.subr.mxu0 0.0
  %6644 = vmatpush1.msra.mxu0 0.0
  %6645 = vmatprep.subr.mxu0 0.0
  %6646 = vmatpush1.msra.mxu0 0.0
  %6647 = vmatprep.subr.mxu0 0.0
  %6648 = vmatpush1.msra.mxu0 0.0
  %6649 = vmatprep.mubr.f32.mxu0 0.0
  %6650 = vmatmul.mubr.f32.gmra.mrb[0].mxu0 %v6464
  %v6651 = vpop.f32.mrb[0].mxu0
  %v6652 = vadd.f32 0.0, %v6651
  %v6653 = vpop.f32.mrb[0].mxu0
  %v6654 = vadd.f32 0.0, %v6653
  %6655 = vdwg.mxu0
  %v6660 = vrot.slane %v6581, 4
  %v6661 = vrot.slane %v6583, 4
  %v6662 = vrot.slane %v6652, 4
  %v6663 = vrot.slane %v6654, 4
  %v6664 = vrot.slane %v6581, 5
  %v6665 = vrot.slane %v6583, 5
  %v6666 = vrot.slane %v6652, 5
  %v6667 = vrot.slane %v6654, 5
  %v6668 = vrot.slane %v6581, 6
  %v6669 = vrot.slane %v6583, 6
  %v6670 = vrot.slane %v6652, 6
  %v6671 = vrot.slane %v6654, 6
  %v6672 = vrot.slane %v6581, 7
  %v6673 = vrot.slane %v6583, 7
  %v6674 = vrot.slane %v6652, 7
  %v6675 = vrot.slane %v6654, 7
  %v6676 = vrot.slane %v6581, 1
  %v6677 = vrot.slane %v6583, 1
  %v6678 = vrot.slane %v6652, 1
  %v6679 = vrot.slane %v6654, 1
  %v6680 = vrot.slane %v6581, 2
  %v6681 = vrot.slane %v6583, 2
  %v6682 = vrot.slane %v6652, 2
  %v6683 = vrot.slane %v6654, 2
  %v6684 = vrot.slane %v6581, 3
  %v6685 = vrot.slane %v6583, 3
  %v6686 = vrot.slane %v6652, 3
  %v6687 = vrot.slane %v6654, 3
  %v6720 = vadd.f32 %v6482, %v6660
  %v6721 = vadd.f32 %v6483, %v6661
  %v6722 = vadd.f32 %v6484, %v6662
  %v6723 = vadd.f32 %v6485, %v6663
  %v6724 = vadd.f32 %v6486, %v6664
  %v6725 = vadd.f32 %v6487, %v6665
  %v6726 = vadd.f32 %v6488, %v6666
  %v6727 = vadd.f32 %v6489, %v6667
  %v6728 = vadd.f32 %v6490, %v6668
  %v6729 = vadd.f32 %v6491, %v6669
  %v6730 = vadd.f32 %v6492, %v6670
  %v6731 = vadd.f32 %v6493, %v6671
  %v6732 = vadd.f32 %v6494, %v6672
  %v6733 = vadd.f32 %v6495, %v6673
  %v6734 = vadd.f32 %v6496, %v6674
  %v6735 = vadd.f32 %v6497, %v6675
  %v6736 = vadd.f32 %v6498, %v6581
  %v6737 = vadd.f32 %v6499, %v6583
  %v6738 = vadd.f32 %v6500, %v6652
  %v6739 = vadd.f32 %v6501, %v6654
  %v6740 = vadd.f32 %v6502, %v6676
  %v6741 = vadd.f32 %v6503, %v6677
  %v6742 = vadd.f32 %v6504, %v6678
  %v6743 = vadd.f32 %v6505, %v6679
  %v6744 = vadd.f32 %v6506, %v6680
  %v6745 = vadd.f32 %v6507, %v6681
  %v6746 = vadd.f32 %v6508, %v6682
  %v6747 = vadd.f32 %v6509, %v6683
  %v6748 = vadd.f32 %v6510, %v6684
  %v6749 = vadd.f32 %v6511, %v6685
  %v6750 = vadd.f32 %v6512, %v6686
  %v6751 = vadd.f32 %v6513, %v6687
  %v6752 = vmul.f32 %v6720, 0.5
  %v6753 = vmul.f32 %v6724, 0.5
  %v6754 = vmul.f32 %v6728, 0.5
  %v6755 = vmul.f32 %v6732, 0.5
  %v6756 = vmul.f32 %v6736, 0.5
  %v6757 = vmul.f32 %v6740, 0.5
  %v6758 = vmul.f32 %v6744, 0.5
  %v6759 = vmul.f32 %v6748, 0.5
  %v6760 = vtanh.pop %v6752
  %v6761 = vtanh.pop %v6753
  %v6762 = vtanh.pop %v6754
  %v6763 = vtanh.pop %v6755
  %v6764 = vtanh.pop %v6756
  %v6765 = vtanh.pop %v6757
  %v6766 = vtanh.pop %v6758
  %v6767 = vtanh.pop %v6759
  %v6768 = vmul.f32 %v6760, 0.5
  %v6769 = vmul.f32 %v6761, 0.5
  %v6770 = vmul.f32 %v6762, 0.5
  %v6771 = vmul.f32 %v6763, 0.5
  %v6772 = vmul.f32 %v6764, 0.5
  %v6773 = vmul.f32 %v6765, 0.5
  %v6774 = vmul.f32 %v6766, 0.5
  %v6775 = vmul.f32 %v6767, 0.5
  %v6776 = vadd.f32 %v6768, 0.5
  %v6777 = vadd.f32 %v6769, 0.5
  %v6778 = vadd.f32 %v6770, 0.5
  %v6779 = vadd.f32 %v6771, 0.5
  %v6780 = vadd.f32 %v6772, 0.5
  %v6781 = vadd.f32 %v6773, 0.5
  %v6782 = vadd.f32 %v6774, 0.5
  %v6783 = vadd.f32 %v6775, 0.5
  %v6784 = vmul.f32 %v6721, 0.5
  %v6785 = vmul.f32 %v6725, 0.5
  %v6786 = vmul.f32 %v6729, 0.5
  %v6787 = vmul.f32 %v6733, 0.5
  %v6788 = vmul.f32 %v6737, 0.5
  %v6789 = vmul.f32 %v6741, 0.5
  %v6790 = vmul.f32 %v6745, 0.5
  %v6791 = vmul.f32 %v6749, 0.5
  %v6792 = vtanh.pop %v6784
  %v6793 = vtanh.pop %v6785
  %v6794 = vtanh.pop %v6786
  %v6795 = vtanh.pop %v6787
  %v6796 = vtanh.pop %v6788
  %v6797 = vtanh.pop %v6789
  %v6798 = vtanh.pop %v6790
  %v6799 = vtanh.pop %v6791
  %v6800 = vmul.f32 %v6792, 0.5
  %v6801 = vmul.f32 %v6793, 0.5
  %v6802 = vmul.f32 %v6794, 0.5
  %v6803 = vmul.f32 %v6795, 0.5
  %v6804 = vmul.f32 %v6796, 0.5
  %v6805 = vmul.f32 %v6797, 0.5
  %v6806 = vmul.f32 %v6798, 0.5
  %v6807 = vmul.f32 %v6799, 0.5
  %v6808 = vadd.f32 %v6800, 0.5
  %v6809 = vadd.f32 %v6801, 0.5
  %v6810 = vadd.f32 %v6802, 0.5
  %v6811 = vadd.f32 %v6803, 0.5
  %v6812 = vadd.f32 %v6804, 0.5
  %v6813 = vadd.f32 %v6805, 0.5
  %v6814 = vadd.f32 %v6806, 0.5
  %v6815 = vadd.f32 %v6807, 0.5
  %v6816 = vtanh.pop %v6722
  %v6817 = vtanh.pop %v6726
  %v6818 = vtanh.pop %v6730
  %v6819 = vtanh.pop %v6734
  %v6820 = vtanh.pop %v6738
  %v6821 = vtanh.pop %v6742
  %v6822 = vtanh.pop %v6746
  %v6823 = vtanh.pop %v6750
  %v6824 = vmul.f32 %v6723, 0.5
  %v6825 = vmul.f32 %v6727, 0.5
  %v6826 = vmul.f32 %v6731, 0.5
  %v6827 = vmul.f32 %v6735, 0.5
  %v6828 = vmul.f32 %v6739, 0.5
  %v6829 = vmul.f32 %v6743, 0.5
  %v6830 = vmul.f32 %v6747, 0.5
  %v6831 = vmul.f32 %v6751, 0.5
  %v6832 = vtanh.pop %v6824
  %v6833 = vtanh.pop %v6825
  %v6834 = vtanh.pop %v6826
  %v6835 = vtanh.pop %v6827
  %v6836 = vtanh.pop %v6828
  %v6837 = vtanh.pop %v6829
  %v6838 = vtanh.pop %v6830
  %v6839 = vtanh.pop %v6831
  %v6840 = vmul.f32 %v6832, 0.5
  %v6841 = vmul.f32 %v6833, 0.5
  %v6842 = vmul.f32 %v6834, 0.5
  %v6843 = vmul.f32 %v6835, 0.5
  %v6844 = vmul.f32 %v6836, 0.5
  %v6845 = vmul.f32 %v6837, 0.5
  %v6846 = vmul.f32 %v6838, 0.5
  %v6847 = vmul.f32 %v6839, 0.5
  %v6848 = vadd.f32 %v6840, 0.5
  %v6849 = vadd.f32 %v6841, 0.5
  %v6850 = vadd.f32 %v6842, 0.5
  %v6851 = vadd.f32 %v6843, 0.5
  %v6852 = vadd.f32 %v6844, 0.5
  %v6853 = vadd.f32 %v6845, 0.5
  %v6854 = vadd.f32 %v6846, 0.5
  %v6855 = vadd.f32 %v6847, 0.5
  %v6857 = vrot.slane %v6465, 4
  %v6858 = vrot.slane %v6465, 5
  %v6859 = vrot.slane %v6465, 6
  %v6860 = vrot.slane %v6465, 7
  %v6861 = vrot.slane %v6465, 1
  %v6862 = vrot.slane %v6465, 2
  %v6863 = vrot.slane %v6465, 3
  %v6872 = vmul.f32 %v6808, %v6857
  %v6873 = vmul.f32 %v6809, %v6858
  %v6874 = vmul.f32 %v6810, %v6859
  %v6875 = vmul.f32 %v6811, %v6860
  %v6876 = vmul.f32 %v6812, %v6465
  %v6877 = vmul.f32 %v6813, %v6861
  %v6878 = vmul.f32 %v6814, %v6862
  %v6879 = vmul.f32 %v6815, %v6863
  %v6880 = vmul.f32 %v6776, %v6816
  %v6881 = vmul.f32 %v6777, %v6817
  %v6882 = vmul.f32 %v6778, %v6818
  %v6883 = vmul.f32 %v6779, %v6819
  %v6884 = vmul.f32 %v6780, %v6820
  %v6885 = vmul.f32 %v6781, %v6821
  %v6886 = vmul.f32 %v6782, %v6822
  %v6887 = vmul.f32 %v6783, %v6823
  %v6888 = vadd.f32 %v6872, %v6880
  %v6889 = vadd.f32 %v6873, %v6881
  %v6890 = vadd.f32 %v6874, %v6882
  %v6891 = vadd.f32 %v6875, %v6883
  %v6892 = vadd.f32 %v6876, %v6884
  %v6893 = vadd.f32 %v6877, %v6885
  %v6894 = vadd.f32 %v6878, %v6886
  %v6895 = vadd.f32 %v6879, %v6887
  %v6896 = vtanh.pop %v6888
  %v6897 = vtanh.pop %v6889
  %v6898 = vtanh.pop %v6890
  %v6899 = vtanh.pop %v6891
  %v6900 = vtanh.pop %v6892
  %v6901 = vtanh.pop %v6893
  %v6902 = vtanh.pop %v6894
  %v6903 = vtanh.pop %v6895
  %v6904 = vmul.f32 %v6848, %v6896
  %v6905 = vmul.f32 %v6849, %v6897
  %v6906 = vmul.f32 %v6850, %v6898
  %v6907 = vmul.f32 %v6851, %v6899
  %v6908 = vmul.f32 %v6852, %v6900
  %v6909 = vmul.f32 %v6853, %v6901
  %v6910 = vmul.f32 %v6854, %v6902
  %v6911 = vmul.f32 %v6855, %v6903
  %v6920 = vrot.slane %v6905, 7
  %v6921 = vsel %vm550, %v6920, %v6904
  %v6922 = vrot.slane %v6906, 6
  %v6923 = vsel %vm553, %v6922, %v6921
  %v6924 = vrot.slane %v6907, 5
  %v6925 = vsel %vm556, %v6924, %v6923
  %v6926 = vrot.slane %v6908, 4
  %v6927 = vrot.slane %v6909, 3
  %v6928 = vsel %vm538, %v6927, %v6926
  %v6929 = vrot.slane %v6910, 2
  %v6930 = vsel %vm541, %v6929, %v6928
  %v6931 = vrot.slane %v6911, 1
  %v6932 = vsel %vm544, %v6931, %v6930
  %6935 = vst [vmem:[#allocation2 - $0x4] sm:$0xf0] %v6925
  %6936 = vst [vmem:[#allocation2 + $0x4] sm:$0xf] %v6932
  %v6945 = vrot.slane %v6889, 7
  %v6946 = vsel %vm550, %v6945, %v6888
  %v6947 = vrot.slane %v6890, 6
  %v6948 = vsel %vm553, %v6947, %v6946
  %v6949 = vrot.slane %v6891, 5
  %v6950 = vsel %vm556, %v6949, %v6948
  %v6951 = vrot.slane %v6892, 4
  %v6952 = vrot.slane %v6893, 3
  %v6953 = vsel %vm538, %v6952, %v6951
  %v6954 = vrot.slane %v6894, 2
  %v6955 = vsel %vm541, %v6954, %v6953
  %v6956 = vrot.slane %v6895, 1
  %v6957 = vsel %vm544, %v6956, %v6955
  %6960 = vst [vmem:[#allocation3 - $0x4] sm:$0xf0] %v6950
  %6961 = vst [vmem:[#allocation3 + $0x4] sm:$0xf] %v6957
  %v6962 = vpack.c.bf16 %v6904, %v6904
  %v6963 = vpack.c.bf16 %v6905, %v6905
  %v6964 = vpack.c.bf16 %v6906, %v6906
  %v6965 = vpack.c.bf16 %v6907, %v6907
  %v6966 = vpack.c.bf16 %v6908, %v6908
  %v6967 = vpack.c.bf16 %v6909, %v6909
  %v6968 = vpack.c.bf16 %v6910, %v6910
  %v6969 = vpack.c.bf16 %v6911, %v6911
  %v6970 = vld [vmem:[%s2 + $0x4] sm:$0x4]
  %v6971 = vsel %vm2724, %v6962, %v6970
  %6972 = vst [vmem:[%s2 + $0x4] sm:$0x4] %v6971
  %v6973 = vld [vmem:[%s2 + $0xc] sm:$0x4]
  %v6974 = vsel %vm2724, %v6963, %v6973
  %6975 = vst [vmem:[%s2 + $0xc] sm:$0x4] %v6974
  %v6976 = vld [vmem:[%s2 + $0x14] sm:$0x4]
  %v6977 = vsel %vm2724, %v6964, %v6976
  %6978 = vst [vmem:[%s2 + $0x14] sm:$0x4] %v6977
  %v6979 = vld [vmem:[%s2 + $0x1c] sm:$0x4]
  %v6980 = vsel %vm2724, %v6965, %v6979
  %6981 = vst [vmem:[%s2 + $0x1c] sm:$0x4] %v6980
  %v6982 = vld [vmem:[%s2 + $0x24] sm:$0x4]
  %v6983 = vsel %vm2724, %v6966, %v6982
  %6984 = vst [vmem:[%s2 + $0x24] sm:$0x4] %v6983
  %v6985 = vld [vmem:[%s2 + $0x2c] sm:$0x4]
  %v6986 = vsel %vm2724, %v6967, %v6985
  %6987 = vst [vmem:[%s2 + $0x2c] sm:$0x4] %v6986
  %v6988 = vld [vmem:[%s2 + $0x34] sm:$0x4]
  %v6989 = vsel %vm2724, %v6968, %v6988
  %6990 = vst [vmem:[%s2 + $0x34] sm:$0x4] %v6989
  %v6991 = vld [vmem:[%s2 + $0x3c] sm:$0x4]
  %v6992 = vsel %vm2724, %v6969, %v6991
  %6993 = vst [vmem:[%s2 + $0x3c] sm:$0x4] %v6992
  %v6994 = vld [vmem:[#allocation2] sm:$0xff]
  %v6995 = vld [vmem:[#allocation3] sm:$0xff]
  %v6996 = vld [vmem:[%s0 + $0x10] sm:$0x44]
  %v6997 = vld [vmem:[%s0 + $0x18] sm:$0x44]
  %v6998 = vld [vmem:[%s0 + $0x30] sm:$0x44]
  %v6999 = vld [vmem:[%s0 + $0x38] sm:$0x44]
  %v7000 = vld [vmem:[%s0 + $0x50] sm:$0x44]
  %v7001 = vld [vmem:[%s0 + $0x58] sm:$0x44]
  %v7002 = vld [vmem:[%s0 + $0x70] sm:$0x44]
  %v7003 = vld [vmem:[%s0 + $0x78] sm:$0x44]
  %v7004 = vld [vmem:[%s0 + $0x90] sm:$0x44]
  %v7005 = vld [vmem:[%s0 + $0x98] sm:$0x44]
  %v7006 = vld [vmem:[%s0 + $0xb0] sm:$0x44]
  %v7007 = vld [vmem:[%s0 + $0xb8] sm:$0x44]
  %v7008 = vld [vmem:[%s0 + $0xd0] sm:$0x44]
  %v7009 = vld [vmem:[%s0 + $0xd8] sm:$0x44]
  %v7010 = vld [vmem:[%s0 + $0xf0] sm:$0x44]
  %v7011 = vld [vmem:[%s0 + $0xf8] sm:$0x44]
  %v7012 = vunpack.c.l.bf16 %v6996
  %v7013 = vunpack.c.h.bf16 %v6996
  %v7014 = vunpack.c.l.bf16 %v6997
  %v7015 = vunpack.c.h.bf16 %v6997
  %v7016 = vunpack.c.l.bf16 %v6998
  %v7017 = vunpack.c.h.bf16 %v6998
  %v7018 = vunpack.c.l.bf16 %v6999
  %v7019 = vunpack.c.h.bf16 %v6999
  %v7020 = vunpack.c.l.bf16 %v7000
  %v7021 = vunpack.c.h.bf16 %v7000
  %v7022 = vunpack.c.l.bf16 %v7001
  %v7023 = vunpack.c.h.bf16 %v7001
  %v7024 = vunpack.c.l.bf16 %v7002
  %v7025 = vunpack.c.h.bf16 %v7002
  %v7026 = vunpack.c.l.bf16 %v7003
  %v7027 = vunpack.c.h.bf16 %v7003
  %v7028 = vunpack.c.l.bf16 %v7004
  %v7029 = vunpack.c.h.bf16 %v7004
  %v7030 = vunpack.c.l.bf16 %v7005
  %v7031 = vunpack.c.h.bf16 %v7005
  %v7032 = vunpack.c.l.bf16 %v7006
  %v7033 = vunpack.c.h.bf16 %v7006
  %v7034 = vunpack.c.l.bf16 %v7007
  %v7035 = vunpack.c.h.bf16 %v7007
  %v7036 = vunpack.c.l.bf16 %v7008
  %v7037 = vunpack.c.h.bf16 %v7008
  %v7038 = vunpack.c.l.bf16 %v7009
  %v7039 = vunpack.c.h.bf16 %v7009
  %v7040 = vunpack.c.l.bf16 %v7010
  %v7041 = vunpack.c.h.bf16 %v7010
  %v7042 = vunpack.c.l.bf16 %v7011
  %v7043 = vunpack.c.h.bf16 %v7011
  %7044 = vmatprep.subr.mxu0 %v18
  %7045 = vmatpush1.msra.mxu0 %v17
  %7046 = vmatprep.subr.mxu0 %v22
  %7047 = vmatpush1.msra.mxu0 %v21
  %7048 = vmatprep.subr.mxu0 %v26
  %7049 = vmatpush1.msra.mxu0 %v25
  %7050 = vmatprep.subr.mxu0 %v30
  %7051 = vmatpush1.msra.mxu0 %v29
  %7052 = vmatprep.subr.mxu0 %v34
  %7053 = vmatpush1.msra.mxu0 %v33
  %7054 = vmatprep.subr.mxu0 %v38
  %7055 = vmatpush1.msra.mxu0 %v37
  %7056 = vmatprep.subr.mxu0 %v42
  %7057 = vmatpush1.msra.mxu0 %v41
  %7058 = vmatprep.subr.mxu0 %v46
  %7059 = vmatpush1.msra.mxu0 %v45
  %7060 = vmatprep.subr.mxu0 %v50
  %7061 = vmatpush1.msra.mxu0 %v49
  %7062 = vmatprep.subr.mxu0 %v54
  %7063 = vmatpush1.msra.mxu0 %v53
  %7064 = vmatprep.subr.mxu0 %v58
  %7065 = vmatpush1.msra.mxu0 %v57
  %7066 = vmatprep.subr.mxu0 %v62
  %7067 = vmatpush1.msra.mxu0 %v61
  %7068 = vmatprep.subr.mxu0 %v66
  %7069 = vmatpush1.msra.mxu0 %v65
  %7070 = vmatprep.subr.mxu0 %v70
  %7071 = vmatpush1.msra.mxu0 %v69
  %7072 = vmatprep.subr.mxu0 %v74
  %7073 = vmatpush1.msra.mxu0 %v73
  %7074 = vmatprep.subr.mxu0 %v78
  %7075 = vmatpush1.msra.mxu0 %v77
  %7076 = vmatprep.subr.mxu0 0.0
  %7077 = vmatpush1.msra.mxu0 0.0
  %7078 = vmatprep.subr.mxu0 0.0
  %7079 = vmatpush1.msra.mxu0 0.0
  %7080 = vmatprep.subr.mxu0 0.0
  %7081 = vmatpush1.msra.mxu0 0.0
  %7082 = vmatprep.subr.mxu0 0.0
  %7083 = vmatpush1.msra.mxu0 0.0
  %7084 = vmatprep.subr.mxu0 0.0
  %7085 = vmatpush1.msra.mxu0 0.0
  %7086 = vmatprep.subr.mxu0 0.0
  %7087 = vmatpush1.msra.mxu0 0.0
  %7088 = vmatprep.subr.mxu0 0.0
  %7089 = vmatpush1.msra.mxu0 0.0
  %7090 = vmatprep.subr.mxu0 0.0
  %7091 = vmatpush1.msra.mxu0 0.0
  %7092 = vmatprep.subr.mxu0 0.0
  %7093 = vmatpush1.msra.mxu0 0.0
  %7094 = vmatprep.subr.mxu0 0.0
  %7095 = vmatpush1.msra.mxu0 0.0
  %7096 = vmatprep.subr.mxu0 0.0
  %7097 = vmatpush1.msra.mxu0 0.0
  %7098 = vmatprep.subr.mxu0 0.0
  %7099 = vmatpush1.msra.mxu0 0.0
  %7100 = vmatprep.subr.mxu0 0.0
  %7101 = vmatpush1.msra.mxu0 0.0
  %7102 = vmatprep.subr.mxu0 0.0
  %7103 = vmatpush1.msra.mxu0 0.0
  %7104 = vmatprep.subr.mxu0 0.0
  %7105 = vmatpush1.msra.mxu0 0.0
  %7106 = vmatprep.subr.mxu0 0.0
  %7107 = vmatpush1.msra.mxu0 0.0
  %7108 = vmatprep.mubr.f32.mxu0 0.0
  %7109 = vmatmul.mubr.f32.gmra.mrb[0].mxu0 %v6994
  %v7110 = vpop.f32.mrb[0].mxu0
  %v7111 = vadd.f32 0.0, %v7110
  %v7112 = vpop.f32.mrb[0].mxu0
  %v7113 = vadd.f32 0.0, %v7112
  %7114 = vdwg.mxu0
  %7115 = vmatprep.subr.mxu0 %v20
  %7116 = vmatpush1.msra.mxu0 %v19
  %7117 = vmatprep.subr.mxu0 %v24
  %7118 = vmatpush1.msra.mxu0 %v23
  %7119 = vmatprep.subr.mxu0 %v28
  %7120 = vmatpush1.msra.mxu0 %v27
  %7121 = vmatprep.subr.mxu0 %v32
  %7122 = vmatpush1.msra.mxu0 %v31
  %7123 = vmatprep.subr.mxu0 %v36
  %7124 = vmatpush1.msra.mxu0 %v35
  %7125 = vmatprep.subr.mxu0 %v40
  %7126 = vmatpush1.msra.mxu0 %v39
  %7127 = vmatprep.subr.mxu0 %v44
  %7128 = vmatpush1.msra.mxu0 %v43
  %7129 = vmatprep.subr.mxu0 %v48
  %7130 = vmatpush1.msra.mxu0 %v47
  %7131 = vmatprep.subr.mxu0 %v52
  %7132 = vmatpush1.msra.mxu0 %v51
  %7133 = vmatprep.subr.mxu0 %v56
  %7134 = vmatpush1.msra.mxu0 %v55
  %7135 = vmatprep.subr.mxu0 %v60
  %7136 = vmatpush1.msra.mxu0 %v59
  %7137 = vmatprep.subr.mxu0 %v64
  %7138 = vmatpush1.msra.mxu0 %v63
  %7139 = vmatprep.subr.mxu0 %v68
  %7140 = vmatpush1.msra.mxu0 %v67
  %7141 = vmatprep.subr.mxu0 %v72
  %7142 = vmatpush1.msra.mxu0 %v71
  %7143 = vmatprep.subr.mxu0 %v76
  %7144 = vmatpush1.msra.mxu0 %v75
  %7145 = vmatprep.subr.mxu0 %v80
  %7146 = vmatpush1.msra.mxu0 %v79
  %7147 = vmatprep.subr.mxu0 0.0
  %7148 = vmatpush1.msra.mxu0 0.0
  %7149 = vmatprep.subr.mxu0 0.0
  %7150 = vmatpush1.msra.mxu0 0.0
  %7151 = vmatprep.subr.mxu0 0.0
  %7152 = vmatpush1.msra.mxu0 0.0
  %7153 = vmatprep.subr.mxu0 0.0
  %7154 = vmatpush1.msra.mxu0 0.0
  %7155 = vmatprep.subr.mxu0 0.0
  %7156 = vmatpush1.msra.mxu0 0.0
  %7157 = vmatprep.subr.mxu0 0.0
  %7158 = vmatpush1.msra.mxu0 0.0
  %7159 = vmatprep.subr.mxu0 0.0
  %7160 = vmatpush1.msra.mxu0 0.0
  %7161 = vmatprep.subr.mxu0 0.0
  %7162 = vmatpush1.msra.mxu0 0.0
  %7163 = vmatprep.subr.mxu0 0.0
  %7164 = vmatpush1.msra.mxu0 0.0
  %7165 = vmatprep.subr.mxu0 0.0
  %7166 = vmatpush1.msra.mxu0 0.0
  %7167 = vmatprep.subr.mxu0 0.0
  %7168 = vmatpush1.msra.mxu0 0.0
  %7169 = vmatprep.subr.mxu0 0.0
  %7170 = vmatpush1.msra.mxu0 0.0
  %7171 = vmatprep.subr.mxu0 0.0
  %7172 = vmatpush1.msra.mxu0 0.0
  %7173 = vmatprep.subr.mxu0 0.0
  %7174 = vmatpush1.msra.mxu0 0.0
  %7175 = vmatprep.subr.mxu0 0.0
  %7176 = vmatpush1.msra.mxu0 0.0
  %7177 = vmatprep.subr.mxu0 0.0
  %7178 = vmatpush1.msra.mxu0 0.0
  %7179 = vmatprep.mubr.f32.mxu0 0.0
  %7180 = vmatmul.mubr.f32.gmra.mrb[0].mxu0 %v6994
  %v7181 = vpop.f32.mrb[0].mxu0
  %v7182 = vadd.f32 0.0, %v7181
  %v7183 = vpop.f32.mrb[0].mxu0
  %v7184 = vadd.f32 0.0, %v7183
  %7185 = vdwg.mxu0
  %v7190 = vrot.slane %v7111, 3
  %v7191 = vrot.slane %v7113, 3
  %v7192 = vrot.slane %v7182, 3
  %v7193 = vrot.slane %v7184, 3
  %v7194 = vrot.slane %v7111, 4
  %v7195 = vrot.slane %v7113, 4
  %v7196 = vrot.slane %v7182, 4
  %v7197 = vrot.slane %v7184, 4
  %v7198 = vrot.slane %v7111, 5
  %v7199 = vrot.slane %v7113, 5
  %v7200 = vrot.slane %v7182, 5
  %v7201 = vrot.slane %v7184, 5
  %v7202 = vrot.slane %v7111, 6
  %v7203 = vrot.slane %v7113, 6
  %v7204 = vrot.slane %v7182, 6
  %v7205 = vrot.slane %v7184, 6
  %v7206 = vrot.slane %v7111, 7
  %v7207 = vrot.slane %v7113, 7
  %v7208 = vrot.slane %v7182, 7
  %v7209 = vrot.slane %v7184, 7
  %v7210 = vrot.slane %v7111, 1
  %v7211 = vrot.slane %v7113, 1
  %v7212 = vrot.slane %v7182, 1
  %v7213 = vrot.slane %v7184, 1
  %v7214 = vrot.slane %v7111, 2
  %v7215 = vrot.slane %v7113, 2
  %v7216 = vrot.slane %v7182, 2
  %v7217 = vrot.slane %v7184, 2
  %v7250 = vadd.f32 %v7012, %v7190
  %v7251 = vadd.f32 %v7013, %v7191
  %v7252 = vadd.f32 %v7014, %v7192
  %v7253 = vadd.f32 %v7015, %v7193
  %v7254 = vadd.f32 %v7016, %v7194
  %v7255 = vadd.f32 %v7017, %v7195
  %v7256 = vadd.f32 %v7018, %v7196
  %v7257 = vadd.f32 %v7019, %v7197
  %v7258 = vadd.f32 %v7020, %v7198
  %v7259 = vadd.f32 %v7021, %v7199
  %v7260 = vadd.f32 %v7022, %v7200
  %v7261 = vadd.f32 %v7023, %v7201
  %v7262 = vadd.f32 %v7024, %v7202
  %v7263 = vadd.f32 %v7025, %v7203
  %v7264 = vadd.f32 %v7026, %v7204
  %v7265 = vadd.f32 %v7027, %v7205
  %v7266 = vadd.f32 %v7028, %v7206
  %v7267 = vadd.f32 %v7029, %v7207
  %v7268 = vadd.f32 %v7030, %v7208
  %v7269 = vadd.f32 %v7031, %v7209
  %v7270 = vadd.f32 %v7032, %v7111
  %v7271 = vadd.f32 %v7033, %v7113
  %v7272 = vadd.f32 %v7034, %v7182
  %v7273 = vadd.f32 %v7035, %v7184
  %v7274 = vadd.f32 %v7036, %v7210
  %v7275 = vadd.f32 %v7037, %v7211
  %v7276 = vadd.f32 %v7038, %v7212
  %v7277 = vadd.f32 %v7039, %v7213
  %v7278 = vadd.f32 %v7040, %v7214
  %v7279 = vadd.f32 %v7041, %v7215
  %v7280 = vadd.f32 %v7042, %v7216
  %v7281 = vadd.f32 %v7043, %v7217
  %v7282 = vmul.f32 %v7250, 0.5
  %v7283 = vmul.f32 %v7254, 0.5
  %v7284 = vmul.f32 %v7258, 0.5
  %v7285 = vmul.f32 %v7262, 0.5
  %v7286 = vmul.f32 %v7266, 0.5
  %v7287 = vmul.f32 %v7270, 0.5
  %v7288 = vmul.f32 %v7274, 0.5
  %v7289 = vmul.f32 %v7278, 0.5
  %v7290 = vtanh.pop %v7282
  %v7291 = vtanh.pop %v7283
  %v7292 = vtanh.pop %v7284
  %v7293 = vtanh.pop %v7285
  %v7294 = vtanh.pop %v7286
  %v7295 = vtanh.pop %v7287
  %v7296 = vtanh.pop %v7288
  %v7297 = vtanh.pop %v7289
  %v7298 = vmul.f32 %v7290, 0.5
  %v7299 = vmul.f32 %v7291, 0.5
  %v7300 = vmul.f32 %v7292, 0.5
  %v7301 = vmul.f32 %v7293, 0.5
  %v7302 = vmul.f32 %v7294, 0.5
  %v7303 = vmul.f32 %v7295, 0.5
  %v7304 = vmul.f32 %v7296, 0.5
  %v7305 = vmul.f32 %v7297, 0.5
  %v7306 = vadd.f32 %v7298, 0.5
  %v7307 = vadd.f32 %v7299, 0.5
  %v7308 = vadd.f32 %v7300, 0.5
  %v7309 = vadd.f32 %v7301, 0.5
  %v7310 = vadd.f32 %v7302, 0.5
  %v7311 = vadd.f32 %v7303, 0.5
  %v7312 = vadd.f32 %v7304, 0.5
  %v7313 = vadd.f32 %v7305, 0.5
  %v7314 = vmul.f32 %v7251, 0.5
  %v7315 = vmul.f32 %v7255, 0.5
  %v7316 = vmul.f32 %v7259, 0.5
  %v7317 = vmul.f32 %v7263, 0.5
  %v7318 = vmul.f32 %v7267, 0.5
  %v7319 = vmul.f32 %v7271, 0.5
  %v7320 = vmul.f32 %v7275, 0.5
  %v7321 = vmul.f32 %v7279, 0.5
  %v7322 = vtanh.pop %v7314
  %v7323 = vtanh.pop %v7315
  %v7324 = vtanh.pop %v7316
  %v7325 = vtanh.pop %v7317
  %v7326 = vtanh.pop %v7318
  %v7327 = vtanh.pop %v7319
  %v7328 = vtanh.pop %v7320
  %v7329 = vtanh.pop %v7321
  %v7330 = vmul.f32 %v7322, 0.5
  %v7331 = vmul.f32 %v7323, 0.5
  %v7332 = vmul.f32 %v7324, 0.5
  %v7333 = vmul.f32 %v7325, 0.5
  %v7334 = vmul.f32 %v7326, 0.5
  %v7335 = vmul.f32 %v7327, 0.5
  %v7336 = vmul.f32 %v7328, 0.5
  %v7337 = vmul.f32 %v7329, 0.5
  %v7338 = vadd.f32 %v7330, 0.5
  %v7339 = vadd.f32 %v7331, 0.5
  %v7340 = vadd.f32 %v7332, 0.5
  %v7341 = vadd.f32 %v7333, 0.5
  %v7342 = vadd.f32 %v7334, 0.5
  %v7343 = vadd.f32 %v7335, 0.5
  %v7344 = vadd.f32 %v7336, 0.5
  %v7345 = vadd.f32 %v7337, 0.5
  %v7346 = vtanh.pop %v7252
  %v7347 = vtanh.pop %v7256
  %v7348 = vtanh.pop %v7260
  %v7349 = vtanh.pop %v7264
  %v7350 = vtanh.pop %v7268
  %v7351 = vtanh.pop %v7272
  %v7352 = vtanh.pop %v7276
  %v7353 = vtanh.pop %v7280
  %v7354 = vmul.f32 %v7253, 0.5
  %v7355 = vmul.f32 %v7257, 0.5
  %v7356 = vmul.f32 %v7261, 0.5
  %v7357 = vmul.f32 %v7265, 0.5
  %v7358 = vmul.f32 %v7269, 0.5
  %v7359 = vmul.f32 %v7273, 0.5
  %v7360 = vmul.f32 %v7277, 0.5
  %v7361 = vmul.f32 %v7281, 0.5
  %v7362 = vtanh.pop %v7354
  %v7363 = vtanh.pop %v7355
  %v7364 = vtanh.pop %v7356
  %v7365 = vtanh.pop %v7357
  %v7366 = vtanh.pop %v7358
  %v7367 = vtanh.pop %v7359
  %v7368 = vtanh.pop %v7360
  %v7369 = vtanh.pop %v7361
  %v7370 = vmul.f32 %v7362, 0.5
  %v7371 = vmul.f32 %v7363, 0.5
  %v7372 = vmul.f32 %v7364, 0.5
  %v7373 = vmul.f32 %v7365, 0.5
  %v7374 = vmul.f32 %v7366, 0.5
  %v7375 = vmul.f32 %v7367, 0.5
  %v7376 = vmul.f32 %v7368, 0.5
  %v7377 = vmul.f32 %v7369, 0.5
  %v7378 = vadd.f32 %v7370, 0.5
  %v7379 = vadd.f32 %v7371, 0.5
  %v7380 = vadd.f32 %v7372, 0.5
  %v7381 = vadd.f32 %v7373, 0.5
  %v7382 = vadd.f32 %v7374, 0.5
  %v7383 = vadd.f32 %v7375, 0.5
  %v7384 = vadd.f32 %v7376, 0.5
  %v7385 = vadd.f32 %v7377, 0.5
  %v7387 = vrot.slane %v6995, 3
  %v7388 = vrot.slane %v6995, 4
  %v7389 = vrot.slane %v6995, 5
  %v7390 = vrot.slane %v6995, 6
  %v7391 = vrot.slane %v6995, 7
  %v7392 = vrot.slane %v6995, 1
  %v7393 = vrot.slane %v6995, 2
  %v7402 = vmul.f32 %v7338, %v7387
  %v7403 = vmul.f32 %v7339, %v7388
  %v7404 = vmul.f32 %v7340, %v7389
  %v7405 = vmul.f32 %v7341, %v7390
  %v7406 = vmul.f32 %v7342, %v7391
  %v7407 = vmul.f32 %v7343, %v6995
  %v7408 = vmul.f32 %v7344, %v7392
  %v7409 = vmul.f32 %v7345, %v7393
  %v7410 = vmul.f32 %v7306, %v7346
  %v7411 = vmul.f32 %v7307, %v7347
  %v7412 = vmul.f32 %v7308, %v7348
  %v7413 = vmul.f32 %v7309, %v7349
  %v7414 = vmul.f32 %v7310, %v7350
  %v7415 = vmul.f32 %v7311, %v7351
  %v7416 = vmul.f32 %v7312, %v7352
  %v7417 = vmul.f32 %v7313, %v7353
  %v7418 = vadd.f32 %v7402, %v7410
  %v7419 = vadd.f32 %v7403, %v7411
  %v7420 = vadd.f32 %v7404, %v7412
  %v7421 = vadd.f32 %v7405, %v7413
  %v7422 = vadd.f32 %v7406, %v7414
  %v7423 = vadd.f32 %v7407, %v7415
  %v7424 = vadd.f32 %v7408, %v7416
  %v7425 = vadd.f32 %v7409, %v7417
  %v7426 = vtanh.pop %v7418
  %v7427 = vtanh.pop %v7419
  %v7428 = vtanh.pop %v7420
  %v7429 = vtanh.pop %v7421
  %v7430 = vtanh.pop %v7422
  %v7431 = vtanh.pop %v7423
  %v7432 = vtanh.pop %v7424
  %v7433 = vtanh.pop %v7425
  %v7434 = vmul.f32 %v7378, %v7426
  %v7435 = vmul.f32 %v7379, %v7427
  %v7436 = vmul.f32 %v7380, %v7428
  %v7437 = vmul.f32 %v7381, %v7429
  %v7438 = vmul.f32 %v7382, %v7430
  %v7439 = vmul.f32 %v7383, %v7431
  %v7440 = vmul.f32 %v7384, %v7432
  %v7441 = vmul.f32 %v7385, %v7433
  %v7450 = vrot.slane %v7435, 7
  %v7451 = vsel %vm553, %v7450, %v7434
  %v7452 = vrot.slane %v7436, 6
  %v7453 = vsel %vm556, %v7452, %v7451
  %v7454 = vrot.slane %v7437, 5
  %v7455 = vrot.slane %v7438, 4
  %v7456 = vsel %vm538, %v7455, %v7454
  %v7457 = vrot.slane %v7439, 3
  %v7458 = vsel %vm541, %v7457, %v7456
  %v7459 = vrot.slane %v7440, 2
  %v7460 = vsel %vm544, %v7459, %v7458
  %v7461 = vrot.slane %v7441, 1
  %v7462 = vsel %vm547, %v7461, %v7460
  %7465 = vst [vmem:[#allocation2 - $0x5] sm:$0xe0] %v7453
  %7466 = vst [vmem:[#allocation2 + $0x3] sm:$0x1f] %v7462
  %v7475 = vrot.slane %v7419, 7
  %v7476 = vsel %vm553, %v7475, %v7418
  %v7477 = vrot.slane %v7420, 6
  %v7478 = vsel %vm556, %v7477, %v7476
  %v7479 = vrot.slane %v7421, 5
  %v7480 = vrot.slane %v7422, 4
  %v7481 = vsel %vm538, %v7480, %v7479
  %v7482 = vrot.slane %v7423, 3
  %v7483 = vsel %vm541, %v7482, %v7481
  %v7484 = vrot.slane %v7424, 2
  %v7485 = vsel %vm544, %v7484, %v7483
  %v7486 = vrot.slane %v7425, 1
  %v7487 = vsel %vm547, %v7486, %v7485
  %7490 = vst [vmem:[#allocation3 - $0x5] sm:$0xe0] %v7478
  %7491 = vst [vmem:[#allocation3 + $0x3] sm:$0x1f] %v7487
  %v7492 = vpack.c.bf16 %v7434, %v7434
  %v7493 = vpack.c.bf16 %v7435, %v7435
  %v7494 = vpack.c.bf16 %v7436, %v7436
  %v7495 = vpack.c.bf16 %v7437, %v7437
  %v7496 = vpack.c.bf16 %v7438, %v7438
  %v7497 = vpack.c.bf16 %v7439, %v7439
  %v7498 = vpack.c.bf16 %v7440, %v7440
  %v7499 = vpack.c.bf16 %v7441, %v7441
  %v7500 = vld [vmem:[%s2 + $0x4] sm:$0x4]
  %v7501 = vsel %vm3256, %v7492, %v7500
  %7502 = vst [vmem:[%s2 + $0x4] sm:$0x4] %v7501
  %v7503 = vld [vmem:[%s2 + $0xc] sm:$0x4]
  %v7504 = vsel %vm3256, %v7493, %v7503
  %7505 = vst [vmem:[%s2 + $0xc] sm:$0x4] %v7504
  %v7506 = vld [vmem:[%s2 + $0x14] sm:$0x4]
  %v7507 = vsel %vm3256, %v7494, %v7506
  %7508 = vst [vmem:[%s2 + $0x14] sm:$0x4] %v7507
  %v7509 = vld [vmem:[%s2 + $0x1c] sm:$0x4]
  %v7510 = vsel %vm3256, %v7495, %v7509
  %7511 = vst [vmem:[%s2 + $0x1c] sm:$0x4] %v7510
  %v7512 = vld [vmem:[%s2 + $0x24] sm:$0x4]
  %v7513 = vsel %vm3256, %v7496, %v7512
  %7514 = vst [vmem:[%s2 + $0x24] sm:$0x4] %v7513
  %v7515 = vld [vmem:[%s2 + $0x2c] sm:$0x4]
  %v7516 = vsel %vm3256, %v7497, %v7515
  %7517 = vst [vmem:[%s2 + $0x2c] sm:$0x4] %v7516
  %v7518 = vld [vmem:[%s2 + $0x34] sm:$0x4]
  %v7519 = vsel %vm3256, %v7498, %v7518
  %7520 = vst [vmem:[%s2 + $0x34] sm:$0x4] %v7519
  %v7521 = vld [vmem:[%s2 + $0x3c] sm:$0x4]
  %v7522 = vsel %vm3256, %v7499, %v7521
  %7523 = vst [vmem:[%s2 + $0x3c] sm:$0x4] %v7522
  %v7524 = vld [vmem:[#allocation2] sm:$0xff]
  %v7525 = vld [vmem:[#allocation3] sm:$0xff]
  %v7526 = vld [vmem:[%s0 + $0x10] sm:$0x88]
  %v7527 = vld [vmem:[%s0 + $0x18] sm:$0x88]
  %v7528 = vld [vmem:[%s0 + $0x30] sm:$0x88]
  %v7529 = vld [vmem:[%s0 + $0x38] sm:$0x88]
  %v7530 = vld [vmem:[%s0 + $0x50] sm:$0x88]
  %v7531 = vld [vmem:[%s0 + $0x58] sm:$0x88]
  %v7532 = vld [vmem:[%s0 + $0x70] sm:$0x88]
  %v7533 = vld [vmem:[%s0 + $0x78] sm:$0x88]
  %v7534 = vld [vmem:[%s0 + $0x90] sm:$0x88]
  %v7535 = vld [vmem:[%s0 + $0x98] sm:$0x88]
  %v7536 = vld [vmem:[%s0 + $0xb0] sm:$0x88]
  %v7537 = vld [vmem:[%s0 + $0xb8] sm:$0x88]
  %v7538 = vld [vmem:[%s0 + $0xd0] sm:$0x88]
  %v7539 = vld [vmem:[%s0 + $0xd8] sm:$0x88]
  %v7540 = vld [vmem:[%s0 + $0xf0] sm:$0x88]
  %v7541 = vld [vmem:[%s0 + $0xf8] sm:$0x88]
  %v7542 = vunpack.c.l.bf16 %v7526
  %v7543 = vunpack.c.h.bf16 %v7526
  %v7544 = vunpack.c.l.bf16 %v7527
  %v7545 = vunpack.c.h.bf16 %v7527
  %v7546 = vunpack.c.l.bf16 %v7528
  %v7547 = vunpack.c.h.bf16 %v7528
  %v7548 = vunpack.c.l.bf16 %v7529
  %v7549 = vunpack.c.h.bf16 %v7529
  %v7550 = vunpack.c.l.bf16 %v7530
  %v7551 = vunpack.c.h.bf16 %v7530
  %v7552 = vunpack.c.l.bf16 %v7531
  %v7553 = vunpack.c.h.bf16 %v7531
  %v7554 = vunpack.c.l.bf16 %v7532
  %v7555 = vunpack.c.h.bf16 %v7532
  %v7556 = vunpack.c.l.bf16 %v7533
  %v7557 = vunpack.c.h.bf16 %v7533
  %v7558 = vunpack.c.l.bf16 %v7534
  %v7559 = vunpack.c.h.bf16 %v7534
  %v7560 = vunpack.c.l.bf16 %v7535
  %v7561 = vunpack.c.h.bf16 %v7535
  %v7562 = vunpack.c.l.bf16 %v7536
  %v7563 = vunpack.c.h.bf16 %v7536
  %v7564 = vunpack.c.l.bf16 %v7537
  %v7565 = vunpack.c.h.bf16 %v7537
  %v7566 = vunpack.c.l.bf16 %v7538
  %v7567 = vunpack.c.h.bf16 %v7538
  %v7568 = vunpack.c.l.bf16 %v7539
  %v7569 = vunpack.c.h.bf16 %v7539
  %v7570 = vunpack.c.l.bf16 %v7540
  %v7571 = vunpack.c.h.bf16 %v7540
  %v7572 = vunpack.c.l.bf16 %v7541
  %v7573 = vunpack.c.h.bf16 %v7541
  %7574 = vmatprep.subr.mxu0 %v18
  %7575 = vmatpush1.msra.mxu0 %v17
  %7576 = vmatprep.subr.mxu0 %v22
  %7577 = vmatpush1.msra.mxu0 %v21
  %7578 = vmatprep.subr.mxu0 %v26
  %7579 = vmatpush1.msra.mxu0 %v25
  %7580 = vmatprep.subr.mxu0 %v30
  %7581 = vmatpush1.msra.mxu0 %v29
  %7582 = vmatprep.subr.mxu0 %v34
  %7583 = vmatpush1.msra.mxu0 %v33
  %7584 = vmatprep.subr.mxu0 %v38
  %7585 = vmatpush1.msra.mxu0 %v37
  %7586 = vmatprep.subr.mxu0 %v42
  %7587 = vmatpush1.msra.mxu0 %v41
  %7588 = vmatprep.subr.mxu0 %v46
  %7589 = vmatpush1.msra.mxu0 %v45
  %7590 = vmatprep.subr.mxu0 %v50
  %7591 = vmatpush1.msra.mxu0 %v49
  %7592 = vmatprep.subr.mxu0 %v54
  %7593 = vmatpush1.msra.mxu0 %v53
  %7594 = vmatprep.subr.mxu0 %v58
  %7595 = vmatpush1.msra.mxu0 %v57
  %7596 = vmatprep.subr.mxu0 %v62
  %7597 = vmatpush1.msra.mxu0 %v61
  %7598 = vmatprep.subr.mxu0 %v66
  %7599 = vmatpush1.msra.mxu0 %v65
  %7600 = vmatprep.subr.mxu0 %v70
  %7601 = vmatpush1.msra.mxu0 %v69
  %7602 = vmatprep.subr.mxu0 %v74
  %7603 = vmatpush1.msra.mxu0 %v73
  %7604 = vmatprep.subr.mxu0 %v78
  %7605 = vmatpush1.msra.mxu0 %v77
  %7606 = vmatprep.subr.mxu0 0.0
  %7607 = vmatpush1.msra.mxu0 0.0
  %7608 = vmatprep.subr.mxu0 0.0
  %7609 = vmatpush1.msra.mxu0 0.0
  %7610 = vmatprep.subr.mxu0 0.0
  %7611 = vmatpush1.msra.mxu0 0.0
  %7612 = vmatprep.subr.mxu0 0.0
  %7613 = vmatpush1.msra.mxu0 0.0
  %7614 = vmatprep.subr.mxu0 0.0
  %7615 = vmatpush1.msra.mxu0 0.0
  %7616 = vmatprep.subr.mxu0 0.0
  %7617 = vmatpush1.msra.mxu0 0.0
  %7618 = vmatprep.subr.mxu0 0.0
  %7619 = vmatpush1.msra.mxu0 0.0
  %7620 = vmatprep.subr.mxu0 0.0
  %7621 = vmatpush1.msra.mxu0 0.0
  %7622 = vmatprep.subr.mxu0 0.0
  %7623 = vmatpush1.msra.mxu0 0.0
  %7624 = vmatprep.subr.mxu0 0.0
  %7625 = vmatpush1.msra.mxu0 0.0
  %7626 = vmatprep.subr.mxu0 0.0
  %7627 = vmatpush1.msra.mxu0 0.0
  %7628 = vmatprep.subr.mxu0 0.0
  %7629 = vmatpush1.msra.mxu0 0.0
  %7630 = vmatprep.subr.mxu0 0.0
  %7631 = vmatpush1.msra.mxu0 0.0
  %7632 = vmatprep.subr.mxu0 0.0
  %7633 = vmatpush1.msra.mxu0 0.0
  %7634 = vmatprep.subr.mxu0 0.0
  %7635 = vmatpush1.msra.mxu0 0.0
  %7636 = vmatprep.subr.mxu0 0.0
  %7637 = vmatpush1.msra.mxu0 0.0
  %7638 = vmatprep.mubr.f32.mxu0 0.0
  %7639 = vmatmul.mubr.f32.gmra.mrb[0].mxu0 %v7524
  %v7640 = vpop.f32.mrb[0].mxu0
  %v7641 = vadd.f32 0.0, %v7640
  %v7642 = vpop.f32.mrb[0].mxu0
  %v7643 = vadd.f32 0.0, %v7642
  %7644 = vdwg.mxu0
  %7645 = vmatprep.subr.mxu0 %v20
  %7646 = vmatpush1.msra.mxu0 %v19
  %7647 = vmatprep.subr.mxu0 %v24
  %7648 = vmatpush1.msra.mxu0 %v23
  %7649 = vmatprep.subr.mxu0 %v28
  %7650 = vmatpush1.msra.mxu0 %v27
  %7651 = vmatprep.subr.mxu0 %v32
  %7652 = vmatpush1.msra.mxu0 %v31
  %7653 = vmatprep.subr.mxu0 %v36
  %7654 = vmatpush1.msra.mxu0 %v35
  %7655 = vmatprep.subr.mxu0 %v40
  %7656 = vmatpush1.msra.mxu0 %v39
  %7657 = vmatprep.subr.mxu0 %v44
  %7658 = vmatpush1.msra.mxu0 %v43
  %7659 = vmatprep.subr.mxu0 %v48
  %7660 = vmatpush1.msra.mxu0 %v47
  %7661 = vmatprep.subr.mxu0 %v52
  %7662 = vmatpush1.msra.mxu0 %v51
  %7663 = vmatprep.subr.mxu0 %v56
  %7664 = vmatpush1.msra.mxu0 %v55
  %7665 = vmatprep.subr.mxu0 %v60
  %7666 = vmatpush1.msra.mxu0 %v59
  %7667 = vmatprep.subr.mxu0 %v64
  %7668 = vmatpush1.msra.mxu0 %v63
  %7669 = vmatprep.subr.mxu0 %v68
  %7670 = vmatpush1.msra.mxu0 %v67
  %7671 = vmatprep.subr.mxu0 %v72
  %7672 = vmatpush1.msra.mxu0 %v71
  %7673 = vmatprep.subr.mxu0 %v76
  %7674 = vmatpush1.msra.mxu0 %v75
  %7675 = vmatprep.subr.mxu0 %v80
  %7676 = vmatpush1.msra.mxu0 %v79
  %7677 = vmatprep.subr.mxu0 0.0
  %7678 = vmatpush1.msra.mxu0 0.0
  %7679 = vmatprep.subr.mxu0 0.0
  %7680 = vmatpush1.msra.mxu0 0.0
  %7681 = vmatprep.subr.mxu0 0.0
  %7682 = vmatpush1.msra.mxu0 0.0
  %7683 = vmatprep.subr.mxu0 0.0
  %7684 = vmatpush1.msra.mxu0 0.0
  %7685 = vmatprep.subr.mxu0 0.0
  %7686 = vmatpush1.msra.mxu0 0.0
  %7687 = vmatprep.subr.mxu0 0.0
  %7688 = vmatpush1.msra.mxu0 0.0
  %7689 = vmatprep.subr.mxu0 0.0
  %7690 = vmatpush1.msra.mxu0 0.0
  %7691 = vmatprep.subr.mxu0 0.0
  %7692 = vmatpush1.msra.mxu0 0.0
  %7693 = vmatprep.subr.mxu0 0.0
  %7694 = vmatpush1.msra.mxu0 0.0
  %7695 = vmatprep.subr.mxu0 0.0
  %7696 = vmatpush1.msra.mxu0 0.0
  %7697 = vmatprep.subr.mxu0 0.0
  %7698 = vmatpush1.msra.mxu0 0.0
  %7699 = vmatprep.subr.mxu0 0.0
  %7700 = vmatpush1.msra.mxu0 0.0
  %7701 = vmatprep.subr.mxu0 0.0
  %7702 = vmatpush1.msra.mxu0 0.0
  %7703 = vmatprep.subr.mxu0 0.0
  %7704 = vmatpush1.msra.mxu0 0.0
  %7705 = vmatprep.subr.mxu0 0.0
  %7706 = vmatpush1.msra.mxu0 0.0
  %7707 = vmatprep.subr.mxu0 0.0
  %7708 = vmatpush1.msra.mxu0 0.0
  %7709 = vmatprep.mubr.f32.mxu0 0.0
  %7710 = vmatmul.mubr.f32.gmra.mrb[0].mxu0 %v7524
  %v7711 = vpop.f32.mrb[0].mxu0
  %v7712 = vadd.f32 0.0, %v7711
  %v7713 = vpop.f32.mrb[0].mxu0
  %v7714 = vadd.f32 0.0, %v7713
  %7715 = vdwg.mxu0
  %v7720 = vrot.slane %v7641, 2
  %v7721 = vrot.slane %v7643, 2
  %v7722 = vrot.slane %v7712, 2
  %v7723 = vrot.slane %v7714, 2
  %v7724 = vrot.slane %v7641, 3
  %v7725 = vrot.slane %v7643, 3
  %v7726 = vrot.slane %v7712, 3
  %v7727 = vrot.slane %v7714, 3
  %v7728 = vrot.slane %v7641, 4
  %v7729 = vrot.slane %v7643, 4
  %v7730 = vrot.slane %v7712, 4
  %v7731 = vrot.slane %v7714, 4
  %v7732 = vrot.slane %v7641, 5
  %v7733 = vrot.slane %v7643, 5
  %v7734 = vrot.slane %v7712, 5
  %v7735 = vrot.slane %v7714, 5
  %v7736 = vrot.slane %v7641, 6
  %v7737 = vrot.slane %v7643, 6
  %v7738 = vrot.slane %v7712, 6
  %v7739 = vrot.slane %v7714, 6
  %v7740 = vrot.slane %v7641, 7
  %v7741 = vrot.slane %v7643, 7
  %v7742 = vrot.slane %v7712, 7
  %v7743 = vrot.slane %v7714, 7
  %v7744 = vrot.slane %v7641, 1
  %v7745 = vrot.slane %v7643, 1
  %v7746 = vrot.slane %v7712, 1
  %v7747 = vrot.slane %v7714, 1
  %v7780 = vadd.f32 %v7542, %v7720
  %v7781 = vadd.f32 %v7543, %v7721
  %v7782 = vadd.f32 %v7544, %v7722
  %v7783 = vadd.f32 %v7545, %v7723
  %v7784 = vadd.f32 %v7546, %v7724
  %v7785 = vadd.f32 %v7547, %v7725
  %v7786 = vadd.f32 %v7548, %v7726
  %v7787 = vadd.f32 %v7549, %v7727
  %v7788 = vadd.f32 %v7550, %v7728
  %v7789 = vadd.f32 %v7551, %v7729
  %v7790 = vadd.f32 %v7552, %v7730
  %v7791 = vadd.f32 %v7553, %v7731
  %v7792 = vadd.f32 %v7554, %v7732
  %v7793 = vadd.f32 %v7555, %v7733
  %v7794 = vadd.f32 %v7556, %v7734
  %v7795 = vadd.f32 %v7557, %v7735
  %v7796 = vadd.f32 %v7558, %v7736
  %v7797 = vadd.f32 %v7559, %v7737
  %v7798 = vadd.f32 %v7560, %v7738
  %v7799 = vadd.f32 %v7561, %v7739
  %v7800 = vadd.f32 %v7562, %v7740
  %v7801 = vadd.f32 %v7563, %v7741
  %v7802 = vadd.f32 %v7564, %v7742
  %v7803 = vadd.f32 %v7565, %v7743
  %v7804 = vadd.f32 %v7566, %v7641
  %v7805 = vadd.f32 %v7567, %v7643
  %v7806 = vadd.f32 %v7568, %v7712
  %v7807 = vadd.f32 %v7569, %v7714
  %v7808 = vadd.f32 %v7570, %v7744
  %v7809 = vadd.f32 %v7571, %v7745
  %v7810 = vadd.f32 %v7572, %v7746
  %v7811 = vadd.f32 %v7573, %v7747
  %v7812 = vmul.f32 %v7780, 0.5
  %v7813 = vmul.f32 %v7784, 0.5
  %v7814 = vmul.f32 %v7788, 0.5
  %v7815 = vmul.f32 %v7792, 0.5
  %v7816 = vmul.f32 %v7796, 0.5
  %v7817 = vmul.f32 %v7800, 0.5
  %v7818 = vmul.f32 %v7804, 0.5
  %v7819 = vmul.f32 %v7808, 0.5
  %v7820 = vtanh.pop %v7812
  %v7821 = vtanh.pop %v7813
  %v7822 = vtanh.pop %v7814
  %v7823 = vtanh.pop %v7815
  %v7824 = vtanh.pop %v7816
  %v7825 = vtanh.pop %v7817
  %v7826 = vtanh.pop %v7818
  %v7827 = vtanh.pop %v7819
  %v7828 = vmul.f32 %v7820, 0.5
  %v7829 = vmul.f32 %v7821, 0.5
  %v7830 = vmul.f32 %v7822, 0.5
  %v7831 = vmul.f32 %v7823, 0.5
  %v7832 = vmul.f32 %v7824, 0.5
  %v7833 = vmul.f32 %v7825, 0.5
  %v7834 = vmul.f32 %v7826, 0.5
  %v7835 = vmul.f32 %v7827, 0.5
  %v7836 = vadd.f32 %v7828, 0.5
  %v7837 = vadd.f32 %v7829, 0.5
  %v7838 = vadd.f32 %v7830, 0.5
  %v7839 = vadd.f32 %v7831, 0.5
  %v7840 = vadd.f32 %v7832, 0.5
  %v7841 = vadd.f32 %v7833, 0.5
  %v7842 = vadd.f32 %v7834, 0.5
  %v7843 = vadd.f32 %v7835, 0.5
  %v7844 = vmul.f32 %v7781, 0.5
  %v7845 = vmul.f32 %v7785, 0.5
  %v7846 = vmul.f32 %v7789, 0.5
  %v7847 = vmul.f32 %v7793, 0.5
  %v7848 = vmul.f32 %v7797, 0.5
  %v7849 = vmul.f32 %v7801, 0.5
  %v7850 = vmul.f32 %v7805, 0.5
  %v7851 = vmul.f32 %v7809, 0.5
  %v7852 = vtanh.pop %v7844
  %v7853 = vtanh.pop %v7845
  %v7854 = vtanh.pop %v7846
  %v7855 = vtanh.pop %v7847
  %v7856 = vtanh.pop %v7848
  %v7857 = vtanh.pop %v7849
  %v7858 = vtanh.pop %v7850
  %v7859 = vtanh.pop %v7851
  %v7860 = vmul.f32 %v7852, 0.5
  %v7861 = vmul.f32 %v7853, 0.5
  %v7862 = vmul.f32 %v7854, 0.5
  %v7863 = vmul.f32 %v7855, 0.5
  %v7864 = vmul.f32 %v7856, 0.5
  %v7865 = vmul.f32 %v7857, 0.5
  %v7866 = vmul.f32 %v7858, 0.5
  %v7867 = vmul.f32 %v7859, 0.5
  %v7868 = vadd.f32 %v7860, 0.5
  %v7869 = vadd.f32 %v7861, 0.5
  %v7870 = vadd.f32 %v7862, 0.5
  %v7871 = vadd.f32 %v7863, 0.5
  %v7872 = vadd.f32 %v7864, 0.5
  %v7873 = vadd.f32 %v7865, 0.5
  %v7874 = vadd.f32 %v7866, 0.5
  %v7875 = vadd.f32 %v7867, 0.5
  %v7876 = vtanh.pop %v7782
  %v7877 = vtanh.pop %v7786
  %v7878 = vtanh.pop %v7790
  %v7879 = vtanh.pop %v7794
  %v7880 = vtanh.pop %v7798
  %v7881 = vtanh.pop %v7802
  %v7882 = vtanh.pop %v7806
  %v7883 = vtanh.pop %v7810
  %v7884 = vmul.f32 %v7783, 0.5
  %v7885 = vmul.f32 %v7787, 0.5
  %v7886 = vmul.f32 %v7791, 0.5
  %v7887 = vmul.f32 %v7795, 0.5
  %v7888 = vmul.f32 %v7799, 0.5
  %v7889 = vmul.f32 %v7803, 0.5
  %v7890 = vmul.f32 %v7807, 0.5
  %v7891 = vmul.f32 %v7811, 0.5
  %v7892 = vtanh.pop %v7884
  %v7893 = vtanh.pop %v7885
  %v7894 = vtanh.pop %v7886
  %v7895 = vtanh.pop %v7887
  %v7896 = vtanh.pop %v7888
  %v7897 = vtanh.pop %v7889
  %v7898 = vtanh.pop %v7890
  %v7899 = vtanh.pop %v7891
  %v7900 = vmul.f32 %v7892, 0.5
  %v7901 = vmul.f32 %v7893, 0.5
  %v7902 = vmul.f32 %v7894, 0.5
  %v7903 = vmul.f32 %v7895, 0.5
  %v7904 = vmul.f32 %v7896, 0.5
  %v7905 = vmul.f32 %v7897, 0.5
  %v7906 = vmul.f32 %v7898, 0.5
  %v7907 = vmul.f32 %v7899, 0.5
  %v7908 = vadd.f32 %v7900, 0.5
  %v7909 = vadd.f32 %v7901, 0.5
  %v7910 = vadd.f32 %v7902, 0.5
  %v7911 = vadd.f32 %v7903, 0.5
  %v7912 = vadd.f32 %v7904, 0.5
  %v7913 = vadd.f32 %v7905, 0.5
  %v7914 = vadd.f32 %v7906, 0.5
  %v7915 = vadd.f32 %v7907, 0.5
  %v7917 = vrot.slane %v7525, 2
  %v7918 = vrot.slane %v7525, 3
  %v7919 = vrot.slane %v7525, 4
  %v7920 = vrot.slane %v7525, 5
  %v7921 = vrot.slane %v7525, 6
  %v7922 = vrot.slane %v7525, 7
  %v7923 = vrot.slane %v7525, 1
  %v7932 = vmul.f32 %v7868, %v7917
  %v7933 = vmul.f32 %v7869, %v7918
  %v7934 = vmul.f32 %v7870, %v7919
  %v7935 = vmul.f32 %v7871, %v7920
  %v7936 = vmul.f32 %v7872, %v7921
  %v7937 = vmul.f32 %v7873, %v7922
  %v7938 = vmul.f32 %v7874, %v7525
  %v7939 = vmul.f32 %v7875, %v7923
  %v7940 = vmul.f32 %v7836, %v7876
  %v7941 = vmul.f32 %v7837, %v7877
  %v7942 = vmul.f32 %v7838, %v7878
  %v7943 = vmul.f32 %v7839, %v7879
  %v7944 = vmul.f32 %v7840, %v7880
  %v7945 = vmul.f32 %v7841, %v7881
  %v7946 = vmul.f32 %v7842, %v7882
  %v7947 = vmul.f32 %v7843, %v7883
  %v7948 = vadd.f32 %v7932, %v7940
  %v7949 = vadd.f32 %v7933, %v7941
  %v7950 = vadd.f32 %v7934, %v7942
  %v7951 = vadd.f32 %v7935, %v7943
  %v7952 = vadd.f32 %v7936, %v7944
  %v7953 = vadd.f32 %v7937, %v7945
  %v7954 = vadd.f32 %v7938, %v7946
  %v7955 = vadd.f32 %v7939, %v7947
  %v7956 = vtanh.pop %v7948
  %v7957 = vtanh.pop %v7949
  %v7958 = vtanh.pop %v7950
  %v7959 = vtanh.pop %v7951
  %v7960 = vtanh.pop %v7952
  %v7961 = vtanh.pop %v7953
  %v7962 = vtanh.pop %v7954
  %v7963 = vtanh.pop %v7955
  %v7964 = vmul.f32 %v7908, %v7956
  %v7965 = vmul.f32 %v7909, %v7957
  %v7966 = vmul.f32 %v7910, %v7958
  %v7967 = vmul.f32 %v7911, %v7959
  %v7968 = vmul.f32 %v7912, %v7960
  %v7969 = vmul.f32 %v7913, %v7961
  %v7970 = vmul.f32 %v7914, %v7962
  %v7971 = vmul.f32 %v7915, %v7963
  %v7980 = vrot.slane %v7965, 7
  %v7981 = vsel %vm556, %v7980, %v7964
  %v7982 = vrot.slane %v7966, 6
  %v7983 = vrot.slane %v7967, 5
  %v7984 = vsel %vm538, %v7983, %v7982
  %v7985 = vrot.slane %v7968, 4
  %v7986 = vsel %vm541, %v7985, %v7984
  %v7987 = vrot.slane %v7969, 3
  %v7988 = vsel %vm544, %v7987, %v7986
  %v7989 = vrot.slane %v7970, 2
  %v7990 = vsel %vm547, %v7989, %v7988
  %v7991 = vrot.slane %v7971, 1
  %v7992 = vsel %vm550, %v7991, %v7990
  %7995 = vst [vmem:[#allocation2 - $0x6] sm:$0xc0] %v7981
  %7996 = vst [vmem:[#allocation2 + $0x2] sm:$0x3f] %v7992
  %v8005 = vrot.slane %v7949, 7
  %v8006 = vsel %vm556, %v8005, %v7948
  %v8007 = vrot.slane %v7950, 6
  %v8008 = vrot.slane %v7951, 5
  %v8009 = vsel %vm538, %v8008, %v8007
  %v8010 = vrot.slane %v7952, 4
  %v8011 = vsel %vm541, %v8010, %v8009
  %v8012 = vrot.slane %v7953, 3
  %v8013 = vsel %vm544, %v8012, %v8011
  %v8014 = vrot.slane %v7954, 2
  %v8015 = vsel %vm547, %v8014, %v8013
  %v8016 = vrot.slane %v7955, 1
  %v8017 = vsel %vm550, %v8016, %v8015
  %8020 = vst [vmem:[#allocation3 - $0x6] sm:$0xc0] %v8006
  %8021 = vst [vmem:[#allocation3 + $0x2] sm:$0x3f] %v8017
  %v8022 = vpack.c.bf16 %v7964, %v7964
  %v8023 = vpack.c.bf16 %v7965, %v7965
  %v8024 = vpack.c.bf16 %v7966, %v7966
  %v8025 = vpack.c.bf16 %v7967, %v7967
  %v8026 = vpack.c.bf16 %v7968, %v7968
  %v8027 = vpack.c.bf16 %v7969, %v7969
  %v8028 = vpack.c.bf16 %v7970, %v7970
  %v8029 = vpack.c.bf16 %v7971, %v7971
  %v8030 = vld [vmem:[%s2 + $0x4] sm:$0x8]
  %v8031 = vsel %vm3789, %v8022, %v8030
  %8032 = vst [vmem:[%s2 + $0x4] sm:$0x8] %v8031
  %v8033 = vld [vmem:[%s2 + $0xc] sm:$0x8]
  %v8034 = vsel %vm3789, %v8023, %v8033
  %8035 = vst [vmem:[%s2 + $0xc] sm:$0x8] %v8034
  %v8036 = vld [vmem:[%s2 + $0x14] sm:$0x8]
  %v8037 = vsel %vm3789, %v8024, %v8036
  %8038 = vst [vmem:[%s2 + $0x14] sm:$0x8] %v8037
  %v8039 = vld [vmem:[%s2 + $0x1c] sm:$0x8]
  %v8040 = vsel %vm3789, %v8025, %v8039
  %8041 = vst [vmem:[%s2 + $0x1c] sm:$0x8] %v8040
  %v8042 = vld [vmem:[%s2 + $0x24] sm:$0x8]
  %v8043 = vsel %vm3789, %v8026, %v8042
  %8044 = vst [vmem:[%s2 + $0x24] sm:$0x8] %v8043
  %v8045 = vld [vmem:[%s2 + $0x2c] sm:$0x8]
  %v8046 = vsel %vm3789, %v8027, %v8045
  %8047 = vst [vmem:[%s2 + $0x2c] sm:$0x8] %v8046
  %v8048 = vld [vmem:[%s2 + $0x34] sm:$0x8]
  %v8049 = vsel %vm3789, %v8028, %v8048
  %8050 = vst [vmem:[%s2 + $0x34] sm:$0x8] %v8049
  %v8051 = vld [vmem:[%s2 + $0x3c] sm:$0x8]
  %v8052 = vsel %vm3789, %v8029, %v8051
  %8053 = vst [vmem:[%s2 + $0x3c] sm:$0x8] %v8052
  %v8054 = vld [vmem:[#allocation2] sm:$0xff]
  %v8055 = vld [vmem:[#allocation3] sm:$0xff]
  %v8056 = vld [vmem:[%s0 + $0x10] sm:$0x88]
  %v8057 = vld [vmem:[%s0 + $0x18] sm:$0x88]
  %v8058 = vld [vmem:[%s0 + $0x30] sm:$0x88]
  %v8059 = vld [vmem:[%s0 + $0x38] sm:$0x88]
  %v8060 = vld [vmem:[%s0 + $0x50] sm:$0x88]
  %v8061 = vld [vmem:[%s0 + $0x58] sm:$0x88]
  %v8062 = vld [vmem:[%s0 + $0x70] sm:$0x88]
  %v8063 = vld [vmem:[%s0 + $0x78] sm:$0x88]
  %v8064 = vld [vmem:[%s0 + $0x90] sm:$0x88]
  %v8065 = vld [vmem:[%s0 + $0x98] sm:$0x88]
  %v8066 = vld [vmem:[%s0 + $0xb0] sm:$0x88]
  %v8067 = vld [vmem:[%s0 + $0xb8] sm:$0x88]
  %v8068 = vld [vmem:[%s0 + $0xd0] sm:$0x88]
  %v8069 = vld [vmem:[%s0 + $0xd8] sm:$0x88]
  %v8070 = vld [vmem:[%s0 + $0xf0] sm:$0x88]
  %v8071 = vld [vmem:[%s0 + $0xf8] sm:$0x88]
  %v8072 = vunpack.c.l.bf16 %v8056
  %v8073 = vunpack.c.h.bf16 %v8056
  %v8074 = vunpack.c.l.bf16 %v8057
  %v8075 = vunpack.c.h.bf16 %v8057
  %v8076 = vunpack.c.l.bf16 %v8058
  %v8077 = vunpack.c.h.bf16 %v8058
  %v8078 = vunpack.c.l.bf16 %v8059
  %v8079 = vunpack.c.h.bf16 %v8059
  %v8080 = vunpack.c.l.bf16 %v8060
  %v8081 = vunpack.c.h.bf16 %v8060
  %v8082 = vunpack.c.l.bf16 %v8061
  %v8083 = vunpack.c.h.bf16 %v8061
  %v8084 = vunpack.c.l.bf16 %v8062
  %v8085 = vunpack.c.h.bf16 %v8062
  %v8086 = vunpack.c.l.bf16 %v8063
  %v8087 = vunpack.c.h.bf16 %v8063
  %v8088 = vunpack.c.l.bf16 %v8064
  %v8089 = vunpack.c.h.bf16 %v8064
  %v8090 = vunpack.c.l.bf16 %v8065
  %v8091 = vunpack.c.h.bf16 %v8065
  %v8092 = vunpack.c.l.bf16 %v8066
  %v8093 = vunpack.c.h.bf16 %v8066
  %v8094 = vunpack.c.l.bf16 %v8067
  %v8095 = vunpack.c.h.bf16 %v8067
  %v8096 = vunpack.c.l.bf16 %v8068
  %v8097 = vunpack.c.h.bf16 %v8068
  %v8098 = vunpack.c.l.bf16 %v8069
  %v8099 = vunpack.c.h.bf16 %v8069
  %v8100 = vunpack.c.l.bf16 %v8070
  %v8101 = vunpack.c.h.bf16 %v8070
  %v8102 = vunpack.c.l.bf16 %v8071
  %v8103 = vunpack.c.h.bf16 %v8071
  %8104 = vmatprep.subr.mxu0 %v18
  %8105 = vmatpush1.msra.mxu0 %v17
  %8106 = vmatprep.subr.mxu0 %v22
  %8107 = vmatpush1.msra.mxu0 %v21
  %8108 = vmatprep.subr.mxu0 %v26
  %8109 = vmatpush1.msra.mxu0 %v25
  %8110 = vmatprep.subr.mxu0 %v30
  %8111 = vmatpush1.msra.mxu0 %v29
  %8112 = vmatprep.subr.mxu0 %v34
  %8113 = vmatpush1.msra.mxu0 %v33
  %8114 = vmatprep.subr.mxu0 %v38
  %8115 = vmatpush1.msra.mxu0 %v37
  %8116 = vmatprep.subr.mxu0 %v42
  %8117 = vmatpush1.msra.mxu0 %v41
  %8118 = vmatprep.subr.mxu0 %v46
  %8119 = vmatpush1.msra.mxu0 %v45
  %8120 = vmatprep.subr.mxu0 %v50
  %8121 = vmatpush1.msra.mxu0 %v49
  %8122 = vmatprep.subr.mxu0 %v54
  %8123 = vmatpush1.msra.mxu0 %v53
  %8124 = vmatprep.subr.mxu0 %v58
  %8125 = vmatpush1.msra.mxu0 %v57
  %8126 = vmatprep.subr.mxu0 %v62
  %8127 = vmatpush1.msra.mxu0 %v61
  %8128 = vmatprep.subr.mxu0 %v66
  %8129 = vmatpush1.msra.mxu0 %v65
  %8130 = vmatprep.subr.mxu0 %v70
  %8131 = vmatpush1.msra.mxu0 %v69
  %8132 = vmatprep.subr.mxu0 %v74
  %8133 = vmatpush1.msra.mxu0 %v73
  %8134 = vmatprep.subr.mxu0 %v78
  %8135 = vmatpush1.msra.mxu0 %v77
  %8136 = vmatprep.subr.mxu0 0.0
  %8137 = vmatpush1.msra.mxu0 0.0
  %8138 = vmatprep.subr.mxu0 0.0
  %8139 = vmatpush1.msra.mxu0 0.0
  %8140 = vmatprep.subr.mxu0 0.0
  %8141 = vmatpush1.msra.mxu0 0.0
  %8142 = vmatprep.subr.mxu0 0.0
  %8143 = vmatpush1.msra.mxu0 0.0
  %8144 = vmatprep.subr.mxu0 0.0
  %8145 = vmatpush1.msra.mxu0 0.0
  %8146 = vmatprep.subr.mxu0 0.0
  %8147 = vmatpush1.msra.mxu0 0.0
  %8148 = vmatprep.subr.mxu0 0.0
  %8149 = vmatpush1.msra.mxu0 0.0
  %8150 = vmatprep.subr.mxu0 0.0
  %8151 = vmatpush1.msra.mxu0 0.0
  %8152 = vmatprep.subr.mxu0 0.0
  %8153 = vmatpush1.msra.mxu0 0.0
  %8154 = vmatprep.subr.mxu0 0.0
  %8155 = vmatpush1.msra.mxu0 0.0
  %8156 = vmatprep.subr.mxu0 0.0
  %8157 = vmatpush1.msra.mxu0 0.0
  %8158 = vmatprep.subr.mxu0 0.0
  %8159 = vmatpush1.msra.mxu0 0.0
  %8160 = vmatprep.subr.mxu0 0.0
  %8161 = vmatpush1.msra.mxu0 0.0
  %8162 = vmatprep.subr.mxu0 0.0
  %8163 = vmatpush1.msra.mxu0 0.0
  %8164 = vmatprep.subr.mxu0 0.0
  %8165 = vmatpush1.msra.mxu0 0.0
  %8166 = vmatprep.subr.mxu0 0.0
  %8167 = vmatpush1.msra.mxu0 0.0
  %8168 = vmatprep.mubr.f32.mxu0 0.0
  %8169 = vmatmul.mubr.f32.gmra.mrb[0].mxu0 %v8054
  %v8170 = vpop.f32.mrb[0].mxu0
  %v8171 = vadd.f32 0.0, %v8170
  %v8172 = vpop.f32.mrb[0].mxu0
  %v8173 = vadd.f32 0.0, %v8172
  %8174 = vdwg.mxu0
  %8175 = vmatprep.subr.mxu0 %v20
  %8176 = vmatpush1.msra.mxu0 %v19
  %8177 = vmatprep.subr.mxu0 %v24
  %8178 = vmatpush1.msra.mxu0 %v23
  %8179 = vmatprep.subr.mxu0 %v28
  %8180 = vmatpush1.msra.mxu0 %v27
  %8181 = vmatprep.subr.mxu0 %v32
  %8182 = vmatpush1.msra.mxu0 %v31
  %8183 = vmatprep.subr.mxu0 %v36
  %8184 = vmatpush1.msra.mxu0 %v35
  %8185 = vmatprep.subr.mxu0 %v40
  %8186 = vmatpush1.msra.mxu0 %v39
  %8187 = vmatprep.subr.mxu0 %v44
  %8188 = vmatpush1.msra.mxu0 %v43
  %8189 = vmatprep.subr.mxu0 %v48
  %8190 = vmatpush1.msra.mxu0 %v47
  %8191 = vmatprep.subr.mxu0 %v52
  %8192 = vmatpush1.msra.mxu0 %v51
  %8193 = vmatprep.subr.mxu0 %v56
  %8194 = vmatpush1.msra.mxu0 %v55
  %8195 = vmatprep.subr.mxu0 %v60
  %8196 = vmatpush1.msra.mxu0 %v59
  %8197 = vmatprep.subr.mxu0 %v64
  %8198 = vmatpush1.msra.mxu0 %v63
  %8199 = vmatprep.subr.mxu0 %v68
  %8200 = vmatpush1.msra.mxu0 %v67
  %8201 = vmatprep.subr.mxu0 %v72
  %8202 = vmatpush1.msra.mxu0 %v71
  %8203 = vmatprep.subr.mxu0 %v76
  %8204 = vmatpush1.msra.mxu0 %v75
  %8205 = vmatprep.subr.mxu0 %v80
  %8206 = vmatpush1.msra.mxu0 %v79
  %8207 = vmatprep.subr.mxu0 0.0
  %8208 = vmatpush1.msra.mxu0 0.0
  %8209 = vmatprep.subr.mxu0 0.0
  %8210 = vmatpush1.msra.mxu0 0.0
  %8211 = vmatprep.subr.mxu0 0.0
  %8212 = vmatpush1.msra.mxu0 0.0
  %8213 = vmatprep.subr.mxu0 0.0
  %8214 = vmatpush1.msra.mxu0 0.0
  %8215 = vmatprep.subr.mxu0 0.0
  %8216 = vmatpush1.msra.mxu0 0.0
  %8217 = vmatprep.subr.mxu0 0.0
  %8218 = vmatpush1.msra.mxu0 0.0
  %8219 = vmatprep.subr.mxu0 0.0
  %8220 = vmatpush1.msra.mxu0 0.0
  %8221 = vmatprep.subr.mxu0 0.0
  %8222 = vmatpush1.msra.mxu0 0.0
  %8223 = vmatprep.subr.mxu0 0.0
  %8224 = vmatpush1.msra.mxu0 0.0
  %8225 = vmatprep.subr.mxu0 0.0
  %8226 = vmatpush1.msra.mxu0 0.0
  %8227 = vmatprep.subr.mxu0 0.0
  %8228 = vmatpush1.msra.mxu0 0.0
  %8229 = vmatprep.subr.mxu0 0.0
  %8230 = vmatpush1.msra.mxu0 0.0
  %8231 = vmatprep.subr.mxu0 0.0
  %8232 = vmatpush1.msra.mxu0 0.0
  %8233 = vmatprep.subr.mxu0 0.0
  %8234 = vmatpush1.msra.mxu0 0.0
  %8235 = vmatprep.subr.mxu0 0.0
  %8236 = vmatpush1.msra.mxu0 0.0
  %8237 = vmatprep.subr.mxu0 0.0
  %8238 = vmatpush1.msra.mxu0 0.0
  %8239 = vmatprep.mubr.f32.mxu0 0.0
  %8240 = vmatmul.mubr.f32.gmra.mrb[0].mxu0 %v8054
  %v8241 = vpop.f32.mrb[0].mxu0
  %v8242 = vadd.f32 0.0, %v8241
  %v8243 = vpop.f32.mrb[0].mxu0
  %v8244 = vadd.f32 0.0, %v8243
  %8245 = vdwg.mxu0
  %v8250 = vrot.slane %v8171, 1
  %v8251 = vrot.slane %v8173, 1
  %v8252 = vrot.slane %v8242, 1
  %v8253 = vrot.slane %v8244, 1
  %v8254 = vrot.slane %v8171, 2
  %v8255 = vrot.slane %v8173, 2
  %v8256 = vrot.slane %v8242, 2
  %v8257 = vrot.slane %v8244, 2
  %v8258 = vrot.slane %v8171, 3
  %v8259 = vrot.slane %v8173, 3
  %v8260 = vrot.slane %v8242, 3
  %v8261 = vrot.slane %v8244, 3
  %v8262 = vrot.slane %v8171, 4
  %v8263 = vrot.slane %v8173, 4
  %v8264 = vrot.slane %v8242, 4
  %v8265 = vrot.slane %v8244, 4
  %v8266 = vrot.slane %v8171, 5
  %v8267 = vrot.slane %v8173, 5
  %v8268 = vrot.slane %v8242, 5
  %v8269 = vrot.slane %v8244, 5
  %v8270 = vrot.slane %v8171, 6
  %v8271 = vrot.slane %v8173, 6
  %v8272 = vrot.slane %v8242, 6
  %v8273 = vrot.slane %v8244, 6
  %v8274 = vrot.slane %v8171, 7
  %v8275 = vrot.slane %v8173, 7
  %v8276 = vrot.slane %v8242, 7
  %v8277 = vrot.slane %v8244, 7
  %v8310 = vadd.f32 %v8072, %v8250
  %v8311 = vadd.f32 %v8073, %v8251
  %v8312 = vadd.f32 %v8074, %v8252
  %v8313 = vadd.f32 %v8075, %v8253
  %v8314 = vadd.f32 %v8076, %v8254
  %v8315 = vadd.f32 %v8077, %v8255
  %v8316 = vadd.f32 %v8078, %v8256
  %v8317 = vadd.f32 %v8079, %v8257
  %v8318 = vadd.f32 %v8080, %v8258
  %v8319 = vadd.f32 %v8081, %v8259
  %v8320 = vadd.f32 %v8082, %v8260
  %v8321 = vadd.f32 %v8083, %v8261
  %v8322 = vadd.f32 %v8084, %v8262
  %v8323 = vadd.f32 %v8085, %v8263
  %v8324 = vadd.f32 %v8086, %v8264
  %v8325 = vadd.f32 %v8087, %v8265
  %v8326 = vadd.f32 %v8088, %v8266
  %v8327 = vadd.f32 %v8089, %v8267
  %v8328 = vadd.f32 %v8090, %v8268
  %v8329 = vadd.f32 %v8091, %v8269
  %v8330 = vadd.f32 %v8092, %v8270
  %v8331 = vadd.f32 %v8093, %v8271
  %v8332 = vadd.f32 %v8094, %v8272
  %v8333 = vadd.f32 %v8095, %v8273
  %v8334 = vadd.f32 %v8096, %v8274
  %v8335 = vadd.f32 %v8097, %v8275
  %v8336 = vadd.f32 %v8098, %v8276
  %v8337 = vadd.f32 %v8099, %v8277
  %v8338 = vadd.f32 %v8100, %v8171
  %v8339 = vadd.f32 %v8101, %v8173
  %v8340 = vadd.f32 %v8102, %v8242
  %v8341 = vadd.f32 %v8103, %v8244
  %v8342 = vmul.f32 %v8310, 0.5
  %v8343 = vmul.f32 %v8314, 0.5
  %v8344 = vmul.f32 %v8318, 0.5
  %v8345 = vmul.f32 %v8322, 0.5
  %v8346 = vmul.f32 %v8326, 0.5
  %v8347 = vmul.f32 %v8330, 0.5
  %v8348 = vmul.f32 %v8334, 0.5
  %v8349 = vmul.f32 %v8338, 0.5
  %v8350 = vtanh.pop %v8342
  %v8351 = vtanh.pop %v8343
  %v8352 = vtanh.pop %v8344
  %v8353 = vtanh.pop %v8345
  %v8354 = vtanh.pop %v8346
  %v8355 = vtanh.pop %v8347
  %v8356 = vtanh.pop %v8348
  %v8357 = vtanh.pop %v8349
  %v8358 = vmul.f32 %v8350, 0.5
  %v8359 = vmul.f32 %v8351, 0.5
  %v8360 = vmul.f32 %v8352, 0.5
  %v8361 = vmul.f32 %v8353, 0.5
  %v8362 = vmul.f32 %v8354, 0.5
  %v8363 = vmul.f32 %v8355, 0.5
  %v8364 = vmul.f32 %v8356, 0.5
  %v8365 = vmul.f32 %v8357, 0.5
  %v8366 = vadd.f32 %v8358, 0.5
  %v8367 = vadd.f32 %v8359, 0.5
  %v8368 = vadd.f32 %v8360, 0.5
  %v8369 = vadd.f32 %v8361, 0.5
  %v8370 = vadd.f32 %v8362, 0.5
  %v8371 = vadd.f32 %v8363, 0.5
  %v8372 = vadd.f32 %v8364, 0.5
  %v8373 = vadd.f32 %v8365, 0.5
  %v8374 = vmul.f32 %v8311, 0.5
  %v8375 = vmul.f32 %v8315, 0.5
  %v8376 = vmul.f32 %v8319, 0.5
  %v8377 = vmul.f32 %v8323, 0.5
  %v8378 = vmul.f32 %v8327, 0.5
  %v8379 = vmul.f32 %v8331, 0.5
  %v8380 = vmul.f32 %v8335, 0.5
  %v8381 = vmul.f32 %v8339, 0.5
  %v8382 = vtanh.pop %v8374
  %v8383 = vtanh.pop %v8375
  %v8384 = vtanh.pop %v8376
  %v8385 = vtanh.pop %v8377
  %v8386 = vtanh.pop %v8378
  %v8387 = vtanh.pop %v8379
  %v8388 = vtanh.pop %v8380
  %v8389 = vtanh.pop %v8381
  %v8390 = vmul.f32 %v8382, 0.5
  %v8391 = vmul.f32 %v8383, 0.5
  %v8392 = vmul.f32 %v8384, 0.5
  %v8393 = vmul.f32 %v8385, 0.5
  %v8394 = vmul.f32 %v8386, 0.5
  %v8395 = vmul.f32 %v8387, 0.5
  %v8396 = vmul.f32 %v8388, 0.5
  %v8397 = vmul.f32 %v8389, 0.5
  %v8398 = vadd.f32 %v8390, 0.5
  %v8399 = vadd.f32 %v8391, 0.5
  %v8400 = vadd.f32 %v8392, 0.5
  %v8401 = vadd.f32 %v8393, 0.5
  %v8402 = vadd.f32 %v8394, 0.5
  %v8403 = vadd.f32 %v8395, 0.5
  %v8404 = vadd.f32 %v8396, 0.5
  %v8405 = vadd.f32 %v8397, 0.5
  %v8406 = vtanh.pop %v8312
  %v8407 = vtanh.pop %v8316
  %v8408 = vtanh.pop %v8320
  %v8409 = vtanh.pop %v8324
  %v8410 = vtanh.pop %v8328
  %v8411 = vtanh.pop %v8332
  %v8412 = vtanh.pop %v8336
  %v8413 = vtanh.pop %v8340
  %v8414 = vmul.f32 %v8313, 0.5
  %v8415 = vmul.f32 %v8317, 0.5
  %v8416 = vmul.f32 %v8321, 0.5
  %v8417 = vmul.f32 %v8325, 0.5
  %v8418 = vmul.f32 %v8329, 0.5
  %v8419 = vmul.f32 %v8333, 0.5
  %v8420 = vmul.f32 %v8337, 0.5
  %v8421 = vmul.f32 %v8341, 0.5
  %v8422 = vtanh.pop %v8414
  %v8423 = vtanh.pop %v8415
  %v8424 = vtanh.pop %v8416
  %v8425 = vtanh.pop %v8417
  %v8426 = vtanh.pop %v8418
  %v8427 = vtanh.pop %v8419
  %v8428 = vtanh.pop %v8420
  %v8429 = vtanh.pop %v8421
  %v8430 = vmul.f32 %v8422, 0.5
  %v8431 = vmul.f32 %v8423, 0.5
  %v8432 = vmul.f32 %v8424, 0.5
  %v8433 = vmul.f32 %v8425, 0.5
  %v8434 = vmul.f32 %v8426, 0.5
  %v8435 = vmul.f32 %v8427, 0.5
  %v8436 = vmul.f32 %v8428, 0.5
  %v8437 = vmul.f32 %v8429, 0.5
  %v8438 = vadd.f32 %v8430, 0.5
  %v8439 = vadd.f32 %v8431, 0.5
  %v8440 = vadd.f32 %v8432, 0.5
  %v8441 = vadd.f32 %v8433, 0.5
  %v8442 = vadd.f32 %v8434, 0.5
  %v8443 = vadd.f32 %v8435, 0.5
  %v8444 = vadd.f32 %v8436, 0.5
  %v8445 = vadd.f32 %v8437, 0.5
  %v8447 = vrot.slane %v8055, 1
  %v8448 = vrot.slane %v8055, 2
  %v8449 = vrot.slane %v8055, 3
  %v8450 = vrot.slane %v8055, 4
  %v8451 = vrot.slane %v8055, 5
  %v8452 = vrot.slane %v8055, 6
  %v8453 = vrot.slane %v8055, 7
  %v8462 = vmul.f32 %v8398, %v8447
  %v8463 = vmul.f32 %v8399, %v8448
  %v8464 = vmul.f32 %v8400, %v8449
  %v8465 = vmul.f32 %v8401, %v8450
  %v8466 = vmul.f32 %v8402, %v8451
  %v8467 = vmul.f32 %v8403, %v8452
  %v8468 = vmul.f32 %v8404, %v8453
  %v8469 = vmul.f32 %v8405, %v8055
  %v8470 = vmul.f32 %v8366, %v8406
  %v8471 = vmul.f32 %v8367, %v8407
  %v8472 = vmul.f32 %v8368, %v8408
  %v8473 = vmul.f32 %v8369, %v8409
  %v8474 = vmul.f32 %v8370, %v8410
  %v8475 = vmul.f32 %v8371, %v8411
  %v8476 = vmul.f32 %v8372, %v8412
  %v8477 = vmul.f32 %v8373, %v8413
  %v8478 = vadd.f32 %v8462, %v8470
  %v8479 = vadd.f32 %v8463, %v8471
  %v8480 = vadd.f32 %v8464, %v8472
  %v8481 = vadd.f32 %v8465, %v8473
  %v8482 = vadd.f32 %v8466, %v8474
  %v8483 = vadd.f32 %v8467, %v8475
  %v8484 = vadd.f32 %v8468, %v8476
  %v8485 = vadd.f32 %v8469, %v8477
  %v8486 = vtanh.pop %v8478
  %v8487 = vtanh.pop %v8479
  %v8488 = vtanh.pop %v8480
  %v8489 = vtanh.pop %v8481
  %v8490 = vtanh.pop %v8482
  %v8491 = vtanh.pop %v8483
  %v8492 = vtanh.pop %v8484
  %v8493 = vtanh.pop %v8485
  %v8494 = vmul.f32 %v8438, %v8486
  %v8495 = vmul.f32 %v8439, %v8487
  %v8496 = vmul.f32 %v8440, %v8488
  %v8497 = vmul.f32 %v8441, %v8489
  %v8498 = vmul.f32 %v8442, %v8490
  %v8499 = vmul.f32 %v8443, %v8491
  %v8500 = vmul.f32 %v8444, %v8492
  %v8501 = vmul.f32 %v8445, %v8493
  %v8510 = vrot.slane %v8495, 7
  %v8511 = vrot.slane %v8496, 6
  %v8512 = vsel %vm538, %v8511, %v8510
  %v8513 = vrot.slane %v8497, 5
  %v8514 = vsel %vm541, %v8513, %v8512
  %v8515 = vrot.slane %v8498, 4
  %v8516 = vsel %vm544, %v8515, %v8514
  %v8517 = vrot.slane %v8499, 3
  %v8518 = vsel %vm547, %v8517, %v8516
  %v8519 = vrot.slane %v8500, 2
  %v8520 = vsel %vm550, %v8519, %v8518
  %v8521 = vrot.slane %v8501, 1
  %v8522 = vsel %vm553, %v8521, %v8520
  %8525 = vst [vmem:[#allocation2 - $0x7] sm:$0x80] %v8494
  %8526 = vst [vmem:[#allocation2 + $0x1] sm:$0x7f] %v8522
  %v8535 = vrot.slane %v8479, 7
  %v8536 = vrot.slane %v8480, 6
  %v8537 = vsel %vm538, %v8536, %v8535
  %v8538 = vrot.slane %v8481, 5
  %v8539 = vsel %vm541, %v8538, %v8537
  %v8540 = vrot.slane %v8482, 4
  %v8541 = vsel %vm544, %v8540, %v8539
  %v8542 = vrot.slane %v8483, 3
  %v8543 = vsel %vm547, %v8542, %v8541
  %v8544 = vrot.slane %v8484, 2
  %v8545 = vsel %vm550, %v8544, %v8543
  %v8546 = vrot.slane %v8485, 1
  %v8547 = vsel %vm553, %v8546, %v8545
  %8550 = vst [vmem:[#allocation3 - $0x7] sm:$0x80] %v8478
  %8551 = vst [vmem:[#allocation3 + $0x1] sm:$0x7f] %v8547
  %v8552 = vpack.c.bf16 %v8494, %v8494
  %v8553 = vpack.c.bf16 %v8495, %v8495
  %v8554 = vpack.c.bf16 %v8496, %v8496
  %v8555 = vpack.c.bf16 %v8497, %v8497
  %v8556 = vpack.c.bf16 %v8498, %v8498
  %v8557 = vpack.c.bf16 %v8499, %v8499
  %v8558 = vpack.c.bf16 %v8500, %v8500
  %v8559 = vpack.c.bf16 %v8501, %v8501
  %v8560 = vld [vmem:[%s2 + $0x4] sm:$0x8]
  %v8561 = vsel %vm4321, %v8552, %v8560
  %8562 = vst [vmem:[%s2 + $0x4] sm:$0x8] %v8561
  %v8563 = vld [vmem:[%s2 + $0xc] sm:$0x8]
  %v8564 = vsel %vm4321, %v8553, %v8563
  %8565 = vst [vmem:[%s2 + $0xc] sm:$0x8] %v8564
  %v8566 = vld [vmem:[%s2 + $0x14] sm:$0x8]
  %v8567 = vsel %vm4321, %v8554, %v8566
  %8568 = vst [vmem:[%s2 + $0x14] sm:$0x8] %v8567
  %v8569 = vld [vmem:[%s2 + $0x1c] sm:$0x8]
  %v8570 = vsel %vm4321, %v8555, %v8569
  %8571 = vst [vmem:[%s2 + $0x1c] sm:$0x8] %v8570
  %v8572 = vld [vmem:[%s2 + $0x24] sm:$0x8]
  %v8573 = vsel %vm4321, %v8556, %v8572
  %8574 = vst [vmem:[%s2 + $0x24] sm:$0x8] %v8573
  %v8575 = vld [vmem:[%s2 + $0x2c] sm:$0x8]
  %v8576 = vsel %vm4321, %v8557, %v8575
  %8577 = vst [vmem:[%s2 + $0x2c] sm:$0x8] %v8576
  %v8578 = vld [vmem:[%s2 + $0x34] sm:$0x8]
  %v8579 = vsel %vm4321, %v8558, %v8578
  %8580 = vst [vmem:[%s2 + $0x34] sm:$0x8] %v8579
  %v8581 = vld [vmem:[%s2 + $0x3c] sm:$0x8]
  %v8582 = vsel %vm4321, %v8559, %v8581
  %8583 = vst [vmem:[%s2 + $0x3c] sm:$0x8] %v8582
  // Predicated region
  $region14: #{decoder_rnn_forward.4} parent=0 // pred_check
    _
  $region15: #{decoder_rnn_forward.4} parent=0 // pred_check_branch
    %8585 = sbr.rel (0) target = $region17
  $region16: #{decoder_rnn_forward.4} parent=0 // pred_region
    _
  $region17: #{decoder_rnn_forward.4} parent=0 // pred_fallthru
    _
  // Predicated region
  $region18: #{decoder_rnn_forward.4} parent=0 // pred_check
    _
  $region19: #{decoder_rnn_forward.4} parent=0 // pred_check_branch
    %8587 = sbr.rel (0) target = $region21
  $region20: #{decoder_rnn_forward.4} parent=0 // pred_region
    _
  $region21: #{decoder_rnn_forward.4} parent=0 // pred_fallthru
    _

</llo_original>
